<compile_context>
chip_gen: v7x
topology: tpu7x:2x2x1
jax: 0.10.0
libtpu: 0.0.40
codegen_flags: <defaults>
</compile_context>

<pallas_src>
import functools

import numpy as np
import jax
import jax.numpy as jnp
from jax import lax
from jax.experimental import pallas as pl
from jax.experimental.pallas import tpu as pltpu

_MXU_DTYPE = jnp.float32   # see header note / TODO(synk)


# ----------------------------------------------------------------------------
# Faithful port of Decoder.__init__ parameter adjustment (pure Python glue)
# ----------------------------------------------------------------------------
def _pair(v):
    return (v, v) if isinstance(v, int) else tuple(v)


def adjust_parameters(default_params, out_shape):
    kernel_size = _pair(default_params["kernel_size"])
    stride = _pair(default_params["stride"])
    padding = _pair(default_params.get("padding", 0))
    output_padding = _pair(default_params.get("output_padding", 0))
    new_padding = list(padding)
    new_output_padding = list(output_padding)
    input_shape = [0, 0]
    for dim in range(2):
        out_dim = out_shape[dim]
        k = kernel_size[dim]
        s = stride[dim]
        p = padding[dim]
        op = output_padding[dim]
        if (out_dim - k + 2 * p - op) % s != 0:
            size_mismatch = (k + s - out_dim) % s
            op = size_mismatch % 2
            p = (size_mismatch + op) // 2
        in_dim = 1 + (out_dim - k + 2 * p - op) // s
        if in_dim <= 0:
            p += s * (2 - in_dim) // 2
            in_dim = 1
        new_padding[dim] = p
        new_output_padding[dim] = op
        input_shape[dim] = in_dim
    params = dict(default_params)
    params["padding"] = tuple(new_padding)
    params["output_padding"] = tuple(new_output_padding)
    return params, tuple(input_shape)


def build_decoder_config(out_shape, in_channels):
    default_layers = (
        {"in_channels": in_channels, "out_channels": in_channels * 2,
         "kernel_size": 3, "stride": 2, "padding": 1},
        {"in_channels": in_channels * 2, "out_channels": in_channels * 4,
         "kernel_size": 9, "stride": 3, "padding": 1},
        {"in_channels": in_channels * 4, "out_channels": in_channels * 4,
         "kernel_size": 7, "stride": 5, "padding": 1},
        {"in_channels": in_channels * 4, "out_channels": in_channels * 2,
         "kernel_size": 9, "stride": 2, "padding": 0},
        {"in_channels": in_channels * 2, "out_channels": in_channels,
         "kernel_size": 6, "stride": 1, "padding": 0},
        {"in_channels": in_channels, "out_channels": out_shape[0],
         "kernel_size": 11, "stride": 1, "padding": 0},
    )
    layer_params = []
    out_hw = tuple(out_shape[1:])
    for i, dp in enumerate(reversed(default_layers)):
        params, out_hw = adjust_parameters(dp, out_hw)
        params = dict(params)
        params["use_bn_relu"] = (i != 0)   # i == 0 is the LAST block (ConvT + Tanh)
        layer_params.insert(0, params)
    return layer_params, out_hw            # out_hw == decoder input spatial shape


# ----------------------------------------------------------------------------
# One-time weight packing (host-side numpy; never re-run per forward)
# ----------------------------------------------------------------------------
def _layer_geometry(lp, in_hw):
    KH, KW = _pair(lp["kernel_size"])
    sh, sw = _pair(lp["stride"])
    ph, pw = _pair(lp["padding"])
    oph, opw = _pair(lp["output_padding"])
    Hin, Win = in_hw
    Hout = (Hin - 1) * sh - 2 * ph + KH + oph
    Wout = (Win - 1) * sw - 2 * pw + KW + opw
    assert Hout >= 1 and Wout >= 1
    return dict(KH=KH, KW=KW, sh=sh, sw=sw, ph=ph, pw=pw,
                Hin=Hin, Win=Win, Hout=Hout, Wout=Wout,
                Cin=lp["in_channels"], Cout=lp["out_channels"])


def pack_decoder(layer_params, weights, batch, in_hw, lane_align=128, eps=1e-5):
    """Pack all six deconv blocks into kernel-ready slabs (done once).

    Per layer:
      gall  (KH*N*Hout, N*Hin)      0/1 row-gather matrix (H stride/pad/taps)
      wflat (KH*Win*Cin, Wout*Cout) banded Toeplitz weights (W taps/stride/pad)
      brow  (1, Wout*Cout)          bias tiled over (ow, cout) lanes
      [BN]  gamma/beta (1, Cout), gmat (Wout*Cout, Cout), gmat.T
    The last (Tanh) layer's lane dim is zero-padded to a multiple of 128.
    """
    metas, arrays = [], []
    hw = tuple(in_hw)
    n_layers = len(layer_params)
    for li, (lp, wt) in enumerate(zip(layer_params, weights)):
        g = _layer_geometry(lp, hw)
        KH, KW, sh, sw, ph, pw = (g["KH"], g["KW"], g["sh"], g["sw"],
                                  g["ph"], g["pw"])
        Hin, Win, Hout, Wout = g["Hin"], g["Win"], g["Hout"], g["Wout"]
        Cin, Cout = g["Cin"], g["Cout"]
        Din, Co2 = Win * Cin, Wout * Cout
        use_bn_relu = bool(lp["use_bn_relu"])
        is_last = (li == n_layers - 1)
        Co2p = (-(-Co2 // lane_align) * lane_align) if is_last else Co2

        # flipped taps: wf[kh, kw, ci, co] = w[ci, co, KH-1-kh, KW-1-kw]
        w = np.asarray(wt["w"], np.float32)
        wf = np.transpose(w[:, :, ::-1, ::-1], (2, 3, 0, 1))

        # banded (Toeplitz) weights over compact input columns: for output
        # column block ow the contribution of input column block iw uses tap
        # kw = (KW-1-pw) + iw*sw - ow when it lands inside the kernel.
        wb = np.zeros((KH, Din, Co2p), np.float32)
        padleft = KW - 1 - pw
        for iw in range(Win):
            for ow in range(Wout):
                kw = padleft + iw * sw - ow
                if 0 <= kw < KW:
                    wb[:, iw * Cin:(iw + 1) * Cin,
                       ow * Cout:(ow + 1) * Cout] = wf[:, kw]
        wflat = wb.reshape(KH * Din, Co2p)

        # row-gather matrix folding H dilation / padding / per-tap shift.
        NHo, NHi = batch * Hout, batch * Hin
        gall = np.zeros((KH * NHo, NHi), np.float32)
        padtop = KH - 1 - ph
        for n in range(batch):
            for ih in range(Hin):
                for oh in range(Hout):
                    kh = padtop + ih * sh - oh
                    if 0 <= kh < KH:
                        gall[kh * NHo + n * Hout + oh, n * Hin + ih] = 1.0

        brow = np.zeros((1, Co2p), np.float32)
        brow[0, :Co2] = np.tile(np.asarray(wt["b"], np.float32), Wout)

        layer_arrays = [gall, wflat, brow]
        if use_bn_relu:
            gmat = np.tile(np.eye(Cout, dtype=np.float32), (Wout, 1))   # (Co2, Cout)
            layer_arrays += [
                np.asarray(wt["gamma"], np.float32).reshape(1, Cout),
                np.asarray(wt["beta"], np.float32).reshape(1, Cout),
                gmat, np.ascontiguousarray(gmat.T)]
        arrays.extend(layer_arrays)

        metas.append(dict(KH=KH, Din=Din, NHo=NHo, Co2=Co2, Co2p=Co2p,
                          Hout=Hout, Wout=Wout, Cout=Cout,
                          use_bn_relu=use_bn_relu,
                          inv_count=1.0 / float(batch * Hout * Wout),
                          n_arrays=len(layer_arrays), eps=eps))
        hw = (Hout, Wout)
    return metas, tuple(jnp.asarray(a) for a in arrays), hw


# ----------------------------------------------------------------------------
# Fused Pallas kernel: all six blocks, activations stay resident in VMEM
# ----------------------------------------------------------------------------
def _fused_decoder_kernel(*refs, metas):
    # refs = (act0, <per-layer packed arrays...>, out)
    out_ref = refs[-1]
    act = refs[0][...]                                  # (N*Hin0, Win0*Cin0) f32
    idx = 1
    for m in metas:
        gall = refs[idx][...]
        wflat = refs[idx + 1][...]
        brow = refs[idx + 2][...]
        KH, NHo = m["KH"], m["NHo"]

        # 1) row gather on the MXU (folds H dilation/padding, no zero slabs).
        xw = jnp.dot(gall.astype(_MXU_DTYPE), act.astype(_MXU_DTYPE),
                     preferred_element_type=jnp.float32)        # (KH*NHo, Din)
        # 2) im2col over the H taps only -> one deep contraction per layer.
        if KH > 1:
            lhs = jnp.concatenate(
                [xw[kh * NHo:(kh + 1) * NHo, :] for kh in range(KH)], axis=1)
        else:
            lhs = xw                                            # (NHo, KH*Din)
        y = jnp.dot(lhs.astype(_MXU_DTYPE), wflat.astype(_MXU_DTYPE),
                    preferred_element_type=jnp.float32) + brow  # (NHo, Co2p)

        if m["use_bn_relu"]:
            gamma = refs[idx + 3][...]
            beta = refs[idx + 4][...]
            gmat = refs[idx + 5][...]
            gmatT = refs[idx + 6][...]
            inv_count = m["inv_count"]
            # BatchNorm2d training-mode (biased) batch stats per channel;
            # per-channel sums over the (ow, cout)-interleaved lanes via tiny
            # group-sum matmuls (no in-kernel reshapes).
            s1 = jnp.sum(y, axis=0, keepdims=True)                      # (1, Co2)
            mean_c = jnp.dot(s1, gmat,
                             preferred_element_type=jnp.float32) * inv_count
            mean_row = jnp.dot(mean_c, gmatT,
                               preferred_element_type=jnp.float32)
            d = y - mean_row
            s2 = jnp.sum(d * d, axis=0, keepdims=True)
            var_c = jnp.dot(s2, gmat,
                            preferred_element_type=jnp.float32) * inv_count
            scale_c = gamma * lax.rsqrt(var_c + m["eps"])
            shift_c = beta - mean_c * scale_c
            scale_row = jnp.dot(scale_c, gmatT,
                                preferred_element_type=jnp.float32)
            shift_row = jnp.dot(shift_c, gmatT,
                                preferred_element_type=jnp.float32)
            act = jnp.maximum(y * scale_row + shift_row, 0.0)   # next layer input
        else:
            act = jnp.tanh(y)                                   # final Tanh block
        idx += m["n_arrays"]

    out_ref[...] = act.astype(out_ref.dtype)                    # (N*Hout, Co2pad)


def make_decoder_forward(layer_params, weights, batch, in_hw, eps=1e-5):
    """Returns (jitted forward(x_nchw, packed) -> NCHW, packed arrays)."""
    metas, packed, _ = pack_decoder(layer_params, weights, batch, in_hw, eps=eps)
    m_last = metas[-1]
    N = batch
    Hin0, Win0 = in_hw
    Cin0 = layer_params[0]["in_channels"]
    Hl, Wl, Cl = m_last["Hout"], m_last["Wout"], m_last["Cout"]
    out_rows, out_cols = N * Hl, m_last["Co2p"]
    kernel = functools.partial(_fused_decoder_kernel, metas=metas)

    def forward(x_nchw, packed_arrays):
        # single NCHW -> (N*H, W*C) layout change at the decoder input
        act0 = jnp.transpose(x_nchw.astype(jnp.float32), (0, 2, 3, 1))
        act0 = act0.reshape(N * Hin0, Win0 * Cin0)
        operands = (act0,) + tuple(packed_arrays)
        y = pl.pallas_call(
            kernel,
            out_shape=jax.ShapeDtypeStruct((out_rows, out_cols), jnp.float32),
            grid=(1,),
            in_specs=[pl.BlockSpec(op.shape, lambda i: (0, 0)) for op in operands],
            out_specs=pl.BlockSpec((out_rows, out_cols), lambda i: (0, 0)),
            compiler_params=pltpu.CompilerParams(
                dimension_semantics=("arbitrary",)),
        )(*operands)
        # crop the lane padding; single (N*H, W*C) -> NCHW at the output
        y = y[:, :Wl * Cl].reshape(N, Hl, Wl, Cl)
        return jnp.transpose(y, (0, 3, 1, 2))

    return jax.jit(forward), packed


# ----------------------------------------------------------------------------
# Pure-JAX reference (validation only)
# ----------------------------------------------------------------------------
def decoder_forward_ref(x, layer_params, weights, eps=1e-5):
    x = x.astype(jnp.float32)
    for lp, wt in zip(layer_params, weights):
        k = lp["kernel_size"]
        s = lp["stride"]
        ph, pw = _pair(lp["padding"])
        oph, opw = _pair(lp["output_padding"])
        W = wt["w"].astype(jnp.float32)                         # (Cin, Cout, KH, KW)
        Wr = jnp.transpose(W[:, :, ::-1, ::-1], (1, 0, 2, 3))   # OIHW, flipped
        y = lax.conv_general_dilated(
            x, Wr, window_strides=(1, 1),
            padding=[(k - 1 - ph, k - 1 - ph + oph),
                     (k - 1 - pw, k - 1 - pw + opw)],
            lhs_dilation=(s, s), rhs_dilation=(1, 1),
            dimension_numbers=("NCHW", "OIHW", "NCHW"),
            precision=lax.Precision.HIGHEST)
        y = y + wt["b"].reshape(1, -1, 1, 1)
        if lp["use_bn_relu"]:
            mean = jnp.mean(y, axis=(0, 2, 3), keepdims=True)
            var = jnp.mean(jnp.square(y - mean), axis=(0, 2, 3), keepdims=True)
            y = (y - mean) * lax.rsqrt(var + eps)
            y = y * wt["gamma"].reshape(1, -1, 1, 1) + wt["beta"].reshape(1, -1, 1, 1)
            y = jnp.maximum(y, 0.0)
        else:
            y = jnp.tanh(y)
        x = y
    return x


# ----------------------------------------------------------------------------
# Deterministic parameter init (shapes given by the module's __init__)
# ----------------------------------------------------------------------------
def init_weights(key, layer_params):
    weights = []
    for lp in layer_params:
        key, k1, k2, k3, k4 = jax.random.split(key, 5)
        cin, cout, k = lp["in_channels"], lp["out_channels"], lp["kernel_size"]
        fan = cin * k * k
        weights.append(dict(
            w=jax.random.normal(k1, (cin, cout, k, k), jnp.float32) / jnp.sqrt(fan),
            b=0.05 * jax.random.normal(k2, (cout,), jnp.float32),
            gamma=1.0 + 0.1 * jax.random.normal(k3, (cout,), jnp.float32),
            beta=0.05 * jax.random.normal(k4, (cout,), jnp.float32),
        ))
    return weights


if __name__ == "__main__":
    out_shape = (3, 64, 64)    # (c, h, w) requested from the decoder
    in_channels = 4
    batch = 2

    layer_params, in_hw = build_decoder_config(out_shape, in_channels)

    key = jax.random.PRNGKey(0)
    kx, kw = jax.random.split(key)
    # Decoder.get_input_shape() -> in_hw ; input is (N, in_channels, *in_hw)
    x = jax.random.normal(kx, (batch, in_channels, *in_hw), jnp.float32)
    weights = init_weights(kw, layer_params)

    fwd, packed = make_decoder_forward(layer_params, weights, batch, in_hw)
    y = jax.block_until_ready(fwd(x, packed))

    y_ref = jax.block_until_ready(
        jax.jit(lambda xx, ww: decoder_forward_ref(xx, layer_params, ww))(x, weights))

    assert y.shape == y_ref.shape, (y.shape, y_ref.shape)
    err = float(jnp.max(jnp.abs(y - y_ref)))
    assert bool(jnp.allclose(y, y_ref, atol=2e-3, rtol=2e-3)), f"max abs err {err}"

    print("KERNEL_OK")
</pallas_src>

<mosaic_0001>
module attributes {stable_mosaic.version = 11 : i64} {
  func.func @_fused_decoder_kernel(%arg0: i32, %arg1: memref<2x4xf32, #tpu.memory_space<vmem>>, %arg2: memref<6x2xf32, #tpu.memory_space<vmem>>, %arg3: memref<12x8xf32, #tpu.memory_space<vmem>>, %arg4: memref<1x8xf32, #tpu.memory_space<vmem>>, %arg5: memref<1x8xf32, #tpu.memory_space<vmem>>, %arg6: memref<1x8xf32, #tpu.memory_space<vmem>>, %arg7: memref<8x8xf32, #tpu.memory_space<vmem>>, %arg8: memref<8x8xf32, #tpu.memory_space<vmem>>, %arg9: memref<18x2xf32, #tpu.memory_space<vmem>>, %arg10: memref<72x16xf32, #tpu.memory_space<vmem>>, %arg11: memref<1x16xf32, #tpu.memory_space<vmem>>, %arg12: memref<1x16xf32, #tpu.memory_space<vmem>>, %arg13: memref<1x16xf32, #tpu.memory_space<vmem>>, %arg14: memref<16x16xf32, #tpu.memory_space<vmem>>, %arg15: memref<16x16xf32, #tpu.memory_space<vmem>>, %arg16: memref<84x2xf32, #tpu.memory_space<vmem>>, %arg17: memref<112x96xf32, #tpu.memory_space<vmem>>, %arg18: memref<1x96xf32, #tpu.memory_space<vmem>>, %arg19: memref<1x16xf32, #tpu.memory_space<vmem>>, %arg20: memref<1x16xf32, #tpu.memory_space<vmem>>, %arg21: memref<96x16xf32, #tpu.memory_space<vmem>>, %arg22: memref<16x96xf32, #tpu.memory_space<vmem>>, %arg23: memref<342x12xf32, #tpu.memory_space<vmem>>, %arg24: memref<864x152xf32, #tpu.memory_space<vmem>>, %arg25: memref<1x152xf32, #tpu.memory_space<vmem>>, %arg26: memref<1x8xf32, #tpu.memory_space<vmem>>, %arg27: memref<1x8xf32, #tpu.memory_space<vmem>>, %arg28: memref<152x8xf32, #tpu.memory_space<vmem>>, %arg29: memref<8x152xf32, #tpu.memory_space<vmem>>, %arg30: memref<288x38xf32, #tpu.memory_space<vmem>>, %arg31: memref<912x96xf32, #tpu.memory_space<vmem>>, %arg32: memref<1x96xf32, #tpu.memory_space<vmem>>, %arg33: memref<1x4xf32, #tpu.memory_space<vmem>>, %arg34: memref<1x4xf32, #tpu.memory_space<vmem>>, %arg35: memref<96x4xf32, #tpu.memory_space<vmem>>, %arg36: memref<4x96xf32, #tpu.memory_space<vmem>>, %arg37: memref<748x48xf32, #tpu.memory_space<vmem>>, %arg38: memref<1056x128xf32, #tpu.memory_space<vmem>>, %arg39: memref<1x128xf32, #tpu.memory_space<vmem>>, %arg40: memref<68x128xf32, #tpu.memory_space<vmem>>) attributes {dimension_semantics = [#tpu.dimension_semantics<arbitrary>], iteration_bounds = array<i64: 1>, scalar_prefetch = 0 : i64, scratch_operands = 0 : i64, tpu.core_type = #tpu.core_type<tc>, window_params = [{pipeline_mode = #tpu.pipeline_mode<synchronous>, transform_indices = @transform_0, window_bounds = array<i64: 2, 4>}, {pipeline_mode = #tpu.pipeline_mode<synchronous>, transform_indices = @transform_1, window_bounds = array<i64: 6, 2>}, {pipeline_mode = #tpu.pipeline_mode<synchronous>, transform_indices = @transform_2, window_bounds = array<i64: 12, 8>}, {pipeline_mode = #tpu.pipeline_mode<synchronous>, transform_indices = @transform_3, window_bounds = array<i64: 1, 8>}, {pipeline_mode = #tpu.pipeline_mode<synchronous>, transform_indices = @transform_4, window_bounds = array<i64: 1, 8>}, {pipeline_mode = #tpu.pipeline_mode<synchronous>, transform_indices = @transform_5, window_bounds = array<i64: 1, 8>}, {pipeline_mode = #tpu.pipeline_mode<synchronous>, transform_indices = @transform_6, window_bounds = array<i64: 8, 8>}, {pipeline_mode = #tpu.pipeline_mode<synchronous>, transform_indices = @transform_7, window_bounds = array<i64: 8, 8>}, {pipeline_mode = #tpu.pipeline_mode<synchronous>, transform_indices = @transform_8, window_bounds = array<i64: 18, 2>}, {pipeline_mode = #tpu.pipeline_mode<synchronous>, transform_indices = @transform_9, window_bounds = array<i64: 72, 16>}, {pipeline_mode = #tpu.pipeline_mode<synchronous>, transform_indices = @transform_10, window_bounds = array<i64: 1, 16>}, {pipeline_mode = #tpu.pipeline_mode<synchronous>, transform_indices = @transform_11, window_bounds = array<i64: 1, 16>}, {pipeline_mode = #tpu.pipeline_mode<synchronous>, transform_indices = @transform_12, window_bounds = array<i64: 1, 16>}, {pipeline_mode = #tpu.pipeline_mode<synchronous>, transform_indices = @transform_13, window_bounds = array<i64: 16, 16>}, {pipeline_mode = #tpu.pipeline_mode<synchronous>, transform_indices = @transform_14, window_bounds = array<i64: 16, 16>}, {pipeline_mode = #tpu.pipeline_mode<synchronous>, transform_indices = @transform_15, window_bounds = array<i64: 84, 2>}, {pipeline_mode = #tpu.pipeline_mode<synchronous>, transform_indices = @transform_16, window_bounds = array<i64: 112, 96>}, {pipeline_mode = #tpu.pipeline_mode<synchronous>, transform_indices = @transform_17, window_bounds = array<i64: 1, 96>}, {pipeline_mode = #tpu.pipeline_mode<synchronous>, transform_indices = @transform_18, window_bounds = array<i64: 1, 16>}, {pipeline_mode = #tpu.pipeline_mode<synchronous>, transform_indices = @transform_19, window_bounds = array<i64: 1, 16>}, {pipeline_mode = #tpu.pipeline_mode<synchronous>, transform_indices = @transform_20, window_bounds = array<i64: 96, 16>}, {pipeline_mode = #tpu.pipeline_mode<synchronous>, transform_indices = @transform_21, window_bounds = array<i64: 16, 96>}, {pipeline_mode = #tpu.pipeline_mode<synchronous>, transform_indices = @transform_22, window_bounds = array<i64: 342, 12>}, {pipeline_mode = #tpu.pipeline_mode<synchronous>, transform_indices = @transform_23, window_bounds = array<i64: 864, 152>}, {pipeline_mode = #tpu.pipeline_mode<synchronous>, transform_indices = @transform_24, window_bounds = array<i64: 1, 152>}, {pipeline_mode = #tpu.pipeline_mode<synchronous>, transform_indices = @transform_25, window_bounds = array<i64: 1, 8>}, {pipeline_mode = #tpu.pipeline_mode<synchronous>, transform_indices = @transform_26, window_bounds = array<i64: 1, 8>}, {pipeline_mode = #tpu.pipeline_mode<synchronous>, transform_indices = @transform_27, window_bounds = array<i64: 152, 8>}, {pipeline_mode = #tpu.pipeline_mode<synchronous>, transform_indices = @transform_28, window_bounds = array<i64: 8, 152>}, {pipeline_mode = #tpu.pipeline_mode<synchronous>, transform_indices = @transform_29, window_bounds = array<i64: 288, 38>}, {pipeline_mode = #tpu.pipeline_mode<synchronous>, transform_indices = @transform_30, window_bounds = array<i64: 912, 96>}, {pipeline_mode = #tpu.pipeline_mode<synchronous>, transform_indices = @transform_31, window_bounds = array<i64: 1, 96>}, {pipeline_mode = #tpu.pipeline_mode<synchronous>, transform_indices = @transform_32, window_bounds = array<i64: 1, 4>}, {pipeline_mode = #tpu.pipeline_mode<synchronous>, transform_indices = @transform_33, window_bounds = array<i64: 1, 4>}, {pipeline_mode = #tpu.pipeline_mode<synchronous>, transform_indices = @transform_34, window_bounds = array<i64: 96, 4>}, {pipeline_mode = #tpu.pipeline_mode<synchronous>, transform_indices = @transform_35, window_bounds = array<i64: 4, 96>}, {pipeline_mode = #tpu.pipeline_mode<synchronous>, transform_indices = @transform_36, window_bounds = array<i64: 748, 48>}, {pipeline_mode = #tpu.pipeline_mode<synchronous>, transform_indices = @transform_37, window_bounds = array<i64: 1056, 128>}, {pipeline_mode = #tpu.pipeline_mode<synchronous>, transform_indices = @transform_38, window_bounds = array<i64: 1, 128>}, {pipeline_mode = #tpu.pipeline_mode<synchronous>, transform_indices = @transform_39, window_bounds = array<i64: 68, 128>}]} {
    %c0 = arith.constant 0 : index
    %c0_0 = arith.constant 0 : index
    %0 = vector.load %arg1[%c0, %c0_0] : memref<2x4xf32, #tpu.memory_space<vmem>>, vector<2x4xf32>
    %c0_1 = arith.constant 0 : index
    %c0_2 = arith.constant 0 : index
    %1 = vector.load %arg2[%c0_1, %c0_2] : memref<6x2xf32, #tpu.memory_space<vmem>>, vector<6x2xf32>
    %c0_3 = arith.constant 0 : index
    %c0_4 = arith.constant 0 : index
    %2 = vector.load %arg3[%c0_3, %c0_4] : memref<12x8xf32, #tpu.memory_space<vmem>>, vector<12x8xf32>
    %c0_5 = arith.constant 0 : index
    %c0_6 = arith.constant 0 : index
    %3 = vector.load %arg4[%c0_5, %c0_6] : memref<1x8xf32, #tpu.memory_space<vmem>>, vector<1x8xf32>
    %cst = arith.constant dense<0.000000e+00> : vector<6x4xf32>
    %4 = tpu.matmul %1, %0, %cst {dimension_numbers = #tpu.dot_dimension_numbers<[1], [0], [0], [1], [0, 0, 1, 1], [], []>} : vector<6x2xf32>, vector<2x4xf32>, vector<6x4xf32> -> vector<6x4xf32>
    %5 = vector.extract_strided_slice %4 {offsets = [0, 0], sizes = [2, 4], strides = [1, 1]} : vector<6x4xf32> to vector<2x4xf32>
    %6 = vector.extract_strided_slice %4 {offsets = [2, 0], sizes = [2, 4], strides = [1, 1]} : vector<6x4xf32> to vector<2x4xf32>
    %7 = vector.extract_strided_slice %4 {offsets = [4, 0], sizes = [2, 4], strides = [1, 1]} : vector<6x4xf32> to vector<2x4xf32>
    %8 = tpu.concatenate %5, %6, %7 in 1 : vector<2x4xf32>, vector<2x4xf32>, vector<2x4xf32> -> vector<2x12xf32>
    %cst_7 = arith.constant dense<0.000000e+00> : vector<2x8xf32>
    %9 = tpu.matmul %8, %2, %cst_7 {dimension_numbers = #tpu.dot_dimension_numbers<[1], [0], [0], [1], [0, 0, 1, 1], [], []>} : vector<2x12xf32>, vector<12x8xf32>, vector<2x8xf32> -> vector<2x8xf32>
    %10 = vector.broadcast %3 : vector<1x8xf32> to vector<2x8xf32>
    %11 = arith.addf %9, %10 : vector<2x8xf32>
    %c0_8 = arith.constant 0 : index
    %c0_9 = arith.constant 0 : index
    %12 = vector.load %arg5[%c0_8, %c0_9] : memref<1x8xf32, #tpu.memory_space<vmem>>, vector<1x8xf32>
    %c0_10 = arith.constant 0 : index
    %c0_11 = arith.constant 0 : index
    %13 = vector.load %arg6[%c0_10, %c0_11] : memref<1x8xf32, #tpu.memory_space<vmem>>, vector<1x8xf32>
    %c0_12 = arith.constant 0 : index
    %c0_13 = arith.constant 0 : index
    %14 = vector.load %arg7[%c0_12, %c0_13] : memref<8x8xf32, #tpu.memory_space<vmem>>, vector<8x8xf32>
    %c0_14 = arith.constant 0 : index
    %c0_15 = arith.constant 0 : index
    %15 = vector.load %arg8[%c0_14, %c0_15] : memref<8x8xf32, #tpu.memory_space<vmem>>, vector<8x8xf32>
    %cst_16 = arith.constant dense<0.000000e+00> : vector<8xf32>
    %16 = vector.multi_reduction <add>, %11, %cst_16 [0] : vector<2x8xf32> to vector<8xf32>
    %17 = vector.shape_cast %16 : vector<8xf32> to vector<1x8xf32>
    %cst_17 = arith.constant dense<0.000000e+00> : vector<1x8xf32>
    %18 = tpu.matmul %17, %14, %cst_17 {dimension_numbers = #tpu.dot_dimension_numbers<[1], [0], [0], [1], [0, 0, 1, 1], [], []>} : vector<1x8xf32>, vector<8x8xf32>, vector<1x8xf32> -> vector<1x8xf32>
    %cst_18 = arith.constant 5.000000e-01 : f32
    %19 = vector.broadcast %cst_18 : f32 to vector<1x8xf32>
    %20 = arith.mulf %18, %19 : vector<1x8xf32>
    %cst_19 = arith.constant dense<0.000000e+00> : vector<1x8xf32>
    %21 = tpu.matmul %20, %15, %cst_19 {dimension_numbers = #tpu.dot_dimension_numbers<[1], [0], [0], [1], [0, 0, 1, 1], [], []>} : vector<1x8xf32>, vector<8x8xf32>, vector<1x8xf32> -> vector<1x8xf32>
    %22 = vector.broadcast %21 : vector<1x8xf32> to vector<2x8xf32>
    %23 = arith.subf %11, %22 : vector<2x8xf32>
    %24 = arith.mulf %23, %23 : vector<2x8xf32>
    %cst_20 = arith.constant dense<0.000000e+00> : vector<8xf32>
    %25 = vector.multi_reduction <add>, %24, %cst_20 [0] : vector<2x8xf32> to vector<8xf32>
    %26 = vector.shape_cast %25 : vector<8xf32> to vector<1x8xf32>
    %cst_21 = arith.constant dense<0.000000e+00> : vector<1x8xf32>
    %27 = tpu.matmul %26, %14, %cst_21 {dimension_numbers = #tpu.dot_dimension_numbers<[1], [0], [0], [1], [0, 0, 1, 1], [], []>} : vector<1x8xf32>, vector<8x8xf32>, vector<1x8xf32> -> vector<1x8xf32>
    %cst_22 = arith.constant 5.000000e-01 : f32
    %28 = vector.broadcast %cst_22 : f32 to vector<1x8xf32>
    %29 = arith.mulf %27, %28 : vector<1x8xf32>
    %cst_23 = arith.constant 9.99999974E-6 : f32
    %30 = vector.broadcast %cst_23 : f32 to vector<1x8xf32>
    %31 = arith.addf %29, %30 : vector<1x8xf32>
    %32 = math.rsqrt %31 : vector<1x8xf32>
    %33 = arith.mulf %12, %32 : vector<1x8xf32>
    %34 = arith.mulf %20, %33 : vector<1x8xf32>
    %35 = arith.subf %13, %34 : vector<1x8xf32>
    %cst_24 = arith.constant dense<0.000000e+00> : vector<1x8xf32>
    %36 = tpu.matmul %33, %15, %cst_24 {dimension_numbers = #tpu.dot_dimension_numbers<[1], [0], [0], [1], [0, 0, 1, 1], [], []>} : vector<1x8xf32>, vector<8x8xf32>, vector<1x8xf32> -> vector<1x8xf32>
    %cst_25 = arith.constant dense<0.000000e+00> : vector<1x8xf32>
    %37 = tpu.matmul %35, %15, %cst_25 {dimension_numbers = #tpu.dot_dimension_numbers<[1], [0], [0], [1], [0, 0, 1, 1], [], []>} : vector<1x8xf32>, vector<8x8xf32>, vector<1x8xf32> -> vector<1x8xf32>
    %38 = vector.broadcast %36 : vector<1x8xf32> to vector<2x8xf32>
    %39 = arith.mulf %11, %38 : vector<2x8xf32>
    %40 = vector.broadcast %37 : vector<1x8xf32> to vector<2x8xf32>
    %41 = arith.addf %39, %40 : vector<2x8xf32>
    %cst_26 = arith.constant 0.000000e+00 : f32
    %42 = vector.broadcast %cst_26 : f32 to vector<2x8xf32>
    %43 = arith.maximumf %41, %42 : vector<2x8xf32>
    %c0_27 = arith.constant 0 : index
    %c0_28 = arith.constant 0 : index
    %44 = vector.load %arg9[%c0_27, %c0_28] : memref<18x2xf32, #tpu.memory_space<vmem>>, vector<18x2xf32>
    %c0_29 = arith.constant 0 : index
    %c0_30 = arith.constant 0 : index
    %45 = vector.load %arg10[%c0_29, %c0_30] : memref<72x16xf32, #tpu.memory_space<vmem>>, vector<72x16xf32>
    %c0_31 = arith.constant 0 : index
    %c0_32 = arith.constant 0 : index
    %46 = vector.load %arg11[%c0_31, %c0_32] : memref<1x16xf32, #tpu.memory_space<vmem>>, vector<1x16xf32>
    %cst_33 = arith.constant dense<0.000000e+00> : vector<18x8xf32>
    %47 = tpu.matmul %44, %43, %cst_33 {dimension_numbers = #tpu.dot_dimension_numbers<[1], [0], [0], [1], [0, 0, 1, 1], [], []>} : vector<18x2xf32>, vector<2x8xf32>, vector<18x8xf32> -> vector<18x8xf32>
    %48 = vector.extract_strided_slice %47 {offsets = [0, 0], sizes = [2, 8], strides = [1, 1]} : vector<18x8xf32> to vector<2x8xf32>
    %49 = vector.extract_strided_slice %47 {offsets = [2, 0], sizes = [2, 8], strides = [1, 1]} : vector<18x8xf32> to vector<2x8xf32>
    %50 = vector.extract_strided_slice %47 {offsets = [4, 0], sizes = [2, 8], strides = [1, 1]} : vector<18x8xf32> to vector<2x8xf32>
    %51 = vector.extract_strided_slice %47 {offsets = [6, 0], sizes = [2, 8], strides = [1, 1]} : vector<18x8xf32> to vector<2x8xf32>
    %52 = vector.extract_strided_slice %47 {offsets = [8, 0], sizes = [2, 8], strides = [1, 1]} : vector<18x8xf32> to vector<2x8xf32>
    %53 = vector.extract_strided_slice %47 {offsets = [10, 0], sizes = [2, 8], strides = [1, 1]} : vector<18x8xf32> to vector<2x8xf32>
    %54 = vector.extract_strided_slice %47 {offsets = [12, 0], sizes = [2, 8], strides = [1, 1]} : vector<18x8xf32> to vector<2x8xf32>
    %55 = vector.extract_strided_slice %47 {offsets = [14, 0], sizes = [2, 8], strides = [1, 1]} : vector<18x8xf32> to vector<2x8xf32>
    %56 = vector.extract_strided_slice %47 {offsets = [16, 0], sizes = [2, 8], strides = [1, 1]} : vector<18x8xf32> to vector<2x8xf32>
    %57 = tpu.concatenate %48, %49, %50, %51, %52, %53, %54, %55, %56 in 1 : vector<2x8xf32>, vector<2x8xf32>, vector<2x8xf32>, vector<2x8xf32>, vector<2x8xf32>, vector<2x8xf32>, vector<2x8xf32>, vector<2x8xf32>, vector<2x8xf32> -> vector<2x72xf32>
    %cst_34 = arith.constant dense<0.000000e+00> : vector<2x16xf32>
    %58 = tpu.matmul %57, %45, %cst_34 {dimension_numbers = #tpu.dot_dimension_numbers<[1], [0], [0], [1], [0, 0, 1, 1], [], []>} : vector<2x72xf32>, vector<72x16xf32>, vector<2x16xf32> -> vector<2x16xf32>
    %59 = vector.broadcast %46 : vector<1x16xf32> to vector<2x16xf32>
    %60 = arith.addf %58, %59 : vector<2x16xf32>
    %c0_35 = arith.constant 0 : index
    %c0_36 = arith.constant 0 : index
    %61 = vector.load %arg12[%c0_35, %c0_36] : memref<1x16xf32, #tpu.memory_space<vmem>>, vector<1x16xf32>
    %c0_37 = arith.constant 0 : index
    %c0_38 = arith.constant 0 : index
    %62 = vector.load %arg13[%c0_37, %c0_38] : memref<1x16xf32, #tpu.memory_space<vmem>>, vector<1x16xf32>
    %c0_39 = arith.constant 0 : index
    %c0_40 = arith.constant 0 : index
    %63 = vector.load %arg14[%c0_39, %c0_40] : memref<16x16xf32, #tpu.memory_space<vmem>>, vector<16x16xf32>
    %c0_41 = arith.constant 0 : index
    %c0_42 = arith.constant 0 : index
    %64 = vector.load %arg15[%c0_41, %c0_42] : memref<16x16xf32, #tpu.memory_space<vmem>>, vector<16x16xf32>
    %cst_43 = arith.constant dense<0.000000e+00> : vector<16xf32>
    %65 = vector.multi_reduction <add>, %60, %cst_43 [0] : vector<2x16xf32> to vector<16xf32>
    %66 = vector.shape_cast %65 : vector<16xf32> to vector<1x16xf32>
    %cst_44 = arith.constant dense<0.000000e+00> : vector<1x16xf32>
    %67 = tpu.matmul %66, %63, %cst_44 {dimension_numbers = #tpu.dot_dimension_numbers<[1], [0], [0], [1], [0, 0, 1, 1], [], []>} : vector<1x16xf32>, vector<16x16xf32>, vector<1x16xf32> -> vector<1x16xf32>
    %cst_45 = arith.constant 5.000000e-01 : f32
    %68 = vector.broadcast %cst_45 : f32 to vector<1x16xf32>
    %69 = arith.mulf %67, %68 : vector<1x16xf32>
    %cst_46 = arith.constant dense<0.000000e+00> : vector<1x16xf32>
    %70 = tpu.matmul %69, %64, %cst_46 {dimension_numbers = #tpu.dot_dimension_numbers<[1], [0], [0], [1], [0, 0, 1, 1], [], []>} : vector<1x16xf32>, vector<16x16xf32>, vector<1x16xf32> -> vector<1x16xf32>
    %71 = vector.broadcast %70 : vector<1x16xf32> to vector<2x16xf32>
    %72 = arith.subf %60, %71 : vector<2x16xf32>
    %73 = arith.mulf %72, %72 : vector<2x16xf32>
    %cst_47 = arith.constant dense<0.000000e+00> : vector<16xf32>
    %74 = vector.multi_reduction <add>, %73, %cst_47 [0] : vector<2x16xf32> to vector<16xf32>
    %75 = vector.shape_cast %74 : vector<16xf32> to vector<1x16xf32>
    %cst_48 = arith.constant dense<0.000000e+00> : vector<1x16xf32>
    %76 = tpu.matmul %75, %63, %cst_48 {dimension_numbers = #tpu.dot_dimension_numbers<[1], [0], [0], [1], [0, 0, 1, 1], [], []>} : vector<1x16xf32>, vector<16x16xf32>, vector<1x16xf32> -> vector<1x16xf32>
    %cst_49 = arith.constant 5.000000e-01 : f32
    %77 = vector.broadcast %cst_49 : f32 to vector<1x16xf32>
    %78 = arith.mulf %76, %77 : vector<1x16xf32>
    %cst_50 = arith.constant 9.99999974E-6 : f32
    %79 = vector.broadcast %cst_50 : f32 to vector<1x16xf32>
    %80 = arith.addf %78, %79 : vector<1x16xf32>
    %81 = math.rsqrt %80 : vector<1x16xf32>
    %82 = arith.mulf %61, %81 : vector<1x16xf32>
    %83 = arith.mulf %69, %82 : vector<1x16xf32>
    %84 = arith.subf %62, %83 : vector<1x16xf32>
    %cst_51 = arith.constant dense<0.000000e+00> : vector<1x16xf32>
    %85 = tpu.matmul %82, %64, %cst_51 {dimension_numbers = #tpu.dot_dimension_numbers<[1], [0], [0], [1], [0, 0, 1, 1], [], []>} : vector<1x16xf32>, vector<16x16xf32>, vector<1x16xf32> -> vector<1x16xf32>
    %cst_52 = arith.constant dense<0.000000e+00> : vector<1x16xf32>
    %86 = tpu.matmul %84, %64, %cst_52 {dimension_numbers = #tpu.dot_dimension_numbers<[1], [0], [0], [1], [0, 0, 1, 1], [], []>} : vector<1x16xf32>, vector<16x16xf32>, vector<1x16xf32> -> vector<1x16xf32>
    %87 = vector.broadcast %85 : vector<1x16xf32> to vector<2x16xf32>
    %88 = arith.mulf %60, %87 : vector<2x16xf32>
    %89 = vector.broadcast %86 : vector<1x16xf32> to vector<2x16xf32>
    %90 = arith.addf %88, %89 : vector<2x16xf32>
    %cst_53 = arith.constant 0.000000e+00 : f32
    %91 = vector.broadcast %cst_53 : f32 to vector<2x16xf32>
    %92 = arith.maximumf %90, %91 : vector<2x16xf32>
    %c0_54 = arith.constant 0 : index
    %c0_55 = arith.constant 0 : index
    %93 = vector.load %arg16[%c0_54, %c0_55] : memref<84x2xf32, #tpu.memory_space<vmem>>, vector<84x2xf32>
    %c0_56 = arith.constant 0 : index
    %c0_57 = arith.constant 0 : index
    %94 = vector.load %arg17[%c0_56, %c0_57] : memref<112x96xf32, #tpu.memory_space<vmem>>, vector<112x96xf32>
    %c0_58 = arith.constant 0 : index
    %c0_59 = arith.constant 0 : index
    %95 = vector.load %arg18[%c0_58, %c0_59] : memref<1x96xf32, #tpu.memory_space<vmem>>, vector<1x96xf32>
    %cst_60 = arith.constant dense<0.000000e+00> : vector<84x16xf32>
    %96 = tpu.matmul %93, %92, %cst_60 {dimension_numbers = #tpu.dot_dimension_numbers<[1], [0], [0], [1], [0, 0, 1, 1], [], []>} : vector<84x2xf32>, vector<2x16xf32>, vector<84x16xf32> -> vector<84x16xf32>
    %97 = vector.extract_strided_slice %96 {offsets = [0, 0], sizes = [12, 16], strides = [1, 1]} : vector<84x16xf32> to vector<12x16xf32>
    %98 = vector.extract_strided_slice %96 {offsets = [12, 0], sizes = [12, 16], strides = [1, 1]} : vector<84x16xf32> to vector<12x16xf32>
    %99 = vector.extract_strided_slice %96 {offsets = [24, 0], sizes = [12, 16], strides = [1, 1]} : vector<84x16xf32> to vector<12x16xf32>
    %100 = vector.extract_strided_slice %96 {offsets = [36, 0], sizes = [12, 16], strides = [1, 1]} : vector<84x16xf32> to vector<12x16xf32>
    %101 = vector.extract_strided_slice %96 {offsets = [48, 0], sizes = [12, 16], strides = [1, 1]} : vector<84x16xf32> to vector<12x16xf32>
    %102 = vector.extract_strided_slice %96 {offsets = [60, 0], sizes = [12, 16], strides = [1, 1]} : vector<84x16xf32> to vector<12x16xf32>
    %103 = vector.extract_strided_slice %96 {offsets = [72, 0], sizes = [12, 16], strides = [1, 1]} : vector<84x16xf32> to vector<12x16xf32>
    %104 = tpu.concatenate %97, %98, %99, %100, %101, %102, %103 in 1 : vector<12x16xf32>, vector<12x16xf32>, vector<12x16xf32>, vector<12x16xf32>, vector<12x16xf32>, vector<12x16xf32>, vector<12x16xf32> -> vector<12x112xf32>
    %cst_61 = arith.constant dense<0.000000e+00> : vector<12x96xf32>
    %105 = tpu.matmul %104, %94, %cst_61 {dimension_numbers = #tpu.dot_dimension_numbers<[1], [0], [0], [1], [0, 0, 1, 1], [], []>} : vector<12x112xf32>, vector<112x96xf32>, vector<12x96xf32> -> vector<12x96xf32>
    %106 = vector.broadcast %95 : vector<1x96xf32> to vector<12x96xf32>
    %107 = arith.addf %105, %106 : vector<12x96xf32>
    %c0_62 = arith.constant 0 : index
    %c0_63 = arith.constant 0 : index
    %108 = vector.load %arg19[%c0_62, %c0_63] : memref<1x16xf32, #tpu.memory_space<vmem>>, vector<1x16xf32>
    %c0_64 = arith.constant 0 : index
    %c0_65 = arith.constant 0 : index
    %109 = vector.load %arg20[%c0_64, %c0_65] : memref<1x16xf32, #tpu.memory_space<vmem>>, vector<1x16xf32>
    %c0_66 = arith.constant 0 : index
    %c0_67 = arith.constant 0 : index
    %110 = vector.load %arg21[%c0_66, %c0_67] : memref<96x16xf32, #tpu.memory_space<vmem>>, vector<96x16xf32>
    %c0_68 = arith.constant 0 : index
    %c0_69 = arith.constant 0 : index
    %111 = vector.load %arg22[%c0_68, %c0_69] : memref<16x96xf32, #tpu.memory_space<vmem>>, vector<16x96xf32>
    %cst_70 = arith.constant dense<0.000000e+00> : vector<96xf32>
    %112 = vector.multi_reduction <add>, %107, %cst_70 [0] : vector<12x96xf32> to vector<96xf32>
    %113 = vector.shape_cast %112 : vector<96xf32> to vector<1x96xf32>
    %cst_71 = arith.constant dense<0.000000e+00> : vector<1x16xf32>
    %114 = tpu.matmul %113, %110, %cst_71 {dimension_numbers = #tpu.dot_dimension_numbers<[1], [0], [0], [1], [0, 0, 1, 1], [], []>} : vector<1x96xf32>, vector<96x16xf32>, vector<1x16xf32> -> vector<1x16xf32>
    %cst_72 = arith.constant 0.013888889 : f32
    %115 = vector.broadcast %cst_72 : f32 to vector<1x16xf32>
    %116 = arith.mulf %114, %115 : vector<1x16xf32>
    %cst_73 = arith.constant dense<0.000000e+00> : vector<1x96xf32>
    %117 = tpu.matmul %116, %111, %cst_73 {dimension_numbers = #tpu.dot_dimension_numbers<[1], [0], [0], [1], [0, 0, 1, 1], [], []>} : vector<1x16xf32>, vector<16x96xf32>, vector<1x96xf32> -> vector<1x96xf32>
    %118 = vector.broadcast %117 : vector<1x96xf32> to vector<12x96xf32>
    %119 = arith.subf %107, %118 : vector<12x96xf32>
    %120 = arith.mulf %119, %119 : vector<12x96xf32>
    %cst_74 = arith.constant dense<0.000000e+00> : vector<96xf32>
    %121 = vector.multi_reduction <add>, %120, %cst_74 [0] : vector<12x96xf32> to vector<96xf32>
    %122 = vector.shape_cast %121 : vector<96xf32> to vector<1x96xf32>
    %cst_75 = arith.constant dense<0.000000e+00> : vector<1x16xf32>
    %123 = tpu.matmul %122, %110, %cst_75 {dimension_numbers = #tpu.dot_dimension_numbers<[1], [0], [0], [1], [0, 0, 1, 1], [], []>} : vector<1x96xf32>, vector<96x16xf32>, vector<1x16xf32> -> vector<1x16xf32>
    %cst_76 = arith.constant 0.013888889 : f32
    %124 = vector.broadcast %cst_76 : f32 to vector<1x16xf32>
    %125 = arith.mulf %123, %124 : vector<1x16xf32>
    %cst_77 = arith.constant 9.99999974E-6 : f32
    %126 = vector.broadcast %cst_77 : f32 to vector<1x16xf32>
    %127 = arith.addf %125, %126 : vector<1x16xf32>
    %128 = math.rsqrt %127 : vector<1x16xf32>
    %129 = arith.mulf %108, %128 : vector<1x16xf32>
    %130 = arith.mulf %116, %129 : vector<1x16xf32>
    %131 = arith.subf %109, %130 : vector<1x16xf32>
    %cst_78 = arith.constant dense<0.000000e+00> : vector<1x96xf32>
    %132 = tpu.matmul %129, %111, %cst_78 {dimension_numbers = #tpu.dot_dimension_numbers<[1], [0], [0], [1], [0, 0, 1, 1], [], []>} : vector<1x16xf32>, vector<16x96xf32>, vector<1x96xf32> -> vector<1x96xf32>
    %cst_79 = arith.constant dense<0.000000e+00> : vector<1x96xf32>
    %133 = tpu.matmul %131, %111, %cst_79 {dimension_numbers = #tpu.dot_dimension_numbers<[1], [0], [0], [1], [0, 0, 1, 1], [], []>} : vector<1x16xf32>, vector<16x96xf32>, vector<1x96xf32> -> vector<1x96xf32>
    %134 = vector.broadcast %132 : vector<1x96xf32> to vector<12x96xf32>
    %135 = arith.mulf %107, %134 : vector<12x96xf32>
    %136 = vector.broadcast %133 : vector<1x96xf32> to vector<12x96xf32>
    %137 = arith.addf %135, %136 : vector<12x96xf32>
    %cst_80 = arith.constant 0.000000e+00 : f32
    %138 = vector.broadcast %cst_80 : f32 to vector<12x96xf32>
    %139 = arith.maximumf %137, %138 : vector<12x96xf32>
    %c0_81 = arith.constant 0 : index
    %c0_82 = arith.constant 0 : index
    %140 = vector.load %arg23[%c0_81, %c0_82] : memref<342x12xf32, #tpu.memory_space<vmem>>, vector<342x12xf32>
    %c0_83 = arith.constant 0 : index
    %c0_84 = arith.constant 0 : index
    %141 = vector.load %arg24[%c0_83, %c0_84] : memref<864x152xf32, #tpu.memory_space<vmem>>, vector<864x152xf32>
    %c0_85 = arith.constant 0 : index
    %c0_86 = arith.constant 0 : index
    %142 = vector.load %arg25[%c0_85, %c0_86] : memref<1x152xf32, #tpu.memory_space<vmem>>, vector<1x152xf32>
    %cst_87 = arith.constant dense<0.000000e+00> : vector<342x96xf32>
    %143 = tpu.matmul %140, %139, %cst_87 {dimension_numbers = #tpu.dot_dimension_numbers<[1], [0], [0], [1], [0, 0, 1, 1], [], []>} : vector<342x12xf32>, vector<12x96xf32>, vector<342x96xf32> -> vector<342x96xf32>
    %144 = vector.extract_strided_slice %143 {offsets = [0, 0], sizes = [38, 96], strides = [1, 1]} : vector<342x96xf32> to vector<38x96xf32>
    %145 = vector.extract_strided_slice %143 {offsets = [38, 0], sizes = [38, 96], strides = [1, 1]} : vector<342x96xf32> to vector<38x96xf32>
    %146 = vector.extract_strided_slice %143 {offsets = [76, 0], sizes = [38, 96], strides = [1, 1]} : vector<342x96xf32> to vector<38x96xf32>
    %147 = vector.extract_strided_slice %143 {offsets = [114, 0], sizes = [38, 96], strides = [1, 1]} : vector<342x96xf32> to vector<38x96xf32>
    %148 = vector.extract_strided_slice %143 {offsets = [152, 0], sizes = [38, 96], strides = [1, 1]} : vector<342x96xf32> to vector<38x96xf32>
    %149 = vector.extract_strided_slice %143 {offsets = [190, 0], sizes = [38, 96], strides = [1, 1]} : vector<342x96xf32> to vector<38x96xf32>
    %150 = vector.extract_strided_slice %143 {offsets = [228, 0], sizes = [38, 96], strides = [1, 1]} : vector<342x96xf32> to vector<38x96xf32>
    %151 = vector.extract_strided_slice %143 {offsets = [266, 0], sizes = [38, 96], strides = [1, 1]} : vector<342x96xf32> to vector<38x96xf32>
    %152 = vector.extract_strided_slice %143 {offsets = [304, 0], sizes = [38, 96], strides = [1, 1]} : vector<342x96xf32> to vector<38x96xf32>
    %153 = tpu.concatenate %144, %145, %146, %147, %148, %149, %150, %151, %152 in 1 : vector<38x96xf32>, vector<38x96xf32>, vector<38x96xf32>, vector<38x96xf32>, vector<38x96xf32>, vector<38x96xf32>, vector<38x96xf32>, vector<38x96xf32>, vector<38x96xf32> -> vector<38x864xf32>
    %cst_88 = arith.constant dense<0.000000e+00> : vector<38x152xf32>
    %154 = tpu.matmul %153, %141, %cst_88 {dimension_numbers = #tpu.dot_dimension_numbers<[1], [0], [0], [1], [0, 0, 1, 1], [], []>} : vector<38x864xf32>, vector<864x152xf32>, vector<38x152xf32> -> vector<38x152xf32>
    %155 = vector.broadcast %142 : vector<1x152xf32> to vector<38x152xf32>
    %156 = arith.addf %154, %155 : vector<38x152xf32>
    %c0_89 = arith.constant 0 : index
    %c0_90 = arith.constant 0 : index
    %157 = vector.load %arg26[%c0_89, %c0_90] : memref<1x8xf32, #tpu.memory_space<vmem>>, vector<1x8xf32>
    %c0_91 = arith.constant 0 : index
    %c0_92 = arith.constant 0 : index
    %158 = vector.load %arg27[%c0_91, %c0_92] : memref<1x8xf32, #tpu.memory_space<vmem>>, vector<1x8xf32>
    %c0_93 = arith.constant 0 : index
    %c0_94 = arith.constant 0 : index
    %159 = vector.load %arg28[%c0_93, %c0_94] : memref<152x8xf32, #tpu.memory_space<vmem>>, vector<152x8xf32>
    %c0_95 = arith.constant 0 : index
    %c0_96 = arith.constant 0 : index
    %160 = vector.load %arg29[%c0_95, %c0_96] : memref<8x152xf32, #tpu.memory_space<vmem>>, vector<8x152xf32>
    %cst_97 = arith.constant dense<0.000000e+00> : vector<152xf32>
    %161 = vector.multi_reduction <add>, %156, %cst_97 [0] : vector<38x152xf32> to vector<152xf32>
    %162 = vector.shape_cast %161 : vector<152xf32> to vector<1x152xf32>
    %cst_98 = arith.constant dense<0.000000e+00> : vector<1x8xf32>
    %163 = tpu.matmul %162, %159, %cst_98 {dimension_numbers = #tpu.dot_dimension_numbers<[1], [0], [0], [1], [0, 0, 1, 1], [], []>} : vector<1x152xf32>, vector<152x8xf32>, vector<1x8xf32> -> vector<1x8xf32>
    %cst_99 = arith.constant 0.00138504151 : f32
    %164 = vector.broadcast %cst_99 : f32 to vector<1x8xf32>
    %165 = arith.mulf %163, %164 : vector<1x8xf32>
    %cst_100 = arith.constant dense<0.000000e+00> : vector<1x152xf32>
    %166 = tpu.matmul %165, %160, %cst_100 {dimension_numbers = #tpu.dot_dimension_numbers<[1], [0], [0], [1], [0, 0, 1, 1], [], []>} : vector<1x8xf32>, vector<8x152xf32>, vector<1x152xf32> -> vector<1x152xf32>
    %167 = vector.broadcast %166 : vector<1x152xf32> to vector<38x152xf32>
    %168 = arith.subf %156, %167 : vector<38x152xf32>
    %169 = arith.mulf %168, %168 : vector<38x152xf32>
    %cst_101 = arith.constant dense<0.000000e+00> : vector<152xf32>
    %170 = vector.multi_reduction <add>, %169, %cst_101 [0] : vector<38x152xf32> to vector<152xf32>
    %171 = vector.shape_cast %170 : vector<152xf32> to vector<1x152xf32>
    %cst_102 = arith.constant dense<0.000000e+00> : vector<1x8xf32>
    %172 = tpu.matmul %171, %159, %cst_102 {dimension_numbers = #tpu.dot_dimension_numbers<[1], [0], [0], [1], [0, 0, 1, 1], [], []>} : vector<1x152xf32>, vector<152x8xf32>, vector<1x8xf32> -> vector<1x8xf32>
    %cst_103 = arith.constant 0.00138504151 : f32
    %173 = vector.broadcast %cst_103 : f32 to vector<1x8xf32>
    %174 = arith.mulf %172, %173 : vector<1x8xf32>
    %cst_104 = arith.constant 9.99999974E-6 : f32
    %175 = vector.broadcast %cst_104 : f32 to vector<1x8xf32>
    %176 = arith.addf %174, %175 : vector<1x8xf32>
    %177 = math.rsqrt %176 : vector<1x8xf32>
    %178 = arith.mulf %157, %177 : vector<1x8xf32>
    %179 = arith.mulf %165, %178 : vector<1x8xf32>
    %180 = arith.subf %158, %179 : vector<1x8xf32>
    %cst_105 = arith.constant dense<0.000000e+00> : vector<1x152xf32>
    %181 = tpu.matmul %178, %160, %cst_105 {dimension_numbers = #tpu.dot_dimension_numbers<[1], [0], [0], [1], [0, 0, 1, 1], [], []>} : vector<1x8xf32>, vector<8x152xf32>, vector<1x152xf32> -> vector<1x152xf32>
    %cst_106 = arith.constant dense<0.000000e+00> : vector<1x152xf32>
    %182 = tpu.matmul %180, %160, %cst_106 {dimension_numbers = #tpu.dot_dimension_numbers<[1], [0], [0], [1], [0, 0, 1, 1], [], []>} : vector<1x8xf32>, vector<8x152xf32>, vector<1x152xf32> -> vector<1x152xf32>
    %183 = vector.broadcast %181 : vector<1x152xf32> to vector<38x152xf32>
    %184 = arith.mulf %156, %183 : vector<38x152xf32>
    %185 = vector.broadcast %182 : vector<1x152xf32> to vector<38x152xf32>
    %186 = arith.addf %184, %185 : vector<38x152xf32>
    %cst_107 = arith.constant 0.000000e+00 : f32
    %187 = vector.broadcast %cst_107 : f32 to vector<38x152xf32>
    %188 = arith.maximumf %186, %187 : vector<38x152xf32>
    %c0_108 = arith.constant 0 : index
    %c0_109 = arith.constant 0 : index
    %189 = vector.load %arg30[%c0_108, %c0_109] : memref<288x38xf32, #tpu.memory_space<vmem>>, vector<288x38xf32>
    %c0_110 = arith.constant 0 : index
    %c0_111 = arith.constant 0 : index
    %190 = vector.load %arg31[%c0_110, %c0_111] : memref<912x96xf32, #tpu.memory_space<vmem>>, vector<912x96xf32>
    %c0_112 = arith.constant 0 : index
    %c0_113 = arith.constant 0 : index
    %191 = vector.load %arg32[%c0_112, %c0_113] : memref<1x96xf32, #tpu.memory_space<vmem>>, vector<1x96xf32>
    %cst_114 = arith.constant dense<0.000000e+00> : vector<288x152xf32>
    %192 = tpu.matmul %189, %188, %cst_114 {dimension_numbers = #tpu.dot_dimension_numbers<[1], [0], [0], [1], [0, 0, 1, 1], [], []>} : vector<288x38xf32>, vector<38x152xf32>, vector<288x152xf32> -> vector<288x152xf32>
    %193 = vector.extract_strided_slice %192 {offsets = [0, 0], sizes = [48, 152], strides = [1, 1]} : vector<288x152xf32> to vector<48x152xf32>
    %194 = vector.extract_strided_slice %192 {offsets = [48, 0], sizes = [48, 152], strides = [1, 1]} : vector<288x152xf32> to vector<48x152xf32>
    %195 = vector.extract_strided_slice %192 {offsets = [96, 0], sizes = [48, 152], strides = [1, 1]} : vector<288x152xf32> to vector<48x152xf32>
    %196 = vector.extract_strided_slice %192 {offsets = [144, 0], sizes = [48, 152], strides = [1, 1]} : vector<288x152xf32> to vector<48x152xf32>
    %197 = vector.extract_strided_slice %192 {offsets = [192, 0], sizes = [48, 152], strides = [1, 1]} : vector<288x152xf32> to vector<48x152xf32>
    %198 = vector.extract_strided_slice %192 {offsets = [240, 0], sizes = [48, 152], strides = [1, 1]} : vector<288x152xf32> to vector<48x152xf32>
    %199 = tpu.concatenate %193, %194, %195, %196, %197, %198 in 1 : vector<48x152xf32>, vector<48x152xf32>, vector<48x152xf32>, vector<48x152xf32>, vector<48x152xf32>, vector<48x152xf32> -> vector<48x912xf32>
    %cst_115 = arith.constant dense<0.000000e+00> : vector<48x96xf32>
    %200 = tpu.matmul %199, %190, %cst_115 {dimension_numbers = #tpu.dot_dimension_numbers<[1], [0], [0], [1], [0, 0, 1, 1], [], []>} : vector<48x912xf32>, vector<912x96xf32>, vector<48x96xf32> -> vector<48x96xf32>
    %201 = vector.broadcast %191 : vector<1x96xf32> to vector<48x96xf32>
    %202 = arith.addf %200, %201 : vector<48x96xf32>
    %c0_116 = arith.constant 0 : index
    %c0_117 = arith.constant 0 : index
    %203 = vector.load %arg33[%c0_116, %c0_117] : memref<1x4xf32, #tpu.memory_space<vmem>>, vector<1x4xf32>
    %c0_118 = arith.constant 0 : index
    %c0_119 = arith.constant 0 : index
    %204 = vector.load %arg34[%c0_118, %c0_119] : memref<1x4xf32, #tpu.memory_space<vmem>>, vector<1x4xf32>
    %c0_120 = arith.constant 0 : index
    %c0_121 = arith.constant 0 : index
    %205 = vector.load %arg35[%c0_120, %c0_121] : memref<96x4xf32, #tpu.memory_space<vmem>>, vector<96x4xf32>
    %c0_122 = arith.constant 0 : index
    %c0_123 = arith.constant 0 : index
    %206 = vector.load %arg36[%c0_122, %c0_123] : memref<4x96xf32, #tpu.memory_space<vmem>>, vector<4x96xf32>
    %cst_124 = arith.constant dense<0.000000e+00> : vector<96xf32>
    %207 = vector.multi_reduction <add>, %202, %cst_124 [0] : vector<48x96xf32> to vector<96xf32>
    %208 = vector.shape_cast %207 : vector<96xf32> to vector<1x96xf32>
    %cst_125 = arith.constant dense<0.000000e+00> : vector<1x4xf32>
    %209 = tpu.matmul %208, %205, %cst_125 {dimension_numbers = #tpu.dot_dimension_numbers<[1], [0], [0], [1], [0, 0, 1, 1], [], []>} : vector<1x96xf32>, vector<96x4xf32>, vector<1x4xf32> -> vector<1x4xf32>
    %cst_126 = arith.constant 8.68055562E-4 : f32
    %210 = vector.broadcast %cst_126 : f32 to vector<1x4xf32>
    %211 = arith.mulf %209, %210 : vector<1x4xf32>
    %cst_127 = arith.constant dense<0.000000e+00> : vector<1x96xf32>
    %212 = tpu.matmul %211, %206, %cst_127 {dimension_numbers = #tpu.dot_dimension_numbers<[1], [0], [0], [1], [0, 0, 1, 1], [], []>} : vector<1x4xf32>, vector<4x96xf32>, vector<1x96xf32> -> vector<1x96xf32>
    %213 = vector.broadcast %212 : vector<1x96xf32> to vector<48x96xf32>
    %214 = arith.subf %202, %213 : vector<48x96xf32>
    %215 = arith.mulf %214, %214 : vector<48x96xf32>
    %cst_128 = arith.constant dense<0.000000e+00> : vector<96xf32>
    %216 = vector.multi_reduction <add>, %215, %cst_128 [0] : vector<48x96xf32> to vector<96xf32>
    %217 = vector.shape_cast %216 : vector<96xf32> to vector<1x96xf32>
    %cst_129 = arith.constant dense<0.000000e+00> : vector<1x4xf32>
    %218 = tpu.matmul %217, %205, %cst_129 {dimension_numbers = #tpu.dot_dimension_numbers<[1], [0], [0], [1], [0, 0, 1, 1], [], []>} : vector<1x96xf32>, vector<96x4xf32>, vector<1x4xf32> -> vector<1x4xf32>
    %cst_130 = arith.constant 8.68055562E-4 : f32
    %219 = vector.broadcast %cst_130 : f32 to vector<1x4xf32>
    %220 = arith.mulf %218, %219 : vector<1x4xf32>
    %cst_131 = arith.constant 9.99999974E-6 : f32
    %221 = vector.broadcast %cst_131 : f32 to vector<1x4xf32>
    %222 = arith.addf %220, %221 : vector<1x4xf32>
    %223 = math.rsqrt %222 : vector<1x4xf32>
    %224 = arith.mulf %203, %223 : vector<1x4xf32>
    %225 = arith.mulf %211, %224 : vector<1x4xf32>
    %226 = arith.subf %204, %225 : vector<1x4xf32>
    %cst_132 = arith.constant dense<0.000000e+00> : vector<1x96xf32>
    %227 = tpu.matmul %224, %206, %cst_132 {dimension_numbers = #tpu.dot_dimension_numbers<[1], [0], [0], [1], [0, 0, 1, 1], [], []>} : vector<1x4xf32>, vector<4x96xf32>, vector<1x96xf32> -> vector<1x96xf32>
    %cst_133 = arith.constant dense<0.000000e+00> : vector<1x96xf32>
    %228 = tpu.matmul %226, %206, %cst_133 {dimension_numbers = #tpu.dot_dimension_numbers<[1], [0], [0], [1], [0, 0, 1, 1], [], []>} : vector<1x4xf32>, vector<4x96xf32>, vector<1x96xf32> -> vector<1x96xf32>
    %229 = vector.broadcast %227 : vector<1x96xf32> to vector<48x96xf32>
    %230 = arith.mulf %202, %229 : vector<48x96xf32>
    %231 = vector.broadcast %228 : vector<1x96xf32> to vector<48x96xf32>
    %232 = arith.addf %230, %231 : vector<48x96xf32>
    %cst_134 = arith.constant 0.000000e+00 : f32
    %233 = vector.broadcast %cst_134 : f32 to vector<48x96xf32>
    %234 = arith.maximumf %232, %233 : vector<48x96xf32>
    %c0_135 = arith.constant 0 : index
    %c0_136 = arith.constant 0 : index
    %235 = vector.load %arg37[%c0_135, %c0_136] : memref<748x48xf32, #tpu.memory_space<vmem>>, vector<748x48xf32>
    %c0_137 = arith.constant 0 : index
    %c0_138 = arith.constant 0 : index
    %236 = vector.load %arg38[%c0_137, %c0_138] : memref<1056x128xf32, #tpu.memory_space<vmem>>, vector<1056x128xf32>
    %c0_139 = arith.constant 0 : index
    %c0_140 = arith.constant 0 : index
    %237 = vector.load %arg39[%c0_139, %c0_140] : memref<1x128xf32, #tpu.memory_space<vmem>>, vector<1x128xf32>
    %cst_141 = arith.constant dense<0.000000e+00> : vector<748x96xf32>
    %238 = tpu.matmul %235, %234, %cst_141 {dimension_numbers = #tpu.dot_dimension_numbers<[1], [0], [0], [1], [0, 0, 1, 1], [], []>} : vector<748x48xf32>, vector<48x96xf32>, vector<748x96xf32> -> vector<748x96xf32>
    %239 = vector.extract_strided_slice %238 {offsets = [0, 0], sizes = [68, 96], strides = [1, 1]} : vector<748x96xf32> to vector<68x96xf32>
    %240 = vector.extract_strided_slice %238 {offsets = [68, 0], sizes = [68, 96], strides = [1, 1]} : vector<748x96xf32> to vector<68x96xf32>
    %241 = vector.extract_strided_slice %238 {offsets = [136, 0], sizes = [68, 96], strides = [1, 1]} : vector<748x96xf32> to vector<68x96xf32>
    %242 = vector.extract_strided_slice %238 {offsets = [204, 0], sizes = [68, 96], strides = [1, 1]} : vector<748x96xf32> to vector<68x96xf32>
    %243 = vector.extract_strided_slice %238 {offsets = [272, 0], sizes = [68, 96], strides = [1, 1]} : vector<748x96xf32> to vector<68x96xf32>
    %244 = vector.extract_strided_slice %238 {offsets = [340, 0], sizes = [68, 96], strides = [1, 1]} : vector<748x96xf32> to vector<68x96xf32>
    %245 = vector.extract_strided_slice %238 {offsets = [408, 0], sizes = [68, 96], strides = [1, 1]} : vector<748x96xf32> to vector<68x96xf32>
    %246 = vector.extract_strided_slice %238 {offsets = [476, 0], sizes = [68, 96], strides = [1, 1]} : vector<748x96xf32> to vector<68x96xf32>
    %247 = vector.extract_strided_slice %238 {offsets = [544, 0], sizes = [68, 96], strides = [1, 1]} : vector<748x96xf32> to vector<68x96xf32>
    %248 = vector.extract_strided_slice %238 {offsets = [612, 0], sizes = [68, 96], strides = [1, 1]} : vector<748x96xf32> to vector<68x96xf32>
    %249 = vector.extract_strided_slice %238 {offsets = [680, 0], sizes = [68, 96], strides = [1, 1]} : vector<748x96xf32> to vector<68x96xf32>
    %250 = tpu.concatenate %239, %240, %241, %242, %243, %244, %245, %246, %247, %248, %249 in 1 : vector<68x96xf32>, vector<68x96xf32>, vector<68x96xf32>, vector<68x96xf32>, vector<68x96xf32>, vector<68x96xf32>, vector<68x96xf32>, vector<68x96xf32>, vector<68x96xf32>, vector<68x96xf32>, vector<68x96xf32> -> vector<68x1056xf32>
    %cst_142 = arith.constant dense<0.000000e+00> : vector<68x128xf32>
    %251 = tpu.matmul %250, %236, %cst_142 {dimension_numbers = #tpu.dot_dimension_numbers<[1], [0], [0], [1], [0, 0, 1, 1], [], []>} : vector<68x1056xf32>, vector<1056x128xf32>, vector<68x128xf32> -> vector<68x128xf32>
    %252 = vector.broadcast %237 : vector<1x128xf32> to vector<68x128xf32>
    %253 = arith.addf %251, %252 : vector<68x128xf32>
    %254 = math.tanh %253 : vector<68x128xf32>
    %c0_143 = arith.constant 0 : index
    %c0_144 = arith.constant 0 : index
    %255 = vector.load %arg40[%c0_143, %c0_144] : memref<68x128xf32, #tpu.memory_space<vmem>>, vector<68x128xf32>
    tpu.vector_store %arg40[%c0_143, %c0_144], %254 {strides = array<i32>} : memref<68x128xf32, #tpu.memory_space<vmem>>, vector<68x128xf32>,
    return
  }
  func.func @transform_0(%arg0: i32) -> (i32, i32) {
    %c0_i32 = arith.constant 0 : i32
    %c0_i32_0 = arith.constant 0 : i32
    %c0_i32_1 = arith.constant 0 : i32
    return %c0_i32, %c0_i32_0 : i32, i32
  }
  func.func @transform_1(%arg0: i32) -> (i32, i32) {
    %c0_i32 = arith.constant 0 : i32
    %c0_i32_0 = arith.constant 0 : i32
    %c0_i32_1 = arith.constant 0 : i32
    return %c0_i32, %c0_i32_0 : i32, i32
  }
  func.func @transform_2(%arg0: i32) -> (i32, i32) {
    %c0_i32 = arith.constant 0 : i32
    %c0_i32_0 = arith.constant 0 : i32
    %c0_i32_1 = arith.constant 0 : i32
    return %c0_i32, %c0_i32_0 : i32, i32
  }
  func.func @transform_3(%arg0: i32) -> (i32, i32) {
    %c0_i32 = arith.constant 0 : i32
    %c0_i32_0 = arith.constant 0 : i32
    %c0_i32_1 = arith.constant 0 : i32
    return %c0_i32, %c0_i32_0 : i32, i32
  }
  func.func @transform_4(%arg0: i32) -> (i32, i32) {
    %c0_i32 = arith.constant 0 : i32
    %c0_i32_0 = arith.constant 0 : i32
    %c0_i32_1 = arith.constant 0 : i32
    return %c0_i32, %c0_i32_0 : i32, i32
  }
  func.func @transform_5(%arg0: i32) -> (i32, i32) {
    %c0_i32 = arith.constant 0 : i32
    %c0_i32_0 = arith.constant 0 : i32
    %c0_i32_1 = arith.constant 0 : i32
    return %c0_i32, %c0_i32_0 : i32, i32
  }
  func.func @transform_6(%arg0: i32) -> (i32, i32) {
    %c0_i32 = arith.constant 0 : i32
    %c0_i32_0 = arith.constant 0 : i32
    %c0_i32_1 = arith.constant 0 : i32
    return %c0_i32, %c0_i32_0 : i32, i32
  }
  func.func @transform_7(%arg0: i32) -> (i32, i32) {
    %c0_i32 = arith.constant 0 : i32
    %c0_i32_0 = arith.constant 0 : i32
    %c0_i32_1 = arith.constant 0 : i32
    return %c0_i32, %c0_i32_0 : i32, i32
  }
  func.func @transform_8(%arg0: i32) -> (i32, i32) {
    %c0_i32 = arith.constant 0 : i32
    %c0_i32_0 = arith.constant 0 : i32
    %c0_i32_1 = arith.constant 0 : i32
    return %c0_i32, %c0_i32_0 : i32, i32
  }
  func.func @transform_9(%arg0: i32) -> (i32, i32) {
    %c0_i32 = arith.constant 0 : i32
    %c0_i32_0 = arith.constant 0 : i32
    %c0_i32_1 = arith.constant 0 : i32
    return %c0_i32, %c0_i32_0 : i32, i32
  }
  func.func @transform_10(%arg0: i32) -> (i32, i32) {
    %c0_i32 = arith.constant 0 : i32
    %c0_i32_0 = arith.constant 0 : i32
    %c0_i32_1 = arith.constant 0 : i32
    return %c0_i32, %c0_i32_0 : i32, i32
  }
  func.func @transform_11(%arg0: i32) -> (i32, i32) {
    %c0_i32 = arith.constant 0 : i32
    %c0_i32_0 = arith.constant 0 : i32
    %c0_i32_1 = arith.constant 0 : i32
    return %c0_i32, %c0_i32_0 : i32, i32
  }
  func.func @transform_12(%arg0: i32) -> (i32, i32) {
    %c0_i32 = arith.constant 0 : i32
    %c0_i32_0 = arith.constant 0 : i32
    %c0_i32_1 = arith.constant 0 : i32
    return %c0_i32, %c0_i32_0 : i32, i32
  }
  func.func @transform_13(%arg0: i32) -> (i32, i32) {
    %c0_i32 = arith.constant 0 : i32
    %c0_i32_0 = arith.constant 0 : i32
    %c0_i32_1 = arith.constant 0 : i32
    return %c0_i32, %c0_i32_0 : i32, i32
  }
  func.func @transform_14(%arg0: i32) -> (i32, i32) {
    %c0_i32 = arith.constant 0 : i32
    %c0_i32_0 = arith.constant 0 : i32
    %c0_i32_1 = arith.constant 0 : i32
    return %c0_i32, %c0_i32_0 : i32, i32
  }
  func.func @transform_15(%arg0: i32) -> (i32, i32) {
    %c0_i32 = arith.constant 0 : i32
    %c0_i32_0 = arith.constant 0 : i32
    %c0_i32_1 = arith.constant 0 : i32
    return %c0_i32, %c0_i32_0 : i32, i32
  }
  func.func @transform_16(%arg0: i32) -> (i32, i32) {
    %c0_i32 = arith.constant 0 : i32
    %c0_i32_0 = arith.constant 0 : i32
    %c0_i32_1 = arith.constant 0 : i32
    return %c0_i32, %c0_i32_0 : i32, i32
  }
  func.func @transform_17(%arg0: i32) -> (i32, i32) {
    %c0_i32 = arith.constant 0 : i32
    %c0_i32_0 = arith.constant 0 : i32
    %c0_i32_1 = arith.constant 0 : i32
    return %c0_i32, %c0_i32_0 : i32, i32
  }
  func.func @transform_18(%arg0: i32) -> (i32, i32) {
    %c0_i32 = arith.constant 0 : i32
    %c0_i32_0 = arith.constant 0 : i32
    %c0_i32_1 = arith.constant 0 : i32
    return %c0_i32, %c0_i32_0 : i32, i32
  }
  func.func @transform_19(%arg0: i32) -> (i32, i32) {
    %c0_i32 = arith.constant 0 : i32
    %c0_i32_0 = arith.constant 0 : i32
    %c0_i32_1 = arith.constant 0 : i32
    return %c0_i32, %c0_i32_0 : i32, i32
  }
  func.func @transform_20(%arg0: i32) -> (i32, i32) {
    %c0_i32 = arith.constant 0 : i32
    %c0_i32_0 = arith.constant 0 : i32
    %c0_i32_1 = arith.constant 0 : i32
    return %c0_i32, %c0_i32_0 : i32, i32
  }
  func.func @transform_21(%arg0: i32) -> (i32, i32) {
    %c0_i32 = arith.constant 0 : i32
    %c0_i32_0 = arith.constant 0 : i32
    %c0_i32_1 = arith.constant 0 : i32
    return %c0_i32, %c0_i32_0 : i32, i32
  }
  func.func @transform_22(%arg0: i32) -> (i32, i32) {
    %c0_i32 = arith.constant 0 : i32
    %c0_i32_0 = arith.constant 0 : i32
    %c0_i32_1 = arith.constant 0 : i32
    return %c0_i32, %c0_i32_0 : i32, i32
  }
  func.func @transform_23(%arg0: i32) -> (i32, i32) {
    %c0_i32 = arith.constant 0 : i32
    %c0_i32_0 = arith.constant 0 : i32
    %c0_i32_1 = arith.constant 0 : i32
    return %c0_i32, %c0_i32_0 : i32, i32
  }
  func.func @transform_24(%arg0: i32) -> (i32, i32) {
    %c0_i32 = arith.constant 0 : i32
    %c0_i32_0 = arith.constant 0 : i32
    %c0_i32_1 = arith.constant 0 : i32
    return %c0_i32, %c0_i32_0 : i32, i32
  }
  func.func @transform_25(%arg0: i32) -> (i32, i32) {
    %c0_i32 = arith.constant 0 : i32
    %c0_i32_0 = arith.constant 0 : i32
    %c0_i32_1 = arith.constant 0 : i32
    return %c0_i32, %c0_i32_0 : i32, i32
  }
  func.func @transform_26(%arg0: i32) -> (i32, i32) {
    %c0_i32 = arith.constant 0 : i32
    %c0_i32_0 = arith.constant 0 : i32
    %c0_i32_1 = arith.constant 0 : i32
    return %c0_i32, %c0_i32_0 : i32, i32
  }
  func.func @transform_27(%arg0: i32) -> (i32, i32) {
    %c0_i32 = arith.constant 0 : i32
    %c0_i32_0 = arith.constant 0 : i32
    %c0_i32_1 = arith.constant 0 : i32
    return %c0_i32, %c0_i32_0 : i32, i32
  }
  func.func @transform_28(%arg0: i32) -> (i32, i32) {
    %c0_i32 = arith.constant 0 : i32
    %c0_i32_0 = arith.constant 0 : i32
    %c0_i32_1 = arith.constant 0 : i32
    return %c0_i32, %c0_i32_0 : i32, i32
  }
  func.func @transform_29(%arg0: i32) -> (i32, i32) {
    %c0_i32 = arith.constant 0 : i32
    %c0_i32_0 = arith.constant 0 : i32
    %c0_i32_1 = arith.constant 0 : i32
    return %c0_i32, %c0_i32_0 : i32, i32
  }
  func.func @transform_30(%arg0: i32) -> (i32, i32) {
    %c0_i32 = arith.constant 0 : i32
    %c0_i32_0 = arith.constant 0 : i32
    %c0_i32_1 = arith.constant 0 : i32
    return %c0_i32, %c0_i32_0 : i32, i32
  }
  func.func @transform_31(%arg0: i32) -> (i32, i32) {
    %c0_i32 = arith.constant 0 : i32
    %c0_i32_0 = arith.constant 0 : i32
    %c0_i32_1 = arith.constant 0 : i32
    return %c0_i32, %c0_i32_0 : i32, i32
  }
  func.func @transform_32(%arg0: i32) -> (i32, i32) {
    %c0_i32 = arith.constant 0 : i32
    %c0_i32_0 = arith.constant 0 : i32
    %c0_i32_1 = arith.constant 0 : i32
    return %c0_i32, %c0_i32_0 : i32, i32
  }
  func.func @transform_33(%arg0: i32) -> (i32, i32) {
    %c0_i32 = arith.constant 0 : i32
    %c0_i32_0 = arith.constant 0 : i32
    %c0_i32_1 = arith.constant 0 : i32
    return %c0_i32, %c0_i32_0 : i32, i32
  }
  func.func @transform_34(%arg0: i32) -> (i32, i32) {
    %c0_i32 = arith.constant 0 : i32
    %c0_i32_0 = arith.constant 0 : i32
    %c0_i32_1 = arith.constant 0 : i32
    return %c0_i32, %c0_i32_0 : i32, i32
  }
  func.func @transform_35(%arg0: i32) -> (i32, i32) {
    %c0_i32 = arith.constant 0 : i32
    %c0_i32_0 = arith.constant 0 : i32
    %c0_i32_1 = arith.constant 0 : i32
    return %c0_i32, %c0_i32_0 : i32, i32
  }
  func.func @transform_36(%arg0: i32) -> (i32, i32) {
    %c0_i32 = arith.constant 0 : i32
    %c0_i32_0 = arith.constant 0 : i32
    %c0_i32_1 = arith.constant 0 : i32
    return %c0_i32, %c0_i32_0 : i32, i32
  }
  func.func @transform_37(%arg0: i32) -> (i32, i32) {
    %c0_i32 = arith.constant 0 : i32
    %c0_i32_0 = arith.constant 0 : i32
    %c0_i32_1 = arith.constant 0 : i32
    return %c0_i32, %c0_i32_0 : i32, i32
  }
  func.func @transform_38(%arg0: i32) -> (i32, i32) {
    %c0_i32 = arith.constant 0 : i32
    %c0_i32_0 = arith.constant 0 : i32
    %c0_i32_1 = arith.constant 0 : i32
    return %c0_i32, %c0_i32_0 : i32, i32
  }
  func.func @transform_39(%arg0: i32) -> (i32, i32) {
    %c0_i32 = arith.constant 0 : i32
    %c0_i32_0 = arith.constant 0 : i32
    %c0_i32_1 = arith.constant 0 : i32
    return %c0_i32, %c0_i32_0 : i32, i32
  }
}

</mosaic_0001>

<llo_original>
// kernel: forward.1
$region0: #{forward.1}
  #allocation0 [shape = 'u32[]', space=smem, size = 0x4, offset = 0x4, fixed_abs, tag = 'smem constant byte address 0x4 - core index']
  #allocation1 [shape = 'u32[144,128]{1,0:T(1,128)}', space=vmem, size = 0x12000, scoped, tag = 'internal scratch']
  %s0 = inlined_call_operand.smem [shape: u32[40], index: -1, kind: input, shape index: {}]
  %s1 = sld [smem:[%s0]]
  %s2 = scalar_lea.smem %s0, 1
  %s3 = sld [smem:[%s2]]
  %s4 = scalar_lea.smem %s0, 2
  %s5 = sld [smem:[%s4]]
  %s6 = scalar_lea.smem %s0, 3
  %s7 = sld [smem:[%s6]]
  %s8 = scalar_lea.smem %s0, 4
  %s9 = sld [smem:[%s8]]
  %s10 = scalar_lea.smem %s0, 5
  %s11 = sld [smem:[%s10]]
  %s12 = scalar_lea.smem %s0, 6
  %s13 = sld [smem:[%s12]]
  %s14 = scalar_lea.smem %s0, 7
  %s15 = sld [smem:[%s14]]
  %s16 = scalar_lea.smem %s0, 8
  %s17 = sld [smem:[%s16]]
  %s18 = scalar_lea.smem %s0, 9
  %s19 = sld [smem:[%s18]]
  %s20 = scalar_lea.smem %s0, 10
  %s21 = sld [smem:[%s20]]
  %s22 = scalar_lea.smem %s0, 11
  %s23 = sld [smem:[%s22]]
  %s24 = scalar_lea.smem %s0, 12
  %s25 = sld [smem:[%s24]]
  %s26 = scalar_lea.smem %s0, 13
  %s27 = sld [smem:[%s26]]
  %s28 = scalar_lea.smem %s0, 14
  %s29 = sld [smem:[%s28]]
  %s30 = scalar_lea.smem %s0, 15
  %s31 = sld [smem:[%s30]]
  %s32 = scalar_lea.smem %s0, 16
  %s33 = sld [smem:[%s32]]
  %s34 = scalar_lea.smem %s0, 17
  %s35 = sld [smem:[%s34]]
  %s36 = scalar_lea.smem %s0, 18
  %s37 = sld [smem:[%s36]]
  %s38 = scalar_lea.smem %s0, 19
  %s39 = sld [smem:[%s38]]
  %s40 = scalar_lea.smem %s0, 20
  %s41 = sld [smem:[%s40]]
  %s42 = scalar_lea.smem %s0, 21
  %s43 = sld [smem:[%s42]]
  %s44 = scalar_lea.smem %s0, 22
  %s45 = sld [smem:[%s44]]
  %s46 = scalar_lea.smem %s0, 23
  %s47 = sld [smem:[%s46]]
  %s48 = scalar_lea.smem %s0, 24
  %s49 = sld [smem:[%s48]]
  %s50 = scalar_lea.smem %s0, 25
  %s51 = sld [smem:[%s50]]
  %s52 = scalar_lea.smem %s0, 26
  %s53 = sld [smem:[%s52]]
  %s54 = scalar_lea.smem %s0, 27
  %s55 = sld [smem:[%s54]]
  %s56 = scalar_lea.smem %s0, 28
  %s57 = sld [smem:[%s56]]
  %s58 = scalar_lea.smem %s0, 29
  %s59 = sld [smem:[%s58]]
  %s60 = scalar_lea.smem %s0, 30
  %s61 = sld [smem:[%s60]]
  %s62 = scalar_lea.smem %s0, 31
  %s63 = sld [smem:[%s62]]
  %s64 = scalar_lea.smem %s0, 32
  %s65 = sld [smem:[%s64]]
  %s66 = scalar_lea.smem %s0, 33
  %s67 = sld [smem:[%s66]]
  %s68 = scalar_lea.smem %s0, 34
  %s69 = sld [smem:[%s68]]
  %s70 = scalar_lea.smem %s0, 35
  %s71 = sld [smem:[%s70]]
  %s72 = scalar_lea.smem %s0, 36
  %s73 = sld [smem:[%s72]]
  %s74 = scalar_lea.smem %s0, 37
  %s75 = sld [smem:[%s74]]
  %s76 = scalar_lea.smem %s0, 38
  %s77 = sld [smem:[%s76]]
  %s78 = scalar_lea.smem %s0, 39
  %s79 = sld [smem:[%s78]]
  %s80 = sld [smem:[#allocation0]]
  $region166: #{forward.1} parent=0
    _
  %s82 = ssub.s32 1, %s80
  %s83 = scalar_select 0, %s82, %s80
  // Predicated region
  $region2: #{forward.1} parent=0 // pred_check
    _
  $region3: #{forward.1} parent=0 // pred_check_branch
    %85 = sbr.rel (0) target = $region5
  $region4: #{forward.1} parent=0 // pred_region
    _
  $region5: #{forward.1} parent=0 // pred_fallthru
    _
  // Predicated region
  $region6: #{forward.1} parent=0 // pred_check
    _
  $region7: #{forward.1} parent=0 // pred_check_branch
    %87 = sbr.rel (0) target = $region9
  $region8: #{forward.1} parent=0 // pred_region
    _
  $region9: #{forward.1} parent=0 // pred_fallthru
    _
  // Predicated region
  $region10: #{forward.1} parent=0 // pred_check
    _
  $region11: #{forward.1} parent=0 // pred_check_branch
    %89 = sbr.rel (0) target = $region13
  $region12: #{forward.1} parent=0 // pred_region
    _
  $region13: #{forward.1} parent=0 // pred_fallthru
    _
  // Predicated region
  $region14: #{forward.1} parent=0 // pred_check
    _
  $region15: #{forward.1} parent=0 // pred_check_branch
    %91 = sbr.rel (0) target = $region17
  $region16: #{forward.1} parent=0 // pred_region
    _
  $region17: #{forward.1} parent=0 // pred_fallthru
    _
  // Predicated region
  $region18: #{forward.1} parent=0 // pred_check
    _
  $region19: #{forward.1} parent=0 // pred_check_branch
    %93 = sbr.rel (0) target = $region21
  $region20: #{forward.1} parent=0 // pred_region
    _
  $region21: #{forward.1} parent=0 // pred_fallthru
    _
  // Predicated region
  $region22: #{forward.1} parent=0 // pred_check
    _
  $region23: #{forward.1} parent=0 // pred_check_branch
    %95 = sbr.rel (0) target = $region25
  $region24: #{forward.1} parent=0 // pred_region
    _
  $region25: #{forward.1} parent=0 // pred_fallthru
    _
  // Predicated region
  $region26: #{forward.1} parent=0 // pred_check
    _
  $region27: #{forward.1} parent=0 // pred_check_branch
    %97 = sbr.rel (0) target = $region29
  $region28: #{forward.1} parent=0 // pred_region
    _
  $region29: #{forward.1} parent=0 // pred_fallthru
    _
  // Predicated region
  $region30: #{forward.1} parent=0 // pred_check
    _
  $region31: #{forward.1} parent=0 // pred_check_branch
    %99 = sbr.rel (0) target = $region33
  $region32: #{forward.1} parent=0 // pred_region
    _
  $region33: #{forward.1} parent=0 // pred_fallthru
    _
  // Predicated region
  $region34: #{forward.1} parent=0 // pred_check
    _
  $region35: #{forward.1} parent=0 // pred_check_branch
    %101 = sbr.rel (0) target = $region37
  $region36: #{forward.1} parent=0 // pred_region
    _
  $region37: #{forward.1} parent=0 // pred_fallthru
    _
  // Predicated region
  $region38: #{forward.1} parent=0 // pred_check
    _
  $region39: #{forward.1} parent=0 // pred_check_branch
    %103 = sbr.rel (0) target = $region41
  $region40: #{forward.1} parent=0 // pred_region
    _
  $region41: #{forward.1} parent=0 // pred_fallthru
    _
  // Predicated region
  $region42: #{forward.1} parent=0 // pred_check
    _
  $region43: #{forward.1} parent=0 // pred_check_branch
    %105 = sbr.rel (0) target = $region45
  $region44: #{forward.1} parent=0 // pred_region
    _
  $region45: #{forward.1} parent=0 // pred_fallthru
    _
  // Predicated region
  $region46: #{forward.1} parent=0 // pred_check
    _
  $region47: #{forward.1} parent=0 // pred_check_branch
    %107 = sbr.rel (0) target = $region49
  $region48: #{forward.1} parent=0 // pred_region
    _
  $region49: #{forward.1} parent=0 // pred_fallthru
    _
  // Predicated region
  $region50: #{forward.1} parent=0 // pred_check
    _
  $region51: #{forward.1} parent=0 // pred_check_branch
    %109 = sbr.rel (0) target = $region53
  $region52: #{forward.1} parent=0 // pred_region
    _
  $region53: #{forward.1} parent=0 // pred_fallthru
    _
  // Predicated region
  $region54: #{forward.1} parent=0 // pred_check
    _
  $region55: #{forward.1} parent=0 // pred_check_branch
    %111 = sbr.rel (0) target = $region57
  $region56: #{forward.1} parent=0 // pred_region
    _
  $region57: #{forward.1} parent=0 // pred_fallthru
    _
  // Predicated region
  $region58: #{forward.1} parent=0 // pred_check
    _
  $region59: #{forward.1} parent=0 // pred_check_branch
    %113 = sbr.rel (0) target = $region61
  $region60: #{forward.1} parent=0 // pred_region
    _
  $region61: #{forward.1} parent=0 // pred_fallthru
    _
  // Predicated region
  $region62: #{forward.1} parent=0 // pred_check
    _
  $region63: #{forward.1} parent=0 // pred_check_branch
    %115 = sbr.rel (0) target = $region65
  $region64: #{forward.1} parent=0 // pred_region
    _
  $region65: #{forward.1} parent=0 // pred_fallthru
    _
  // Predicated region
  $region66: #{forward.1} parent=0 // pred_check
    _
  $region67: #{forward.1} parent=0 // pred_check_branch
    %117 = sbr.rel (0) target = $region69
  $region68: #{forward.1} parent=0 // pred_region
    _
  $region69: #{forward.1} parent=0 // pred_fallthru
    _
  // Predicated region
  $region70: #{forward.1} parent=0 // pred_check
    _
  $region71: #{forward.1} parent=0 // pred_check_branch
    %119 = sbr.rel (0) target = $region73
  $region72: #{forward.1} parent=0 // pred_region
    _
  $region73: #{forward.1} parent=0 // pred_fallthru
    _
  // Predicated region
  $region74: #{forward.1} parent=0 // pred_check
    _
  $region75: #{forward.1} parent=0 // pred_check_branch
    %121 = sbr.rel (0) target = $region77
  $region76: #{forward.1} parent=0 // pred_region
    _
  $region77: #{forward.1} parent=0 // pred_fallthru
    _
  // Predicated region
  $region78: #{forward.1} parent=0 // pred_check
    _
  $region79: #{forward.1} parent=0 // pred_check_branch
    %123 = sbr.rel (0) target = $region81
  $region80: #{forward.1} parent=0 // pred_region
    _
  $region81: #{forward.1} parent=0 // pred_fallthru
    _
  // Predicated region
  $region82: #{forward.1} parent=0 // pred_check
    _
  $region83: #{forward.1} parent=0 // pred_check_branch
    %125 = sbr.rel (0) target = $region85
  $region84: #{forward.1} parent=0 // pred_region
    _
  $region85: #{forward.1} parent=0 // pred_fallthru
    _
  // Predicated region
  $region86: #{forward.1} parent=0 // pred_check
    _
  $region87: #{forward.1} parent=0 // pred_check_branch
    %127 = sbr.rel (0) target = $region89
  $region88: #{forward.1} parent=0 // pred_region
    _
  $region89: #{forward.1} parent=0 // pred_fallthru
    _
  // Predicated region
  $region90: #{forward.1} parent=0 // pred_check
    _
  $region91: #{forward.1} parent=0 // pred_check_branch
    %129 = sbr.rel (0) target = $region93
  $region92: #{forward.1} parent=0 // pred_region
    _
  $region93: #{forward.1} parent=0 // pred_fallthru
    _
  // Predicated region
  $region94: #{forward.1} parent=0 // pred_check
    _
  $region95: #{forward.1} parent=0 // pred_check_branch
    %131 = sbr.rel (0) target = $region97
  $region96: #{forward.1} parent=0 // pred_region
    _
  $region97: #{forward.1} parent=0 // pred_fallthru
    _
  // Predicated region
  $region98: #{forward.1} parent=0 // pred_check
    _
  $region99: #{forward.1} parent=0 // pred_check_branch
    %133 = sbr.rel (0) target = $region101
  $region100: #{forward.1} parent=0 // pred_region
    _
  $region101: #{forward.1} parent=0 // pred_fallthru
    _
  // Predicated region
  $region102: #{forward.1} parent=0 // pred_check
    _
  $region103: #{forward.1} parent=0 // pred_check_branch
    %135 = sbr.rel (0) target = $region105
  $region104: #{forward.1} parent=0 // pred_region
    _
  $region105: #{forward.1} parent=0 // pred_fallthru
    _
  // Predicated region
  $region106: #{forward.1} parent=0 // pred_check
    _
  $region107: #{forward.1} parent=0 // pred_check_branch
    %137 = sbr.rel (0) target = $region109
  $region108: #{forward.1} parent=0 // pred_region
    _
  $region109: #{forward.1} parent=0 // pred_fallthru
    _
  // Predicated region
  $region110: #{forward.1} parent=0 // pred_check
    _
  $region111: #{forward.1} parent=0 // pred_check_branch
    %139 = sbr.rel (0) target = $region113
  $region112: #{forward.1} parent=0 // pred_region
    _
  $region113: #{forward.1} parent=0 // pred_fallthru
    _
  // Predicated region
  $region114: #{forward.1} parent=0 // pred_check
    _
  $region115: #{forward.1} parent=0 // pred_check_branch
    %141 = sbr.rel (0) target = $region117
  $region116: #{forward.1} parent=0 // pred_region
    _
  $region117: #{forward.1} parent=0 // pred_fallthru
    _
  // Predicated region
  $region118: #{forward.1} parent=0 // pred_check
    _
  $region119: #{forward.1} parent=0 // pred_check_branch
    %143 = sbr.rel (0) target = $region121
  $region120: #{forward.1} parent=0 // pred_region
    _
  $region121: #{forward.1} parent=0 // pred_fallthru
    _
  // Predicated region
  $region122: #{forward.1} parent=0 // pred_check
    _
  $region123: #{forward.1} parent=0 // pred_check_branch
    %145 = sbr.rel (0) target = $region125
  $region124: #{forward.1} parent=0 // pred_region
    _
  $region125: #{forward.1} parent=0 // pred_fallthru
    _
  // Predicated region
  $region126: #{forward.1} parent=0 // pred_check
    _
  $region127: #{forward.1} parent=0 // pred_check_branch
    %147 = sbr.rel (0) target = $region129
  $region128: #{forward.1} parent=0 // pred_region
    _
  $region129: #{forward.1} parent=0 // pred_fallthru
    _
  // Predicated region
  $region130: #{forward.1} parent=0 // pred_check
    _
  $region131: #{forward.1} parent=0 // pred_check_branch
    %149 = sbr.rel (0) target = $region133
  $region132: #{forward.1} parent=0 // pred_region
    _
  $region133: #{forward.1} parent=0 // pred_fallthru
    _
  // Predicated region
  $region134: #{forward.1} parent=0 // pred_check
    _
  $region135: #{forward.1} parent=0 // pred_check_branch
    %151 = sbr.rel (0) target = $region137
  $region136: #{forward.1} parent=0 // pred_region
    _
  $region137: #{forward.1} parent=0 // pred_fallthru
    _
  // Predicated region
  $region138: #{forward.1} parent=0 // pred_check
    _
  $region139: #{forward.1} parent=0 // pred_check_branch
    %153 = sbr.rel (0) target = $region141
  $region140: #{forward.1} parent=0 // pred_region
    _
  $region141: #{forward.1} parent=0 // pred_fallthru
    _
  // Predicated region
  $region142: #{forward.1} parent=0 // pred_check
    _
  $region143: #{forward.1} parent=0 // pred_check_branch
    %155 = sbr.rel (0) target = $region145
  $region144: #{forward.1} parent=0 // pred_region
    _
  $region145: #{forward.1} parent=0 // pred_fallthru
    _
  // Predicated region
  $region146: #{forward.1} parent=0 // pred_check
    _
  $region147: #{forward.1} parent=0 // pred_check_branch
    %157 = sbr.rel (0) target = $region149
  $region148: #{forward.1} parent=0 // pred_region
    _
  $region149: #{forward.1} parent=0 // pred_fallthru
    _
  // Predicated region
  $region150: #{forward.1} parent=0 // pred_check
    _
  $region151: #{forward.1} parent=0 // pred_check_branch
    %159 = sbr.rel (0) target = $region153
  $region152: #{forward.1} parent=0 // pred_region
    _
  $region153: #{forward.1} parent=0 // pred_fallthru
    _
  // Predicated region
  $region154: #{forward.1} parent=0 // pred_check
    _
  $region155: #{forward.1} parent=0 // pred_check_branch
    %161 = sbr.rel (0) target = $region157
  $region156: #{forward.1} parent=0 // pred_region
    _
  $region157: #{forward.1} parent=0 // pred_fallthru
    _
  %v162 = vld [vmem:[%s1] sm:$0x3]
  %v163 = vld [vmem:[%s3] sm:$0x3f]
  %v164 = vld [vmem:[%s5] sm:$0xff]
  %v165 = vld [vmem:[%s5 + $0x8] sm:$0xf]
  %v166 = vld [vmem:[%s7] sm:$0x1]
  %vm167 = vcmask 15360
  %v169 = vsel %vm167, %v163, 0
  %vm171 = vcmask 1041408
  %v173 = vsel %vm171, %v162, 0
  %175 = vmatprep.subr.mxu0 0.0
  %176 = vmatpush1.msra.mxu0 %v173
  %177 = vmatprep.subr.mxu0 0.0
  %178 = vmatpush1.msra.mxu0 0.0
  %179 = vmatprep.subr.mxu0 0.0
  %180 = vmatpush1.msra.mxu0 0.0
  %181 = vmatprep.subr.mxu0 0.0
  %182 = vmatpush1.msra.mxu0 0.0
  %183 = vmatprep.subr.mxu0 0.0
  %184 = vmatpush1.msra.mxu0 0.0
  %185 = vmatprep.subr.mxu0 0.0
  %186 = vmatpush1.msra.mxu0 0.0
  %187 = vmatprep.subr.mxu0 0.0
  %188 = vmatpush1.msra.mxu0 0.0
  %189 = vmatprep.subr.mxu0 0.0
  %190 = vmatpush1.msra.mxu0 0.0
  %191 = vmatprep.subr.mxu0 0.0
  %192 = vmatpush1.msra.mxu0 0.0
  %193 = vmatprep.subr.mxu0 0.0
  %194 = vmatpush1.msra.mxu0 0.0
  %195 = vmatprep.subr.mxu0 0.0
  %196 = vmatpush1.msra.mxu0 0.0
  %197 = vmatprep.subr.mxu0 0.0
  %198 = vmatpush1.msra.mxu0 0.0
  %199 = vmatprep.subr.mxu0 0.0
  %200 = vmatpush1.msra.mxu0 0.0
  %201 = vmatprep.subr.mxu0 0.0
  %202 = vmatpush1.msra.mxu0 0.0
  %203 = vmatprep.subr.mxu0 0.0
  %204 = vmatpush1.msra.mxu0 0.0
  %205 = vmatprep.subr.mxu0 0.0
  %206 = vmatpush1.msra.mxu0 0.0
  %207 = vmatprep.subr.mxu0 0.0
  %208 = vmatpush1.msra.mxu0 0.0
  %209 = vmatprep.subr.mxu0 0.0
  %210 = vmatpush1.msra.mxu0 0.0
  %211 = vmatprep.subr.mxu0 0.0
  %212 = vmatpush1.msra.mxu0 0.0
  %213 = vmatprep.subr.mxu0 0.0
  %214 = vmatpush1.msra.mxu0 0.0
  %215 = vmatprep.subr.mxu0 0.0
  %216 = vmatpush1.msra.mxu0 0.0
  %217 = vmatprep.subr.mxu0 0.0
  %218 = vmatpush1.msra.mxu0 0.0
  %219 = vmatprep.subr.mxu0 0.0
  %220 = vmatpush1.msra.mxu0 0.0
  %221 = vmatprep.subr.mxu0 0.0
  %222 = vmatpush1.msra.mxu0 0.0
  %223 = vmatprep.subr.mxu0 0.0
  %224 = vmatpush1.msra.mxu0 0.0
  %225 = vmatprep.subr.mxu0 0.0
  %226 = vmatpush1.msra.mxu0 0.0
  %227 = vmatprep.subr.mxu0 0.0
  %228 = vmatpush1.msra.mxu0 0.0
  %229 = vmatprep.subr.mxu0 0.0
  %230 = vmatpush1.msra.mxu0 0.0
  %231 = vmatprep.subr.mxu0 0.0
  %232 = vmatpush1.msra.mxu0 0.0
  %233 = vmatprep.subr.mxu0 0.0
  %234 = vmatpush1.msra.mxu0 0.0
  %235 = vmatprep.subr.mxu0 0.0
  %236 = vmatpush1.msra.mxu0 0.0
  %237 = vmatprep.subr.mxu0 0.0
  %238 = vmatpush1.msra.mxu0 0.0
  %239 = vmatprep.mubr.f32.mxu0 0.0
  %240 = vmatmul.mubr.f32.gmra.mrb[0].mxu0 %v169
  %v241 = vpop.f32.mrb[0].mxu0
  %v242 = vadd.f32 0.0, %v241
  %v243 = vpop.f32.mrb[0].mxu0
  %244 = vdwg.mxu0
  %v246 = vrot.slane %v242, 2
  %247 = vrot.lane.b32.xlu0 %v246, 4
  %v248 = vpop.permute.xlu0 %247
  %v250 = vrot.slane %v242, 4
  %251 = vrot.lane.b32.xlu0 %v250, 8
  %v252 = vpop.permute.xlu0 %251
  %vm254 = vcmask 31744
  %v255 = vsel %vm254, %v242, %v248
  %vm256 = vcmask 64512
  %v257 = vsel %vm256, %v255, %v252
  %v259 = vlaneseq
  %v260 = vshrl.u32 %v259, 7
  %v261 = vsub.s32 0, %v260
  %v262 = vrot.slane %v166, %v261
  %vm264 = vcmask 97280
  %v266 = vsel %vm264, %v257, 0
  %vm268 = vcmask 1043456
  %v270 = vsel %vm268, %v165, 0
  %272 = vmatprep.subr.mxu0 0.0
  %273 = vmatpush1.msra.mxu0 %v164
  %274 = vmatprep.subr.mxu0 0.0
  %275 = vmatpush1.msra.mxu0 %v270
  %276 = vmatprep.subr.mxu0 0.0
  %277 = vmatpush1.msra.mxu0 0.0
  %278 = vmatprep.subr.mxu0 0.0
  %279 = vmatpush1.msra.mxu0 0.0
  %280 = vmatprep.subr.mxu0 0.0
  %281 = vmatpush1.msra.mxu0 0.0
  %282 = vmatprep.subr.mxu0 0.0
  %283 = vmatpush1.msra.mxu0 0.0
  %284 = vmatprep.subr.mxu0 0.0
  %285 = vmatpush1.msra.mxu0 0.0
  %286 = vmatprep.subr.mxu0 0.0
  %287 = vmatpush1.msra.mxu0 0.0
  %288 = vmatprep.subr.mxu0 0.0
  %289 = vmatpush1.msra.mxu0 0.0
  %290 = vmatprep.subr.mxu0 0.0
  %291 = vmatpush1.msra.mxu0 0.0
  %292 = vmatprep.subr.mxu0 0.0
  %293 = vmatpush1.msra.mxu0 0.0
  %294 = vmatprep.subr.mxu0 0.0
  %295 = vmatpush1.msra.mxu0 0.0
  %296 = vmatprep.subr.mxu0 0.0
  %297 = vmatpush1.msra.mxu0 0.0
  %298 = vmatprep.subr.mxu0 0.0
  %299 = vmatpush1.msra.mxu0 0.0
  %300 = vmatprep.subr.mxu0 0.0
  %301 = vmatpush1.msra.mxu0 0.0
  %302 = vmatprep.subr.mxu0 0.0
  %303 = vmatpush1.msra.mxu0 0.0
  %304 = vmatprep.subr.mxu0 0.0
  %305 = vmatpush1.msra.mxu0 0.0
  %306 = vmatprep.subr.mxu0 0.0
  %307 = vmatpush1.msra.mxu0 0.0
  %308 = vmatprep.subr.mxu0 0.0
  %309 = vmatpush1.msra.mxu0 0.0
  %310 = vmatprep.subr.mxu0 0.0
  %311 = vmatpush1.msra.mxu0 0.0
  %312 = vmatprep.subr.mxu0 0.0
  %313 = vmatpush1.msra.mxu0 0.0
  %314 = vmatprep.subr.mxu0 0.0
  %315 = vmatpush1.msra.mxu0 0.0
  %316 = vmatprep.subr.mxu0 0.0
  %317 = vmatpush1.msra.mxu0 0.0
  %318 = vmatprep.subr.mxu0 0.0
  %319 = vmatpush1.msra.mxu0 0.0
  %320 = vmatprep.subr.mxu0 0.0
  %321 = vmatpush1.msra.mxu0 0.0
  %322 = vmatprep.subr.mxu0 0.0
  %323 = vmatpush1.msra.mxu0 0.0
  %324 = vmatprep.subr.mxu0 0.0
  %325 = vmatpush1.msra.mxu0 0.0
  %326 = vmatprep.subr.mxu0 0.0
  %327 = vmatpush1.msra.mxu0 0.0
  %328 = vmatprep.subr.mxu0 0.0
  %329 = vmatpush1.msra.mxu0 0.0
  %330 = vmatprep.subr.mxu0 0.0
  %331 = vmatpush1.msra.mxu0 0.0
  %332 = vmatprep.subr.mxu0 0.0
  %333 = vmatpush1.msra.mxu0 0.0
  %334 = vmatprep.subr.mxu0 0.0
  %335 = vmatpush1.msra.mxu0 0.0
  %336 = vmatprep.mubr.f32.mxu0 0.0
  %337 = vmatmul.mubr.f32.gmra.mrb[0].mxu0 %v266
  %v338 = vpop.f32.mrb[0].mxu0
  %v339 = vadd.f32 %v262, %v338
  %v340 = vpop.f32.mrb[0].mxu0
  %341 = vdwg.mxu0
  %v342 = vld [vmem:[%s9] sm:$0x1]
  %v343 = vld [vmem:[%s11] sm:$0x1]
  %v344 = vld [vmem:[%s13] sm:$0xff]
  %v345 = vld [vmem:[%s15] sm:$0xff]
  %vm346 = vcmask 58368
  %v347 = vsel %vm346, %v339, 0.0
  %v348 = vrot.slane %v347, 4
  %v349 = vadd.f32 %v347, %v348
  %v350 = vrot.slane %v349, 2
  %v351 = vadd.f32 %v349, %v350
  %v352 = vrot.slane %v351, 1
  %v353 = vadd.f32 %v351, %v352
  %v355 = vsel %vm256, %v353, 0
  %357 = vmatprep.subr.mxu0 0.0
  %358 = vmatpush1.msra.mxu0 %v344
  %359 = vmatprep.subr.mxu0 0.0
  %360 = vmatpush1.msra.mxu0 0.0
  %361 = vmatprep.subr.mxu0 0.0
  %362 = vmatpush1.msra.mxu0 0.0
  %363 = vmatprep.subr.mxu0 0.0
  %364 = vmatpush1.msra.mxu0 0.0
  %365 = vmatprep.subr.mxu0 0.0
  %366 = vmatpush1.msra.mxu0 0.0
  %367 = vmatprep.subr.mxu0 0.0
  %368 = vmatpush1.msra.mxu0 0.0
  %369 = vmatprep.subr.mxu0 0.0
  %370 = vmatpush1.msra.mxu0 0.0
  %371 = vmatprep.subr.mxu0 0.0
  %372 = vmatpush1.msra.mxu0 0.0
  %373 = vmatprep.subr.mxu0 0.0
  %374 = vmatpush1.msra.mxu0 0.0
  %375 = vmatprep.subr.mxu0 0.0
  %376 = vmatpush1.msra.mxu0 0.0
  %377 = vmatprep.subr.mxu0 0.0
  %378 = vmatpush1.msra.mxu0 0.0
  %379 = vmatprep.subr.mxu0 0.0
  %380 = vmatpush1.msra.mxu0 0.0
  %381 = vmatprep.subr.mxu0 0.0
  %382 = vmatpush1.msra.mxu0 0.0
  %383 = vmatprep.subr.mxu0 0.0
  %384 = vmatpush1.msra.mxu0 0.0
  %385 = vmatprep.subr.mxu0 0.0
  %386 = vmatpush1.msra.mxu0 0.0
  %387 = vmatprep.subr.mxu0 0.0
  %388 = vmatpush1.msra.mxu0 0.0
  %389 = vmatprep.subr.mxu0 0.0
  %390 = vmatpush1.msra.mxu0 0.0
  %391 = vmatprep.subr.mxu0 0.0
  %392 = vmatpush1.msra.mxu0 0.0
  %393 = vmatprep.subr.mxu0 0.0
  %394 = vmatpush1.msra.mxu0 0.0
  %395 = vmatprep.subr.mxu0 0.0
  %396 = vmatpush1.msra.mxu0 0.0
  %397 = vmatprep.subr.mxu0 0.0
  %398 = vmatpush1.msra.mxu0 0.0
  %399 = vmatprep.subr.mxu0 0.0
  %400 = vmatpush1.msra.mxu0 0.0
  %401 = vmatprep.subr.mxu0 0.0
  %402 = vmatpush1.msra.mxu0 0.0
  %403 = vmatprep.subr.mxu0 0.0
  %404 = vmatpush1.msra.mxu0 0.0
  %405 = vmatprep.subr.mxu0 0.0
  %406 = vmatpush1.msra.mxu0 0.0
  %407 = vmatprep.subr.mxu0 0.0
  %408 = vmatpush1.msra.mxu0 0.0
  %409 = vmatprep.subr.mxu0 0.0
  %410 = vmatpush1.msra.mxu0 0.0
  %411 = vmatprep.subr.mxu0 0.0
  %412 = vmatpush1.msra.mxu0 0.0
  %413 = vmatprep.subr.mxu0 0.0
  %414 = vmatpush1.msra.mxu0 0.0
  %415 = vmatprep.subr.mxu0 0.0
  %416 = vmatpush1.msra.mxu0 0.0
  %417 = vmatprep.subr.mxu0 0.0
  %418 = vmatpush1.msra.mxu0 0.0
  %419 = vmatprep.subr.mxu0 0.0
  %420 = vmatpush1.msra.mxu0 0.0
  %421 = vmatprep.mubr.f32.mxu0 0.0
  %422 = vmatmul.mubr.f32.gmra.mrb[0].mxu0 %v355
  %v423 = vpop.f32.mrb[0].mxu0
  %v424 = vadd.f32 0.0, %v423
  %v425 = vpop.f32.mrb[0].mxu0
  %426 = vdwg.mxu0
  %v427 = vmul.f32 %v424, 0.5
  %v429 = vsel %vm256, %v427, 0
  %431 = vmatprep.subr.mxu0 0.0
  %432 = vmatpush1.msra.mxu0 %v345
  %433 = vmatprep.subr.mxu0 0.0
  %434 = vmatpush1.msra.mxu0 0.0
  %435 = vmatprep.subr.mxu0 0.0
  %436 = vmatpush1.msra.mxu0 0.0
  %437 = vmatprep.subr.mxu0 0.0
  %438 = vmatpush1.msra.mxu0 0.0
  %439 = vmatprep.subr.mxu0 0.0
  %440 = vmatpush1.msra.mxu0 0.0
  %441 = vmatprep.subr.mxu0 0.0
  %442 = vmatpush1.msra.mxu0 0.0
  %443 = vmatprep.subr.mxu0 0.0
  %444 = vmatpush1.msra.mxu0 0.0
  %445 = vmatprep.subr.mxu0 0.0
  %446 = vmatpush1.msra.mxu0 0.0
  %447 = vmatprep.subr.mxu0 0.0
  %448 = vmatpush1.msra.mxu0 0.0
  %449 = vmatprep.subr.mxu0 0.0
  %450 = vmatpush1.msra.mxu0 0.0
  %451 = vmatprep.subr.mxu0 0.0
  %452 = vmatpush1.msra.mxu0 0.0
  %453 = vmatprep.subr.mxu0 0.0
  %454 = vmatpush1.msra.mxu0 0.0
  %455 = vmatprep.subr.mxu0 0.0
  %456 = vmatpush1.msra.mxu0 0.0
  %457 = vmatprep.subr.mxu0 0.0
  %458 = vmatpush1.msra.mxu0 0.0
  %459 = vmatprep.subr.mxu0 0.0
  %460 = vmatpush1.msra.mxu0 0.0
  %461 = vmatprep.subr.mxu0 0.0
  %462 = vmatpush1.msra.mxu0 0.0
  %463 = vmatprep.subr.mxu0 0.0
  %464 = vmatpush1.msra.mxu0 0.0
  %465 = vmatprep.subr.mxu0 0.0
  %466 = vmatpush1.msra.mxu0 0.0
  %467 = vmatprep.subr.mxu0 0.0
  %468 = vmatpush1.msra.mxu0 0.0
  %469 = vmatprep.subr.mxu0 0.0
  %470 = vmatpush1.msra.mxu0 0.0
  %471 = vmatprep.subr.mxu0 0.0
  %472 = vmatpush1.msra.mxu0 0.0
  %473 = vmatprep.subr.mxu0 0.0
  %474 = vmatpush1.msra.mxu0 0.0
  %475 = vmatprep.subr.mxu0 0.0
  %476 = vmatpush1.msra.mxu0 0.0
  %477 = vmatprep.subr.mxu0 0.0
  %478 = vmatpush1.msra.mxu0 0.0
  %479 = vmatprep.subr.mxu0 0.0
  %480 = vmatpush1.msra.mxu0 0.0
  %481 = vmatprep.subr.mxu0 0.0
  %482 = vmatpush1.msra.mxu0 0.0
  %483 = vmatprep.subr.mxu0 0.0
  %484 = vmatpush1.msra.mxu0 0.0
  %485 = vmatprep.subr.mxu0 0.0
  %486 = vmatpush1.msra.mxu0 0.0
  %487 = vmatprep.subr.mxu0 0.0
  %488 = vmatpush1.msra.mxu0 0.0
  %489 = vmatprep.subr.mxu0 0.0
  %490 = vmatpush1.msra.mxu0 0.0
  %491 = vmatprep.subr.mxu0 0.0
  %492 = vmatpush1.msra.mxu0 0.0
  %493 = vmatprep.subr.mxu0 0.0
  %494 = vmatpush1.msra.mxu0 0.0
  %495 = vmatprep.mubr.f32.mxu0 0.0
  %496 = vmatmul.mubr.f32.gmra.mrb[0].mxu0 %v429
  %v497 = vpop.f32.mrb[0].mxu0
  %v498 = vadd.f32 0.0, %v497
  %v499 = vpop.f32.mrb[0].mxu0
  %500 = vdwg.mxu0
  %v501 = vlaneseq
  %v502 = vshrl.u32 %v501, 7
  %v503 = vsub.s32 0, %v502
  %v504 = vrot.slane %v498, %v503
  %v505 = vsub.f32 %v339, %v504
  %v506 = vmul.f32 %v505, %v505
  %v507 = vsel %vm346, %v506, 0.0
  %v508 = vrot.slane %v507, 4
  %v509 = vadd.f32 %v507, %v508
  %v510 = vrot.slane %v509, 2
  %v511 = vadd.f32 %v509, %v510
  %v512 = vrot.slane %v511, 1
  %v513 = vadd.f32 %v511, %v512
  %v515 = vsel %vm256, %v513, 0
  %517 = vmatprep.subr.mxu0 0.0
  %518 = vmatpush1.msra.mxu0 %v344
  %519 = vmatprep.subr.mxu0 0.0
  %520 = vmatpush1.msra.mxu0 0.0
  %521 = vmatprep.subr.mxu0 0.0
  %522 = vmatpush1.msra.mxu0 0.0
  %523 = vmatprep.subr.mxu0 0.0
  %524 = vmatpush1.msra.mxu0 0.0
  %525 = vmatprep.subr.mxu0 0.0
  %526 = vmatpush1.msra.mxu0 0.0
  %527 = vmatprep.subr.mxu0 0.0
  %528 = vmatpush1.msra.mxu0 0.0
  %529 = vmatprep.subr.mxu0 0.0
  %530 = vmatpush1.msra.mxu0 0.0
  %531 = vmatprep.subr.mxu0 0.0
  %532 = vmatpush1.msra.mxu0 0.0
  %533 = vmatprep.subr.mxu0 0.0
  %534 = vmatpush1.msra.mxu0 0.0
  %535 = vmatprep.subr.mxu0 0.0
  %536 = vmatpush1.msra.mxu0 0.0
  %537 = vmatprep.subr.mxu0 0.0
  %538 = vmatpush1.msra.mxu0 0.0
  %539 = vmatprep.subr.mxu0 0.0
  %540 = vmatpush1.msra.mxu0 0.0
  %541 = vmatprep.subr.mxu0 0.0
  %542 = vmatpush1.msra.mxu0 0.0
  %543 = vmatprep.subr.mxu0 0.0
  %544 = vmatpush1.msra.mxu0 0.0
  %545 = vmatprep.subr.mxu0 0.0
  %546 = vmatpush1.msra.mxu0 0.0
  %547 = vmatprep.subr.mxu0 0.0
  %548 = vmatpush1.msra.mxu0 0.0
  %549 = vmatprep.subr.mxu0 0.0
  %550 = vmatpush1.msra.mxu0 0.0
  %551 = vmatprep.subr.mxu0 0.0
  %552 = vmatpush1.msra.mxu0 0.0
  %553 = vmatprep.subr.mxu0 0.0
  %554 = vmatpush1.msra.mxu0 0.0
  %555 = vmatprep.subr.mxu0 0.0
  %556 = vmatpush1.msra.mxu0 0.0
  %557 = vmatprep.subr.mxu0 0.0
  %558 = vmatpush1.msra.mxu0 0.0
  %559 = vmatprep.subr.mxu0 0.0
  %560 = vmatpush1.msra.mxu0 0.0
  %561 = vmatprep.subr.mxu0 0.0
  %562 = vmatpush1.msra.mxu0 0.0
  %563 = vmatprep.subr.mxu0 0.0
  %564 = vmatpush1.msra.mxu0 0.0
  %565 = vmatprep.subr.mxu0 0.0
  %566 = vmatpush1.msra.mxu0 0.0
  %567 = vmatprep.subr.mxu0 0.0
  %568 = vmatpush1.msra.mxu0 0.0
  %569 = vmatprep.subr.mxu0 0.0
  %570 = vmatpush1.msra.mxu0 0.0
  %571 = vmatprep.subr.mxu0 0.0
  %572 = vmatpush1.msra.mxu0 0.0
  %573 = vmatprep.subr.mxu0 0.0
  %574 = vmatpush1.msra.mxu0 0.0
  %575 = vmatprep.subr.mxu0 0.0
  %576 = vmatpush1.msra.mxu0 0.0
  %577 = vmatprep.subr.mxu0 0.0
  %578 = vmatpush1.msra.mxu0 0.0
  %579 = vmatprep.subr.mxu0 0.0
  %580 = vmatpush1.msra.mxu0 0.0
  %581 = vmatprep.mubr.f32.mxu0 0.0
  %582 = vmatmul.mubr.f32.gmra.mrb[0].mxu0 %v515
  %v583 = vpop.f32.mrb[0].mxu0
  %v584 = vadd.f32 0.0, %v583
  %v585 = vpop.f32.mrb[0].mxu0
  %586 = vdwg.mxu0
  %v587 = vmul.f32 %v584, 0.5
  %v588 = vadd.f32 %v587, 1e-05
  %v589 = vrsqrt.pop %v588
  %v590 = vmul.f32 %v342, %v589
  %v591 = vmul.f32 %v427, %v590
  %v592 = vsub.f32 %v343, %v591
  %v594 = vsel %vm256, %v590, 0
  %596 = vmatprep.subr.mxu0 0.0
  %597 = vmatpush1.msra.mxu0 %v345
  %598 = vmatprep.subr.mxu0 0.0
  %599 = vmatpush1.msra.mxu0 0.0
  %600 = vmatprep.subr.mxu0 0.0
  %601 = vmatpush1.msra.mxu0 0.0
  %602 = vmatprep.subr.mxu0 0.0
  %603 = vmatpush1.msra.mxu0 0.0
  %604 = vmatprep.subr.mxu0 0.0
  %605 = vmatpush1.msra.mxu0 0.0
  %606 = vmatprep.subr.mxu0 0.0
  %607 = vmatpush1.msra.mxu0 0.0
  %608 = vmatprep.subr.mxu0 0.0
  %609 = vmatpush1.msra.mxu0 0.0
  %610 = vmatprep.subr.mxu0 0.0
  %611 = vmatpush1.msra.mxu0 0.0
  %612 = vmatprep.subr.mxu0 0.0
  %613 = vmatpush1.msra.mxu0 0.0
  %614 = vmatprep.subr.mxu0 0.0
  %615 = vmatpush1.msra.mxu0 0.0
  %616 = vmatprep.subr.mxu0 0.0
  %617 = vmatpush1.msra.mxu0 0.0
  %618 = vmatprep.subr.mxu0 0.0
  %619 = vmatpush1.msra.mxu0 0.0
  %620 = vmatprep.subr.mxu0 0.0
  %621 = vmatpush1.msra.mxu0 0.0
  %622 = vmatprep.subr.mxu0 0.0
  %623 = vmatpush1.msra.mxu0 0.0
  %624 = vmatprep.subr.mxu0 0.0
  %625 = vmatpush1.msra.mxu0 0.0
  %626 = vmatprep.subr.mxu0 0.0
  %627 = vmatpush1.msra.mxu0 0.0
  %628 = vmatprep.subr.mxu0 0.0
  %629 = vmatpush1.msra.mxu0 0.0
  %630 = vmatprep.subr.mxu0 0.0
  %631 = vmatpush1.msra.mxu0 0.0
  %632 = vmatprep.subr.mxu0 0.0
  %633 = vmatpush1.msra.mxu0 0.0
  %634 = vmatprep.subr.mxu0 0.0
  %635 = vmatpush1.msra.mxu0 0.0
  %636 = vmatprep.subr.mxu0 0.0
  %637 = vmatpush1.msra.mxu0 0.0
  %638 = vmatprep.subr.mxu0 0.0
  %639 = vmatpush1.msra.mxu0 0.0
  %640 = vmatprep.subr.mxu0 0.0
  %641 = vmatpush1.msra.mxu0 0.0
  %642 = vmatprep.subr.mxu0 0.0
  %643 = vmatpush1.msra.mxu0 0.0
  %644 = vmatprep.subr.mxu0 0.0
  %645 = vmatpush1.msra.mxu0 0.0
  %646 = vmatprep.subr.mxu0 0.0
  %647 = vmatpush1.msra.mxu0 0.0
  %648 = vmatprep.subr.mxu0 0.0
  %649 = vmatpush1.msra.mxu0 0.0
  %650 = vmatprep.subr.mxu0 0.0
  %651 = vmatpush1.msra.mxu0 0.0
  %652 = vmatprep.subr.mxu0 0.0
  %653 = vmatpush1.msra.mxu0 0.0
  %654 = vmatprep.subr.mxu0 0.0
  %655 = vmatpush1.msra.mxu0 0.0
  %656 = vmatprep.subr.mxu0 0.0
  %657 = vmatpush1.msra.mxu0 0.0
  %658 = vmatprep.subr.mxu0 0.0
  %659 = vmatpush1.msra.mxu0 0.0
  %660 = vmatprep.mubr.f32.mxu0 0.0
  %661 = vmatmul.mubr.f32.gmra.mrb[0].mxu0 %v594
  %v662 = vpop.f32.mrb[0].mxu0
  %v663 = vadd.f32 0.0, %v662
  %v664 = vpop.f32.mrb[0].mxu0
  %665 = vdwg.mxu0
  %v667 = vsel %vm256, %v592, 0
  %669 = vmatprep.subr.mxu0 0.0
  %670 = vmatpush1.msra.mxu0 %v345
  %671 = vmatprep.subr.mxu0 0.0
  %672 = vmatpush1.msra.mxu0 0.0
  %673 = vmatprep.subr.mxu0 0.0
  %674 = vmatpush1.msra.mxu0 0.0
  %675 = vmatprep.subr.mxu0 0.0
  %676 = vmatpush1.msra.mxu0 0.0
  %677 = vmatprep.subr.mxu0 0.0
  %678 = vmatpush1.msra.mxu0 0.0
  %679 = vmatprep.subr.mxu0 0.0
  %680 = vmatpush1.msra.mxu0 0.0
  %681 = vmatprep.subr.mxu0 0.0
  %682 = vmatpush1.msra.mxu0 0.0
  %683 = vmatprep.subr.mxu0 0.0
  %684 = vmatpush1.msra.mxu0 0.0
  %685 = vmatprep.subr.mxu0 0.0
  %686 = vmatpush1.msra.mxu0 0.0
  %687 = vmatprep.subr.mxu0 0.0
  %688 = vmatpush1.msra.mxu0 0.0
  %689 = vmatprep.subr.mxu0 0.0
  %690 = vmatpush1.msra.mxu0 0.0
  %691 = vmatprep.subr.mxu0 0.0
  %692 = vmatpush1.msra.mxu0 0.0
  %693 = vmatprep.subr.mxu0 0.0
  %694 = vmatpush1.msra.mxu0 0.0
  %695 = vmatprep.subr.mxu0 0.0
  %696 = vmatpush1.msra.mxu0 0.0
  %697 = vmatprep.subr.mxu0 0.0
  %698 = vmatpush1.msra.mxu0 0.0
  %699 = vmatprep.subr.mxu0 0.0
  %700 = vmatpush1.msra.mxu0 0.0
  %701 = vmatprep.subr.mxu0 0.0
  %702 = vmatpush1.msra.mxu0 0.0
  %703 = vmatprep.subr.mxu0 0.0
  %704 = vmatpush1.msra.mxu0 0.0
  %705 = vmatprep.subr.mxu0 0.0
  %706 = vmatpush1.msra.mxu0 0.0
  %707 = vmatprep.subr.mxu0 0.0
  %708 = vmatpush1.msra.mxu0 0.0
  %709 = vmatprep.subr.mxu0 0.0
  %710 = vmatpush1.msra.mxu0 0.0
  %711 = vmatprep.subr.mxu0 0.0
  %712 = vmatpush1.msra.mxu0 0.0
  %713 = vmatprep.subr.mxu0 0.0
  %714 = vmatpush1.msra.mxu0 0.0
  %715 = vmatprep.subr.mxu0 0.0
  %716 = vmatpush1.msra.mxu0 0.0
  %717 = vmatprep.subr.mxu0 0.0
  %718 = vmatpush1.msra.mxu0 0.0
  %719 = vmatprep.subr.mxu0 0.0
  %720 = vmatpush1.msra.mxu0 0.0
  %721 = vmatprep.subr.mxu0 0.0
  %722 = vmatpush1.msra.mxu0 0.0
  %723 = vmatprep.subr.mxu0 0.0
  %724 = vmatpush1.msra.mxu0 0.0
  %725 = vmatprep.subr.mxu0 0.0
  %726 = vmatpush1.msra.mxu0 0.0
  %727 = vmatprep.subr.mxu0 0.0
  %728 = vmatpush1.msra.mxu0 0.0
  %729 = vmatprep.subr.mxu0 0.0
  %730 = vmatpush1.msra.mxu0 0.0
  %731 = vmatprep.subr.mxu0 0.0
  %732 = vmatpush1.msra.mxu0 0.0
  %733 = vmatprep.mubr.f32.mxu0 0.0
  %734 = vmatmul.mubr.f32.gmra.mrb[0].mxu0 %v667
  %v735 = vpop.f32.mrb[0].mxu0
  %v736 = vadd.f32 0.0, %v735
  %v737 = vpop.f32.mrb[0].mxu0
  %738 = vdwg.mxu0
  %v739 = vlaneseq
  %v740 = vshrl.u32 %v739, 7
  %v741 = vsub.s32 0, %v740
  %v742 = vrot.slane %v663, %v741
  %v743 = vmul.f32 %v339, %v742
  %v744 = vlaneseq
  %v745 = vshrl.u32 %v744, 7
  %v746 = vsub.s32 0, %v745
  %v747 = vrot.slane %v736, %v746
  %v748 = vadd.f32 %v743, %v747
  %v749 = vmax.f32 %v748, 0.0
  %v750 = vld [vmem:[%s17] sm:$0xff]
  %v751 = vld [vmem:[%s17 + $0x8] sm:$0xff]
  %v752 = vld [vmem:[%s17 + $0x10] sm:$0x3]
  %v753 = vld [vmem:[%s19] sm:$0xff]
  %v754 = vld [vmem:[%s19 + $0x8] sm:$0xff]
  %v755 = vld [vmem:[%s19 + $0x10] sm:$0xff]
  %v756 = vld [vmem:[%s19 + $0x18] sm:$0xff]
  %v757 = vld [vmem:[%s19 + $0x20] sm:$0xff]
  %v758 = vld [vmem:[%s19 + $0x28] sm:$0xff]
  %v759 = vld [vmem:[%s19 + $0x30] sm:$0xff]
  %v760 = vld [vmem:[%s19 + $0x38] sm:$0xff]
  %v761 = vld [vmem:[%s19 + $0x40] sm:$0xff]
  %v762 = vld [vmem:[%s21] sm:$0x1]
  %v764 = vsel %vm167, %v750, 0
  %v767 = vsel %vm167, %v751, 0
  %v770 = vsel %vm167, %v752, 0
  %v773 = vsel %vm171, %v749, 0
  %775 = vmatprep.subr.mxu0 0.0
  %776 = vmatpush1.msra.mxu0 %v773
  %777 = vmatprep.subr.mxu0 0.0
  %778 = vmatpush1.msra.mxu0 0.0
  %779 = vmatprep.subr.mxu0 0.0
  %780 = vmatpush1.msra.mxu0 0.0
  %781 = vmatprep.subr.mxu0 0.0
  %782 = vmatpush1.msra.mxu0 0.0
  %783 = vmatprep.subr.mxu0 0.0
  %784 = vmatpush1.msra.mxu0 0.0
  %785 = vmatprep.subr.mxu0 0.0
  %786 = vmatpush1.msra.mxu0 0.0
  %787 = vmatprep.subr.mxu0 0.0
  %788 = vmatpush1.msra.mxu0 0.0
  %789 = vmatprep.subr.mxu0 0.0
  %790 = vmatpush1.msra.mxu0 0.0
  %791 = vmatprep.subr.mxu0 0.0
  %792 = vmatpush1.msra.mxu0 0.0
  %793 = vmatprep.subr.mxu0 0.0
  %794 = vmatpush1.msra.mxu0 0.0
  %795 = vmatprep.subr.mxu0 0.0
  %796 = vmatpush1.msra.mxu0 0.0
  %797 = vmatprep.subr.mxu0 0.0
  %798 = vmatpush1.msra.mxu0 0.0
  %799 = vmatprep.subr.mxu0 0.0
  %800 = vmatpush1.msra.mxu0 0.0
  %801 = vmatprep.subr.mxu0 0.0
  %802 = vmatpush1.msra.mxu0 0.0
  %803 = vmatprep.subr.mxu0 0.0
  %804 = vmatpush1.msra.mxu0 0.0
  %805 = vmatprep.subr.mxu0 0.0
  %806 = vmatpush1.msra.mxu0 0.0
  %807 = vmatprep.subr.mxu0 0.0
  %808 = vmatpush1.msra.mxu0 0.0
  %809 = vmatprep.subr.mxu0 0.0
  %810 = vmatpush1.msra.mxu0 0.0
  %811 = vmatprep.subr.mxu0 0.0
  %812 = vmatpush1.msra.mxu0 0.0
  %813 = vmatprep.subr.mxu0 0.0
  %814 = vmatpush1.msra.mxu0 0.0
  %815 = vmatprep.subr.mxu0 0.0
  %816 = vmatpush1.msra.mxu0 0.0
  %817 = vmatprep.subr.mxu0 0.0
  %818 = vmatpush1.msra.mxu0 0.0
  %819 = vmatprep.subr.mxu0 0.0
  %820 = vmatpush1.msra.mxu0 0.0
  %821 = vmatprep.subr.mxu0 0.0
  %822 = vmatpush1.msra.mxu0 0.0
  %823 = vmatprep.subr.mxu0 0.0
  %824 = vmatpush1.msra.mxu0 0.0
  %825 = vmatprep.subr.mxu0 0.0
  %826 = vmatpush1.msra.mxu0 0.0
  %827 = vmatprep.subr.mxu0 0.0
  %828 = vmatpush1.msra.mxu0 0.0
  %829 = vmatprep.subr.mxu0 0.0
  %830 = vmatpush1.msra.mxu0 0.0
  %831 = vmatprep.subr.mxu0 0.0
  %832 = vmatpush1.msra.mxu0 0.0
  %833 = vmatprep.subr.mxu0 0.0
  %834 = vmatpush1.msra.mxu0 0.0
  %835 = vmatprep.subr.mxu0 0.0
  %836 = vmatpush1.msra.mxu0 0.0
  %837 = vmatprep.subr.mxu0 0.0
  %838 = vmatpush1.msra.mxu0 0.0
  %839 = vmatprep.mubr.f32.mxu0 0.0
  %840 = vmatmul.mubr.f32.gmra.mrb[0].mxu0 %v764
  %v841 = vpop.f32.mrb[0].mxu0
  %v842 = vadd.f32 0.0, %v841
  %v843 = vpop.f32.mrb[0].mxu0
  %844 = vmatprep.mubr.f32.mxu0 0.0
  %845 = vmatmul.mubr.f32.gmra.mrb[0].mxu0 %v767
  %v846 = vpop.f32.mrb[0].mxu0
  %v847 = vadd.f32 0.0, %v846
  %v848 = vpop.f32.mrb[0].mxu0
  %849 = vmatprep.mubr.f32.mxu0 0.0
  %850 = vmatmul.mubr.f32.gmra.mrb[0].mxu0 %v770
  %v851 = vpop.f32.mrb[0].mxu0
  %v852 = vadd.f32 0.0, %v851
  %v853 = vpop.f32.mrb[0].mxu0
  %854 = vdwg.mxu0
  %v856 = vrot.slane %v842, 2
  %857 = vrot.lane.b32.xlu0 %v856, 8
  %v858 = vpop.permute.xlu0 %857
  %v860 = vrot.slane %v842, 4
  %861 = vrot.lane.b32.xlu0 %v860, 16
  %v862 = vpop.permute.xlu0 %861
  %v864 = vrot.slane %v842, 6
  %865 = vrot.lane.b32.xlu0 %v864, 24
  %v866 = vpop.permute.xlu0 %865
  %869 = vrot.lane.b32.xlu0 %v847, 32
  %v870 = vpop.permute.xlu0 %869
  %v872 = vrot.slane %v847, 2
  %873 = vrot.lane.b32.xlu0 %v872, 40
  %v874 = vpop.permute.xlu0 %873
  %v876 = vrot.slane %v847, 4
  %877 = vrot.lane.b32.xlu0 %v876, 48
  %v878 = vpop.permute.xlu0 %877
  %v880 = vrot.slane %v847, 6
  %881 = vrot.lane.b32.xlu0 %v880, 56
  %v882 = vpop.permute.xlu0 %881
  %885 = vrot.lane.b32.xlu0 %v852, 64
  %v886 = vpop.permute.xlu0 %885
  %v888 = vsel %vm256, %v842, %v858
  %vm889 = vcmask 130048
  %v890 = vsel %vm889, %v888, %v862
  %vm891 = vcmask 195584
  %v892 = vsel %vm891, %v890, %v866
  %vm893 = vcmask 261120
  %v894 = vsel %vm893, %v892, %v870
  %vm895 = vcmask 326656
  %v896 = vsel %vm895, %v894, %v874
  %vm897 = vcmask 392192
  %v898 = vsel %vm897, %v896, %v878
  %vm899 = vcmask 457728
  %v900 = vsel %vm899, %v898, %v882
  %vm901 = vcmask 523264
  %v902 = vsel %vm901, %v900, %v886
  %v904 = vlaneseq
  %v905 = vshrl.u32 %v904, 7
  %v906 = vsub.s32 0, %v905
  %v907 = vrot.slane %v762, %v906
  %vm909 = vcmask 588800
  %v911 = vsel %vm909, %v902, 0
  %913 = vmatprep.subr.mxu0 0.0
  %914 = vmatpush1.msra.mxu0 %v753
  %915 = vmatprep.subr.mxu0 0.0
  %916 = vmatpush1.msra.mxu0 %v754
  %917 = vmatprep.subr.mxu0 0.0
  %918 = vmatpush1.msra.mxu0 %v755
  %919 = vmatprep.subr.mxu0 0.0
  %920 = vmatpush1.msra.mxu0 %v756
  %921 = vmatprep.subr.mxu0 0.0
  %922 = vmatpush1.msra.mxu0 %v757
  %923 = vmatprep.subr.mxu0 0.0
  %924 = vmatpush1.msra.mxu0 %v758
  %925 = vmatprep.subr.mxu0 0.0
  %926 = vmatpush1.msra.mxu0 %v759
  %927 = vmatprep.subr.mxu0 0.0
  %928 = vmatpush1.msra.mxu0 %v760
  %929 = vmatprep.subr.mxu0 0.0
  %930 = vmatpush1.msra.mxu0 %v761
  %931 = vmatprep.subr.mxu0 0.0
  %932 = vmatpush1.msra.mxu0 0.0
  %933 = vmatprep.subr.mxu0 0.0
  %934 = vmatpush1.msra.mxu0 0.0
  %935 = vmatprep.subr.mxu0 0.0
  %936 = vmatpush1.msra.mxu0 0.0
  %937 = vmatprep.subr.mxu0 0.0
  %938 = vmatpush1.msra.mxu0 0.0
  %939 = vmatprep.subr.mxu0 0.0
  %940 = vmatpush1.msra.mxu0 0.0
  %941 = vmatprep.subr.mxu0 0.0
  %942 = vmatpush1.msra.mxu0 0.0
  %943 = vmatprep.subr.mxu0 0.0
  %944 = vmatpush1.msra.mxu0 0.0
  %945 = vmatprep.subr.mxu0 0.0
  %946 = vmatpush1.msra.mxu0 0.0
  %947 = vmatprep.subr.mxu0 0.0
  %948 = vmatpush1.msra.mxu0 0.0
  %949 = vmatprep.subr.mxu0 0.0
  %950 = vmatpush1.msra.mxu0 0.0
  %951 = vmatprep.subr.mxu0 0.0
  %952 = vmatpush1.msra.mxu0 0.0
  %953 = vmatprep.subr.mxu0 0.0
  %954 = vmatpush1.msra.mxu0 0.0
  %955 = vmatprep.subr.mxu0 0.0
  %956 = vmatpush1.msra.mxu0 0.0
  %957 = vmatprep.subr.mxu0 0.0
  %958 = vmatpush1.msra.mxu0 0.0
  %959 = vmatprep.subr.mxu0 0.0
  %960 = vmatpush1.msra.mxu0 0.0
  %961 = vmatprep.subr.mxu0 0.0
  %962 = vmatpush1.msra.mxu0 0.0
  %963 = vmatprep.subr.mxu0 0.0
  %964 = vmatpush1.msra.mxu0 0.0
  %965 = vmatprep.subr.mxu0 0.0
  %966 = vmatpush1.msra.mxu0 0.0
  %967 = vmatprep.subr.mxu0 0.0
  %968 = vmatpush1.msra.mxu0 0.0
  %969 = vmatprep.subr.mxu0 0.0
  %970 = vmatpush1.msra.mxu0 0.0
  %971 = vmatprep.subr.mxu0 0.0
  %972 = vmatpush1.msra.mxu0 0.0
  %973 = vmatprep.subr.mxu0 0.0
  %974 = vmatpush1.msra.mxu0 0.0
  %975 = vmatprep.subr.mxu0 0.0
  %976 = vmatpush1.msra.mxu0 0.0
  %977 = vmatprep.mubr.f32.mxu0 0.0
  %978 = vmatmul.mubr.f32.gmra.mrb[0].mxu0 %v911
  %v979 = vpop.f32.mrb[0].mxu0
  %v980 = vadd.f32 %v907, %v979
  %v981 = vpop.f32.mrb[0].mxu0
  %982 = vdwg.mxu0
  %v983 = vld [vmem:[%s23] sm:$0x1]
  %v984 = vld [vmem:[%s25] sm:$0x1]
  %v985 = vld [vmem:[%s27] sm:$0xff]
  %v986 = vld [vmem:[%s27 + $0x8] sm:$0xff]
  %v987 = vld [vmem:[%s29] sm:$0xff]
  %v988 = vld [vmem:[%s29 + $0x8] sm:$0xff]
  %vm989 = vcmask 123904
  %v990 = vsel %vm989, %v980, 0.0
  %v991 = vrot.slane %v990, 4
  %v992 = vadd.f32 %v990, %v991
  %v993 = vrot.slane %v992, 2
  %v994 = vadd.f32 %v992, %v993
  %v995 = vrot.slane %v994, 1
  %v996 = vadd.f32 %v994, %v995
  %v998 = vsel %vm889, %v996, 0
  %1000 = vmatprep.subr.mxu0 0.0
  %1001 = vmatpush1.msra.mxu0 %v985
  %1002 = vmatprep.subr.mxu0 0.0
  %1003 = vmatpush1.msra.mxu0 %v986
  %1004 = vmatprep.subr.mxu0 0.0
  %1005 = vmatpush1.msra.mxu0 0.0
  %1006 = vmatprep.subr.mxu0 0.0
  %1007 = vmatpush1.msra.mxu0 0.0
  %1008 = vmatprep.subr.mxu0 0.0
  %1009 = vmatpush1.msra.mxu0 0.0
  %1010 = vmatprep.subr.mxu0 0.0
  %1011 = vmatpush1.msra.mxu0 0.0
  %1012 = vmatprep.subr.mxu0 0.0
  %1013 = vmatpush1.msra.mxu0 0.0
  %1014 = vmatprep.subr.mxu0 0.0
  %1015 = vmatpush1.msra.mxu0 0.0
  %1016 = vmatprep.subr.mxu0 0.0
  %1017 = vmatpush1.msra.mxu0 0.0
  %1018 = vmatprep.subr.mxu0 0.0
  %1019 = vmatpush1.msra.mxu0 0.0
  %1020 = vmatprep.subr.mxu0 0.0
  %1021 = vmatpush1.msra.mxu0 0.0
  %1022 = vmatprep.subr.mxu0 0.0
  %1023 = vmatpush1.msra.mxu0 0.0
  %1024 = vmatprep.subr.mxu0 0.0
  %1025 = vmatpush1.msra.mxu0 0.0
  %1026 = vmatprep.subr.mxu0 0.0
  %1027 = vmatpush1.msra.mxu0 0.0
  %1028 = vmatprep.subr.mxu0 0.0
  %1029 = vmatpush1.msra.mxu0 0.0
  %1030 = vmatprep.subr.mxu0 0.0
  %1031 = vmatpush1.msra.mxu0 0.0
  %1032 = vmatprep.subr.mxu0 0.0
  %1033 = vmatpush1.msra.mxu0 0.0
  %1034 = vmatprep.subr.mxu0 0.0
  %1035 = vmatpush1.msra.mxu0 0.0
  %1036 = vmatprep.subr.mxu0 0.0
  %1037 = vmatpush1.msra.mxu0 0.0
  %1038 = vmatprep.subr.mxu0 0.0
  %1039 = vmatpush1.msra.mxu0 0.0
  %1040 = vmatprep.subr.mxu0 0.0
  %1041 = vmatpush1.msra.mxu0 0.0
  %1042 = vmatprep.subr.mxu0 0.0
  %1043 = vmatpush1.msra.mxu0 0.0
  %1044 = vmatprep.subr.mxu0 0.0
  %1045 = vmatpush1.msra.mxu0 0.0
  %1046 = vmatprep.subr.mxu0 0.0
  %1047 = vmatpush1.msra.mxu0 0.0
  %1048 = vmatprep.subr.mxu0 0.0
  %1049 = vmatpush1.msra.mxu0 0.0
  %1050 = vmatprep.subr.mxu0 0.0
  %1051 = vmatpush1.msra.mxu0 0.0
  %1052 = vmatprep.subr.mxu0 0.0
  %1053 = vmatpush1.msra.mxu0 0.0
  %1054 = vmatprep.subr.mxu0 0.0
  %1055 = vmatpush1.msra.mxu0 0.0
  %1056 = vmatprep.subr.mxu0 0.0
  %1057 = vmatpush1.msra.mxu0 0.0
  %1058 = vmatprep.subr.mxu0 0.0
  %1059 = vmatpush1.msra.mxu0 0.0
  %1060 = vmatprep.subr.mxu0 0.0
  %1061 = vmatpush1.msra.mxu0 0.0
  %1062 = vmatprep.subr.mxu0 0.0
  %1063 = vmatpush1.msra.mxu0 0.0
  %1064 = vmatprep.mubr.f32.mxu0 0.0
  %1065 = vmatmul.mubr.f32.gmra.mrb[0].mxu0 %v998
  %v1066 = vpop.f32.mrb[0].mxu0
  %v1067 = vadd.f32 0.0, %v1066
  %v1068 = vpop.f32.mrb[0].mxu0
  %1069 = vdwg.mxu0
  %v1070 = vmul.f32 %v1067, 0.5
  %v1072 = vsel %vm889, %v1070, 0
  %1074 = vmatprep.subr.mxu0 0.0
  %1075 = vmatpush1.msra.mxu0 %v987
  %1076 = vmatprep.subr.mxu0 0.0
  %1077 = vmatpush1.msra.mxu0 %v988
  %1078 = vmatprep.subr.mxu0 0.0
  %1079 = vmatpush1.msra.mxu0 0.0
  %1080 = vmatprep.subr.mxu0 0.0
  %1081 = vmatpush1.msra.mxu0 0.0
  %1082 = vmatprep.subr.mxu0 0.0
  %1083 = vmatpush1.msra.mxu0 0.0
  %1084 = vmatprep.subr.mxu0 0.0
  %1085 = vmatpush1.msra.mxu0 0.0
  %1086 = vmatprep.subr.mxu0 0.0
  %1087 = vmatpush1.msra.mxu0 0.0
  %1088 = vmatprep.subr.mxu0 0.0
  %1089 = vmatpush1.msra.mxu0 0.0
  %1090 = vmatprep.subr.mxu0 0.0
  %1091 = vmatpush1.msra.mxu0 0.0
  %1092 = vmatprep.subr.mxu0 0.0
  %1093 = vmatpush1.msra.mxu0 0.0
  %1094 = vmatprep.subr.mxu0 0.0
  %1095 = vmatpush1.msra.mxu0 0.0
  %1096 = vmatprep.subr.mxu0 0.0
  %1097 = vmatpush1.msra.mxu0 0.0
  %1098 = vmatprep.subr.mxu0 0.0
  %1099 = vmatpush1.msra.mxu0 0.0
  %1100 = vmatprep.subr.mxu0 0.0
  %1101 = vmatpush1.msra.mxu0 0.0
  %1102 = vmatprep.subr.mxu0 0.0
  %1103 = vmatpush1.msra.mxu0 0.0
  %1104 = vmatprep.subr.mxu0 0.0
  %1105 = vmatpush1.msra.mxu0 0.0
  %1106 = vmatprep.subr.mxu0 0.0
  %1107 = vmatpush1.msra.mxu0 0.0
  %1108 = vmatprep.subr.mxu0 0.0
  %1109 = vmatpush1.msra.mxu0 0.0
  %1110 = vmatprep.subr.mxu0 0.0
  %1111 = vmatpush1.msra.mxu0 0.0
  %1112 = vmatprep.subr.mxu0 0.0
  %1113 = vmatpush1.msra.mxu0 0.0
  %1114 = vmatprep.subr.mxu0 0.0
  %1115 = vmatpush1.msra.mxu0 0.0
  %1116 = vmatprep.subr.mxu0 0.0
  %1117 = vmatpush1.msra.mxu0 0.0
  %1118 = vmatprep.subr.mxu0 0.0
  %1119 = vmatpush1.msra.mxu0 0.0
  %1120 = vmatprep.subr.mxu0 0.0
  %1121 = vmatpush1.msra.mxu0 0.0
  %1122 = vmatprep.subr.mxu0 0.0
  %1123 = vmatpush1.msra.mxu0 0.0
  %1124 = vmatprep.subr.mxu0 0.0
  %1125 = vmatpush1.msra.mxu0 0.0
  %1126 = vmatprep.subr.mxu0 0.0
  %1127 = vmatpush1.msra.mxu0 0.0
  %1128 = vmatprep.subr.mxu0 0.0
  %1129 = vmatpush1.msra.mxu0 0.0
  %1130 = vmatprep.subr.mxu0 0.0
  %1131 = vmatpush1.msra.mxu0 0.0
  %1132 = vmatprep.subr.mxu0 0.0
  %1133 = vmatpush1.msra.mxu0 0.0
  %1134 = vmatprep.subr.mxu0 0.0
  %1135 = vmatpush1.msra.mxu0 0.0
  %1136 = vmatprep.subr.mxu0 0.0
  %1137 = vmatpush1.msra.mxu0 0.0
  %1138 = vmatprep.mubr.f32.mxu0 0.0
  %1139 = vmatmul.mubr.f32.gmra.mrb[0].mxu0 %v1072
  %v1140 = vpop.f32.mrb[0].mxu0
  %v1141 = vadd.f32 0.0, %v1140
  %v1142 = vpop.f32.mrb[0].mxu0
  %1143 = vdwg.mxu0
  %v1144 = vlaneseq
  %v1145 = vshrl.u32 %v1144, 7
  %v1146 = vsub.s32 0, %v1145
  %v1147 = vrot.slane %v1141, %v1146
  %v1148 = vsub.f32 %v980, %v1147
  %v1149 = vmul.f32 %v1148, %v1148
  %v1150 = vsel %vm989, %v1149, 0.0
  %v1151 = vrot.slane %v1150, 4
  %v1152 = vadd.f32 %v1150, %v1151
  %v1153 = vrot.slane %v1152, 2
  %v1154 = vadd.f32 %v1152, %v1153
  %v1155 = vrot.slane %v1154, 1
  %v1156 = vadd.f32 %v1154, %v1155
  %v1158 = vsel %vm889, %v1156, 0
  %1160 = vmatprep.subr.mxu0 0.0
  %1161 = vmatpush1.msra.mxu0 %v985
  %1162 = vmatprep.subr.mxu0 0.0
  %1163 = vmatpush1.msra.mxu0 %v986
  %1164 = vmatprep.subr.mxu0 0.0
  %1165 = vmatpush1.msra.mxu0 0.0
  %1166 = vmatprep.subr.mxu0 0.0
  %1167 = vmatpush1.msra.mxu0 0.0
  %1168 = vmatprep.subr.mxu0 0.0
  %1169 = vmatpush1.msra.mxu0 0.0
  %1170 = vmatprep.subr.mxu0 0.0
  %1171 = vmatpush1.msra.mxu0 0.0
  %1172 = vmatprep.subr.mxu0 0.0
  %1173 = vmatpush1.msra.mxu0 0.0
  %1174 = vmatprep.subr.mxu0 0.0
  %1175 = vmatpush1.msra.mxu0 0.0
  %1176 = vmatprep.subr.mxu0 0.0
  %1177 = vmatpush1.msra.mxu0 0.0
  %1178 = vmatprep.subr.mxu0 0.0
  %1179 = vmatpush1.msra.mxu0 0.0
  %1180 = vmatprep.subr.mxu0 0.0
  %1181 = vmatpush1.msra.mxu0 0.0
  %1182 = vmatprep.subr.mxu0 0.0
  %1183 = vmatpush1.msra.mxu0 0.0
  %1184 = vmatprep.subr.mxu0 0.0
  %1185 = vmatpush1.msra.mxu0 0.0
  %1186 = vmatprep.subr.mxu0 0.0
  %1187 = vmatpush1.msra.mxu0 0.0
  %1188 = vmatprep.subr.mxu0 0.0
  %1189 = vmatpush1.msra.mxu0 0.0
  %1190 = vmatprep.subr.mxu0 0.0
  %1191 = vmatpush1.msra.mxu0 0.0
  %1192 = vmatprep.subr.mxu0 0.0
  %1193 = vmatpush1.msra.mxu0 0.0
  %1194 = vmatprep.subr.mxu0 0.0
  %1195 = vmatpush1.msra.mxu0 0.0
  %1196 = vmatprep.subr.mxu0 0.0
  %1197 = vmatpush1.msra.mxu0 0.0
  %1198 = vmatprep.subr.mxu0 0.0
  %1199 = vmatpush1.msra.mxu0 0.0
  %1200 = vmatprep.subr.mxu0 0.0
  %1201 = vmatpush1.msra.mxu0 0.0
  %1202 = vmatprep.subr.mxu0 0.0
  %1203 = vmatpush1.msra.mxu0 0.0
  %1204 = vmatprep.subr.mxu0 0.0
  %1205 = vmatpush1.msra.mxu0 0.0
  %1206 = vmatprep.subr.mxu0 0.0
  %1207 = vmatpush1.msra.mxu0 0.0
  %1208 = vmatprep.subr.mxu0 0.0
  %1209 = vmatpush1.msra.mxu0 0.0
  %1210 = vmatprep.subr.mxu0 0.0
  %1211 = vmatpush1.msra.mxu0 0.0
  %1212 = vmatprep.subr.mxu0 0.0
  %1213 = vmatpush1.msra.mxu0 0.0
  %1214 = vmatprep.subr.mxu0 0.0
  %1215 = vmatpush1.msra.mxu0 0.0
  %1216 = vmatprep.subr.mxu0 0.0
  %1217 = vmatpush1.msra.mxu0 0.0
  %1218 = vmatprep.subr.mxu0 0.0
  %1219 = vmatpush1.msra.mxu0 0.0
  %1220 = vmatprep.subr.mxu0 0.0
  %1221 = vmatpush1.msra.mxu0 0.0
  %1222 = vmatprep.subr.mxu0 0.0
  %1223 = vmatpush1.msra.mxu0 0.0
  %1224 = vmatprep.mubr.f32.mxu0 0.0
  %1225 = vmatmul.mubr.f32.gmra.mrb[0].mxu0 %v1158
  %v1226 = vpop.f32.mrb[0].mxu0
  %v1227 = vadd.f32 0.0, %v1226
  %v1228 = vpop.f32.mrb[0].mxu0
  %1229 = vdwg.mxu0
  %v1230 = vmul.f32 %v1227, 0.5
  %v1231 = vadd.f32 %v1230, 1e-05
  %v1232 = vrsqrt.pop %v1231
  %v1233 = vmul.f32 %v983, %v1232
  %v1234 = vmul.f32 %v1070, %v1233
  %v1235 = vsub.f32 %v984, %v1234
  %v1237 = vsel %vm889, %v1233, 0
  %1239 = vmatprep.subr.mxu0 0.0
  %1240 = vmatpush1.msra.mxu0 %v987
  %1241 = vmatprep.subr.mxu0 0.0
  %1242 = vmatpush1.msra.mxu0 %v988
  %1243 = vmatprep.subr.mxu0 0.0
  %1244 = vmatpush1.msra.mxu0 0.0
  %1245 = vmatprep.subr.mxu0 0.0
  %1246 = vmatpush1.msra.mxu0 0.0
  %1247 = vmatprep.subr.mxu0 0.0
  %1248 = vmatpush1.msra.mxu0 0.0
  %1249 = vmatprep.subr.mxu0 0.0
  %1250 = vmatpush1.msra.mxu0 0.0
  %1251 = vmatprep.subr.mxu0 0.0
  %1252 = vmatpush1.msra.mxu0 0.0
  %1253 = vmatprep.subr.mxu0 0.0
  %1254 = vmatpush1.msra.mxu0 0.0
  %1255 = vmatprep.subr.mxu0 0.0
  %1256 = vmatpush1.msra.mxu0 0.0
  %1257 = vmatprep.subr.mxu0 0.0
  %1258 = vmatpush1.msra.mxu0 0.0
  %1259 = vmatprep.subr.mxu0 0.0
  %1260 = vmatpush1.msra.mxu0 0.0
  %1261 = vmatprep.subr.mxu0 0.0
  %1262 = vmatpush1.msra.mxu0 0.0
  %1263 = vmatprep.subr.mxu0 0.0
  %1264 = vmatpush1.msra.mxu0 0.0
  %1265 = vmatprep.subr.mxu0 0.0
  %1266 = vmatpush1.msra.mxu0 0.0
  %1267 = vmatprep.subr.mxu0 0.0
  %1268 = vmatpush1.msra.mxu0 0.0
  %1269 = vmatprep.subr.mxu0 0.0
  %1270 = vmatpush1.msra.mxu0 0.0
  %1271 = vmatprep.subr.mxu0 0.0
  %1272 = vmatpush1.msra.mxu0 0.0
  %1273 = vmatprep.subr.mxu0 0.0
  %1274 = vmatpush1.msra.mxu0 0.0
  %1275 = vmatprep.subr.mxu0 0.0
  %1276 = vmatpush1.msra.mxu0 0.0
  %1277 = vmatprep.subr.mxu0 0.0
  %1278 = vmatpush1.msra.mxu0 0.0
  %1279 = vmatprep.subr.mxu0 0.0
  %1280 = vmatpush1.msra.mxu0 0.0
  %1281 = vmatprep.subr.mxu0 0.0
  %1282 = vmatpush1.msra.mxu0 0.0
  %1283 = vmatprep.subr.mxu0 0.0
  %1284 = vmatpush1.msra.mxu0 0.0
  %1285 = vmatprep.subr.mxu0 0.0
  %1286 = vmatpush1.msra.mxu0 0.0
  %1287 = vmatprep.subr.mxu0 0.0
  %1288 = vmatpush1.msra.mxu0 0.0
  %1289 = vmatprep.subr.mxu0 0.0
  %1290 = vmatpush1.msra.mxu0 0.0
  %1291 = vmatprep.subr.mxu0 0.0
  %1292 = vmatpush1.msra.mxu0 0.0
  %1293 = vmatprep.subr.mxu0 0.0
  %1294 = vmatpush1.msra.mxu0 0.0
  %1295 = vmatprep.subr.mxu0 0.0
  %1296 = vmatpush1.msra.mxu0 0.0
  %1297 = vmatprep.subr.mxu0 0.0
  %1298 = vmatpush1.msra.mxu0 0.0
  %1299 = vmatprep.subr.mxu0 0.0
  %1300 = vmatpush1.msra.mxu0 0.0
  %1301 = vmatprep.subr.mxu0 0.0
  %1302 = vmatpush1.msra.mxu0 0.0
  %1303 = vmatprep.mubr.f32.mxu0 0.0
  %1304 = vmatmul.mubr.f32.gmra.mrb[0].mxu0 %v1237
  %v1305 = vpop.f32.mrb[0].mxu0
  %v1306 = vadd.f32 0.0, %v1305
  %v1307 = vpop.f32.mrb[0].mxu0
  %1308 = vdwg.mxu0
  %v1310 = vsel %vm889, %v1235, 0
  %1312 = vmatprep.subr.mxu0 0.0
  %1313 = vmatpush1.msra.mxu0 %v987
  %1314 = vmatprep.subr.mxu0 0.0
  %1315 = vmatpush1.msra.mxu0 %v988
  %1316 = vmatprep.subr.mxu0 0.0
  %1317 = vmatpush1.msra.mxu0 0.0
  %1318 = vmatprep.subr.mxu0 0.0
  %1319 = vmatpush1.msra.mxu0 0.0
  %1320 = vmatprep.subr.mxu0 0.0
  %1321 = vmatpush1.msra.mxu0 0.0
  %1322 = vmatprep.subr.mxu0 0.0
  %1323 = vmatpush1.msra.mxu0 0.0
  %1324 = vmatprep.subr.mxu0 0.0
  %1325 = vmatpush1.msra.mxu0 0.0
  %1326 = vmatprep.subr.mxu0 0.0
  %1327 = vmatpush1.msra.mxu0 0.0
  %1328 = vmatprep.subr.mxu0 0.0
  %1329 = vmatpush1.msra.mxu0 0.0
  %1330 = vmatprep.subr.mxu0 0.0
  %1331 = vmatpush1.msra.mxu0 0.0
  %1332 = vmatprep.subr.mxu0 0.0
  %1333 = vmatpush1.msra.mxu0 0.0
  %1334 = vmatprep.subr.mxu0 0.0
  %1335 = vmatpush1.msra.mxu0 0.0
  %1336 = vmatprep.subr.mxu0 0.0
  %1337 = vmatpush1.msra.mxu0 0.0
  %1338 = vmatprep.subr.mxu0 0.0
  %1339 = vmatpush1.msra.mxu0 0.0
  %1340 = vmatprep.subr.mxu0 0.0
  %1341 = vmatpush1.msra.mxu0 0.0
  %1342 = vmatprep.subr.mxu0 0.0
  %1343 = vmatpush1.msra.mxu0 0.0
  %1344 = vmatprep.subr.mxu0 0.0
  %1345 = vmatpush1.msra.mxu0 0.0
  %1346 = vmatprep.subr.mxu0 0.0
  %1347 = vmatpush1.msra.mxu0 0.0
  %1348 = vmatprep.subr.mxu0 0.0
  %1349 = vmatpush1.msra.mxu0 0.0
  %1350 = vmatprep.subr.mxu0 0.0
  %1351 = vmatpush1.msra.mxu0 0.0
  %1352 = vmatprep.subr.mxu0 0.0
  %1353 = vmatpush1.msra.mxu0 0.0
  %1354 = vmatprep.subr.mxu0 0.0
  %1355 = vmatpush1.msra.mxu0 0.0
  %1356 = vmatprep.subr.mxu0 0.0
  %1357 = vmatpush1.msra.mxu0 0.0
  %1358 = vmatprep.subr.mxu0 0.0
  %1359 = vmatpush1.msra.mxu0 0.0
  %1360 = vmatprep.subr.mxu0 0.0
  %1361 = vmatpush1.msra.mxu0 0.0
  %1362 = vmatprep.subr.mxu0 0.0
  %1363 = vmatpush1.msra.mxu0 0.0
  %1364 = vmatprep.subr.mxu0 0.0
  %1365 = vmatpush1.msra.mxu0 0.0
  %1366 = vmatprep.subr.mxu0 0.0
  %1367 = vmatpush1.msra.mxu0 0.0
  %1368 = vmatprep.subr.mxu0 0.0
  %1369 = vmatpush1.msra.mxu0 0.0
  %1370 = vmatprep.subr.mxu0 0.0
  %1371 = vmatpush1.msra.mxu0 0.0
  %1372 = vmatprep.subr.mxu0 0.0
  %1373 = vmatpush1.msra.mxu0 0.0
  %1374 = vmatprep.subr.mxu0 0.0
  %1375 = vmatpush1.msra.mxu0 0.0
  %1376 = vmatprep.mubr.f32.mxu0 0.0
  %1377 = vmatmul.mubr.f32.gmra.mrb[0].mxu0 %v1310
  %v1378 = vpop.f32.mrb[0].mxu0
  %v1379 = vadd.f32 0.0, %v1378
  %v1380 = vpop.f32.mrb[0].mxu0
  %1381 = vdwg.mxu0
  %v1382 = vlaneseq
  %v1383 = vshrl.u32 %v1382, 7
  %v1384 = vsub.s32 0, %v1383
  %v1385 = vrot.slane %v1306, %v1384
  %v1386 = vmul.f32 %v980, %v1385
  %v1387 = vlaneseq
  %v1388 = vshrl.u32 %v1387, 7
  %v1389 = vsub.s32 0, %v1388
  %v1390 = vrot.slane %v1379, %v1389
  %v1391 = vadd.f32 %v1386, %v1390
  %v1392 = vmax.f32 %v1391, 0.0
  %v1393 = vld [vmem:[%s31] sm:$0xff]
  %v1394 = vld [vmem:[%s31 + $0x8] sm:$0xff]
  %v1395 = vld [vmem:[%s31 + $0x10] sm:$0xff]
  %v1396 = vld [vmem:[%s31 + $0x18] sm:$0xff]
  %v1397 = vld [vmem:[%s31 + $0x20] sm:$0xff]
  %v1398 = vld [vmem:[%s31 + $0x28] sm:$0xff]
  %v1399 = vld [vmem:[%s31 + $0x30] sm:$0xff]
  %v1400 = vld [vmem:[%s31 + $0x38] sm:$0xff]
  %v1401 = vld [vmem:[%s31 + $0x40] sm:$0xff]
  %v1402 = vld [vmem:[%s31 + $0x48] sm:$0xff]
  %v1403 = vld [vmem:[%s31 + $0x50] sm:$0xf]
  %v1404 = vld [vmem:[%s33] sm:$0xff]
  %v1405 = vld [vmem:[%s33 + $0x8] sm:$0xff]
  %v1406 = vld [vmem:[%s33 + $0x10] sm:$0xff]
  %v1407 = vld [vmem:[%s33 + $0x18] sm:$0xff]
  %v1408 = vld [vmem:[%s33 + $0x20] sm:$0xff]
  %v1409 = vld [vmem:[%s33 + $0x28] sm:$0xff]
  %v1410 = vld [vmem:[%s33 + $0x30] sm:$0xff]
  %v1411 = vld [vmem:[%s33 + $0x38] sm:$0xff]
  %v1412 = vld [vmem:[%s33 + $0x40] sm:$0xff]
  %v1413 = vld [vmem:[%s33 + $0x48] sm:$0xff]
  %v1414 = vld [vmem:[%s33 + $0x50] sm:$0xff]
  %v1415 = vld [vmem:[%s33 + $0x58] sm:$0xff]
  %v1416 = vld [vmem:[%s33 + $0x60] sm:$0xff]
  %v1417 = vld [vmem:[%s33 + $0x68] sm:$0xff]
  %v1418 = vld [vmem:[%s35] sm:$0x1]
  %v1420 = vsel %vm167, %v1393, 0
  %v1423 = vsel %vm167, %v1394, 0
  %v1426 = vsel %vm167, %v1395, 0
  %v1429 = vsel %vm167, %v1396, 0
  %v1432 = vsel %vm167, %v1397, 0
  %v1435 = vsel %vm167, %v1398, 0
  %v1438 = vsel %vm167, %v1399, 0
  %v1441 = vsel %vm167, %v1400, 0
  %v1444 = vsel %vm167, %v1401, 0
  %v1447 = vsel %vm167, %v1402, 0
  %v1450 = vsel %vm167, %v1403, 0
  %v1453 = vsel %vm171, %v1392, 0
  %1455 = vmatprep.subr.mxu0 0.0
  %1456 = vmatpush1.msra.mxu0 %v1453
  %1457 = vmatprep.subr.mxu0 0.0
  %1458 = vmatpush1.msra.mxu0 0.0
  %1459 = vmatprep.subr.mxu0 0.0
  %1460 = vmatpush1.msra.mxu0 0.0
  %1461 = vmatprep.subr.mxu0 0.0
  %1462 = vmatpush1.msra.mxu0 0.0
  %1463 = vmatprep.subr.mxu0 0.0
  %1464 = vmatpush1.msra.mxu0 0.0
  %1465 = vmatprep.subr.mxu0 0.0
  %1466 = vmatpush1.msra.mxu0 0.0
  %1467 = vmatprep.subr.mxu0 0.0
  %1468 = vmatpush1.msra.mxu0 0.0
  %1469 = vmatprep.subr.mxu0 0.0
  %1470 = vmatpush1.msra.mxu0 0.0
  %1471 = vmatprep.subr.mxu0 0.0
  %1472 = vmatpush1.msra.mxu0 0.0
  %1473 = vmatprep.subr.mxu0 0.0
  %1474 = vmatpush1.msra.mxu0 0.0
  %1475 = vmatprep.subr.mxu0 0.0
  %1476 = vmatpush1.msra.mxu0 0.0
  %1477 = vmatprep.subr.mxu0 0.0
  %1478 = vmatpush1.msra.mxu0 0.0
  %1479 = vmatprep.subr.mxu0 0.0
  %1480 = vmatpush1.msra.mxu0 0.0
  %1481 = vmatprep.subr.mxu0 0.0
  %1482 = vmatpush1.msra.mxu0 0.0
  %1483 = vmatprep.subr.mxu0 0.0
  %1484 = vmatpush1.msra.mxu0 0.0
  %1485 = vmatprep.subr.mxu0 0.0
  %1486 = vmatpush1.msra.mxu0 0.0
  %1487 = vmatprep.subr.mxu0 0.0
  %1488 = vmatpush1.msra.mxu0 0.0
  %1489 = vmatprep.subr.mxu0 0.0
  %1490 = vmatpush1.msra.mxu0 0.0
  %1491 = vmatprep.subr.mxu0 0.0
  %1492 = vmatpush1.msra.mxu0 0.0
  %1493 = vmatprep.subr.mxu0 0.0
  %1494 = vmatpush1.msra.mxu0 0.0
  %1495 = vmatprep.subr.mxu0 0.0
  %1496 = vmatpush1.msra.mxu0 0.0
  %1497 = vmatprep.subr.mxu0 0.0
  %1498 = vmatpush1.msra.mxu0 0.0
  %1499 = vmatprep.subr.mxu0 0.0
  %1500 = vmatpush1.msra.mxu0 0.0
  %1501 = vmatprep.subr.mxu0 0.0
  %1502 = vmatpush1.msra.mxu0 0.0
  %1503 = vmatprep.subr.mxu0 0.0
  %1504 = vmatpush1.msra.mxu0 0.0
  %1505 = vmatprep.subr.mxu0 0.0
  %1506 = vmatpush1.msra.mxu0 0.0
  %1507 = vmatprep.subr.mxu0 0.0
  %1508 = vmatpush1.msra.mxu0 0.0
  %1509 = vmatprep.subr.mxu0 0.0
  %1510 = vmatpush1.msra.mxu0 0.0
  %1511 = vmatprep.subr.mxu0 0.0
  %1512 = vmatpush1.msra.mxu0 0.0
  %1513 = vmatprep.subr.mxu0 0.0
  %1514 = vmatpush1.msra.mxu0 0.0
  %1515 = vmatprep.subr.mxu0 0.0
  %1516 = vmatpush1.msra.mxu0 0.0
  %1517 = vmatprep.subr.mxu0 0.0
  %1518 = vmatpush1.msra.mxu0 0.0
  %1519 = vmatprep.mubr.f32.mxu0 0.0
  %1520 = vmatmul.mubr.f32.gmra.mrb[0].mxu0 %v1420
  %v1521 = vpop.f32.mrb[0].mxu0
  %v1522 = vadd.f32 0.0, %v1521
  %v1523 = vpop.f32.mrb[0].mxu0
  %1524 = vmatprep.mubr.f32.mxu0 0.0
  %1525 = vmatmul.mubr.f32.gmra.mrb[0].mxu0 %v1423
  %v1526 = vpop.f32.mrb[0].mxu0
  %v1527 = vadd.f32 0.0, %v1526
  %v1528 = vpop.f32.mrb[0].mxu0
  %1529 = vmatprep.mubr.f32.mxu0 0.0
  %1530 = vmatmul.mubr.f32.gmra.mrb[0].mxu0 %v1426
  %v1531 = vpop.f32.mrb[0].mxu0
  %v1532 = vadd.f32 0.0, %v1531
  %v1533 = vpop.f32.mrb[0].mxu0
  %1534 = vmatprep.mubr.f32.mxu0 0.0
  %1535 = vmatmul.mubr.f32.gmra.mrb[0].mxu0 %v1429
  %v1536 = vpop.f32.mrb[0].mxu0
  %v1537 = vadd.f32 0.0, %v1536
  %v1538 = vpop.f32.mrb[0].mxu0
  %1539 = vmatprep.mubr.f32.mxu0 0.0
  %1540 = vmatmul.mubr.f32.gmra.mrb[0].mxu0 %v1432
  %v1541 = vpop.f32.mrb[0].mxu0
  %v1542 = vadd.f32 0.0, %v1541
  %v1543 = vpop.f32.mrb[0].mxu0
  %1544 = vmatprep.mubr.f32.mxu0 0.0
  %1545 = vmatmul.mubr.f32.gmra.mrb[0].mxu0 %v1435
  %v1546 = vpop.f32.mrb[0].mxu0
  %v1547 = vadd.f32 0.0, %v1546
  %v1548 = vpop.f32.mrb[0].mxu0
  %1549 = vmatprep.mubr.f32.mxu0 0.0
  %1550 = vmatmul.mubr.f32.gmra.mrb[0].mxu0 %v1438
  %v1551 = vpop.f32.mrb[0].mxu0
  %v1552 = vadd.f32 0.0, %v1551
  %v1553 = vpop.f32.mrb[0].mxu0
  %1554 = vmatprep.mubr.f32.mxu0 0.0
  %1555 = vmatmul.mubr.f32.gmra.mrb[0].mxu0 %v1441
  %v1556 = vpop.f32.mrb[0].mxu0
  %v1557 = vadd.f32 0.0, %v1556
  %v1558 = vpop.f32.mrb[0].mxu0
  %1559 = vmatprep.mubr.f32.mxu0 0.0
  %1560 = vmatmul.mubr.f32.gmra.mrb[0].mxu0 %v1444
  %v1561 = vpop.f32.mrb[0].mxu0
  %v1562 = vadd.f32 0.0, %v1561
  %v1563 = vpop.f32.mrb[0].mxu0
  %1564 = vmatprep.mubr.f32.mxu0 0.0
  %1565 = vmatmul.mubr.f32.gmra.mrb[0].mxu0 %v1447
  %v1566 = vpop.f32.mrb[0].mxu0
  %v1567 = vadd.f32 0.0, %v1566
  %v1568 = vpop.f32.mrb[0].mxu0
  %1569 = vmatprep.mubr.f32.mxu0 0.0
  %1570 = vmatmul.mubr.f32.gmra.mrb[0].mxu0 %v1450
  %v1571 = vpop.f32.mrb[0].mxu0
  %v1572 = vadd.f32 0.0, %v1571
  %v1573 = vpop.f32.mrb[0].mxu0
  %1574 = vdwg.mxu0
  %v1577 = vrot.slane %v1527, 4
  %v1578 = vrot.slane %v1532, 4
  %v1579 = vsel %vm268, %v1577, %v1578
  %1580 = vrot.lane.b32.xlu0 %v1579, 16
  %v1581 = vpop.permute.xlu0 %1580
  %1582 = vrot.lane.b32.xlu0 %v1578, 16
  %v1583 = vpop.permute.xlu0 %1582
  %1588 = vrot.lane.b32.xlu0 %v1537, 32
  %v1589 = vpop.permute.xlu0 %1588
  %1590 = vrot.lane.b32.xlu0 %v1542, 32
  %v1591 = vpop.permute.xlu0 %1590
  %v1595 = vrot.slane %v1542, 4
  %v1596 = vrot.slane %v1547, 4
  %v1597 = vsel %vm268, %v1595, %v1596
  %1598 = vrot.lane.b32.xlu0 %v1597, 48
  %v1599 = vpop.permute.xlu0 %1598
  %1600 = vrot.lane.b32.xlu0 %v1596, 48
  %v1601 = vpop.permute.xlu0 %1600
  %1606 = vrot.lane.b32.xlu0 %v1552, 64
  %v1607 = vpop.permute.xlu0 %1606
  %1608 = vrot.lane.b32.xlu0 %v1557, 64
  %v1609 = vpop.permute.xlu0 %1608
  %v1613 = vrot.slane %v1557, 4
  %v1614 = vrot.slane %v1562, 4
  %v1615 = vsel %vm268, %v1613, %v1614
  %1616 = vrot.lane.b32.xlu0 %v1615, 80
  %v1617 = vpop.permute.xlu0 %1616
  %1618 = vrot.lane.b32.xlu0 %v1614, 80
  %v1619 = vpop.permute.xlu0 %1618
  %1624 = vrot.lane.b32.xlu0 %v1567, 96
  %v1625 = vpop.permute.xlu0 %1624
  %1626 = vrot.lane.b32.xlu0 %v1572, 96
  %v1627 = vpop.permute.xlu0 %1626
  %v1630 = vsel %vm889, %v1522, %v1581
  %v1631 = vsel %vm889, %v1527, %v1583
  %v1632 = vsel %vm893, %v1630, %v1589
  %v1633 = vsel %vm893, %v1631, %v1591
  %v1634 = vsel %vm897, %v1632, %v1599
  %v1635 = vsel %vm897, %v1633, %v1601
  %v1636 = vsel %vm901, %v1634, %v1607
  %v1637 = vsel %vm901, %v1635, %v1609
  %vm1638 = vcmask 654336
  %v1639 = vsel %vm1638, %v1636, %v1617
  %v1640 = vsel %vm1638, %v1637, %v1619
  %vm1641 = vcmask 785408
  %v1642 = vsel %vm1641, %v1639, %v1625
  %v1643 = vsel %vm1641, %v1640, %v1627
  %v1645 = vlaneseq
  %v1646 = vshrl.u32 %v1645, 7
  %v1647 = vsub.s32 0, %v1646
  %v1648 = vrot.slane %v1418, %v1647
  %vm1650 = vcmask 916480
  %v1652 = vsel %vm1650, %v1642, 0
  %v1655 = vsel %vm1650, %v1643, 0
  %1657 = vmatprep.subr.mxu0 0.0
  %1658 = vmatpush1.msra.mxu0 %v1404
  %1659 = vmatprep.subr.mxu0 0.0
  %1660 = vmatpush1.msra.mxu0 %v1405
  %1661 = vmatprep.subr.mxu0 0.0
  %1662 = vmatpush1.msra.mxu0 %v1406
  %1663 = vmatprep.subr.mxu0 0.0
  %1664 = vmatpush1.msra.mxu0 %v1407
  %1665 = vmatprep.subr.mxu0 0.0
  %1666 = vmatpush1.msra.mxu0 %v1408
  %1667 = vmatprep.subr.mxu0 0.0
  %1668 = vmatpush1.msra.mxu0 %v1409
  %1669 = vmatprep.subr.mxu0 0.0
  %1670 = vmatpush1.msra.mxu0 %v1410
  %1671 = vmatprep.subr.mxu0 0.0
  %1672 = vmatpush1.msra.mxu0 %v1411
  %1673 = vmatprep.subr.mxu0 0.0
  %1674 = vmatpush1.msra.mxu0 %v1412
  %1675 = vmatprep.subr.mxu0 0.0
  %1676 = vmatpush1.msra.mxu0 %v1413
  %1677 = vmatprep.subr.mxu0 0.0
  %1678 = vmatpush1.msra.mxu0 %v1414
  %1679 = vmatprep.subr.mxu0 0.0
  %1680 = vmatpush1.msra.mxu0 %v1415
  %1681 = vmatprep.subr.mxu0 0.0
  %1682 = vmatpush1.msra.mxu0 %v1416
  %1683 = vmatprep.subr.mxu0 0.0
  %1684 = vmatpush1.msra.mxu0 %v1417
  %1685 = vmatprep.subr.mxu0 0.0
  %1686 = vmatpush1.msra.mxu0 0.0
  %1687 = vmatprep.subr.mxu0 0.0
  %1688 = vmatpush1.msra.mxu0 0.0
  %1689 = vmatprep.subr.mxu0 0.0
  %1690 = vmatpush1.msra.mxu0 0.0
  %1691 = vmatprep.subr.mxu0 0.0
  %1692 = vmatpush1.msra.mxu0 0.0
  %1693 = vmatprep.subr.mxu0 0.0
  %1694 = vmatpush1.msra.mxu0 0.0
  %1695 = vmatprep.subr.mxu0 0.0
  %1696 = vmatpush1.msra.mxu0 0.0
  %1697 = vmatprep.subr.mxu0 0.0
  %1698 = vmatpush1.msra.mxu0 0.0
  %1699 = vmatprep.subr.mxu0 0.0
  %1700 = vmatpush1.msra.mxu0 0.0
  %1701 = vmatprep.subr.mxu0 0.0
  %1702 = vmatpush1.msra.mxu0 0.0
  %1703 = vmatprep.subr.mxu0 0.0
  %1704 = vmatpush1.msra.mxu0 0.0
  %1705 = vmatprep.subr.mxu0 0.0
  %1706 = vmatpush1.msra.mxu0 0.0
  %1707 = vmatprep.subr.mxu0 0.0
  %1708 = vmatpush1.msra.mxu0 0.0
  %1709 = vmatprep.subr.mxu0 0.0
  %1710 = vmatpush1.msra.mxu0 0.0
  %1711 = vmatprep.subr.mxu0 0.0
  %1712 = vmatpush1.msra.mxu0 0.0
  %1713 = vmatprep.subr.mxu0 0.0
  %1714 = vmatpush1.msra.mxu0 0.0
  %1715 = vmatprep.subr.mxu0 0.0
  %1716 = vmatpush1.msra.mxu0 0.0
  %1717 = vmatprep.subr.mxu0 0.0
  %1718 = vmatpush1.msra.mxu0 0.0
  %1719 = vmatprep.subr.mxu0 0.0
  %1720 = vmatpush1.msra.mxu0 0.0
  %1721 = vmatprep.mubr.f32.mxu0 0.0
  %1722 = vmatmul.mubr.f32.gmra.mrb[0].mxu0 %v1652
  %v1723 = vpop.f32.mrb[0].mxu0
  %v1724 = vadd.f32 %v1648, %v1723
  %v1725 = vpop.f32.mrb[0].mxu0
  %1726 = vmatprep.mubr.f32.mxu0 0.0
  %1727 = vmatmul.mubr.f32.gmra.mrb[0].mxu0 %v1655
  %v1728 = vpop.f32.mrb[0].mxu0
  %v1729 = vadd.f32 %v1648, %v1728
  %v1730 = vpop.f32.mrb[0].mxu0
  %1731 = vdwg.mxu0
  %v1732 = vld [vmem:[%s37] sm:$0x1]
  %v1733 = vld [vmem:[%s39] sm:$0x1]
  %v1734 = vld [vmem:[%s41] sm:$0xff]
  %v1735 = vld [vmem:[%s41 + $0x8] sm:$0xff]
  %v1736 = vld [vmem:[%s41 + $0x10] sm:$0xff]
  %v1737 = vld [vmem:[%s41 + $0x18] sm:$0xff]
  %v1738 = vld [vmem:[%s41 + $0x20] sm:$0xff]
  %v1739 = vld [vmem:[%s41 + $0x28] sm:$0xff]
  %v1740 = vld [vmem:[%s41 + $0x30] sm:$0xff]
  %v1741 = vld [vmem:[%s41 + $0x38] sm:$0xff]
  %v1742 = vld [vmem:[%s41 + $0x40] sm:$0xff]
  %v1743 = vld [vmem:[%s41 + $0x48] sm:$0xff]
  %v1744 = vld [vmem:[%s41 + $0x50] sm:$0xff]
  %v1745 = vld [vmem:[%s41 + $0x58] sm:$0xff]
  %v1746 = vld [vmem:[%s43] sm:$0xff]
  %v1747 = vld [vmem:[%s43 + $0x8] sm:$0xff]
  %v1748 = vsel %vm1641, %v1724, 0.0
  %vm1749 = vcmask 781312
  %v1750 = vsel %vm1749, %v1729, 0.0
  %v1751 = vadd.f32 %v1748, %v1750
  %v1752 = vrot.slane %v1751, 4
  %v1753 = vadd.f32 %v1751, %v1752
  %v1754 = vrot.slane %v1753, 2
  %v1755 = vadd.f32 %v1753, %v1754
  %v1756 = vrot.slane %v1755, 1
  %v1757 = vadd.f32 %v1755, %v1756
  %v1759 = vsel %vm1641, %v1757, 0
  %1761 = vmatprep.subr.mxu0 0.0
  %1762 = vmatpush1.msra.mxu0 %v1734
  %1763 = vmatprep.subr.mxu0 0.0
  %1764 = vmatpush1.msra.mxu0 %v1735
  %1765 = vmatprep.subr.mxu0 0.0
  %1766 = vmatpush1.msra.mxu0 %v1736
  %1767 = vmatprep.subr.mxu0 0.0
  %1768 = vmatpush1.msra.mxu0 %v1737
  %1769 = vmatprep.subr.mxu0 0.0
  %1770 = vmatpush1.msra.mxu0 %v1738
  %1771 = vmatprep.subr.mxu0 0.0
  %1772 = vmatpush1.msra.mxu0 %v1739
  %1773 = vmatprep.subr.mxu0 0.0
  %1774 = vmatpush1.msra.mxu0 %v1740
  %1775 = vmatprep.subr.mxu0 0.0
  %1776 = vmatpush1.msra.mxu0 %v1741
  %1777 = vmatprep.subr.mxu0 0.0
  %1778 = vmatpush1.msra.mxu0 %v1742
  %1779 = vmatprep.subr.mxu0 0.0
  %1780 = vmatpush1.msra.mxu0 %v1743
  %1781 = vmatprep.subr.mxu0 0.0
  %1782 = vmatpush1.msra.mxu0 %v1744
  %1783 = vmatprep.subr.mxu0 0.0
  %1784 = vmatpush1.msra.mxu0 %v1745
  %1785 = vmatprep.subr.mxu0 0.0
  %1786 = vmatpush1.msra.mxu0 0.0
  %1787 = vmatprep.subr.mxu0 0.0
  %1788 = vmatpush1.msra.mxu0 0.0
  %1789 = vmatprep.subr.mxu0 0.0
  %1790 = vmatpush1.msra.mxu0 0.0
  %1791 = vmatprep.subr.mxu0 0.0
  %1792 = vmatpush1.msra.mxu0 0.0
  %1793 = vmatprep.subr.mxu0 0.0
  %1794 = vmatpush1.msra.mxu0 0.0
  %1795 = vmatprep.subr.mxu0 0.0
  %1796 = vmatpush1.msra.mxu0 0.0
  %1797 = vmatprep.subr.mxu0 0.0
  %1798 = vmatpush1.msra.mxu0 0.0
  %1799 = vmatprep.subr.mxu0 0.0
  %1800 = vmatpush1.msra.mxu0 0.0
  %1801 = vmatprep.subr.mxu0 0.0
  %1802 = vmatpush1.msra.mxu0 0.0
  %1803 = vmatprep.subr.mxu0 0.0
  %1804 = vmatpush1.msra.mxu0 0.0
  %1805 = vmatprep.subr.mxu0 0.0
  %1806 = vmatpush1.msra.mxu0 0.0
  %1807 = vmatprep.subr.mxu0 0.0
  %1808 = vmatpush1.msra.mxu0 0.0
  %1809 = vmatprep.subr.mxu0 0.0
  %1810 = vmatpush1.msra.mxu0 0.0
  %1811 = vmatprep.subr.mxu0 0.0
  %1812 = vmatpush1.msra.mxu0 0.0
  %1813 = vmatprep.subr.mxu0 0.0
  %1814 = vmatpush1.msra.mxu0 0.0
  %1815 = vmatprep.subr.mxu0 0.0
  %1816 = vmatpush1.msra.mxu0 0.0
  %1817 = vmatprep.subr.mxu0 0.0
  %1818 = vmatpush1.msra.mxu0 0.0
  %1819 = vmatprep.subr.mxu0 0.0
  %1820 = vmatpush1.msra.mxu0 0.0
  %1821 = vmatprep.subr.mxu0 0.0
  %1822 = vmatpush1.msra.mxu0 0.0
  %1823 = vmatprep.subr.mxu0 0.0
  %1824 = vmatpush1.msra.mxu0 0.0
  %1825 = vmatprep.mubr.f32.mxu0 0.0
  %1826 = vmatmul.mubr.f32.gmra.mrb[0].mxu0 %v1759
  %v1827 = vpop.f32.mrb[0].mxu0
  %v1828 = vadd.f32 0.0, %v1827
  %v1829 = vpop.f32.mrb[0].mxu0
  %1830 = vdwg.mxu0
  %v1831 = vmul.f32 %v1828, 0.013888889
  %v1833 = vsel %vm889, %v1831, 0
  %1835 = vmatprep.subr.mxu0 0.0
  %1836 = vmatpush1.msra.mxu0 %v1746
  %1837 = vmatprep.subr.mxu0 0.0
  %1838 = vmatpush1.msra.mxu0 %v1747
  %1839 = vmatprep.subr.mxu0 0.0
  %1840 = vmatpush1.msra.mxu0 0.0
  %1841 = vmatprep.subr.mxu0 0.0
  %1842 = vmatpush1.msra.mxu0 0.0
  %1843 = vmatprep.subr.mxu0 0.0
  %1844 = vmatpush1.msra.mxu0 0.0
  %1845 = vmatprep.subr.mxu0 0.0
  %1846 = vmatpush1.msra.mxu0 0.0
  %1847 = vmatprep.subr.mxu0 0.0
  %1848 = vmatpush1.msra.mxu0 0.0
  %1849 = vmatprep.subr.mxu0 0.0
  %1850 = vmatpush1.msra.mxu0 0.0
  %1851 = vmatprep.subr.mxu0 0.0
  %1852 = vmatpush1.msra.mxu0 0.0
  %1853 = vmatprep.subr.mxu0 0.0
  %1854 = vmatpush1.msra.mxu0 0.0
  %1855 = vmatprep.subr.mxu0 0.0
  %1856 = vmatpush1.msra.mxu0 0.0
  %1857 = vmatprep.subr.mxu0 0.0
  %1858 = vmatpush1.msra.mxu0 0.0
  %1859 = vmatprep.subr.mxu0 0.0
  %1860 = vmatpush1.msra.mxu0 0.0
  %1861 = vmatprep.subr.mxu0 0.0
  %1862 = vmatpush1.msra.mxu0 0.0
  %1863 = vmatprep.subr.mxu0 0.0
  %1864 = vmatpush1.msra.mxu0 0.0
  %1865 = vmatprep.subr.mxu0 0.0
  %1866 = vmatpush1.msra.mxu0 0.0
  %1867 = vmatprep.subr.mxu0 0.0
  %1868 = vmatpush1.msra.mxu0 0.0
  %1869 = vmatprep.subr.mxu0 0.0
  %1870 = vmatpush1.msra.mxu0 0.0
  %1871 = vmatprep.subr.mxu0 0.0
  %1872 = vmatpush1.msra.mxu0 0.0
  %1873 = vmatprep.subr.mxu0 0.0
  %1874 = vmatpush1.msra.mxu0 0.0
  %1875 = vmatprep.subr.mxu0 0.0
  %1876 = vmatpush1.msra.mxu0 0.0
  %1877 = vmatprep.subr.mxu0 0.0
  %1878 = vmatpush1.msra.mxu0 0.0
  %1879 = vmatprep.subr.mxu0 0.0
  %1880 = vmatpush1.msra.mxu0 0.0
  %1881 = vmatprep.subr.mxu0 0.0
  %1882 = vmatpush1.msra.mxu0 0.0
  %1883 = vmatprep.subr.mxu0 0.0
  %1884 = vmatpush1.msra.mxu0 0.0
  %1885 = vmatprep.subr.mxu0 0.0
  %1886 = vmatpush1.msra.mxu0 0.0
  %1887 = vmatprep.subr.mxu0 0.0
  %1888 = vmatpush1.msra.mxu0 0.0
  %1889 = vmatprep.subr.mxu0 0.0
  %1890 = vmatpush1.msra.mxu0 0.0
  %1891 = vmatprep.subr.mxu0 0.0
  %1892 = vmatpush1.msra.mxu0 0.0
  %1893 = vmatprep.subr.mxu0 0.0
  %1894 = vmatpush1.msra.mxu0 0.0
  %1895 = vmatprep.subr.mxu0 0.0
  %1896 = vmatpush1.msra.mxu0 0.0
  %1897 = vmatprep.subr.mxu0 0.0
  %1898 = vmatpush1.msra.mxu0 0.0
  %1899 = vmatprep.mubr.f32.mxu0 0.0
  %1900 = vmatmul.mubr.f32.gmra.mrb[0].mxu0 %v1833
  %v1901 = vpop.f32.mrb[0].mxu0
  %v1902 = vadd.f32 0.0, %v1901
  %v1903 = vpop.f32.mrb[0].mxu0
  %1904 = vdwg.mxu0
  %v1905 = vlaneseq
  %v1906 = vshrl.u32 %v1905, 7
  %v1907 = vsub.s32 0, %v1906
  %v1908 = vrot.slane %v1902, %v1907
  %v1909 = vsub.f32 %v1724, %v1908
  %v1910 = vsub.f32 %v1729, %v1908
  %v1911 = vmul.f32 %v1909, %v1909
  %v1912 = vmul.f32 %v1910, %v1910
  %v1913 = vsel %vm1641, %v1911, 0.0
  %v1914 = vsel %vm1749, %v1912, 0.0
  %v1915 = vadd.f32 %v1913, %v1914
  %v1916 = vrot.slane %v1915, 4
  %v1917 = vadd.f32 %v1915, %v1916
  %v1918 = vrot.slane %v1917, 2
  %v1919 = vadd.f32 %v1917, %v1918
  %v1920 = vrot.slane %v1919, 1
  %v1921 = vadd.f32 %v1919, %v1920
  %v1923 = vsel %vm1641, %v1921, 0
  %1925 = vmatprep.subr.mxu0 0.0
  %1926 = vmatpush1.msra.mxu0 %v1734
  %1927 = vmatprep.subr.mxu0 0.0
  %1928 = vmatpush1.msra.mxu0 %v1735
  %1929 = vmatprep.subr.mxu0 0.0
  %1930 = vmatpush1.msra.mxu0 %v1736
  %1931 = vmatprep.subr.mxu0 0.0
  %1932 = vmatpush1.msra.mxu0 %v1737
  %1933 = vmatprep.subr.mxu0 0.0
  %1934 = vmatpush1.msra.mxu0 %v1738
  %1935 = vmatprep.subr.mxu0 0.0
  %1936 = vmatpush1.msra.mxu0 %v1739
  %1937 = vmatprep.subr.mxu0 0.0
  %1938 = vmatpush1.msra.mxu0 %v1740
  %1939 = vmatprep.subr.mxu0 0.0
  %1940 = vmatpush1.msra.mxu0 %v1741
  %1941 = vmatprep.subr.mxu0 0.0
  %1942 = vmatpush1.msra.mxu0 %v1742
  %1943 = vmatprep.subr.mxu0 0.0
  %1944 = vmatpush1.msra.mxu0 %v1743
  %1945 = vmatprep.subr.mxu0 0.0
  %1946 = vmatpush1.msra.mxu0 %v1744
  %1947 = vmatprep.subr.mxu0 0.0
  %1948 = vmatpush1.msra.mxu0 %v1745
  %1949 = vmatprep.subr.mxu0 0.0
  %1950 = vmatpush1.msra.mxu0 0.0
  %1951 = vmatprep.subr.mxu0 0.0
  %1952 = vmatpush1.msra.mxu0 0.0
  %1953 = vmatprep.subr.mxu0 0.0
  %1954 = vmatpush1.msra.mxu0 0.0
  %1955 = vmatprep.subr.mxu0 0.0
  %1956 = vmatpush1.msra.mxu0 0.0
  %1957 = vmatprep.subr.mxu0 0.0
  %1958 = vmatpush1.msra.mxu0 0.0
  %1959 = vmatprep.subr.mxu0 0.0
  %1960 = vmatpush1.msra.mxu0 0.0
  %1961 = vmatprep.subr.mxu0 0.0
  %1962 = vmatpush1.msra.mxu0 0.0
  %1963 = vmatprep.subr.mxu0 0.0
  %1964 = vmatpush1.msra.mxu0 0.0
  %1965 = vmatprep.subr.mxu0 0.0
  %1966 = vmatpush1.msra.mxu0 0.0
  %1967 = vmatprep.subr.mxu0 0.0
  %1968 = vmatpush1.msra.mxu0 0.0
  %1969 = vmatprep.subr.mxu0 0.0
  %1970 = vmatpush1.msra.mxu0 0.0
  %1971 = vmatprep.subr.mxu0 0.0
  %1972 = vmatpush1.msra.mxu0 0.0
  %1973 = vmatprep.subr.mxu0 0.0
  %1974 = vmatpush1.msra.mxu0 0.0
  %1975 = vmatprep.subr.mxu0 0.0
  %1976 = vmatpush1.msra.mxu0 0.0
  %1977 = vmatprep.subr.mxu0 0.0
  %1978 = vmatpush1.msra.mxu0 0.0
  %1979 = vmatprep.subr.mxu0 0.0
  %1980 = vmatpush1.msra.mxu0 0.0
  %1981 = vmatprep.subr.mxu0 0.0
  %1982 = vmatpush1.msra.mxu0 0.0
  %1983 = vmatprep.subr.mxu0 0.0
  %1984 = vmatpush1.msra.mxu0 0.0
  %1985 = vmatprep.subr.mxu0 0.0
  %1986 = vmatpush1.msra.mxu0 0.0
  %1987 = vmatprep.subr.mxu0 0.0
  %1988 = vmatpush1.msra.mxu0 0.0
  %1989 = vmatprep.mubr.f32.mxu0 0.0
  %1990 = vmatmul.mubr.f32.gmra.mrb[0].mxu0 %v1923
  %v1991 = vpop.f32.mrb[0].mxu0
  %v1992 = vadd.f32 0.0, %v1991
  %v1993 = vpop.f32.mrb[0].mxu0
  %1994 = vdwg.mxu0
  %v1995 = vmul.f32 %v1992, 0.013888889
  %v1996 = vadd.f32 %v1995, 1e-05
  %v1997 = vrsqrt.pop %v1996
  %v1998 = vmul.f32 %v1732, %v1997
  %v1999 = vmul.f32 %v1831, %v1998
  %v2000 = vsub.f32 %v1733, %v1999
  %v2002 = vsel %vm889, %v1998, 0
  %2004 = vmatprep.subr.mxu0 0.0
  %2005 = vmatpush1.msra.mxu0 %v1746
  %2006 = vmatprep.subr.mxu0 0.0
  %2007 = vmatpush1.msra.mxu0 %v1747
  %2008 = vmatprep.subr.mxu0 0.0
  %2009 = vmatpush1.msra.mxu0 0.0
  %2010 = vmatprep.subr.mxu0 0.0
  %2011 = vmatpush1.msra.mxu0 0.0
  %2012 = vmatprep.subr.mxu0 0.0
  %2013 = vmatpush1.msra.mxu0 0.0
  %2014 = vmatprep.subr.mxu0 0.0
  %2015 = vmatpush1.msra.mxu0 0.0
  %2016 = vmatprep.subr.mxu0 0.0
  %2017 = vmatpush1.msra.mxu0 0.0
  %2018 = vmatprep.subr.mxu0 0.0
  %2019 = vmatpush1.msra.mxu0 0.0
  %2020 = vmatprep.subr.mxu0 0.0
  %2021 = vmatpush1.msra.mxu0 0.0
  %2022 = vmatprep.subr.mxu0 0.0
  %2023 = vmatpush1.msra.mxu0 0.0
  %2024 = vmatprep.subr.mxu0 0.0
  %2025 = vmatpush1.msra.mxu0 0.0
  %2026 = vmatprep.subr.mxu0 0.0
  %2027 = vmatpush1.msra.mxu0 0.0
  %2028 = vmatprep.subr.mxu0 0.0
  %2029 = vmatpush1.msra.mxu0 0.0
  %2030 = vmatprep.subr.mxu0 0.0
  %2031 = vmatpush1.msra.mxu0 0.0
  %2032 = vmatprep.subr.mxu0 0.0
  %2033 = vmatpush1.msra.mxu0 0.0
  %2034 = vmatprep.subr.mxu0 0.0
  %2035 = vmatpush1.msra.mxu0 0.0
  %2036 = vmatprep.subr.mxu0 0.0
  %2037 = vmatpush1.msra.mxu0 0.0
  %2038 = vmatprep.subr.mxu0 0.0
  %2039 = vmatpush1.msra.mxu0 0.0
  %2040 = vmatprep.subr.mxu0 0.0
  %2041 = vmatpush1.msra.mxu0 0.0
  %2042 = vmatprep.subr.mxu0 0.0
  %2043 = vmatpush1.msra.mxu0 0.0
  %2044 = vmatprep.subr.mxu0 0.0
  %2045 = vmatpush1.msra.mxu0 0.0
  %2046 = vmatprep.subr.mxu0 0.0
  %2047 = vmatpush1.msra.mxu0 0.0
  %2048 = vmatprep.subr.mxu0 0.0
  %2049 = vmatpush1.msra.mxu0 0.0
  %2050 = vmatprep.subr.mxu0 0.0
  %2051 = vmatpush1.msra.mxu0 0.0
  %2052 = vmatprep.subr.mxu0 0.0
  %2053 = vmatpush1.msra.mxu0 0.0
  %2054 = vmatprep.subr.mxu0 0.0
  %2055 = vmatpush1.msra.mxu0 0.0
  %2056 = vmatprep.subr.mxu0 0.0
  %2057 = vmatpush1.msra.mxu0 0.0
  %2058 = vmatprep.subr.mxu0 0.0
  %2059 = vmatpush1.msra.mxu0 0.0
  %2060 = vmatprep.subr.mxu0 0.0
  %2061 = vmatpush1.msra.mxu0 0.0
  %2062 = vmatprep.subr.mxu0 0.0
  %2063 = vmatpush1.msra.mxu0 0.0
  %2064 = vmatprep.subr.mxu0 0.0
  %2065 = vmatpush1.msra.mxu0 0.0
  %2066 = vmatprep.subr.mxu0 0.0
  %2067 = vmatpush1.msra.mxu0 0.0
  %2068 = vmatprep.mubr.f32.mxu0 0.0
  %2069 = vmatmul.mubr.f32.gmra.mrb[0].mxu0 %v2002
  %v2070 = vpop.f32.mrb[0].mxu0
  %v2071 = vadd.f32 0.0, %v2070
  %v2072 = vpop.f32.mrb[0].mxu0
  %2073 = vdwg.mxu0
  %v2075 = vsel %vm889, %v2000, 0
  %2077 = vmatprep.subr.mxu0 0.0
  %2078 = vmatpush1.msra.mxu0 %v1746
  %2079 = vmatprep.subr.mxu0 0.0
  %2080 = vmatpush1.msra.mxu0 %v1747
  %2081 = vmatprep.subr.mxu0 0.0
  %2082 = vmatpush1.msra.mxu0 0.0
  %2083 = vmatprep.subr.mxu0 0.0
  %2084 = vmatpush1.msra.mxu0 0.0
  %2085 = vmatprep.subr.mxu0 0.0
  %2086 = vmatpush1.msra.mxu0 0.0
  %2087 = vmatprep.subr.mxu0 0.0
  %2088 = vmatpush1.msra.mxu0 0.0
  %2089 = vmatprep.subr.mxu0 0.0
  %2090 = vmatpush1.msra.mxu0 0.0
  %2091 = vmatprep.subr.mxu0 0.0
  %2092 = vmatpush1.msra.mxu0 0.0
  %2093 = vmatprep.subr.mxu0 0.0
  %2094 = vmatpush1.msra.mxu0 0.0
  %2095 = vmatprep.subr.mxu0 0.0
  %2096 = vmatpush1.msra.mxu0 0.0
  %2097 = vmatprep.subr.mxu0 0.0
  %2098 = vmatpush1.msra.mxu0 0.0
  %2099 = vmatprep.subr.mxu0 0.0
  %2100 = vmatpush1.msra.mxu0 0.0
  %2101 = vmatprep.subr.mxu0 0.0
  %2102 = vmatpush1.msra.mxu0 0.0
  %2103 = vmatprep.subr.mxu0 0.0
  %2104 = vmatpush1.msra.mxu0 0.0
  %2105 = vmatprep.subr.mxu0 0.0
  %2106 = vmatpush1.msra.mxu0 0.0
  %2107 = vmatprep.subr.mxu0 0.0
  %2108 = vmatpush1.msra.mxu0 0.0
  %2109 = vmatprep.subr.mxu0 0.0
  %2110 = vmatpush1.msra.mxu0 0.0
  %2111 = vmatprep.subr.mxu0 0.0
  %2112 = vmatpush1.msra.mxu0 0.0
  %2113 = vmatprep.subr.mxu0 0.0
  %2114 = vmatpush1.msra.mxu0 0.0
  %2115 = vmatprep.subr.mxu0 0.0
  %2116 = vmatpush1.msra.mxu0 0.0
  %2117 = vmatprep.subr.mxu0 0.0
  %2118 = vmatpush1.msra.mxu0 0.0
  %2119 = vmatprep.subr.mxu0 0.0
  %2120 = vmatpush1.msra.mxu0 0.0
  %2121 = vmatprep.subr.mxu0 0.0
  %2122 = vmatpush1.msra.mxu0 0.0
  %2123 = vmatprep.subr.mxu0 0.0
  %2124 = vmatpush1.msra.mxu0 0.0
  %2125 = vmatprep.subr.mxu0 0.0
  %2126 = vmatpush1.msra.mxu0 0.0
  %2127 = vmatprep.subr.mxu0 0.0
  %2128 = vmatpush1.msra.mxu0 0.0
  %2129 = vmatprep.subr.mxu0 0.0
  %2130 = vmatpush1.msra.mxu0 0.0
  %2131 = vmatprep.subr.mxu0 0.0
  %2132 = vmatpush1.msra.mxu0 0.0
  %2133 = vmatprep.subr.mxu0 0.0
  %2134 = vmatpush1.msra.mxu0 0.0
  %2135 = vmatprep.subr.mxu0 0.0
  %2136 = vmatpush1.msra.mxu0 0.0
  %2137 = vmatprep.subr.mxu0 0.0
  %2138 = vmatpush1.msra.mxu0 0.0
  %2139 = vmatprep.subr.mxu0 0.0
  %2140 = vmatpush1.msra.mxu0 0.0
  %2141 = vmatprep.mubr.f32.mxu0 0.0
  %2142 = vmatmul.mubr.f32.gmra.mrb[0].mxu0 %v2075
  %v2143 = vpop.f32.mrb[0].mxu0
  %v2144 = vadd.f32 0.0, %v2143
  %v2145 = vpop.f32.mrb[0].mxu0
  %2146 = vdwg.mxu0
  %v2147 = vlaneseq
  %v2148 = vshrl.u32 %v2147, 7
  %v2149 = vsub.s32 0, %v2148
  %v2150 = vrot.slane %v2071, %v2149
  %v2151 = vmul.f32 %v1724, %v2150
  %v2152 = vmul.f32 %v1729, %v2150
  %v2153 = vlaneseq
  %v2154 = vshrl.u32 %v2153, 7
  %v2155 = vsub.s32 0, %v2154
  %v2156 = vrot.slane %v2144, %v2155
  %v2157 = vadd.f32 %v2151, %v2156
  %v2158 = vadd.f32 %v2152, %v2156
  %v2159 = vmax.f32 %v2157, 0.0
  %v2160 = vmax.f32 %v2158, 0.0
  %v2161 = vld [vmem:[%s45] sm:$0xff]
  %v2162 = vld [vmem:[%s45 + $0x8] sm:$0xff]
  %v2163 = vld [vmem:[%s45 + $0x10] sm:$0xff]
  %v2164 = vld [vmem:[%s45 + $0x18] sm:$0xff]
  %v2165 = vld [vmem:[%s45 + $0x20] sm:$0xff]
  %v2166 = vld [vmem:[%s45 + $0x28] sm:$0xff]
  %v2167 = vld [vmem:[%s45 + $0x30] sm:$0xff]
  %v2168 = vld [vmem:[%s45 + $0x38] sm:$0xff]
  %v2169 = vld [vmem:[%s45 + $0x40] sm:$0xff]
  %v2170 = vld [vmem:[%s45 + $0x48] sm:$0xff]
  %v2171 = vld [vmem:[%s45 + $0x50] sm:$0xff]
  %v2172 = vld [vmem:[%s45 + $0x58] sm:$0xff]
  %v2173 = vld [vmem:[%s45 + $0x60] sm:$0xff]
  %v2174 = vld [vmem:[%s45 + $0x68] sm:$0xff]
  %v2175 = vld [vmem:[%s45 + $0x70] sm:$0xff]
  %v2176 = vld [vmem:[%s45 + $0x78] sm:$0xff]
  %v2177 = vld [vmem:[%s45 + $0x80] sm:$0xff]
  %v2178 = vld [vmem:[%s45 + $0x88] sm:$0xff]
  %v2179 = vld [vmem:[%s45 + $0x90] sm:$0xff]
  %v2180 = vld [vmem:[%s45 + $0x98] sm:$0xff]
  %v2181 = vld [vmem:[%s45 + $0xa0] sm:$0xff]
  %v2182 = vld [vmem:[%s45 + $0xa8] sm:$0xff]
  %v2183 = vld [vmem:[%s45 + $0xb0] sm:$0xff]
  %v2184 = vld [vmem:[%s45 + $0xb8] sm:$0xff]
  %v2185 = vld [vmem:[%s45 + $0xc0] sm:$0xff]
  %v2186 = vld [vmem:[%s45 + $0xc8] sm:$0xff]
  %v2187 = vld [vmem:[%s45 + $0xd0] sm:$0xff]
  %v2188 = vld [vmem:[%s45 + $0xd8] sm:$0xff]
  %v2189 = vld [vmem:[%s45 + $0xe0] sm:$0xff]
  %v2190 = vld [vmem:[%s45 + $0xe8] sm:$0xff]
  %v2191 = vld [vmem:[%s45 + $0xf0] sm:$0xff]
  %v2192 = vld [vmem:[%s45 + $0xf8] sm:$0xff]
  %v2193 = vld [vmem:[%s45 + $0x100] sm:$0xff]
  %v2194 = vld [vmem:[%s45 + $0x108] sm:$0xff]
  %v2195 = vld [vmem:[%s45 + $0x110] sm:$0xff]
  %v2196 = vld [vmem:[%s45 + $0x118] sm:$0xff]
  %v2197 = vld [vmem:[%s45 + $0x120] sm:$0xff]
  %v2198 = vld [vmem:[%s45 + $0x128] sm:$0xff]
  %v2199 = vld [vmem:[%s45 + $0x130] sm:$0xff]
  %v2200 = vld [vmem:[%s45 + $0x138] sm:$0xff]
  %v2201 = vld [vmem:[%s45 + $0x140] sm:$0xff]
  %v2202 = vld [vmem:[%s45 + $0x148] sm:$0xff]
  %v2203 = vld [vmem:[%s45 + $0x150] sm:$0x3f]
  %v2204 = vld [vmem:[%s47] sm:$0xff]
  %v2205 = vld [vmem:[%s47 + $0x8] sm:$0xff]
  %v2206 = vld [vmem:[%s47 + $0x10] sm:$0xff]
  %v2207 = vld [vmem:[%s47 + $0x18] sm:$0xff]
  %v2208 = vld [vmem:[%s47 + $0x20] sm:$0xff]
  %v2209 = vld [vmem:[%s47 + $0x28] sm:$0xff]
  %v2210 = vld [vmem:[%s47 + $0x30] sm:$0xff]
  %v2211 = vld [vmem:[%s47 + $0x38] sm:$0xff]
  %v2212 = vld [vmem:[%s47 + $0x40] sm:$0xff]
  %v2213 = vld [vmem:[%s47 + $0x48] sm:$0xff]
  %v2214 = vld [vmem:[%s47 + $0x50] sm:$0xff]
  %v2215 = vld [vmem:[%s47 + $0x58] sm:$0xff]
  %v2216 = vld [vmem:[%s47 + $0x60] sm:$0xff]
  %v2217 = vld [vmem:[%s47 + $0x68] sm:$0xff]
  %v2218 = vld [vmem:[%s47 + $0x70] sm:$0xff]
  %v2219 = vld [vmem:[%s47 + $0x78] sm:$0xff]
  %v2220 = vld [vmem:[%s47 + $0x80] sm:$0xff]
  %v2221 = vld [vmem:[%s47 + $0x88] sm:$0xff]
  %v2222 = vld [vmem:[%s47 + $0x90] sm:$0xff]
  %v2223 = vld [vmem:[%s47 + $0x98] sm:$0xff]
  %v2224 = vld [vmem:[%s47 + $0xa0] sm:$0xff]
  %v2225 = vld [vmem:[%s47 + $0xa8] sm:$0xff]
  %v2226 = vld [vmem:[%s47 + $0xb0] sm:$0xff]
  %v2227 = vld [vmem:[%s47 + $0xb8] sm:$0xff]
  %v2228 = vld [vmem:[%s47 + $0xc0] sm:$0xff]
  %v2229 = vld [vmem:[%s47 + $0xc8] sm:$0xff]
  %v2230 = vld [vmem:[%s47 + $0xd0] sm:$0xff]
  %v2231 = vld [vmem:[%s47 + $0xd8] sm:$0xff]
  %v2232 = vld [vmem:[%s47 + $0xe0] sm:$0xff]
  %v2233 = vld [vmem:[%s47 + $0xe8] sm:$0xff]
  %v2234 = vld [vmem:[%s47 + $0xf0] sm:$0xff]
  %v2235 = vld [vmem:[%s47 + $0xf8] sm:$0xff]
  %v2236 = vld [vmem:[%s47 + $0x100] sm:$0xff]
  %v2237 = vld [vmem:[%s47 + $0x108] sm:$0xff]
  %v2238 = vld [vmem:[%s47 + $0x110] sm:$0xff]
  %v2239 = vld [vmem:[%s47 + $0x118] sm:$0xff]
  %v2240 = vld [vmem:[%s47 + $0x120] sm:$0xff]
  %v2241 = vld [vmem:[%s47 + $0x128] sm:$0xff]
  %v2242 = vld [vmem:[%s47 + $0x130] sm:$0xff]
  %v2243 = vld [vmem:[%s47 + $0x138] sm:$0xff]
  %v2244 = vld [vmem:[%s47 + $0x140] sm:$0xff]
  %v2245 = vld [vmem:[%s47 + $0x148] sm:$0xff]
  %v2246 = vld [vmem:[%s47 + $0x150] sm:$0xff]
  %v2247 = vld [vmem:[%s47 + $0x158] sm:$0xff]
  %v2248 = vld [vmem:[%s47 + $0x160] sm:$0xff]
  %v2249 = vld [vmem:[%s47 + $0x168] sm:$0xff]
  %v2250 = vld [vmem:[%s47 + $0x170] sm:$0xff]
  %v2251 = vld [vmem:[%s47 + $0x178] sm:$0xff]
  %v2252 = vld [vmem:[%s47 + $0x180] sm:$0xff]
  %v2253 = vld [vmem:[%s47 + $0x188] sm:$0xff]
  %v2254 = vld [vmem:[%s47 + $0x190] sm:$0xff]
  %v2255 = vld [vmem:[%s47 + $0x198] sm:$0xff]
  %v2256 = vld [vmem:[%s47 + $0x1a0] sm:$0xff]
  %v2257 = vld [vmem:[%s47 + $0x1a8] sm:$0xff]
  %v2258 = vld [vmem:[%s47 + $0x1b0] sm:$0xff]
  %v2259 = vld [vmem:[%s47 + $0x1b8] sm:$0xff]
  %v2260 = vld [vmem:[%s47 + $0x1c0] sm:$0xff]
  %v2261 = vld [vmem:[%s47 + $0x1c8] sm:$0xff]
  %v2262 = vld [vmem:[%s47 + $0x1d0] sm:$0xff]
  %v2263 = vld [vmem:[%s47 + $0x1d8] sm:$0xff]
  %v2264 = vld [vmem:[%s47 + $0x1e0] sm:$0xff]
  %v2265 = vld [vmem:[%s47 + $0x1e8] sm:$0xff]
  %v2266 = vld [vmem:[%s47 + $0x1f0] sm:$0xff]
  %v2267 = vld [vmem:[%s47 + $0x1f8] sm:$0xff]
  %v2268 = vld [vmem:[%s47 + $0x200] sm:$0xff]
  %v2269 = vld [vmem:[%s47 + $0x208] sm:$0xff]
  %v2270 = vld [vmem:[%s47 + $0x210] sm:$0xff]
  %v2271 = vld [vmem:[%s47 + $0x218] sm:$0xff]
  %v2272 = vld [vmem:[%s47 + $0x220] sm:$0xff]
  %v2273 = vld [vmem:[%s47 + $0x228] sm:$0xff]
  %v2274 = vld [vmem:[%s47 + $0x230] sm:$0xff]
  %v2275 = vld [vmem:[%s47 + $0x238] sm:$0xff]
  %v2276 = vld [vmem:[%s47 + $0x240] sm:$0xff]
  %v2277 = vld [vmem:[%s47 + $0x248] sm:$0xff]
  %v2278 = vld [vmem:[%s47 + $0x250] sm:$0xff]
  %v2279 = vld [vmem:[%s47 + $0x258] sm:$0xff]
  %v2280 = vld [vmem:[%s47 + $0x260] sm:$0xff]
  %v2281 = vld [vmem:[%s47 + $0x268] sm:$0xff]
  %v2282 = vld [vmem:[%s47 + $0x270] sm:$0xff]
  %v2283 = vld [vmem:[%s47 + $0x278] sm:$0xff]
  %v2284 = vld [vmem:[%s47 + $0x280] sm:$0xff]
  %v2285 = vld [vmem:[%s47 + $0x288] sm:$0xff]
  %v2286 = vld [vmem:[%s47 + $0x290] sm:$0xff]
  %v2287 = vld [vmem:[%s47 + $0x298] sm:$0xff]
  %v2288 = vld [vmem:[%s47 + $0x2a0] sm:$0xff]
  %v2289 = vld [vmem:[%s47 + $0x2a8] sm:$0xff]
  %v2290 = vld [vmem:[%s47 + $0x2b0] sm:$0xff]
  %v2291 = vld [vmem:[%s47 + $0x2b8] sm:$0xff]
  %v2292 = vld [vmem:[%s47 + $0x2c0] sm:$0xff]
  %v2293 = vld [vmem:[%s47 + $0x2c8] sm:$0xff]
  %v2294 = vld [vmem:[%s47 + $0x2d0] sm:$0xff]
  %v2295 = vld [vmem:[%s47 + $0x2d8] sm:$0xff]
  %v2296 = vld [vmem:[%s47 + $0x2e0] sm:$0xff]
  %v2297 = vld [vmem:[%s47 + $0x2e8] sm:$0xff]
  %v2298 = vld [vmem:[%s47 + $0x2f0] sm:$0xff]
  %v2299 = vld [vmem:[%s47 + $0x2f8] sm:$0xff]
  %v2300 = vld [vmem:[%s47 + $0x300] sm:$0xff]
  %v2301 = vld [vmem:[%s47 + $0x308] sm:$0xff]
  %v2302 = vld [vmem:[%s47 + $0x310] sm:$0xff]
  %v2303 = vld [vmem:[%s47 + $0x318] sm:$0xff]
  %v2304 = vld [vmem:[%s47 + $0x320] sm:$0xff]
  %v2305 = vld [vmem:[%s47 + $0x328] sm:$0xff]
  %v2306 = vld [vmem:[%s47 + $0x330] sm:$0xff]
  %v2307 = vld [vmem:[%s47 + $0x338] sm:$0xff]
  %v2308 = vld [vmem:[%s47 + $0x340] sm:$0xff]
  %v2309 = vld [vmem:[%s47 + $0x348] sm:$0xff]
  %v2310 = vld [vmem:[%s47 + $0x350] sm:$0xff]
  %v2311 = vld [vmem:[%s47 + $0x358] sm:$0xff]
  %v2312 = vld [vmem:[%s47 + $0x360] sm:$0xff]
  %v2313 = vld [vmem:[%s47 + $0x368] sm:$0xff]
  %v2314 = vld [vmem:[%s47 + $0x370] sm:$0xff]
  %v2315 = vld [vmem:[%s47 + $0x378] sm:$0xff]
  %v2316 = vld [vmem:[%s47 + $0x380] sm:$0xff]
  %v2317 = vld [vmem:[%s47 + $0x388] sm:$0xff]
  %v2318 = vld [vmem:[%s47 + $0x390] sm:$0xff]
  %v2319 = vld [vmem:[%s47 + $0x398] sm:$0xff]
  %v2320 = vld [vmem:[%s47 + $0x3a0] sm:$0xff]
  %v2321 = vld [vmem:[%s47 + $0x3a8] sm:$0xff]
  %v2322 = vld [vmem:[%s47 + $0x3b0] sm:$0xff]
  %v2323 = vld [vmem:[%s47 + $0x3b8] sm:$0xff]
  %v2324 = vld [vmem:[%s47 + $0x3c0] sm:$0xff]
  %v2325 = vld [vmem:[%s47 + $0x3c8] sm:$0xff]
  %v2326 = vld [vmem:[%s47 + $0x3d0] sm:$0xff]
  %v2327 = vld [vmem:[%s47 + $0x3d8] sm:$0xff]
  %v2328 = vld [vmem:[%s47 + $0x3e0] sm:$0xff]
  %v2329 = vld [vmem:[%s47 + $0x3e8] sm:$0xff]
  %v2330 = vld [vmem:[%s47 + $0x3f0] sm:$0xff]
  %v2331 = vld [vmem:[%s47 + $0x3f8] sm:$0xff]
  %v2332 = vld [vmem:[%s47 + $0x400] sm:$0xff]
  %v2333 = vld [vmem:[%s47 + $0x408] sm:$0xff]
  %v2334 = vld [vmem:[%s47 + $0x410] sm:$0xff]
  %v2335 = vld [vmem:[%s47 + $0x418] sm:$0xff]
  %v2336 = vld [vmem:[%s47 + $0x420] sm:$0xff]
  %v2337 = vld [vmem:[%s47 + $0x428] sm:$0xff]
  %v2338 = vld [vmem:[%s47 + $0x430] sm:$0xff]
  %v2339 = vld [vmem:[%s47 + $0x438] sm:$0xff]
  %v2340 = vld [vmem:[%s47 + $0x440] sm:$0xff]
  %v2341 = vld [vmem:[%s47 + $0x448] sm:$0xff]
  %v2342 = vld [vmem:[%s47 + $0x450] sm:$0xff]
  %v2343 = vld [vmem:[%s47 + $0x458] sm:$0xff]
  %v2344 = vld [vmem:[%s47 + $0x460] sm:$0xff]
  %v2345 = vld [vmem:[%s47 + $0x468] sm:$0xff]
  %v2346 = vld [vmem:[%s47 + $0x470] sm:$0xff]
  %v2347 = vld [vmem:[%s47 + $0x478] sm:$0xff]
  %v2348 = vld [vmem:[%s47 + $0x480] sm:$0xff]
  %v2349 = vld [vmem:[%s47 + $0x488] sm:$0xff]
  %v2350 = vld [vmem:[%s47 + $0x490] sm:$0xff]
  %v2351 = vld [vmem:[%s47 + $0x498] sm:$0xff]
  %v2352 = vld [vmem:[%s47 + $0x4a0] sm:$0xff]
  %v2353 = vld [vmem:[%s47 + $0x4a8] sm:$0xff]
  %v2354 = vld [vmem:[%s47 + $0x4b0] sm:$0xff]
  %v2355 = vld [vmem:[%s47 + $0x4b8] sm:$0xff]
  %v2356 = vld [vmem:[%s47 + $0x4c0] sm:$0xff]
  %v2357 = vld [vmem:[%s47 + $0x4c8] sm:$0xff]
  %v2358 = vld [vmem:[%s47 + $0x4d0] sm:$0xff]
  %v2359 = vld [vmem:[%s47 + $0x4d8] sm:$0xff]
  %v2360 = vld [vmem:[%s47 + $0x4e0] sm:$0xff]
  %v2361 = vld [vmem:[%s47 + $0x4e8] sm:$0xff]
  %v2362 = vld [vmem:[%s47 + $0x4f0] sm:$0xff]
  %v2363 = vld [vmem:[%s47 + $0x4f8] sm:$0xff]
  %v2364 = vld [vmem:[%s47 + $0x500] sm:$0xff]
  %v2365 = vld [vmem:[%s47 + $0x508] sm:$0xff]
  %v2366 = vld [vmem:[%s47 + $0x510] sm:$0xff]
  %v2367 = vld [vmem:[%s47 + $0x518] sm:$0xff]
  %v2368 = vld [vmem:[%s47 + $0x520] sm:$0xff]
  %v2369 = vld [vmem:[%s47 + $0x528] sm:$0xff]
  %v2370 = vld [vmem:[%s47 + $0x530] sm:$0xff]
  %v2371 = vld [vmem:[%s47 + $0x538] sm:$0xff]
  %v2372 = vld [vmem:[%s47 + $0x540] sm:$0xff]
  %v2373 = vld [vmem:[%s47 + $0x548] sm:$0xff]
  %v2374 = vld [vmem:[%s47 + $0x550] sm:$0xff]
  %v2375 = vld [vmem:[%s47 + $0x558] sm:$0xff]
  %v2376 = vld [vmem:[%s47 + $0x560] sm:$0xff]
  %v2377 = vld [vmem:[%s47 + $0x568] sm:$0xff]
  %v2378 = vld [vmem:[%s47 + $0x570] sm:$0xff]
  %v2379 = vld [vmem:[%s47 + $0x578] sm:$0xff]
  %v2380 = vld [vmem:[%s47 + $0x580] sm:$0xff]
  %v2381 = vld [vmem:[%s47 + $0x588] sm:$0xff]
  %v2382 = vld [vmem:[%s47 + $0x590] sm:$0xff]
  %v2383 = vld [vmem:[%s47 + $0x598] sm:$0xff]
  %v2384 = vld [vmem:[%s47 + $0x5a0] sm:$0xff]
  %v2385 = vld [vmem:[%s47 + $0x5a8] sm:$0xff]
  %v2386 = vld [vmem:[%s47 + $0x5b0] sm:$0xff]
  %v2387 = vld [vmem:[%s47 + $0x5b8] sm:$0xff]
  %v2388 = vld [vmem:[%s47 + $0x5c0] sm:$0xff]
  %v2389 = vld [vmem:[%s47 + $0x5c8] sm:$0xff]
  %v2390 = vld [vmem:[%s47 + $0x5d0] sm:$0xff]
  %v2391 = vld [vmem:[%s47 + $0x5d8] sm:$0xff]
  %v2392 = vld [vmem:[%s47 + $0x5e0] sm:$0xff]
  %v2393 = vld [vmem:[%s47 + $0x5e8] sm:$0xff]
  %v2394 = vld [vmem:[%s47 + $0x5f0] sm:$0xff]
  %v2395 = vld [vmem:[%s47 + $0x5f8] sm:$0xff]
  %v2396 = vld [vmem:[%s47 + $0x600] sm:$0xff]
  %v2397 = vld [vmem:[%s47 + $0x608] sm:$0xff]
  %v2398 = vld [vmem:[%s47 + $0x610] sm:$0xff]
  %v2399 = vld [vmem:[%s47 + $0x618] sm:$0xff]
  %v2400 = vld [vmem:[%s47 + $0x620] sm:$0xff]
  %v2401 = vld [vmem:[%s47 + $0x628] sm:$0xff]
  %v2402 = vld [vmem:[%s47 + $0x630] sm:$0xff]
  %v2403 = vld [vmem:[%s47 + $0x638] sm:$0xff]
  %v2404 = vld [vmem:[%s47 + $0x640] sm:$0xff]
  %v2405 = vld [vmem:[%s47 + $0x648] sm:$0xff]
  %v2406 = vld [vmem:[%s47 + $0x650] sm:$0xff]
  %v2407 = vld [vmem:[%s47 + $0x658] sm:$0xff]
  %v2408 = vld [vmem:[%s47 + $0x660] sm:$0xff]
  %v2409 = vld [vmem:[%s47 + $0x668] sm:$0xff]
  %v2410 = vld [vmem:[%s47 + $0x670] sm:$0xff]
  %v2411 = vld [vmem:[%s47 + $0x678] sm:$0xff]
  %v2412 = vld [vmem:[%s47 + $0x680] sm:$0xff]
  %v2413 = vld [vmem:[%s47 + $0x688] sm:$0xff]
  %v2414 = vld [vmem:[%s47 + $0x690] sm:$0xff]
  %v2415 = vld [vmem:[%s47 + $0x698] sm:$0xff]
  %v2416 = vld [vmem:[%s47 + $0x6a0] sm:$0xff]
  %v2417 = vld [vmem:[%s47 + $0x6a8] sm:$0xff]
  %v2418 = vld [vmem:[%s47 + $0x6b0] sm:$0xff]
  %v2419 = vld [vmem:[%s47 + $0x6b8] sm:$0xff]
  %v2420 = vld [vmem:[%s49] sm:$0x3]
  %v2422 = vsel %vm264, %v2161, 0
  %v2425 = vsel %vm264, %v2162, 0
  %v2428 = vsel %vm264, %v2163, 0
  %v2431 = vsel %vm264, %v2164, 0
  %v2434 = vsel %vm264, %v2165, 0
  %v2437 = vsel %vm264, %v2166, 0
  %v2440 = vsel %vm264, %v2167, 0
  %v2443 = vsel %vm264, %v2168, 0
  %v2446 = vsel %vm264, %v2169, 0
  %v2449 = vsel %vm264, %v2170, 0
  %v2452 = vsel %vm264, %v2171, 0
  %v2455 = vsel %vm264, %v2172, 0
  %v2458 = vsel %vm264, %v2173, 0
  %v2461 = vsel %vm264, %v2174, 0
  %v2464 = vsel %vm264, %v2175, 0
  %v2467 = vsel %vm264, %v2176, 0
  %v2470 = vsel %vm264, %v2177, 0
  %v2473 = vsel %vm264, %v2178, 0
  %v2476 = vsel %vm264, %v2179, 0
  %v2479 = vsel %vm264, %v2180, 0
  %v2482 = vsel %vm264, %v2181, 0
  %v2485 = vsel %vm264, %v2182, 0
  %v2488 = vsel %vm264, %v2183, 0
  %v2491 = vsel %vm264, %v2184, 0
  %v2494 = vsel %vm264, %v2185, 0
  %v2497 = vsel %vm264, %v2186, 0
  %v2500 = vsel %vm264, %v2187, 0
  %v2503 = vsel %vm264, %v2188, 0
  %v2506 = vsel %vm264, %v2189, 0
  %v2509 = vsel %vm264, %v2190, 0
  %v2512 = vsel %vm264, %v2191, 0
  %v2515 = vsel %vm264, %v2192, 0
  %v2518 = vsel %vm264, %v2193, 0
  %v2521 = vsel %vm264, %v2194, 0
  %v2524 = vsel %vm264, %v2195, 0
  %v2527 = vsel %vm264, %v2196, 0
  %v2530 = vsel %vm264, %v2197, 0
  %v2533 = vsel %vm264, %v2198, 0
  %v2536 = vsel %vm264, %v2199, 0
  %v2539 = vsel %vm264, %v2200, 0
  %v2542 = vsel %vm264, %v2201, 0
  %v2545 = vsel %vm264, %v2202, 0
  %v2548 = vsel %vm264, %v2203, 0
  %v2551 = vsel %vm268, %v2160, 0
  %2553 = vmatprep.subr.mxu0 0.0
  %2554 = vmatpush1.msra.mxu0 %v2159
  %2555 = vmatprep.subr.mxu0 0.0
  %2556 = vmatpush1.msra.mxu0 %v2551
  %2557 = vmatprep.subr.mxu0 0.0
  %2558 = vmatpush1.msra.mxu0 0.0
  %2559 = vmatprep.subr.mxu0 0.0
  %2560 = vmatpush1.msra.mxu0 0.0
  %2561 = vmatprep.subr.mxu0 0.0
  %2562 = vmatpush1.msra.mxu0 0.0
  %2563 = vmatprep.subr.mxu0 0.0
  %2564 = vmatpush1.msra.mxu0 0.0
  %2565 = vmatprep.subr.mxu0 0.0
  %2566 = vmatpush1.msra.mxu0 0.0
  %2567 = vmatprep.subr.mxu0 0.0
  %2568 = vmatpush1.msra.mxu0 0.0
  %2569 = vmatprep.subr.mxu0 0.0
  %2570 = vmatpush1.msra.mxu0 0.0
  %2571 = vmatprep.subr.mxu0 0.0
  %2572 = vmatpush1.msra.mxu0 0.0
  %2573 = vmatprep.subr.mxu0 0.0
  %2574 = vmatpush1.msra.mxu0 0.0
  %2575 = vmatprep.subr.mxu0 0.0
  %2576 = vmatpush1.msra.mxu0 0.0
  %2577 = vmatprep.subr.mxu0 0.0
  %2578 = vmatpush1.msra.mxu0 0.0
  %2579 = vmatprep.subr.mxu0 0.0
  %2580 = vmatpush1.msra.mxu0 0.0
  %2581 = vmatprep.subr.mxu0 0.0
  %2582 = vmatpush1.msra.mxu0 0.0
  %2583 = vmatprep.subr.mxu0 0.0
  %2584 = vmatpush1.msra.mxu0 0.0
  %2585 = vmatprep.subr.mxu0 0.0
  %2586 = vmatpush1.msra.mxu0 0.0
  %2587 = vmatprep.subr.mxu0 0.0
  %2588 = vmatpush1.msra.mxu0 0.0
  %2589 = vmatprep.subr.mxu0 0.0
  %2590 = vmatpush1.msra.mxu0 0.0
  %2591 = vmatprep.subr.mxu0 0.0
  %2592 = vmatpush1.msra.mxu0 0.0
  %2593 = vmatprep.subr.mxu0 0.0
  %2594 = vmatpush1.msra.mxu0 0.0
  %2595 = vmatprep.subr.mxu0 0.0
  %2596 = vmatpush1.msra.mxu0 0.0
  %2597 = vmatprep.subr.mxu0 0.0
  %2598 = vmatpush1.msra.mxu0 0.0
  %2599 = vmatprep.subr.mxu0 0.0
  %2600 = vmatpush1.msra.mxu0 0.0
  %2601 = vmatprep.subr.mxu0 0.0
  %2602 = vmatpush1.msra.mxu0 0.0
  %2603 = vmatprep.subr.mxu0 0.0
  %2604 = vmatpush1.msra.mxu0 0.0
  %2605 = vmatprep.subr.mxu0 0.0
  %2606 = vmatpush1.msra.mxu0 0.0
  %2607 = vmatprep.subr.mxu0 0.0
  %2608 = vmatpush1.msra.mxu0 0.0
  %2609 = vmatprep.subr.mxu0 0.0
  %2610 = vmatpush1.msra.mxu0 0.0
  %2611 = vmatprep.subr.mxu0 0.0
  %2612 = vmatpush1.msra.mxu0 0.0
  %2613 = vmatprep.subr.mxu0 0.0
  %2614 = vmatpush1.msra.mxu0 0.0
  %2615 = vmatprep.subr.mxu0 0.0
  %2616 = vmatpush1.msra.mxu0 0.0
  %2617 = vmatprep.mubr.f32.mxu0 0.0
  %2618 = vmatmul.mubr.f32.gmra.mrb[0].mxu0 %v2422
  %v2619 = vpop.f32.mrb[0].mxu0
  %v2620 = vadd.f32 0.0, %v2619
  %v2621 = vpop.f32.mrb[0].mxu0
  %2622 = vmatprep.mubr.f32.mxu0 0.0
  %2623 = vmatmul.mubr.f32.gmra.mrb[0].mxu0 %v2425
  %v2624 = vpop.f32.mrb[0].mxu0
  %v2625 = vadd.f32 0.0, %v2624
  %v2626 = vpop.f32.mrb[0].mxu0
  %2627 = vmatprep.mubr.f32.mxu0 0.0
  %2628 = vmatmul.mubr.f32.gmra.mrb[0].mxu0 %v2428
  %v2629 = vpop.f32.mrb[0].mxu0
  %v2630 = vadd.f32 0.0, %v2629
  %v2631 = vpop.f32.mrb[0].mxu0
  %2632 = vmatprep.mubr.f32.mxu0 0.0
  %2633 = vmatmul.mubr.f32.gmra.mrb[0].mxu0 %v2431
  %v2634 = vpop.f32.mrb[0].mxu0
  %v2635 = vadd.f32 0.0, %v2634
  %v2636 = vpop.f32.mrb[0].mxu0
  %2637 = vmatprep.mubr.f32.mxu0 0.0
  %2638 = vmatmul.mubr.f32.gmra.mrb[0].mxu0 %v2434
  %v2639 = vpop.f32.mrb[0].mxu0
  %v2640 = vadd.f32 0.0, %v2639
  %v2641 = vpop.f32.mrb[0].mxu0
  %2642 = vmatprep.mubr.f32.mxu0 0.0
  %2643 = vmatmul.mubr.f32.gmra.mrb[0].mxu0 %v2437
  %v2644 = vpop.f32.mrb[0].mxu0
  %v2645 = vadd.f32 0.0, %v2644
  %v2646 = vpop.f32.mrb[0].mxu0
  %2647 = vmatprep.mubr.f32.mxu0 0.0
  %2648 = vmatmul.mubr.f32.gmra.mrb[0].mxu0 %v2440
  %v2649 = vpop.f32.mrb[0].mxu0
  %v2650 = vadd.f32 0.0, %v2649
  %v2651 = vpop.f32.mrb[0].mxu0
  %2652 = vmatprep.mubr.f32.mxu0 0.0
  %2653 = vmatmul.mubr.f32.gmra.mrb[0].mxu0 %v2443
  %v2654 = vpop.f32.mrb[0].mxu0
  %v2655 = vadd.f32 0.0, %v2654
  %v2656 = vpop.f32.mrb[0].mxu0
  %2657 = vmatprep.mubr.f32.mxu0 0.0
  %2658 = vmatmul.mubr.f32.gmra.mrb[0].mxu0 %v2446
  %v2659 = vpop.f32.mrb[0].mxu0
  %v2660 = vadd.f32 0.0, %v2659
  %v2661 = vpop.f32.mrb[0].mxu0
  %2662 = vmatprep.mubr.f32.mxu0 0.0
  %2663 = vmatmul.mubr.f32.gmra.mrb[0].mxu0 %v2449
  %v2664 = vpop.f32.mrb[0].mxu0
  %v2665 = vadd.f32 0.0, %v2664
  %v2666 = vpop.f32.mrb[0].mxu0
  %2667 = vmatprep.mubr.f32.mxu0 0.0
  %2668 = vmatmul.mubr.f32.gmra.mrb[0].mxu0 %v2452
  %v2669 = vpop.f32.mrb[0].mxu0
  %v2670 = vadd.f32 0.0, %v2669
  %v2671 = vpop.f32.mrb[0].mxu0
  %2672 = vmatprep.mubr.f32.mxu0 0.0
  %2673 = vmatmul.mubr.f32.gmra.mrb[0].mxu0 %v2455
  %v2674 = vpop.f32.mrb[0].mxu0
  %v2675 = vadd.f32 0.0, %v2674
  %v2676 = vpop.f32.mrb[0].mxu0
  %2677 = vmatprep.mubr.f32.mxu0 0.0
  %2678 = vmatmul.mubr.f32.gmra.mrb[0].mxu0 %v2458
  %v2679 = vpop.f32.mrb[0].mxu0
  %v2680 = vadd.f32 0.0, %v2679
  %v2681 = vpop.f32.mrb[0].mxu0
  %2682 = vmatprep.mubr.f32.mxu0 0.0
  %2683 = vmatmul.mubr.f32.gmra.mrb[0].mxu0 %v2461
  %v2684 = vpop.f32.mrb[0].mxu0
  %v2685 = vadd.f32 0.0, %v2684
  %v2686 = vpop.f32.mrb[0].mxu0
  %2687 = vmatprep.mubr.f32.mxu0 0.0
  %2688 = vmatmul.mubr.f32.gmra.mrb[0].mxu0 %v2464
  %v2689 = vpop.f32.mrb[0].mxu0
  %v2690 = vadd.f32 0.0, %v2689
  %v2691 = vpop.f32.mrb[0].mxu0
  %2692 = vmatprep.mubr.f32.mxu0 0.0
  %2693 = vmatmul.mubr.f32.gmra.mrb[0].mxu0 %v2467
  %v2694 = vpop.f32.mrb[0].mxu0
  %v2695 = vadd.f32 0.0, %v2694
  %v2696 = vpop.f32.mrb[0].mxu0
  %2697 = vmatprep.mubr.f32.mxu0 0.0
  %2698 = vmatmul.mubr.f32.gmra.mrb[0].mxu0 %v2470
  %v2699 = vpop.f32.mrb[0].mxu0
  %v2700 = vadd.f32 0.0, %v2699
  %v2701 = vpop.f32.mrb[0].mxu0
  %2702 = vmatprep.mubr.f32.mxu0 0.0
  %2703 = vmatmul.mubr.f32.gmra.mrb[0].mxu0 %v2473
  %v2704 = vpop.f32.mrb[0].mxu0
  %v2705 = vadd.f32 0.0, %v2704
  %v2706 = vpop.f32.mrb[0].mxu0
  %2707 = vmatprep.mubr.f32.mxu0 0.0
  %2708 = vmatmul.mubr.f32.gmra.mrb[0].mxu0 %v2476
  %v2709 = vpop.f32.mrb[0].mxu0
  %v2710 = vadd.f32 0.0, %v2709
  %v2711 = vpop.f32.mrb[0].mxu0
  %2712 = vmatprep.mubr.f32.mxu0 0.0
  %2713 = vmatmul.mubr.f32.gmra.mrb[0].mxu0 %v2479
  %v2714 = vpop.f32.mrb[0].mxu0
  %v2715 = vadd.f32 0.0, %v2714
  %v2716 = vpop.f32.mrb[0].mxu0
  %2717 = vmatprep.mubr.f32.mxu0 0.0
  %2718 = vmatmul.mubr.f32.gmra.mrb[0].mxu0 %v2482
  %v2719 = vpop.f32.mrb[0].mxu0
  %v2720 = vadd.f32 0.0, %v2719
  %v2721 = vpop.f32.mrb[0].mxu0
  %2722 = vmatprep.mubr.f32.mxu0 0.0
  %2723 = vmatmul.mubr.f32.gmra.mrb[0].mxu0 %v2485
  %v2724 = vpop.f32.mrb[0].mxu0
  %v2725 = vadd.f32 0.0, %v2724
  %v2726 = vpop.f32.mrb[0].mxu0
  %2727 = vmatprep.mubr.f32.mxu0 0.0
  %2728 = vmatmul.mubr.f32.gmra.mrb[0].mxu0 %v2488
  %v2729 = vpop.f32.mrb[0].mxu0
  %v2730 = vadd.f32 0.0, %v2729
  %v2731 = vpop.f32.mrb[0].mxu0
  %2732 = vmatprep.mubr.f32.mxu0 0.0
  %2733 = vmatmul.mubr.f32.gmra.mrb[0].mxu0 %v2491
  %v2734 = vpop.f32.mrb[0].mxu0
  %v2735 = vadd.f32 0.0, %v2734
  %v2736 = vpop.f32.mrb[0].mxu0
  %2737 = vmatprep.mubr.f32.mxu0 0.0
  %2738 = vmatmul.mubr.f32.gmra.mrb[0].mxu0 %v2494
  %v2739 = vpop.f32.mrb[0].mxu0
  %v2740 = vadd.f32 0.0, %v2739
  %v2741 = vpop.f32.mrb[0].mxu0
  %2742 = vmatprep.mubr.f32.mxu0 0.0
  %2743 = vmatmul.mubr.f32.gmra.mrb[0].mxu0 %v2497
  %v2744 = vpop.f32.mrb[0].mxu0
  %v2745 = vadd.f32 0.0, %v2744
  %v2746 = vpop.f32.mrb[0].mxu0
  %2747 = vmatprep.mubr.f32.mxu0 0.0
  %2748 = vmatmul.mubr.f32.gmra.mrb[0].mxu0 %v2500
  %v2749 = vpop.f32.mrb[0].mxu0
  %v2750 = vadd.f32 0.0, %v2749
  %v2751 = vpop.f32.mrb[0].mxu0
  %2752 = vmatprep.mubr.f32.mxu0 0.0
  %2753 = vmatmul.mubr.f32.gmra.mrb[0].mxu0 %v2503
  %v2754 = vpop.f32.mrb[0].mxu0
  %v2755 = vadd.f32 0.0, %v2754
  %v2756 = vpop.f32.mrb[0].mxu0
  %2757 = vmatprep.mubr.f32.mxu0 0.0
  %2758 = vmatmul.mubr.f32.gmra.mrb[0].mxu0 %v2506
  %v2759 = vpop.f32.mrb[0].mxu0
  %v2760 = vadd.f32 0.0, %v2759
  %v2761 = vpop.f32.mrb[0].mxu0
  %2762 = vmatprep.mubr.f32.mxu0 0.0
  %2763 = vmatmul.mubr.f32.gmra.mrb[0].mxu0 %v2509
  %v2764 = vpop.f32.mrb[0].mxu0
  %v2765 = vadd.f32 0.0, %v2764
  %v2766 = vpop.f32.mrb[0].mxu0
  %2767 = vmatprep.mubr.f32.mxu0 0.0
  %2768 = vmatmul.mubr.f32.gmra.mrb[0].mxu0 %v2512
  %v2769 = vpop.f32.mrb[0].mxu0
  %v2770 = vadd.f32 0.0, %v2769
  %v2771 = vpop.f32.mrb[0].mxu0
  %2772 = vmatprep.mubr.f32.mxu0 0.0
  %2773 = vmatmul.mubr.f32.gmra.mrb[0].mxu0 %v2515
  %v2774 = vpop.f32.mrb[0].mxu0
  %v2775 = vadd.f32 0.0, %v2774
  %v2776 = vpop.f32.mrb[0].mxu0
  %2777 = vmatprep.mubr.f32.mxu0 0.0
  %2778 = vmatmul.mubr.f32.gmra.mrb[0].mxu0 %v2518
  %v2779 = vpop.f32.mrb[0].mxu0
  %v2780 = vadd.f32 0.0, %v2779
  %v2781 = vpop.f32.mrb[0].mxu0
  %2782 = vmatprep.mubr.f32.mxu0 0.0
  %2783 = vmatmul.mubr.f32.gmra.mrb[0].mxu0 %v2521
  %v2784 = vpop.f32.mrb[0].mxu0
  %v2785 = vadd.f32 0.0, %v2784
  %v2786 = vpop.f32.mrb[0].mxu0
  %2787 = vmatprep.mubr.f32.mxu0 0.0
  %2788 = vmatmul.mubr.f32.gmra.mrb[0].mxu0 %v2524
  %v2789 = vpop.f32.mrb[0].mxu0
  %v2790 = vadd.f32 0.0, %v2789
  %v2791 = vpop.f32.mrb[0].mxu0
  %2792 = vmatprep.mubr.f32.mxu0 0.0
  %2793 = vmatmul.mubr.f32.gmra.mrb[0].mxu0 %v2527
  %v2794 = vpop.f32.mrb[0].mxu0
  %v2795 = vadd.f32 0.0, %v2794
  %v2796 = vpop.f32.mrb[0].mxu0
  %2797 = vmatprep.mubr.f32.mxu0 0.0
  %2798 = vmatmul.mubr.f32.gmra.mrb[0].mxu0 %v2530
  %v2799 = vpop.f32.mrb[0].mxu0
  %v2800 = vadd.f32 0.0, %v2799
  %v2801 = vpop.f32.mrb[0].mxu0
  %2802 = vmatprep.mubr.f32.mxu0 0.0
  %2803 = vmatmul.mubr.f32.gmra.mrb[0].mxu0 %v2533
  %v2804 = vpop.f32.mrb[0].mxu0
  %v2805 = vadd.f32 0.0, %v2804
  %v2806 = vpop.f32.mrb[0].mxu0
  %2807 = vmatprep.mubr.f32.mxu0 0.0
  %2808 = vmatmul.mubr.f32.gmra.mrb[0].mxu0 %v2536
  %v2809 = vpop.f32.mrb[0].mxu0
  %v2810 = vadd.f32 0.0, %v2809
  %v2811 = vpop.f32.mrb[0].mxu0
  %2812 = vmatprep.mubr.f32.mxu0 0.0
  %2813 = vmatmul.mubr.f32.gmra.mrb[0].mxu0 %v2539
  %v2814 = vpop.f32.mrb[0].mxu0
  %v2815 = vadd.f32 0.0, %v2814
  %v2816 = vpop.f32.mrb[0].mxu0
  %2817 = vmatprep.mubr.f32.mxu0 0.0
  %2818 = vmatmul.mubr.f32.gmra.mrb[0].mxu0 %v2542
  %v2819 = vpop.f32.mrb[0].mxu0
  %v2820 = vadd.f32 0.0, %v2819
  %v2821 = vpop.f32.mrb[0].mxu0
  %2822 = vmatprep.mubr.f32.mxu0 0.0
  %2823 = vmatmul.mubr.f32.gmra.mrb[0].mxu0 %v2545
  %v2824 = vpop.f32.mrb[0].mxu0
  %v2825 = vadd.f32 0.0, %v2824
  %v2826 = vpop.f32.mrb[0].mxu0
  %2827 = vmatprep.mubr.f32.mxu0 0.0
  %2828 = vmatmul.mubr.f32.gmra.mrb[0].mxu0 %v2548
  %v2829 = vpop.f32.mrb[0].mxu0
  %v2830 = vadd.f32 0.0, %v2829
  %v2831 = vpop.f32.mrb[0].mxu0
  %2832 = vdwg.mxu0
  %v2839 = vrot.slane %v2640, 6
  %v2840 = vrot.slane %v2645, 6
  %v2841 = vsel %vm171, %v2839, %v2840
  %v2842 = vrot.slane %v2650, 6
  %v2843 = vsel %vm171, %v2840, %v2842
  %v2844 = vrot.slane %v2655, 6
  %v2845 = vsel %vm171, %v2842, %v2844
  %v2846 = vrot.slane %v2660, 6
  %v2847 = vsel %vm171, %v2844, %v2846
  %v2848 = vrot.slane %v2665, 6
  %v2849 = vsel %vm171, %v2846, %v2848
  %2850 = vrot.lane.b32.xlu0 %v2841, 96
  %v2851 = vpop.permute.xlu0 %2850
  %2852 = vrot.lane.b32.xlu0 %v2843, 96
  %v2853 = vpop.permute.xlu0 %2852
  %2854 = vrot.lane.b32.xlu0 %v2845, 96
  %v2855 = vpop.permute.xlu0 %2854
  %2856 = vrot.lane.b32.xlu0 %v2847, 96
  %v2857 = vpop.permute.xlu0 %2856
  %2858 = vrot.lane.b32.xlu0 %v2849, 96
  %v2859 = vpop.permute.xlu0 %2858
  %v2870 = vrot.slane %v2665, 4
  %v2871 = vrot.slane %v2670, 4
  %v2872 = vsel %vm268, %v2870, %v2871
  %v2873 = vrot.slane %v2675, 4
  %v2874 = vsel %vm268, %v2871, %v2873
  %v2875 = vrot.slane %v2680, 4
  %v2876 = vsel %vm268, %v2873, %v2875
  %v2877 = vrot.slane %v2685, 4
  %v2878 = vsel %vm268, %v2875, %v2877
  %v2879 = vrot.slane %v2690, 4
  %v2880 = vsel %vm268, %v2877, %v2879
  %2881 = vrot.lane.b32.xlu0 %v2872, 64
  %v2882 = vpop.permute.xlu0 %2881
  %2883 = vrot.lane.b32.xlu0 %v2874, 64
  %v2884 = vpop.permute.xlu0 %2883
  %2885 = vrot.lane.b32.xlu0 %v2876, 64
  %v2886 = vpop.permute.xlu0 %2885
  %2887 = vrot.lane.b32.xlu0 %v2878, 64
  %v2888 = vpop.permute.xlu0 %2887
  %2889 = vrot.lane.b32.xlu0 %v2880, 64
  %v2890 = vpop.permute.xlu0 %2889
  %vm2900 = vcmask 1045504
  %v2901 = vrot.slane %v2690, 2
  %v2902 = vrot.slane %v2695, 2
  %v2903 = vsel %vm2900, %v2901, %v2902
  %v2904 = vrot.slane %v2700, 2
  %v2905 = vsel %vm2900, %v2902, %v2904
  %v2906 = vrot.slane %v2705, 2
  %v2907 = vsel %vm2900, %v2904, %v2906
  %v2908 = vrot.slane %v2710, 2
  %v2909 = vsel %vm2900, %v2906, %v2908
  %2910 = vrot.lane.b32.xlu0 %v2903, 32
  %v2911 = vpop.permute.xlu0 %2910
  %2912 = vrot.lane.b32.xlu0 %v2905, 32
  %v2913 = vpop.permute.xlu0 %2912
  %2914 = vrot.lane.b32.xlu0 %v2907, 32
  %v2915 = vpop.permute.xlu0 %2914
  %2916 = vrot.lane.b32.xlu0 %v2909, 32
  %v2917 = vpop.permute.xlu0 %2916
  %2918 = vrot.lane.b32.xlu0 %v2908, 32
  %v2919 = vpop.permute.xlu0 %2918
  %v2931 = vrot.slane %v2735, 6
  %v2932 = vrot.slane %v2740, 6
  %v2933 = vsel %vm171, %v2931, %v2932
  %v2934 = vrot.slane %v2745, 6
  %v2935 = vsel %vm171, %v2932, %v2934
  %v2936 = vrot.slane %v2750, 6
  %v2937 = vsel %vm171, %v2934, %v2936
  %v2938 = vrot.slane %v2755, 6
  %v2939 = vsel %vm171, %v2936, %v2938
  %v2940 = vrot.slane %v2760, 6
  %v2941 = vsel %vm171, %v2938, %v2940
  %2942 = vrot.lane.b32.xlu0 %v2933, 96
  %v2943 = vpop.permute.xlu0 %2942
  %2944 = vrot.lane.b32.xlu0 %v2935, 96
  %v2945 = vpop.permute.xlu0 %2944
  %2946 = vrot.lane.b32.xlu0 %v2937, 96
  %v2947 = vpop.permute.xlu0 %2946
  %2948 = vrot.lane.b32.xlu0 %v2939, 96
  %v2949 = vpop.permute.xlu0 %2948
  %2950 = vrot.lane.b32.xlu0 %v2941, 96
  %v2951 = vpop.permute.xlu0 %2950
  %v2962 = vrot.slane %v2760, 4
  %v2963 = vrot.slane %v2765, 4
  %v2964 = vsel %vm268, %v2962, %v2963
  %v2965 = vrot.slane %v2770, 4
  %v2966 = vsel %vm268, %v2963, %v2965
  %v2967 = vrot.slane %v2775, 4
  %v2968 = vsel %vm268, %v2965, %v2967
  %v2969 = vrot.slane %v2780, 4
  %v2970 = vsel %vm268, %v2967, %v2969
  %v2971 = vrot.slane %v2785, 4
  %v2972 = vsel %vm268, %v2969, %v2971
  %2973 = vrot.lane.b32.xlu0 %v2964, 64
  %v2974 = vpop.permute.xlu0 %2973
  %2975 = vrot.lane.b32.xlu0 %v2966, 64
  %v2976 = vpop.permute.xlu0 %2975
  %2977 = vrot.lane.b32.xlu0 %v2968, 64
  %v2978 = vpop.permute.xlu0 %2977
  %2979 = vrot.lane.b32.xlu0 %v2970, 64
  %v2980 = vpop.permute.xlu0 %2979
  %2981 = vrot.lane.b32.xlu0 %v2972, 64
  %v2982 = vpop.permute.xlu0 %2981
  %v2992 = vrot.slane %v2785, 2
  %v2993 = vrot.slane %v2790, 2
  %v2994 = vsel %vm2900, %v2992, %v2993
  %v2995 = vrot.slane %v2795, 2
  %v2996 = vsel %vm2900, %v2993, %v2995
  %v2997 = vrot.slane %v2800, 2
  %v2998 = vsel %vm2900, %v2995, %v2997
  %v2999 = vrot.slane %v2805, 2
  %v3000 = vsel %vm2900, %v2997, %v2999
  %3001 = vrot.lane.b32.xlu0 %v2994, 32
  %v3002 = vpop.permute.xlu0 %3001
  %3003 = vrot.lane.b32.xlu0 %v2996, 32
  %v3004 = vpop.permute.xlu0 %3003
  %3005 = vrot.lane.b32.xlu0 %v2998, 32
  %v3006 = vpop.permute.xlu0 %3005
  %3007 = vrot.lane.b32.xlu0 %v3000, 32
  %v3008 = vpop.permute.xlu0 %3007
  %3009 = vrot.lane.b32.xlu0 %v2999, 32
  %v3010 = vpop.permute.xlu0 %3009
  %v3016 = vsel %vm1641, %v2620, %v2851
  %v3017 = vsel %vm1641, %v2625, %v2853
  %v3018 = vsel %vm1641, %v2630, %v2855
  %v3019 = vsel %vm1641, %v2635, %v2857
  %v3020 = vsel %vm1641, %v2640, %v2859
  %v3021 = vsel %vm901, %v2851, %v2882
  %v3022 = vsel %vm901, %v2853, %v2884
  %v3023 = vsel %vm901, %v2855, %v2886
  %v3024 = vsel %vm901, %v2857, %v2888
  %v3025 = vsel %vm901, %v2859, %v2890
  %v3026 = vsel %vm893, %v2882, %v2911
  %v3027 = vsel %vm893, %v2884, %v2913
  %v3028 = vsel %vm893, %v2886, %v2915
  %v3029 = vsel %vm893, %v2888, %v2917
  %v3030 = vsel %vm893, %v2890, %v2919
  %v3031 = vsel %vm1641, %v2715, %v2943
  %v3032 = vsel %vm1641, %v2720, %v2945
  %v3033 = vsel %vm1641, %v2725, %v2947
  %v3034 = vsel %vm1641, %v2730, %v2949
  %v3035 = vsel %vm1641, %v2735, %v2951
  %v3036 = vsel %vm901, %v2943, %v2974
  %v3037 = vsel %vm901, %v2945, %v2976
  %v3038 = vsel %vm901, %v2947, %v2978
  %v3039 = vsel %vm901, %v2949, %v2980
  %v3040 = vsel %vm901, %v2951, %v2982
  %v3041 = vsel %vm893, %v2974, %v3002
  %v3042 = vsel %vm893, %v2976, %v3004
  %v3043 = vsel %vm893, %v2978, %v3006
  %v3044 = vsel %vm893, %v2980, %v3008
  %v3045 = vsel %vm893, %v2982, %v3010
  %v3047 = vlaneseq
  %v3048 = vshrl.u32 %v3047, 7
  %v3049 = vsub.s32 0, %v3048
  %v3050 = vrot.slane %v2420, %v3049
  %v3051 = vlaneseq
  %v3052 = vshrl.u32 %v3051, 7
  %v3053 = vsub.s32 1, %v3052
  %v3054 = vrot.slane %v2420, %v3053
  %v3058 = vsel %vm1641, %v2810, 0
  %v3061 = vsel %vm1641, %v2815, 0
  %v3064 = vsel %vm1641, %v2820, 0
  %v3067 = vsel %vm1641, %v2825, 0
  %v3070 = vsel %vm1641, %v2830, 0
  %3072 = vmatprep.subr.mxu0 %v2205
  %3073 = vmatpush1.msra.mxu0 %v2204
  %3074 = vmatprep.subr.mxu0 %v2207
  %3075 = vmatpush1.msra.mxu0 %v2206
  %3076 = vmatprep.subr.mxu0 %v2209
  %3077 = vmatpush1.msra.mxu0 %v2208
  %3078 = vmatprep.subr.mxu0 %v2211
  %3079 = vmatpush1.msra.mxu0 %v2210
  %3080 = vmatprep.subr.mxu0 %v2213
  %3081 = vmatpush1.msra.mxu0 %v2212
  %3082 = vmatprep.subr.mxu0 %v2215
  %3083 = vmatpush1.msra.mxu0 %v2214
  %3084 = vmatprep.subr.mxu0 %v2217
  %3085 = vmatpush1.msra.mxu0 %v2216
  %3086 = vmatprep.subr.mxu0 %v2219
  %3087 = vmatpush1.msra.mxu0 %v2218
  %3088 = vmatprep.subr.mxu0 %v2221
  %3089 = vmatpush1.msra.mxu0 %v2220
  %3090 = vmatprep.subr.mxu0 %v2223
  %3091 = vmatpush1.msra.mxu0 %v2222
  %3092 = vmatprep.subr.mxu0 %v2225
  %3093 = vmatpush1.msra.mxu0 %v2224
  %3094 = vmatprep.subr.mxu0 %v2227
  %3095 = vmatpush1.msra.mxu0 %v2226
  %3096 = vmatprep.subr.mxu0 %v2229
  %3097 = vmatpush1.msra.mxu0 %v2228
  %3098 = vmatprep.subr.mxu0 %v2231
  %3099 = vmatpush1.msra.mxu0 %v2230
  %3100 = vmatprep.subr.mxu0 %v2233
  %3101 = vmatpush1.msra.mxu0 %v2232
  %3102 = vmatprep.subr.mxu0 %v2235
  %3103 = vmatpush1.msra.mxu0 %v2234
  %3104 = vmatprep.subr.mxu0 %v2237
  %3105 = vmatpush1.msra.mxu0 %v2236
  %3106 = vmatprep.subr.mxu0 %v2239
  %3107 = vmatpush1.msra.mxu0 %v2238
  %3108 = vmatprep.subr.mxu0 %v2241
  %3109 = vmatpush1.msra.mxu0 %v2240
  %3110 = vmatprep.subr.mxu0 %v2243
  %3111 = vmatpush1.msra.mxu0 %v2242
  %3112 = vmatprep.subr.mxu0 %v2245
  %3113 = vmatpush1.msra.mxu0 %v2244
  %3114 = vmatprep.subr.mxu0 %v2247
  %3115 = vmatpush1.msra.mxu0 %v2246
  %3116 = vmatprep.subr.mxu0 %v2249
  %3117 = vmatpush1.msra.mxu0 %v2248
  %3118 = vmatprep.subr.mxu0 %v2251
  %3119 = vmatpush1.msra.mxu0 %v2250
  %3120 = vmatprep.subr.mxu0 %v2253
  %3121 = vmatpush1.msra.mxu0 %v2252
  %3122 = vmatprep.subr.mxu0 %v2255
  %3123 = vmatpush1.msra.mxu0 %v2254
  %3124 = vmatprep.subr.mxu0 %v2257
  %3125 = vmatpush1.msra.mxu0 %v2256
  %3126 = vmatprep.subr.mxu0 %v2259
  %3127 = vmatpush1.msra.mxu0 %v2258
  %3128 = vmatprep.subr.mxu0 %v2261
  %3129 = vmatpush1.msra.mxu0 %v2260
  %3130 = vmatprep.subr.mxu0 %v2263
  %3131 = vmatpush1.msra.mxu0 %v2262
  %3132 = vmatprep.subr.mxu0 %v2265
  %3133 = vmatpush1.msra.mxu0 %v2264
  %3134 = vmatprep.subr.mxu0 %v2267
  %3135 = vmatpush1.msra.mxu0 %v2266
  %3136 = vmatprep.mubr.f32.mxu0 %v3021
  %3137 = vmatmul.mubr.f32.gmra.mrb[0].mxu0 %v3016
  %v3138 = vpop.f32.mrb[0].mxu0
  %v3139 = vadd.f32 %v3050, %v3138
  %v3140 = vpop.f32.mrb[0].mxu0
  %v3141 = vadd.f32 %v3054, %v3140
  %3142 = vmatprep.mubr.f32.mxu0 %v3022
  %3143 = vmatmul.mubr.f32.gmra.mrb[0].mxu0 %v3017
  %v3144 = vpop.f32.mrb[0].mxu0
  %v3145 = vadd.f32 %v3050, %v3144
  %v3146 = vpop.f32.mrb[0].mxu0
  %v3147 = vadd.f32 %v3054, %v3146
  %3148 = vmatprep.mubr.f32.mxu0 %v3023
  %3149 = vmatmul.mubr.f32.gmra.mrb[0].mxu0 %v3018
  %v3150 = vpop.f32.mrb[0].mxu0
  %v3151 = vadd.f32 %v3050, %v3150
  %v3152 = vpop.f32.mrb[0].mxu0
  %v3153 = vadd.f32 %v3054, %v3152
  %3154 = vmatprep.mubr.f32.mxu0 %v3024
  %3155 = vmatmul.mubr.f32.gmra.mrb[0].mxu0 %v3019
  %v3156 = vpop.f32.mrb[0].mxu0
  %v3157 = vadd.f32 %v3050, %v3156
  %v3158 = vpop.f32.mrb[0].mxu0
  %v3159 = vadd.f32 %v3054, %v3158
  %3160 = vmatprep.mubr.f32.mxu0 %v3025
  %3161 = vmatmul.mubr.f32.gmra.mrb[0].mxu0 %v3020
  %v3162 = vpop.f32.mrb[0].mxu0
  %v3163 = vadd.f32 %v3050, %v3162
  %v3164 = vpop.f32.mrb[0].mxu0
  %v3165 = vadd.f32 %v3054, %v3164
  %3166 = vdwg.mxu0
  %3167 = vmatprep.subr.mxu0 %v2269
  %3168 = vmatpush1.msra.mxu0 %v2268
  %3169 = vmatprep.subr.mxu0 %v2271
  %3170 = vmatpush1.msra.mxu0 %v2270
  %3171 = vmatprep.subr.mxu0 %v2273
  %3172 = vmatpush1.msra.mxu0 %v2272
  %3173 = vmatprep.subr.mxu0 %v2275
  %3174 = vmatpush1.msra.mxu0 %v2274
  %3175 = vmatprep.subr.mxu0 %v2277
  %3176 = vmatpush1.msra.mxu0 %v2276
  %3177 = vmatprep.subr.mxu0 %v2279
  %3178 = vmatpush1.msra.mxu0 %v2278
  %3179 = vmatprep.subr.mxu0 %v2281
  %3180 = vmatpush1.msra.mxu0 %v2280
  %3181 = vmatprep.subr.mxu0 %v2283
  %3182 = vmatpush1.msra.mxu0 %v2282
  %3183 = vmatprep.subr.mxu0 %v2285
  %3184 = vmatpush1.msra.mxu0 %v2284
  %3185 = vmatprep.subr.mxu0 %v2287
  %3186 = vmatpush1.msra.mxu0 %v2286
  %3187 = vmatprep.subr.mxu0 %v2289
  %3188 = vmatpush1.msra.mxu0 %v2288
  %3189 = vmatprep.subr.mxu0 %v2291
  %3190 = vmatpush1.msra.mxu0 %v2290
  %3191 = vmatprep.subr.mxu0 %v2293
  %3192 = vmatpush1.msra.mxu0 %v2292
  %3193 = vmatprep.subr.mxu0 %v2295
  %3194 = vmatpush1.msra.mxu0 %v2294
  %3195 = vmatprep.subr.mxu0 %v2297
  %3196 = vmatpush1.msra.mxu0 %v2296
  %3197 = vmatprep.subr.mxu0 %v2299
  %3198 = vmatpush1.msra.mxu0 %v2298
  %3199 = vmatprep.subr.mxu0 %v2301
  %3200 = vmatpush1.msra.mxu0 %v2300
  %3201 = vmatprep.subr.mxu0 %v2303
  %3202 = vmatpush1.msra.mxu0 %v2302
  %3203 = vmatprep.subr.mxu0 %v2305
  %3204 = vmatpush1.msra.mxu0 %v2304
  %3205 = vmatprep.subr.mxu0 %v2307
  %3206 = vmatpush1.msra.mxu0 %v2306
  %3207 = vmatprep.subr.mxu0 %v2309
  %3208 = vmatpush1.msra.mxu0 %v2308
  %3209 = vmatprep.subr.mxu0 %v2311
  %3210 = vmatpush1.msra.mxu0 %v2310
  %3211 = vmatprep.subr.mxu0 %v2313
  %3212 = vmatpush1.msra.mxu0 %v2312
  %3213 = vmatprep.subr.mxu0 %v2315
  %3214 = vmatpush1.msra.mxu0 %v2314
  %3215 = vmatprep.subr.mxu0 %v2317
  %3216 = vmatpush1.msra.mxu0 %v2316
  %3217 = vmatprep.subr.mxu0 %v2319
  %3218 = vmatpush1.msra.mxu0 %v2318
  %3219 = vmatprep.subr.mxu0 %v2321
  %3220 = vmatpush1.msra.mxu0 %v2320
  %3221 = vmatprep.subr.mxu0 %v2323
  %3222 = vmatpush1.msra.mxu0 %v2322
  %3223 = vmatprep.subr.mxu0 %v2325
  %3224 = vmatpush1.msra.mxu0 %v2324
  %3225 = vmatprep.subr.mxu0 %v2327
  %3226 = vmatpush1.msra.mxu0 %v2326
  %3227 = vmatprep.subr.mxu0 %v2329
  %3228 = vmatpush1.msra.mxu0 %v2328
  %3229 = vmatprep.subr.mxu0 %v2331
  %3230 = vmatpush1.msra.mxu0 %v2330
  %3231 = vmatprep.mubr.f32.mxu0 %v3031
  %3232 = vmatmul.mubr.f32.gmra.mrb[0].mxu0 %v3026
  %v3233 = vpop.f32.mrb[0].mxu0
  %v3234 = vadd.f32 %v3139, %v3233
  %v3235 = vpop.f32.mrb[0].mxu0
  %v3236 = vadd.f32 %v3141, %v3235
  %3237 = vmatprep.mubr.f32.mxu0 %v3032
  %3238 = vmatmul.mubr.f32.gmra.mrb[0].mxu0 %v3027
  %v3239 = vpop.f32.mrb[0].mxu0
  %v3240 = vadd.f32 %v3145, %v3239
  %v3241 = vpop.f32.mrb[0].mxu0
  %v3242 = vadd.f32 %v3147, %v3241
  %3243 = vmatprep.mubr.f32.mxu0 %v3033
  %3244 = vmatmul.mubr.f32.gmra.mrb[0].mxu0 %v3028
  %v3245 = vpop.f32.mrb[0].mxu0
  %v3246 = vadd.f32 %v3151, %v3245
  %v3247 = vpop.f32.mrb[0].mxu0
  %v3248 = vadd.f32 %v3153, %v3247
  %3249 = vmatprep.mubr.f32.mxu0 %v3034
  %3250 = vmatmul.mubr.f32.gmra.mrb[0].mxu0 %v3029
  %v3251 = vpop.f32.mrb[0].mxu0
  %v3252 = vadd.f32 %v3157, %v3251
  %v3253 = vpop.f32.mrb[0].mxu0
  %v3254 = vadd.f32 %v3159, %v3253
  %3255 = vmatprep.mubr.f32.mxu0 %v3035
  %3256 = vmatmul.mubr.f32.gmra.mrb[0].mxu0 %v3030
  %v3257 = vpop.f32.mrb[0].mxu0
  %v3258 = vadd.f32 %v3163, %v3257
  %v3259 = vpop.f32.mrb[0].mxu0
  %v3260 = vadd.f32 %v3165, %v3259
  %3261 = vdwg.mxu0
  %3262 = vmatprep.subr.mxu0 %v2333
  %3263 = vmatpush1.msra.mxu0 %v2332
  %3264 = vmatprep.subr.mxu0 %v2335
  %3265 = vmatpush1.msra.mxu0 %v2334
  %3266 = vmatprep.subr.mxu0 %v2337
  %3267 = vmatpush1.msra.mxu0 %v2336
  %3268 = vmatprep.subr.mxu0 %v2339
  %3269 = vmatpush1.msra.mxu0 %v2338
  %3270 = vmatprep.subr.mxu0 %v2341
  %3271 = vmatpush1.msra.mxu0 %v2340
  %3272 = vmatprep.subr.mxu0 %v2343
  %3273 = vmatpush1.msra.mxu0 %v2342
  %3274 = vmatprep.subr.mxu0 %v2345
  %3275 = vmatpush1.msra.mxu0 %v2344
  %3276 = vmatprep.subr.mxu0 %v2347
  %3277 = vmatpush1.msra.mxu0 %v2346
  %3278 = vmatprep.subr.mxu0 %v2349
  %3279 = vmatpush1.msra.mxu0 %v2348
  %3280 = vmatprep.subr.mxu0 %v2351
  %3281 = vmatpush1.msra.mxu0 %v2350
  %3282 = vmatprep.subr.mxu0 %v2353
  %3283 = vmatpush1.msra.mxu0 %v2352
  %3284 = vmatprep.subr.mxu0 %v2355
  %3285 = vmatpush1.msra.mxu0 %v2354
  %3286 = vmatprep.subr.mxu0 %v2357
  %3287 = vmatpush1.msra.mxu0 %v2356
  %3288 = vmatprep.subr.mxu0 %v2359
  %3289 = vmatpush1.msra.mxu0 %v2358
  %3290 = vmatprep.subr.mxu0 %v2361
  %3291 = vmatpush1.msra.mxu0 %v2360
  %3292 = vmatprep.subr.mxu0 %v2363
  %3293 = vmatpush1.msra.mxu0 %v2362
  %3294 = vmatprep.subr.mxu0 %v2365
  %3295 = vmatpush1.msra.mxu0 %v2364
  %3296 = vmatprep.subr.mxu0 %v2367
  %3297 = vmatpush1.msra.mxu0 %v2366
  %3298 = vmatprep.subr.mxu0 %v2369
  %3299 = vmatpush1.msra.mxu0 %v2368
  %3300 = vmatprep.subr.mxu0 %v2371
  %3301 = vmatpush1.msra.mxu0 %v2370
  %3302 = vmatprep.subr.mxu0 %v2373
  %3303 = vmatpush1.msra.mxu0 %v2372
  %3304 = vmatprep.subr.mxu0 %v2375
  %3305 = vmatpush1.msra.mxu0 %v2374
  %3306 = vmatprep.subr.mxu0 %v2377
  %3307 = vmatpush1.msra.mxu0 %v2376
  %3308 = vmatprep.subr.mxu0 %v2379
  %3309 = vmatpush1.msra.mxu0 %v2378
  %3310 = vmatprep.subr.mxu0 %v2381
  %3311 = vmatpush1.msra.mxu0 %v2380
  %3312 = vmatprep.subr.mxu0 %v2383
  %3313 = vmatpush1.msra.mxu0 %v2382
  %3314 = vmatprep.subr.mxu0 %v2385
  %3315 = vmatpush1.msra.mxu0 %v2384
  %3316 = vmatprep.subr.mxu0 %v2387
  %3317 = vmatpush1.msra.mxu0 %v2386
  %3318 = vmatprep.subr.mxu0 %v2389
  %3319 = vmatpush1.msra.mxu0 %v2388
  %3320 = vmatprep.subr.mxu0 %v2391
  %3321 = vmatpush1.msra.mxu0 %v2390
  %3322 = vmatprep.subr.mxu0 %v2393
  %3323 = vmatpush1.msra.mxu0 %v2392
  %3324 = vmatprep.subr.mxu0 %v2395
  %3325 = vmatpush1.msra.mxu0 %v2394
  %3326 = vmatprep.mubr.f32.mxu0 %v3041
  %3327 = vmatmul.mubr.f32.gmra.mrb[0].mxu0 %v3036
  %v3328 = vpop.f32.mrb[0].mxu0
  %v3329 = vadd.f32 %v3234, %v3328
  %v3330 = vpop.f32.mrb[0].mxu0
  %v3331 = vadd.f32 %v3236, %v3330
  %3332 = vmatprep.mubr.f32.mxu0 %v3042
  %3333 = vmatmul.mubr.f32.gmra.mrb[0].mxu0 %v3037
  %v3334 = vpop.f32.mrb[0].mxu0
  %v3335 = vadd.f32 %v3240, %v3334
  %v3336 = vpop.f32.mrb[0].mxu0
  %v3337 = vadd.f32 %v3242, %v3336
  %3338 = vmatprep.mubr.f32.mxu0 %v3043
  %3339 = vmatmul.mubr.f32.gmra.mrb[0].mxu0 %v3038
  %v3340 = vpop.f32.mrb[0].mxu0
  %v3341 = vadd.f32 %v3246, %v3340
  %v3342 = vpop.f32.mrb[0].mxu0
  %v3343 = vadd.f32 %v3248, %v3342
  %3344 = vmatprep.mubr.f32.mxu0 %v3044
  %3345 = vmatmul.mubr.f32.gmra.mrb[0].mxu0 %v3039
  %v3346 = vpop.f32.mrb[0].mxu0
  %v3347 = vadd.f32 %v3252, %v3346
  %v3348 = vpop.f32.mrb[0].mxu0
  %v3349 = vadd.f32 %v3254, %v3348
  %3350 = vmatprep.mubr.f32.mxu0 %v3045
  %3351 = vmatmul.mubr.f32.gmra.mrb[0].mxu0 %v3040
  %v3352 = vpop.f32.mrb[0].mxu0
  %v3353 = vadd.f32 %v3258, %v3352
  %v3354 = vpop.f32.mrb[0].mxu0
  %v3355 = vadd.f32 %v3260, %v3354
  %3356 = vdwg.mxu0
  %3357 = vmatprep.subr.mxu0 %v2397
  %3358 = vmatpush1.msra.mxu0 %v2396
  %3359 = vmatprep.subr.mxu0 %v2399
  %3360 = vmatpush1.msra.mxu0 %v2398
  %3361 = vmatprep.subr.mxu0 %v2401
  %3362 = vmatpush1.msra.mxu0 %v2400
  %3363 = vmatprep.subr.mxu0 %v2403
  %3364 = vmatpush1.msra.mxu0 %v2402
  %3365 = vmatprep.subr.mxu0 %v2405
  %3366 = vmatpush1.msra.mxu0 %v2404
  %3367 = vmatprep.subr.mxu0 %v2407
  %3368 = vmatpush1.msra.mxu0 %v2406
  %3369 = vmatprep.subr.mxu0 %v2409
  %3370 = vmatpush1.msra.mxu0 %v2408
  %3371 = vmatprep.subr.mxu0 %v2411
  %3372 = vmatpush1.msra.mxu0 %v2410
  %3373 = vmatprep.subr.mxu0 %v2413
  %3374 = vmatpush1.msra.mxu0 %v2412
  %3375 = vmatprep.subr.mxu0 %v2415
  %3376 = vmatpush1.msra.mxu0 %v2414
  %3377 = vmatprep.subr.mxu0 %v2417
  %3378 = vmatpush1.msra.mxu0 %v2416
  %3379 = vmatprep.subr.mxu0 %v2419
  %3380 = vmatpush1.msra.mxu0 %v2418
  %3381 = vmatprep.subr.mxu0 0.0
  %3382 = vmatpush1.msra.mxu0 0.0
  %3383 = vmatprep.subr.mxu0 0.0
  %3384 = vmatpush1.msra.mxu0 0.0
  %3385 = vmatprep.subr.mxu0 0.0
  %3386 = vmatpush1.msra.mxu0 0.0
  %3387 = vmatprep.subr.mxu0 0.0
  %3388 = vmatpush1.msra.mxu0 0.0
  %3389 = vmatprep.subr.mxu0 0.0
  %3390 = vmatpush1.msra.mxu0 0.0
  %3391 = vmatprep.subr.mxu0 0.0
  %3392 = vmatpush1.msra.mxu0 0.0
  %3393 = vmatprep.subr.mxu0 0.0
  %3394 = vmatpush1.msra.mxu0 0.0
  %3395 = vmatprep.subr.mxu0 0.0
  %3396 = vmatpush1.msra.mxu0 0.0
  %3397 = vmatprep.subr.mxu0 0.0
  %3398 = vmatpush1.msra.mxu0 0.0
  %3399 = vmatprep.subr.mxu0 0.0
  %3400 = vmatpush1.msra.mxu0 0.0
  %3401 = vmatprep.subr.mxu0 0.0
  %3402 = vmatpush1.msra.mxu0 0.0
  %3403 = vmatprep.subr.mxu0 0.0
  %3404 = vmatpush1.msra.mxu0 0.0
  %3405 = vmatprep.subr.mxu0 0.0
  %3406 = vmatpush1.msra.mxu0 0.0
  %3407 = vmatprep.subr.mxu0 0.0
  %3408 = vmatpush1.msra.mxu0 0.0
  %3409 = vmatprep.subr.mxu0 0.0
  %3410 = vmatpush1.msra.mxu0 0.0
  %3411 = vmatprep.subr.mxu0 0.0
  %3412 = vmatpush1.msra.mxu0 0.0
  %3413 = vmatprep.subr.mxu0 0.0
  %3414 = vmatpush1.msra.mxu0 0.0
  %3415 = vmatprep.subr.mxu0 0.0
  %3416 = vmatpush1.msra.mxu0 0.0
  %3417 = vmatprep.subr.mxu0 0.0
  %3418 = vmatpush1.msra.mxu0 0.0
  %3419 = vmatprep.subr.mxu0 0.0
  %3420 = vmatpush1.msra.mxu0 0.0
  %3421 = vmatprep.mubr.f32.mxu0 0.0
  %3422 = vmatmul.mubr.f32.gmra.mrb[0].mxu0 %v3058
  %v3423 = vpop.f32.mrb[0].mxu0
  %v3424 = vadd.f32 %v3329, %v3423
  %v3425 = vpop.f32.mrb[0].mxu0
  %v3426 = vadd.f32 %v3331, %v3425
  %3427 = vmatprep.mubr.f32.mxu0 0.0
  %3428 = vmatmul.mubr.f32.gmra.mrb[0].mxu0 %v3061
  %v3429 = vpop.f32.mrb[0].mxu0
  %v3430 = vadd.f32 %v3335, %v3429
  %v3431 = vpop.f32.mrb[0].mxu0
  %v3432 = vadd.f32 %v3337, %v3431
  %3433 = vmatprep.mubr.f32.mxu0 0.0
  %3434 = vmatmul.mubr.f32.gmra.mrb[0].mxu0 %v3064
  %v3435 = vpop.f32.mrb[0].mxu0
  %v3436 = vadd.f32 %v3341, %v3435
  %v3437 = vpop.f32.mrb[0].mxu0
  %v3438 = vadd.f32 %v3343, %v3437
  %3439 = vmatprep.mubr.f32.mxu0 0.0
  %3440 = vmatmul.mubr.f32.gmra.mrb[0].mxu0 %v3067
  %v3441 = vpop.f32.mrb[0].mxu0
  %v3442 = vadd.f32 %v3347, %v3441
  %v3443 = vpop.f32.mrb[0].mxu0
  %v3444 = vadd.f32 %v3349, %v3443
  %3445 = vmatprep.mubr.f32.mxu0 0.0
  %3446 = vmatmul.mubr.f32.gmra.mrb[0].mxu0 %v3070
  %v3447 = vpop.f32.mrb[0].mxu0
  %v3448 = vadd.f32 %v3353, %v3447
  %v3449 = vpop.f32.mrb[0].mxu0
  %v3450 = vadd.f32 %v3355, %v3449
  %3451 = vdwg.mxu0
  %v3452 = vld [vmem:[%s51] sm:$0x1]
  %v3453 = vld [vmem:[%s53] sm:$0x1]
  %v3454 = vld [vmem:[%s55] sm:$0xff]
  %v3455 = vld [vmem:[%s55 + $0x8] sm:$0xff]
  %v3456 = vld [vmem:[%s55 + $0x10] sm:$0xff]
  %v3457 = vld [vmem:[%s55 + $0x18] sm:$0xff]
  %v3458 = vld [vmem:[%s55 + $0x20] sm:$0xff]
  %v3459 = vld [vmem:[%s55 + $0x28] sm:$0xff]
  %v3460 = vld [vmem:[%s55 + $0x30] sm:$0xff]
  %v3461 = vld [vmem:[%s55 + $0x38] sm:$0xff]
  %v3462 = vld [vmem:[%s55 + $0x40] sm:$0xff]
  %v3463 = vld [vmem:[%s55 + $0x48] sm:$0xff]
  %v3464 = vld [vmem:[%s55 + $0x50] sm:$0xff]
  %v3465 = vld [vmem:[%s55 + $0x58] sm:$0xff]
  %v3466 = vld [vmem:[%s55 + $0x60] sm:$0xff]
  %v3467 = vld [vmem:[%s55 + $0x68] sm:$0xff]
  %v3468 = vld [vmem:[%s55 + $0x70] sm:$0xff]
  %v3469 = vld [vmem:[%s55 + $0x78] sm:$0xff]
  %v3470 = vld [vmem:[%s55 + $0x80] sm:$0xff]
  %v3471 = vld [vmem:[%s55 + $0x88] sm:$0xff]
  %v3472 = vld [vmem:[%s55 + $0x90] sm:$0xff]
  %v3473 = vld [vmem:[%s57] sm:$0xff]
  %v3474 = vld [vmem:[%s57 + $0x8] sm:$0xff]
  %v3475 = vadd.f32 %v3424, %v3430
  %v3476 = vadd.f32 %v3475, %v3436
  %v3477 = vadd.f32 %v3476, %v3442
  %v3478 = vsel %vm2900, %v3448, 0.0
  %v3479 = vadd.f32 %v3477, %v3478
  %v3480 = vrot.slane %v3479, 4
  %v3481 = vadd.f32 %v3479, %v3480
  %v3482 = vrot.slane %v3481, 2
  %v3483 = vadd.f32 %v3481, %v3482
  %v3484 = vrot.slane %v3483, 1
  %v3485 = vadd.f32 %v3483, %v3484
  %v3486 = vsel %vm891, %v3426, 0.0
  %v3487 = vsel %vm891, %v3432, 0.0
  %v3488 = vadd.f32 %v3486, %v3487
  %v3489 = vsel %vm891, %v3438, 0.0
  %v3490 = vadd.f32 %v3488, %v3489
  %v3491 = vsel %vm891, %v3444, 0.0
  %v3492 = vadd.f32 %v3490, %v3491
  %vm3493 = vcmask 193536
  %v3494 = vsel %vm3493, %v3450, 0.0
  %v3495 = vadd.f32 %v3492, %v3494
  %v3496 = vrot.slane %v3495, 4
  %v3497 = vadd.f32 %v3495, %v3496
  %v3498 = vrot.slane %v3497, 2
  %v3499 = vadd.f32 %v3497, %v3498
  %v3500 = vrot.slane %v3499, 1
  %v3501 = vadd.f32 %v3499, %v3500
  %v3503 = vsel %vm891, %v3501, 0
  %3505 = vmatprep.subr.mxu0 0.0
  %3506 = vmatpush1.msra.mxu0 %v3454
  %3507 = vmatprep.subr.mxu0 0.0
  %3508 = vmatpush1.msra.mxu0 %v3455
  %3509 = vmatprep.subr.mxu0 0.0
  %3510 = vmatpush1.msra.mxu0 %v3456
  %3511 = vmatprep.subr.mxu0 0.0
  %3512 = vmatpush1.msra.mxu0 %v3457
  %3513 = vmatprep.subr.mxu0 0.0
  %3514 = vmatpush1.msra.mxu0 %v3458
  %3515 = vmatprep.subr.mxu0 0.0
  %3516 = vmatpush1.msra.mxu0 %v3459
  %3517 = vmatprep.subr.mxu0 0.0
  %3518 = vmatpush1.msra.mxu0 %v3460
  %3519 = vmatprep.subr.mxu0 0.0
  %3520 = vmatpush1.msra.mxu0 %v3461
  %3521 = vmatprep.subr.mxu0 0.0
  %3522 = vmatpush1.msra.mxu0 %v3462
  %3523 = vmatprep.subr.mxu0 0.0
  %3524 = vmatpush1.msra.mxu0 %v3463
  %3525 = vmatprep.subr.mxu0 0.0
  %3526 = vmatpush1.msra.mxu0 %v3464
  %3527 = vmatprep.subr.mxu0 0.0
  %3528 = vmatpush1.msra.mxu0 %v3465
  %3529 = vmatprep.subr.mxu0 0.0
  %3530 = vmatpush1.msra.mxu0 %v3466
  %3531 = vmatprep.subr.mxu0 0.0
  %3532 = vmatpush1.msra.mxu0 %v3467
  %3533 = vmatprep.subr.mxu0 0.0
  %3534 = vmatpush1.msra.mxu0 %v3468
  %3535 = vmatprep.subr.mxu0 0.0
  %3536 = vmatpush1.msra.mxu0 %v3469
  %3537 = vmatprep.subr.mxu0 0.0
  %3538 = vmatpush1.msra.mxu0 %v3470
  %3539 = vmatprep.subr.mxu0 0.0
  %3540 = vmatpush1.msra.mxu0 %v3471
  %3541 = vmatprep.subr.mxu0 0.0
  %3542 = vmatpush1.msra.mxu0 %v3472
  %3543 = vmatprep.subr.mxu0 0.0
  %3544 = vmatpush1.msra.mxu0 0.0
  %3545 = vmatprep.subr.mxu0 0.0
  %3546 = vmatpush1.msra.mxu0 0.0
  %3547 = vmatprep.subr.mxu0 0.0
  %3548 = vmatpush1.msra.mxu0 0.0
  %3549 = vmatprep.subr.mxu0 0.0
  %3550 = vmatpush1.msra.mxu0 0.0
  %3551 = vmatprep.subr.mxu0 0.0
  %3552 = vmatpush1.msra.mxu0 0.0
  %3553 = vmatprep.subr.mxu0 0.0
  %3554 = vmatpush1.msra.mxu0 0.0
  %3555 = vmatprep.subr.mxu0 0.0
  %3556 = vmatpush1.msra.mxu0 0.0
  %3557 = vmatprep.subr.mxu0 0.0
  %3558 = vmatpush1.msra.mxu0 0.0
  %3559 = vmatprep.subr.mxu0 0.0
  %3560 = vmatpush1.msra.mxu0 0.0
  %3561 = vmatprep.subr.mxu0 0.0
  %3562 = vmatpush1.msra.mxu0 0.0
  %3563 = vmatprep.subr.mxu0 0.0
  %3564 = vmatpush1.msra.mxu0 0.0
  %3565 = vmatprep.subr.mxu0 0.0
  %3566 = vmatpush1.msra.mxu0 0.0
  %3567 = vmatprep.subr.mxu0 0.0
  %3568 = vmatpush1.msra.mxu0 0.0
  %3569 = vmatprep.mubr.f32.mxu0 %v3503
  %3570 = vmatmul.mubr.f32.gmra.mrb[0].mxu0 %v3485
  %v3571 = vpop.f32.mrb[0].mxu0
  %v3572 = vadd.f32 0.0, %v3571
  %v3573 = vpop.f32.mrb[0].mxu0
  %3574 = vdwg.mxu0
  %v3575 = vmul.f32 %v3572, 0.0013850415
  %v3577 = vsel %vm256, %v3575, 0
  %3579 = vmatprep.subr.mxu0 %v3474
  %3580 = vmatpush1.msra.mxu0 %v3473
  %3581 = vmatprep.subr.mxu0 0.0
  %3582 = vmatpush1.msra.mxu0 0.0
  %3583 = vmatprep.subr.mxu0 0.0
  %3584 = vmatpush1.msra.mxu0 0.0
  %3585 = vmatprep.subr.mxu0 0.0
  %3586 = vmatpush1.msra.mxu0 0.0
  %3587 = vmatprep.subr.mxu0 0.0
  %3588 = vmatpush1.msra.mxu0 0.0
  %3589 = vmatprep.subr.mxu0 0.0
  %3590 = vmatpush1.msra.mxu0 0.0
  %3591 = vmatprep.subr.mxu0 0.0
  %3592 = vmatpush1.msra.mxu0 0.0
  %3593 = vmatprep.subr.mxu0 0.0
  %3594 = vmatpush1.msra.mxu0 0.0
  %3595 = vmatprep.subr.mxu0 0.0
  %3596 = vmatpush1.msra.mxu0 0.0
  %3597 = vmatprep.subr.mxu0 0.0
  %3598 = vmatpush1.msra.mxu0 0.0
  %3599 = vmatprep.subr.mxu0 0.0
  %3600 = vmatpush1.msra.mxu0 0.0
  %3601 = vmatprep.subr.mxu0 0.0
  %3602 = vmatpush1.msra.mxu0 0.0
  %3603 = vmatprep.subr.mxu0 0.0
  %3604 = vmatpush1.msra.mxu0 0.0
  %3605 = vmatprep.subr.mxu0 0.0
  %3606 = vmatpush1.msra.mxu0 0.0
  %3607 = vmatprep.subr.mxu0 0.0
  %3608 = vmatpush1.msra.mxu0 0.0
  %3609 = vmatprep.subr.mxu0 0.0
  %3610 = vmatpush1.msra.mxu0 0.0
  %3611 = vmatprep.subr.mxu0 0.0
  %3612 = vmatpush1.msra.mxu0 0.0
  %3613 = vmatprep.subr.mxu0 0.0
  %3614 = vmatpush1.msra.mxu0 0.0
  %3615 = vmatprep.subr.mxu0 0.0
  %3616 = vmatpush1.msra.mxu0 0.0
  %3617 = vmatprep.subr.mxu0 0.0
  %3618 = vmatpush1.msra.mxu0 0.0
  %3619 = vmatprep.subr.mxu0 0.0
  %3620 = vmatpush1.msra.mxu0 0.0
  %3621 = vmatprep.subr.mxu0 0.0
  %3622 = vmatpush1.msra.mxu0 0.0
  %3623 = vmatprep.subr.mxu0 0.0
  %3624 = vmatpush1.msra.mxu0 0.0
  %3625 = vmatprep.subr.mxu0 0.0
  %3626 = vmatpush1.msra.mxu0 0.0
  %3627 = vmatprep.subr.mxu0 0.0
  %3628 = vmatpush1.msra.mxu0 0.0
  %3629 = vmatprep.subr.mxu0 0.0
  %3630 = vmatpush1.msra.mxu0 0.0
  %3631 = vmatprep.subr.mxu0 0.0
  %3632 = vmatpush1.msra.mxu0 0.0
  %3633 = vmatprep.subr.mxu0 0.0
  %3634 = vmatpush1.msra.mxu0 0.0
  %3635 = vmatprep.subr.mxu0 0.0
  %3636 = vmatpush1.msra.mxu0 0.0
  %3637 = vmatprep.subr.mxu0 0.0
  %3638 = vmatpush1.msra.mxu0 0.0
  %3639 = vmatprep.subr.mxu0 0.0
  %3640 = vmatpush1.msra.mxu0 0.0
  %3641 = vmatprep.subr.mxu0 0.0
  %3642 = vmatpush1.msra.mxu0 0.0
  %3643 = vmatprep.mubr.f32.mxu0 0.0
  %3644 = vmatmul.mubr.f32.gmra.mrb[0].mxu0 %v3577
  %v3645 = vpop.f32.mrb[0].mxu0
  %v3646 = vadd.f32 0.0, %v3645
  %v3647 = vpop.f32.mrb[0].mxu0
  %v3648 = vadd.f32 0.0, %v3647
  %3649 = vdwg.mxu0
  %v3650 = vlaneseq
  %v3651 = vshrl.u32 %v3650, 7
  %v3652 = vsub.s32 0, %v3651
  %v3653 = vrot.slane %v3646, %v3652
  %v3654 = vlaneseq
  %v3655 = vshrl.u32 %v3654, 7
  %v3656 = vsub.s32 0, %v3655
  %v3657 = vrot.slane %v3648, %v3656
  %v3658 = vsub.f32 %v3424, %v3653
  %v3659 = vsub.f32 %v3426, %v3657
  %v3660 = vsub.f32 %v3430, %v3653
  %v3661 = vsub.f32 %v3432, %v3657
  %v3662 = vsub.f32 %v3436, %v3653
  %v3663 = vsub.f32 %v3438, %v3657
  %v3664 = vsub.f32 %v3442, %v3653
  %v3665 = vsub.f32 %v3444, %v3657
  %v3666 = vsub.f32 %v3448, %v3653
  %v3667 = vsub.f32 %v3450, %v3657
  %v3668 = vmul.f32 %v3658, %v3658
  %v3669 = vmul.f32 %v3659, %v3659
  %v3670 = vmul.f32 %v3660, %v3660
  %v3671 = vmul.f32 %v3661, %v3661
  %v3672 = vmul.f32 %v3662, %v3662
  %v3673 = vmul.f32 %v3663, %v3663
  %v3674 = vmul.f32 %v3664, %v3664
  %v3675 = vmul.f32 %v3665, %v3665
  %v3676 = vmul.f32 %v3666, %v3666
  %v3677 = vmul.f32 %v3667, %v3667
  %v3678 = vadd.f32 %v3668, %v3670
  %v3679 = vadd.f32 %v3678, %v3672
  %v3680 = vadd.f32 %v3679, %v3674
  %v3681 = vsel %vm2900, %v3676, 0.0
  %v3682 = vadd.f32 %v3680, %v3681
  %v3683 = vrot.slane %v3682, 4
  %v3684 = vadd.f32 %v3682, %v3683
  %v3685 = vrot.slane %v3684, 2
  %v3686 = vadd.f32 %v3684, %v3685
  %v3687 = vrot.slane %v3686, 1
  %v3688 = vadd.f32 %v3686, %v3687
  %v3689 = vsel %vm891, %v3669, 0.0
  %v3690 = vsel %vm891, %v3671, 0.0
  %v3691 = vadd.f32 %v3689, %v3690
  %v3692 = vsel %vm891, %v3673, 0.0
  %v3693 = vadd.f32 %v3691, %v3692
  %v3694 = vsel %vm891, %v3675, 0.0
  %v3695 = vadd.f32 %v3693, %v3694
  %v3696 = vsel %vm3493, %v3677, 0.0
  %v3697 = vadd.f32 %v3695, %v3696
  %v3698 = vrot.slane %v3697, 4
  %v3699 = vadd.f32 %v3697, %v3698
  %v3700 = vrot.slane %v3699, 2
  %v3701 = vadd.f32 %v3699, %v3700
  %v3702 = vrot.slane %v3701, 1
  %v3703 = vadd.f32 %v3701, %v3702
  %v3705 = vsel %vm891, %v3703, 0
  %3707 = vmatprep.subr.mxu0 0.0
  %3708 = vmatpush1.msra.mxu0 %v3454
  %3709 = vmatprep.subr.mxu0 0.0
  %3710 = vmatpush1.msra.mxu0 %v3455
  %3711 = vmatprep.subr.mxu0 0.0
  %3712 = vmatpush1.msra.mxu0 %v3456
  %3713 = vmatprep.subr.mxu0 0.0
  %3714 = vmatpush1.msra.mxu0 %v3457
  %3715 = vmatprep.subr.mxu0 0.0
  %3716 = vmatpush1.msra.mxu0 %v3458
  %3717 = vmatprep.subr.mxu0 0.0
  %3718 = vmatpush1.msra.mxu0 %v3459
  %3719 = vmatprep.subr.mxu0 0.0
  %3720 = vmatpush1.msra.mxu0 %v3460
  %3721 = vmatprep.subr.mxu0 0.0
  %3722 = vmatpush1.msra.mxu0 %v3461
  %3723 = vmatprep.subr.mxu0 0.0
  %3724 = vmatpush1.msra.mxu0 %v3462
  %3725 = vmatprep.subr.mxu0 0.0
  %3726 = vmatpush1.msra.mxu0 %v3463
  %3727 = vmatprep.subr.mxu0 0.0
  %3728 = vmatpush1.msra.mxu0 %v3464
  %3729 = vmatprep.subr.mxu0 0.0
  %3730 = vmatpush1.msra.mxu0 %v3465
  %3731 = vmatprep.subr.mxu0 0.0
  %3732 = vmatpush1.msra.mxu0 %v3466
  %3733 = vmatprep.subr.mxu0 0.0
  %3734 = vmatpush1.msra.mxu0 %v3467
  %3735 = vmatprep.subr.mxu0 0.0
  %3736 = vmatpush1.msra.mxu0 %v3468
  %3737 = vmatprep.subr.mxu0 0.0
  %3738 = vmatpush1.msra.mxu0 %v3469
  %3739 = vmatprep.subr.mxu0 0.0
  %3740 = vmatpush1.msra.mxu0 %v3470
  %3741 = vmatprep.subr.mxu0 0.0
  %3742 = vmatpush1.msra.mxu0 %v3471
  %3743 = vmatprep.subr.mxu0 0.0
  %3744 = vmatpush1.msra.mxu0 %v3472
  %3745 = vmatprep.subr.mxu0 0.0
  %3746 = vmatpush1.msra.mxu0 0.0
  %3747 = vmatprep.subr.mxu0 0.0
  %3748 = vmatpush1.msra.mxu0 0.0
  %3749 = vmatprep.subr.mxu0 0.0
  %3750 = vmatpush1.msra.mxu0 0.0
  %3751 = vmatprep.subr.mxu0 0.0
  %3752 = vmatpush1.msra.mxu0 0.0
  %3753 = vmatprep.subr.mxu0 0.0
  %3754 = vmatpush1.msra.mxu0 0.0
  %3755 = vmatprep.subr.mxu0 0.0
  %3756 = vmatpush1.msra.mxu0 0.0
  %3757 = vmatprep.subr.mxu0 0.0
  %3758 = vmatpush1.msra.mxu0 0.0
  %3759 = vmatprep.subr.mxu0 0.0
  %3760 = vmatpush1.msra.mxu0 0.0
  %3761 = vmatprep.subr.mxu0 0.0
  %3762 = vmatpush1.msra.mxu0 0.0
  %3763 = vmatprep.subr.mxu0 0.0
  %3764 = vmatpush1.msra.mxu0 0.0
  %3765 = vmatprep.subr.mxu0 0.0
  %3766 = vmatpush1.msra.mxu0 0.0
  %3767 = vmatprep.subr.mxu0 0.0
  %3768 = vmatpush1.msra.mxu0 0.0
  %3769 = vmatprep.subr.mxu0 0.0
  %3770 = vmatpush1.msra.mxu0 0.0
  %3771 = vmatprep.mubr.f32.mxu0 %v3705
  %3772 = vmatmul.mubr.f32.gmra.mrb[0].mxu0 %v3688
  %v3773 = vpop.f32.mrb[0].mxu0
  %v3774 = vadd.f32 0.0, %v3773
  %v3775 = vpop.f32.mrb[0].mxu0
  %3776 = vdwg.mxu0
  %v3777 = vmul.f32 %v3774, 0.0013850415
  %v3778 = vadd.f32 %v3777, 1e-05
  %v3779 = vrsqrt.pop %v3778
  %v3780 = vmul.f32 %v3452, %v3779
  %v3781 = vmul.f32 %v3575, %v3780
  %v3782 = vsub.f32 %v3453, %v3781
  %v3784 = vsel %vm256, %v3780, 0
  %3786 = vmatprep.subr.mxu0 %v3474
  %3787 = vmatpush1.msra.mxu0 %v3473
  %3788 = vmatprep.subr.mxu0 0.0
  %3789 = vmatpush1.msra.mxu0 0.0
  %3790 = vmatprep.subr.mxu0 0.0
  %3791 = vmatpush1.msra.mxu0 0.0
  %3792 = vmatprep.subr.mxu0 0.0
  %3793 = vmatpush1.msra.mxu0 0.0
  %3794 = vmatprep.subr.mxu0 0.0
  %3795 = vmatpush1.msra.mxu0 0.0
  %3796 = vmatprep.subr.mxu0 0.0
  %3797 = vmatpush1.msra.mxu0 0.0
  %3798 = vmatprep.subr.mxu0 0.0
  %3799 = vmatpush1.msra.mxu0 0.0
  %3800 = vmatprep.subr.mxu0 0.0
  %3801 = vmatpush1.msra.mxu0 0.0
  %3802 = vmatprep.subr.mxu0 0.0
  %3803 = vmatpush1.msra.mxu0 0.0
  %3804 = vmatprep.subr.mxu0 0.0
  %3805 = vmatpush1.msra.mxu0 0.0
  %3806 = vmatprep.subr.mxu0 0.0
  %3807 = vmatpush1.msra.mxu0 0.0
  %3808 = vmatprep.subr.mxu0 0.0
  %3809 = vmatpush1.msra.mxu0 0.0
  %3810 = vmatprep.subr.mxu0 0.0
  %3811 = vmatpush1.msra.mxu0 0.0
  %3812 = vmatprep.subr.mxu0 0.0
  %3813 = vmatpush1.msra.mxu0 0.0
  %3814 = vmatprep.subr.mxu0 0.0
  %3815 = vmatpush1.msra.mxu0 0.0
  %3816 = vmatprep.subr.mxu0 0.0
  %3817 = vmatpush1.msra.mxu0 0.0
  %3818 = vmatprep.subr.mxu0 0.0
  %3819 = vmatpush1.msra.mxu0 0.0
  %3820 = vmatprep.subr.mxu0 0.0
  %3821 = vmatpush1.msra.mxu0 0.0
  %3822 = vmatprep.subr.mxu0 0.0
  %3823 = vmatpush1.msra.mxu0 0.0
  %3824 = vmatprep.subr.mxu0 0.0
  %3825 = vmatpush1.msra.mxu0 0.0
  %3826 = vmatprep.subr.mxu0 0.0
  %3827 = vmatpush1.msra.mxu0 0.0
  %3828 = vmatprep.subr.mxu0 0.0
  %3829 = vmatpush1.msra.mxu0 0.0
  %3830 = vmatprep.subr.mxu0 0.0
  %3831 = vmatpush1.msra.mxu0 0.0
  %3832 = vmatprep.subr.mxu0 0.0
  %3833 = vmatpush1.msra.mxu0 0.0
  %3834 = vmatprep.subr.mxu0 0.0
  %3835 = vmatpush1.msra.mxu0 0.0
  %3836 = vmatprep.subr.mxu0 0.0
  %3837 = vmatpush1.msra.mxu0 0.0
  %3838 = vmatprep.subr.mxu0 0.0
  %3839 = vmatpush1.msra.mxu0 0.0
  %3840 = vmatprep.subr.mxu0 0.0
  %3841 = vmatpush1.msra.mxu0 0.0
  %3842 = vmatprep.subr.mxu0 0.0
  %3843 = vmatpush1.msra.mxu0 0.0
  %3844 = vmatprep.subr.mxu0 0.0
  %3845 = vmatpush1.msra.mxu0 0.0
  %3846 = vmatprep.subr.mxu0 0.0
  %3847 = vmatpush1.msra.mxu0 0.0
  %3848 = vmatprep.subr.mxu0 0.0
  %3849 = vmatpush1.msra.mxu0 0.0
  %3850 = vmatprep.mubr.f32.mxu0 0.0
  %3851 = vmatmul.mubr.f32.gmra.mrb[0].mxu0 %v3784
  %v3852 = vpop.f32.mrb[0].mxu0
  %v3853 = vadd.f32 0.0, %v3852
  %v3854 = vpop.f32.mrb[0].mxu0
  %v3855 = vadd.f32 0.0, %v3854
  %3856 = vdwg.mxu0
  %v3858 = vsel %vm256, %v3782, 0
  %3860 = vmatprep.subr.mxu0 %v3474
  %3861 = vmatpush1.msra.mxu0 %v3473
  %3862 = vmatprep.subr.mxu0 0.0
  %3863 = vmatpush1.msra.mxu0 0.0
  %3864 = vmatprep.subr.mxu0 0.0
  %3865 = vmatpush1.msra.mxu0 0.0
  %3866 = vmatprep.subr.mxu0 0.0
  %3867 = vmatpush1.msra.mxu0 0.0
  %3868 = vmatprep.subr.mxu0 0.0
  %3869 = vmatpush1.msra.mxu0 0.0
  %3870 = vmatprep.subr.mxu0 0.0
  %3871 = vmatpush1.msra.mxu0 0.0
  %3872 = vmatprep.subr.mxu0 0.0
  %3873 = vmatpush1.msra.mxu0 0.0
  %3874 = vmatprep.subr.mxu0 0.0
  %3875 = vmatpush1.msra.mxu0 0.0
  %3876 = vmatprep.subr.mxu0 0.0
  %3877 = vmatpush1.msra.mxu0 0.0
  %3878 = vmatprep.subr.mxu0 0.0
  %3879 = vmatpush1.msra.mxu0 0.0
  %3880 = vmatprep.subr.mxu0 0.0
  %3881 = vmatpush1.msra.mxu0 0.0
  %3882 = vmatprep.subr.mxu0 0.0
  %3883 = vmatpush1.msra.mxu0 0.0
  %3884 = vmatprep.subr.mxu0 0.0
  %3885 = vmatpush1.msra.mxu0 0.0
  %3886 = vmatprep.subr.mxu0 0.0
  %3887 = vmatpush1.msra.mxu0 0.0
  %3888 = vmatprep.subr.mxu0 0.0
  %3889 = vmatpush1.msra.mxu0 0.0
  %3890 = vmatprep.subr.mxu0 0.0
  %3891 = vmatpush1.msra.mxu0 0.0
  %3892 = vmatprep.subr.mxu0 0.0
  %3893 = vmatpush1.msra.mxu0 0.0
  %3894 = vmatprep.subr.mxu0 0.0
  %3895 = vmatpush1.msra.mxu0 0.0
  %3896 = vmatprep.subr.mxu0 0.0
  %3897 = vmatpush1.msra.mxu0 0.0
  %3898 = vmatprep.subr.mxu0 0.0
  %3899 = vmatpush1.msra.mxu0 0.0
  %3900 = vmatprep.subr.mxu0 0.0
  %3901 = vmatpush1.msra.mxu0 0.0
  %3902 = vmatprep.subr.mxu0 0.0
  %3903 = vmatpush1.msra.mxu0 0.0
  %3904 = vmatprep.subr.mxu0 0.0
  %3905 = vmatpush1.msra.mxu0 0.0
  %3906 = vmatprep.subr.mxu0 0.0
  %3907 = vmatpush1.msra.mxu0 0.0
  %3908 = vmatprep.subr.mxu0 0.0
  %3909 = vmatpush1.msra.mxu0 0.0
  %3910 = vmatprep.subr.mxu0 0.0
  %3911 = vmatpush1.msra.mxu0 0.0
  %3912 = vmatprep.subr.mxu0 0.0
  %3913 = vmatpush1.msra.mxu0 0.0
  %3914 = vmatprep.subr.mxu0 0.0
  %3915 = vmatpush1.msra.mxu0 0.0
  %3916 = vmatprep.subr.mxu0 0.0
  %3917 = vmatpush1.msra.mxu0 0.0
  %3918 = vmatprep.subr.mxu0 0.0
  %3919 = vmatpush1.msra.mxu0 0.0
  %3920 = vmatprep.subr.mxu0 0.0
  %3921 = vmatpush1.msra.mxu0 0.0
  %3922 = vmatprep.subr.mxu0 0.0
  %3923 = vmatpush1.msra.mxu0 0.0
  %3924 = vmatprep.mubr.f32.mxu0 0.0
  %3925 = vmatmul.mubr.f32.gmra.mrb[0].mxu0 %v3858
  %v3926 = vpop.f32.mrb[0].mxu0
  %v3927 = vadd.f32 0.0, %v3926
  %v3928 = vpop.f32.mrb[0].mxu0
  %v3929 = vadd.f32 0.0, %v3928
  %3930 = vdwg.mxu0
  %v3931 = vlaneseq
  %v3932 = vshrl.u32 %v3931, 7
  %v3933 = vsub.s32 0, %v3932
  %v3934 = vrot.slane %v3853, %v3933
  %v3935 = vlaneseq
  %v3936 = vshrl.u32 %v3935, 7
  %v3937 = vsub.s32 0, %v3936
  %v3938 = vrot.slane %v3855, %v3937
  %v3939 = vmul.f32 %v3424, %v3934
  %v3940 = vmul.f32 %v3426, %v3938
  %v3941 = vmul.f32 %v3430, %v3934
  %v3942 = vmul.f32 %v3432, %v3938
  %v3943 = vmul.f32 %v3436, %v3934
  %v3944 = vmul.f32 %v3438, %v3938
  %v3945 = vmul.f32 %v3442, %v3934
  %v3946 = vmul.f32 %v3444, %v3938
  %v3947 = vmul.f32 %v3448, %v3934
  %v3948 = vmul.f32 %v3450, %v3938
  %v3949 = vlaneseq
  %v3950 = vshrl.u32 %v3949, 7
  %v3951 = vsub.s32 0, %v3950
  %v3952 = vrot.slane %v3927, %v3951
  %v3953 = vlaneseq
  %v3954 = vshrl.u32 %v3953, 7
  %v3955 = vsub.s32 0, %v3954
  %v3956 = vrot.slane %v3929, %v3955
  %v3957 = vadd.f32 %v3939, %v3952
  %v3958 = vadd.f32 %v3940, %v3956
  %v3959 = vadd.f32 %v3941, %v3952
  %v3960 = vadd.f32 %v3942, %v3956
  %v3961 = vadd.f32 %v3943, %v3952
  %v3962 = vadd.f32 %v3944, %v3956
  %v3963 = vadd.f32 %v3945, %v3952
  %v3964 = vadd.f32 %v3946, %v3956
  %v3965 = vadd.f32 %v3947, %v3952
  %v3966 = vadd.f32 %v3948, %v3956
  %v3967 = vmax.f32 %v3957, 0.0
  %v3968 = vmax.f32 %v3958, 0.0
  %v3969 = vmax.f32 %v3959, 0.0
  %v3970 = vmax.f32 %v3960, 0.0
  %v3971 = vmax.f32 %v3961, 0.0
  %v3972 = vmax.f32 %v3962, 0.0
  %v3973 = vmax.f32 %v3963, 0.0
  %v3974 = vmax.f32 %v3964, 0.0
  %v3975 = vmax.f32 %v3965, 0.0
  %v3976 = vmax.f32 %v3966, 0.0
  %v3977 = vld [vmem:[%s59] sm:$0xff]
  %v3978 = vld [vmem:[%s59 + $0x8] sm:$0xff]
  %v3979 = vld [vmem:[%s59 + $0x10] sm:$0xff]
  %v3980 = vld [vmem:[%s59 + $0x18] sm:$0xff]
  %v3981 = vld [vmem:[%s59 + $0x20] sm:$0xff]
  %v3982 = vld [vmem:[%s59 + $0x28] sm:$0xff]
  %v3983 = vld [vmem:[%s59 + $0x30] sm:$0xff]
  %v3984 = vld [vmem:[%s59 + $0x38] sm:$0xff]
  %v3985 = vld [vmem:[%s59 + $0x40] sm:$0xff]
  %v3986 = vld [vmem:[%s59 + $0x48] sm:$0xff]
  %v3987 = vld [vmem:[%s59 + $0x50] sm:$0xff]
  %v3988 = vld [vmem:[%s59 + $0x58] sm:$0xff]
  %v3989 = vld [vmem:[%s59 + $0x60] sm:$0xff]
  %v3990 = vld [vmem:[%s59 + $0x68] sm:$0xff]
  %v3991 = vld [vmem:[%s59 + $0x70] sm:$0xff]
  %v3992 = vld [vmem:[%s59 + $0x78] sm:$0xff]
  %v3993 = vld [vmem:[%s59 + $0x80] sm:$0xff]
  %v3994 = vld [vmem:[%s59 + $0x88] sm:$0xff]
  %v3995 = vld [vmem:[%s59 + $0x90] sm:$0xff]
  %v3996 = vld [vmem:[%s59 + $0x98] sm:$0xff]
  %v3997 = vld [vmem:[%s59 + $0xa0] sm:$0xff]
  %v3998 = vld [vmem:[%s59 + $0xa8] sm:$0xff]
  %v3999 = vld [vmem:[%s59 + $0xb0] sm:$0xff]
  %v4000 = vld [vmem:[%s59 + $0xb8] sm:$0xff]
  %v4001 = vld [vmem:[%s59 + $0xc0] sm:$0xff]
  %v4002 = vld [vmem:[%s59 + $0xc8] sm:$0xff]
  %v4003 = vld [vmem:[%s59 + $0xd0] sm:$0xff]
  %v4004 = vld [vmem:[%s59 + $0xd8] sm:$0xff]
  %v4005 = vld [vmem:[%s59 + $0xe0] sm:$0xff]
  %v4006 = vld [vmem:[%s59 + $0xe8] sm:$0xff]
  %v4007 = vld [vmem:[%s59 + $0xf0] sm:$0xff]
  %v4008 = vld [vmem:[%s59 + $0xf8] sm:$0xff]
  %v4009 = vld [vmem:[%s59 + $0x100] sm:$0xff]
  %v4010 = vld [vmem:[%s59 + $0x108] sm:$0xff]
  %v4011 = vld [vmem:[%s59 + $0x110] sm:$0xff]
  %v4012 = vld [vmem:[%s59 + $0x118] sm:$0xff]
  %v4013 = vld [vmem:[%s61] sm:$0xff]
  %v4014 = vld [vmem:[%s61 + $0x8] sm:$0xff]
  %v4015 = vld [vmem:[%s61 + $0x10] sm:$0xff]
  %v4016 = vld [vmem:[%s61 + $0x18] sm:$0xff]
  %v4017 = vld [vmem:[%s61 + $0x20] sm:$0xff]
  %v4018 = vld [vmem:[%s61 + $0x28] sm:$0xff]
  %v4019 = vld [vmem:[%s61 + $0x30] sm:$0xff]
  %v4020 = vld [vmem:[%s61 + $0x38] sm:$0xff]
  %v4021 = vld [vmem:[%s61 + $0x40] sm:$0xff]
  %v4022 = vld [vmem:[%s61 + $0x48] sm:$0xff]
  %v4023 = vld [vmem:[%s61 + $0x50] sm:$0xff]
  %v4024 = vld [vmem:[%s61 + $0x58] sm:$0xff]
  %v4025 = vld [vmem:[%s61 + $0x60] sm:$0xff]
  %v4026 = vld [vmem:[%s61 + $0x68] sm:$0xff]
  %v4027 = vld [vmem:[%s61 + $0x70] sm:$0xff]
  %v4028 = vld [vmem:[%s61 + $0x78] sm:$0xff]
  %v4029 = vld [vmem:[%s61 + $0x80] sm:$0xff]
  %v4030 = vld [vmem:[%s61 + $0x88] sm:$0xff]
  %v4031 = vld [vmem:[%s61 + $0x90] sm:$0xff]
  %v4032 = vld [vmem:[%s61 + $0x98] sm:$0xff]
  %v4033 = vld [vmem:[%s61 + $0xa0] sm:$0xff]
  %v4034 = vld [vmem:[%s61 + $0xa8] sm:$0xff]
  %v4035 = vld [vmem:[%s61 + $0xb0] sm:$0xff]
  %v4036 = vld [vmem:[%s61 + $0xb8] sm:$0xff]
  %v4037 = vld [vmem:[%s61 + $0xc0] sm:$0xff]
  %v4038 = vld [vmem:[%s61 + $0xc8] sm:$0xff]
  %v4039 = vld [vmem:[%s61 + $0xd0] sm:$0xff]
  %v4040 = vld [vmem:[%s61 + $0xd8] sm:$0xff]
  %v4041 = vld [vmem:[%s61 + $0xe0] sm:$0xff]
  %v4042 = vld [vmem:[%s61 + $0xe8] sm:$0xff]
  %v4043 = vld [vmem:[%s61 + $0xf0] sm:$0xff]
  %v4044 = vld [vmem:[%s61 + $0xf8] sm:$0xff]
  %v4045 = vld [vmem:[%s61 + $0x100] sm:$0xff]
  %v4046 = vld [vmem:[%s61 + $0x108] sm:$0xff]
  %v4047 = vld [vmem:[%s61 + $0x110] sm:$0xff]
  %v4048 = vld [vmem:[%s61 + $0x118] sm:$0xff]
  %v4049 = vld [vmem:[%s61 + $0x120] sm:$0xff]
  %v4050 = vld [vmem:[%s61 + $0x128] sm:$0xff]
  %v4051 = vld [vmem:[%s61 + $0x130] sm:$0xff]
  %v4052 = vld [vmem:[%s61 + $0x138] sm:$0xff]
  %v4053 = vld [vmem:[%s61 + $0x140] sm:$0xff]
  %v4054 = vld [vmem:[%s61 + $0x148] sm:$0xff]
  %v4055 = vld [vmem:[%s61 + $0x150] sm:$0xff]
  %v4056 = vld [vmem:[%s61 + $0x158] sm:$0xff]
  %v4057 = vld [vmem:[%s61 + $0x160] sm:$0xff]
  %v4058 = vld [vmem:[%s61 + $0x168] sm:$0xff]
  %v4059 = vld [vmem:[%s61 + $0x170] sm:$0xff]
  %v4060 = vld [vmem:[%s61 + $0x178] sm:$0xff]
  %v4061 = vld [vmem:[%s61 + $0x180] sm:$0xff]
  %v4062 = vld [vmem:[%s61 + $0x188] sm:$0xff]
  %v4063 = vld [vmem:[%s61 + $0x190] sm:$0xff]
  %v4064 = vld [vmem:[%s61 + $0x198] sm:$0xff]
  %v4065 = vld [vmem:[%s61 + $0x1a0] sm:$0xff]
  %v4066 = vld [vmem:[%s61 + $0x1a8] sm:$0xff]
  %v4067 = vld [vmem:[%s61 + $0x1b0] sm:$0xff]
  %v4068 = vld [vmem:[%s61 + $0x1b8] sm:$0xff]
  %v4069 = vld [vmem:[%s61 + $0x1c0] sm:$0xff]
  %v4070 = vld [vmem:[%s61 + $0x1c8] sm:$0xff]
  %v4071 = vld [vmem:[%s61 + $0x1d0] sm:$0xff]
  %v4072 = vld [vmem:[%s61 + $0x1d8] sm:$0xff]
  %v4073 = vld [vmem:[%s61 + $0x1e0] sm:$0xff]
  %v4074 = vld [vmem:[%s61 + $0x1e8] sm:$0xff]
  %v4075 = vld [vmem:[%s61 + $0x1f0] sm:$0xff]
  %v4076 = vld [vmem:[%s61 + $0x1f8] sm:$0xff]
  %v4077 = vld [vmem:[%s61 + $0x200] sm:$0xff]
  %v4078 = vld [vmem:[%s61 + $0x208] sm:$0xff]
  %v4079 = vld [vmem:[%s61 + $0x210] sm:$0xff]
  %v4080 = vld [vmem:[%s61 + $0x218] sm:$0xff]
  %v4081 = vld [vmem:[%s61 + $0x220] sm:$0xff]
  %v4082 = vld [vmem:[%s61 + $0x228] sm:$0xff]
  %v4083 = vld [vmem:[%s61 + $0x230] sm:$0xff]
  %v4084 = vld [vmem:[%s61 + $0x238] sm:$0xff]
  %v4085 = vld [vmem:[%s61 + $0x240] sm:$0xff]
  %v4086 = vld [vmem:[%s61 + $0x248] sm:$0xff]
  %v4087 = vld [vmem:[%s61 + $0x250] sm:$0xff]
  %v4088 = vld [vmem:[%s61 + $0x258] sm:$0xff]
  %v4089 = vld [vmem:[%s61 + $0x260] sm:$0xff]
  %v4090 = vld [vmem:[%s61 + $0x268] sm:$0xff]
  %v4091 = vld [vmem:[%s61 + $0x270] sm:$0xff]
  %v4092 = vld [vmem:[%s61 + $0x278] sm:$0xff]
  %v4093 = vld [vmem:[%s61 + $0x280] sm:$0xff]
  %v4094 = vld [vmem:[%s61 + $0x288] sm:$0xff]
  %v4095 = vld [vmem:[%s61 + $0x290] sm:$0xff]
  %v4096 = vld [vmem:[%s61 + $0x298] sm:$0xff]
  %v4097 = vld [vmem:[%s61 + $0x2a0] sm:$0xff]
  %v4098 = vld [vmem:[%s61 + $0x2a8] sm:$0xff]
  %v4099 = vld [vmem:[%s61 + $0x2b0] sm:$0xff]
  %v4100 = vld [vmem:[%s61 + $0x2b8] sm:$0xff]
  %v4101 = vld [vmem:[%s61 + $0x2c0] sm:$0xff]
  %v4102 = vld [vmem:[%s61 + $0x2c8] sm:$0xff]
  %v4103 = vld [vmem:[%s61 + $0x2d0] sm:$0xff]
  %v4104 = vld [vmem:[%s61 + $0x2d8] sm:$0xff]
  %v4105 = vld [vmem:[%s61 + $0x2e0] sm:$0xff]
  %v4106 = vld [vmem:[%s61 + $0x2e8] sm:$0xff]
  %v4107 = vld [vmem:[%s61 + $0x2f0] sm:$0xff]
  %v4108 = vld [vmem:[%s61 + $0x2f8] sm:$0xff]
  %v4109 = vld [vmem:[%s61 + $0x300] sm:$0xff]
  %v4110 = vld [vmem:[%s61 + $0x308] sm:$0xff]
  %v4111 = vld [vmem:[%s61 + $0x310] sm:$0xff]
  %v4112 = vld [vmem:[%s61 + $0x318] sm:$0xff]
  %v4113 = vld [vmem:[%s61 + $0x320] sm:$0xff]
  %v4114 = vld [vmem:[%s61 + $0x328] sm:$0xff]
  %v4115 = vld [vmem:[%s61 + $0x330] sm:$0xff]
  %v4116 = vld [vmem:[%s61 + $0x338] sm:$0xff]
  %v4117 = vld [vmem:[%s61 + $0x340] sm:$0xff]
  %v4118 = vld [vmem:[%s61 + $0x348] sm:$0xff]
  %v4119 = vld [vmem:[%s61 + $0x350] sm:$0xff]
  %v4120 = vld [vmem:[%s61 + $0x358] sm:$0xff]
  %v4121 = vld [vmem:[%s61 + $0x360] sm:$0xff]
  %v4122 = vld [vmem:[%s61 + $0x368] sm:$0xff]
  %v4123 = vld [vmem:[%s61 + $0x370] sm:$0xff]
  %v4124 = vld [vmem:[%s61 + $0x378] sm:$0xff]
  %v4125 = vld [vmem:[%s61 + $0x380] sm:$0xff]
  %v4126 = vld [vmem:[%s61 + $0x388] sm:$0xff]
  %v4127 = vld [vmem:[%s63] sm:$0x1]
  %vm4128 = vcmask 310272
  %v4130 = vsel %vm4128, %v3977, 0
  %v4133 = vsel %vm4128, %v3978, 0
  %v4136 = vsel %vm4128, %v3979, 0
  %v4139 = vsel %vm4128, %v3980, 0
  %v4142 = vsel %vm4128, %v3981, 0
  %v4145 = vsel %vm4128, %v3982, 0
  %v4148 = vsel %vm4128, %v3983, 0
  %v4151 = vsel %vm4128, %v3984, 0
  %v4154 = vsel %vm4128, %v3985, 0
  %v4157 = vsel %vm4128, %v3986, 0
  %v4160 = vsel %vm4128, %v3987, 0
  %v4163 = vsel %vm4128, %v3988, 0
  %v4166 = vsel %vm4128, %v3989, 0
  %v4169 = vsel %vm4128, %v3990, 0
  %v4172 = vsel %vm4128, %v3991, 0
  %v4175 = vsel %vm4128, %v3992, 0
  %v4178 = vsel %vm4128, %v3993, 0
  %v4181 = vsel %vm4128, %v3994, 0
  %v4184 = vsel %vm4128, %v3995, 0
  %v4187 = vsel %vm4128, %v3996, 0
  %v4190 = vsel %vm4128, %v3997, 0
  %v4193 = vsel %vm4128, %v3998, 0
  %v4196 = vsel %vm4128, %v3999, 0
  %v4199 = vsel %vm4128, %v4000, 0
  %v4202 = vsel %vm4128, %v4001, 0
  %v4205 = vsel %vm4128, %v4002, 0
  %v4208 = vsel %vm4128, %v4003, 0
  %v4211 = vsel %vm4128, %v4004, 0
  %v4214 = vsel %vm4128, %v4005, 0
  %v4217 = vsel %vm4128, %v4006, 0
  %v4220 = vsel %vm4128, %v4007, 0
  %v4223 = vsel %vm4128, %v4008, 0
  %v4226 = vsel %vm4128, %v4009, 0
  %v4229 = vsel %vm4128, %v4010, 0
  %v4232 = vsel %vm4128, %v4011, 0
  %v4235 = vsel %vm4128, %v4012, 0
  %v4238 = vsel %vm2900, %v3975, 0
  %v4241 = vsel %vm2900, %v3976, 0
  %4243 = vmatprep.subr.mxu0 %v3968
  %4244 = vmatpush1.msra.mxu0 %v3967
  %4245 = vmatprep.subr.mxu0 %v3970
  %4246 = vmatpush1.msra.mxu0 %v3969
  %4247 = vmatprep.subr.mxu0 %v3972
  %4248 = vmatpush1.msra.mxu0 %v3971
  %4249 = vmatprep.subr.mxu0 %v3974
  %4250 = vmatpush1.msra.mxu0 %v3973
  %4251 = vmatprep.subr.mxu0 %v4241
  %4252 = vmatpush1.msra.mxu0 %v4238
  %4253 = vmatprep.subr.mxu0 0.0
  %4254 = vmatpush1.msra.mxu0 0.0
  %4255 = vmatprep.subr.mxu0 0.0
  %4256 = vmatpush1.msra.mxu0 0.0
  %4257 = vmatprep.subr.mxu0 0.0
  %4258 = vmatpush1.msra.mxu0 0.0
  %4259 = vmatprep.subr.mxu0 0.0
  %4260 = vmatpush1.msra.mxu0 0.0
  %4261 = vmatprep.subr.mxu0 0.0
  %4262 = vmatpush1.msra.mxu0 0.0
  %4263 = vmatprep.subr.mxu0 0.0
  %4264 = vmatpush1.msra.mxu0 0.0
  %4265 = vmatprep.subr.mxu0 0.0
  %4266 = vmatpush1.msra.mxu0 0.0
  %4267 = vmatprep.subr.mxu0 0.0
  %4268 = vmatpush1.msra.mxu0 0.0
  %4269 = vmatprep.subr.mxu0 0.0
  %4270 = vmatpush1.msra.mxu0 0.0
  %4271 = vmatprep.subr.mxu0 0.0
  %4272 = vmatpush1.msra.mxu0 0.0
  %4273 = vmatprep.subr.mxu0 0.0
  %4274 = vmatpush1.msra.mxu0 0.0
  %4275 = vmatprep.subr.mxu0 0.0
  %4276 = vmatpush1.msra.mxu0 0.0
  %4277 = vmatprep.subr.mxu0 0.0
  %4278 = vmatpush1.msra.mxu0 0.0
  %4279 = vmatprep.subr.mxu0 0.0
  %4280 = vmatpush1.msra.mxu0 0.0
  %4281 = vmatprep.subr.mxu0 0.0
  %4282 = vmatpush1.msra.mxu0 0.0
  %4283 = vmatprep.subr.mxu0 0.0
  %4284 = vmatpush1.msra.mxu0 0.0
  %4285 = vmatprep.subr.mxu0 0.0
  %4286 = vmatpush1.msra.mxu0 0.0
  %4287 = vmatprep.subr.mxu0 0.0
  %4288 = vmatpush1.msra.mxu0 0.0
  %4289 = vmatprep.subr.mxu0 0.0
  %4290 = vmatpush1.msra.mxu0 0.0
  %4291 = vmatprep.subr.mxu0 0.0
  %4292 = vmatpush1.msra.mxu0 0.0
  %4293 = vmatprep.subr.mxu0 0.0
  %4294 = vmatpush1.msra.mxu0 0.0
  %4295 = vmatprep.subr.mxu0 0.0
  %4296 = vmatpush1.msra.mxu0 0.0
  %4297 = vmatprep.subr.mxu0 0.0
  %4298 = vmatpush1.msra.mxu0 0.0
  %4299 = vmatprep.subr.mxu0 0.0
  %4300 = vmatpush1.msra.mxu0 0.0
  %4301 = vmatprep.subr.mxu0 0.0
  %4302 = vmatpush1.msra.mxu0 0.0
  %4303 = vmatprep.subr.mxu0 0.0
  %4304 = vmatpush1.msra.mxu0 0.0
  %4305 = vmatprep.subr.mxu0 0.0
  %4306 = vmatpush1.msra.mxu0 0.0
  %4307 = vmatprep.mubr.f32.mxu0 0.0
  %4308 = vmatmul.mubr.f32.gmra.mrb[0].mxu0 %v4130
  %v4309 = vpop.f32.mrb[0].mxu0
  %v4310 = vadd.f32 0.0, %v4309
  %v4311 = vpop.f32.mrb[0].mxu0
  %v4312 = vadd.f32 0.0, %v4311
  %4313 = vmatprep.mubr.f32.mxu0 0.0
  %4314 = vmatmul.mubr.f32.gmra.mrb[0].mxu0 %v4133
  %v4315 = vpop.f32.mrb[0].mxu0
  %v4316 = vadd.f32 0.0, %v4315
  %v4317 = vpop.f32.mrb[0].mxu0
  %v4318 = vadd.f32 0.0, %v4317
  %4319 = vmatprep.mubr.f32.mxu0 0.0
  %4320 = vmatmul.mubr.f32.gmra.mrb[0].mxu0 %v4136
  %v4321 = vpop.f32.mrb[0].mxu0
  %v4322 = vadd.f32 0.0, %v4321
  %v4323 = vpop.f32.mrb[0].mxu0
  %v4324 = vadd.f32 0.0, %v4323
  %4325 = vmatprep.mubr.f32.mxu0 0.0
  %4326 = vmatmul.mubr.f32.gmra.mrb[0].mxu0 %v4139
  %v4327 = vpop.f32.mrb[0].mxu0
  %v4328 = vadd.f32 0.0, %v4327
  %v4329 = vpop.f32.mrb[0].mxu0
  %v4330 = vadd.f32 0.0, %v4329
  %4331 = vmatprep.mubr.f32.mxu0 0.0
  %4332 = vmatmul.mubr.f32.gmra.mrb[0].mxu0 %v4142
  %v4333 = vpop.f32.mrb[0].mxu0
  %v4334 = vadd.f32 0.0, %v4333
  %v4335 = vpop.f32.mrb[0].mxu0
  %v4336 = vadd.f32 0.0, %v4335
  %4337 = vmatprep.mubr.f32.mxu0 0.0
  %4338 = vmatmul.mubr.f32.gmra.mrb[0].mxu0 %v4145
  %v4339 = vpop.f32.mrb[0].mxu0
  %v4340 = vadd.f32 0.0, %v4339
  %v4341 = vpop.f32.mrb[0].mxu0
  %v4342 = vadd.f32 0.0, %v4341
  %4343 = vmatprep.mubr.f32.mxu0 0.0
  %4344 = vmatmul.mubr.f32.gmra.mrb[0].mxu0 %v4148
  %v4345 = vpop.f32.mrb[0].mxu0
  %v4346 = vadd.f32 0.0, %v4345
  %v4347 = vpop.f32.mrb[0].mxu0
  %v4348 = vadd.f32 0.0, %v4347
  %4349 = vmatprep.mubr.f32.mxu0 0.0
  %4350 = vmatmul.mubr.f32.gmra.mrb[0].mxu0 %v4151
  %v4351 = vpop.f32.mrb[0].mxu0
  %v4352 = vadd.f32 0.0, %v4351
  %v4353 = vpop.f32.mrb[0].mxu0
  %v4354 = vadd.f32 0.0, %v4353
  %4355 = vmatprep.mubr.f32.mxu0 0.0
  %4356 = vmatmul.mubr.f32.gmra.mrb[0].mxu0 %v4154
  %v4357 = vpop.f32.mrb[0].mxu0
  %v4358 = vadd.f32 0.0, %v4357
  %v4359 = vpop.f32.mrb[0].mxu0
  %v4360 = vadd.f32 0.0, %v4359
  %4361 = vmatprep.mubr.f32.mxu0 0.0
  %4362 = vmatmul.mubr.f32.gmra.mrb[0].mxu0 %v4157
  %v4363 = vpop.f32.mrb[0].mxu0
  %v4364 = vadd.f32 0.0, %v4363
  %v4365 = vpop.f32.mrb[0].mxu0
  %v4366 = vadd.f32 0.0, %v4365
  %4367 = vmatprep.mubr.f32.mxu0 0.0
  %4368 = vmatmul.mubr.f32.gmra.mrb[0].mxu0 %v4160
  %v4369 = vpop.f32.mrb[0].mxu0
  %v4370 = vadd.f32 0.0, %v4369
  %v4371 = vpop.f32.mrb[0].mxu0
  %v4372 = vadd.f32 0.0, %v4371
  %4373 = vmatprep.mubr.f32.mxu0 0.0
  %4374 = vmatmul.mubr.f32.gmra.mrb[0].mxu0 %v4163
  %v4375 = vpop.f32.mrb[0].mxu0
  %v4376 = vadd.f32 0.0, %v4375
  %v4377 = vpop.f32.mrb[0].mxu0
  %v4378 = vadd.f32 0.0, %v4377
  %4379 = vmatprep.mubr.f32.mxu0 0.0
  %4380 = vmatmul.mubr.f32.gmra.mrb[0].mxu0 %v4166
  %v4381 = vpop.f32.mrb[0].mxu0
  %v4382 = vadd.f32 0.0, %v4381
  %v4383 = vpop.f32.mrb[0].mxu0
  %v4384 = vadd.f32 0.0, %v4383
  %4385 = vmatprep.mubr.f32.mxu0 0.0
  %4386 = vmatmul.mubr.f32.gmra.mrb[0].mxu0 %v4169
  %v4387 = vpop.f32.mrb[0].mxu0
  %v4388 = vadd.f32 0.0, %v4387
  %v4389 = vpop.f32.mrb[0].mxu0
  %v4390 = vadd.f32 0.0, %v4389
  %4391 = vmatprep.mubr.f32.mxu0 0.0
  %4392 = vmatmul.mubr.f32.gmra.mrb[0].mxu0 %v4172
  %v4393 = vpop.f32.mrb[0].mxu0
  %v4394 = vadd.f32 0.0, %v4393
  %v4395 = vpop.f32.mrb[0].mxu0
  %v4396 = vadd.f32 0.0, %v4395
  %4397 = vmatprep.mubr.f32.mxu0 0.0
  %4398 = vmatmul.mubr.f32.gmra.mrb[0].mxu0 %v4175
  %v4399 = vpop.f32.mrb[0].mxu0
  %v4400 = vadd.f32 0.0, %v4399
  %v4401 = vpop.f32.mrb[0].mxu0
  %v4402 = vadd.f32 0.0, %v4401
  %4403 = vmatprep.mubr.f32.mxu0 0.0
  %4404 = vmatmul.mubr.f32.gmra.mrb[0].mxu0 %v4178
  %v4405 = vpop.f32.mrb[0].mxu0
  %v4406 = vadd.f32 0.0, %v4405
  %v4407 = vpop.f32.mrb[0].mxu0
  %v4408 = vadd.f32 0.0, %v4407
  %4409 = vmatprep.mubr.f32.mxu0 0.0
  %4410 = vmatmul.mubr.f32.gmra.mrb[0].mxu0 %v4181
  %v4411 = vpop.f32.mrb[0].mxu0
  %v4412 = vadd.f32 0.0, %v4411
  %v4413 = vpop.f32.mrb[0].mxu0
  %v4414 = vadd.f32 0.0, %v4413
  %4415 = vmatprep.mubr.f32.mxu0 0.0
  %4416 = vmatmul.mubr.f32.gmra.mrb[0].mxu0 %v4184
  %v4417 = vpop.f32.mrb[0].mxu0
  %v4418 = vadd.f32 0.0, %v4417
  %v4419 = vpop.f32.mrb[0].mxu0
  %v4420 = vadd.f32 0.0, %v4419
  %4421 = vmatprep.mubr.f32.mxu0 0.0
  %4422 = vmatmul.mubr.f32.gmra.mrb[0].mxu0 %v4187
  %v4423 = vpop.f32.mrb[0].mxu0
  %v4424 = vadd.f32 0.0, %v4423
  %v4425 = vpop.f32.mrb[0].mxu0
  %v4426 = vadd.f32 0.0, %v4425
  %4427 = vmatprep.mubr.f32.mxu0 0.0
  %4428 = vmatmul.mubr.f32.gmra.mrb[0].mxu0 %v4190
  %v4429 = vpop.f32.mrb[0].mxu0
  %v4430 = vadd.f32 0.0, %v4429
  %v4431 = vpop.f32.mrb[0].mxu0
  %v4432 = vadd.f32 0.0, %v4431
  %4433 = vmatprep.mubr.f32.mxu0 0.0
  %4434 = vmatmul.mubr.f32.gmra.mrb[0].mxu0 %v4193
  %v4435 = vpop.f32.mrb[0].mxu0
  %v4436 = vadd.f32 0.0, %v4435
  %v4437 = vpop.f32.mrb[0].mxu0
  %v4438 = vadd.f32 0.0, %v4437
  %4439 = vmatprep.mubr.f32.mxu0 0.0
  %4440 = vmatmul.mubr.f32.gmra.mrb[0].mxu0 %v4196
  %v4441 = vpop.f32.mrb[0].mxu0
  %v4442 = vadd.f32 0.0, %v4441
  %v4443 = vpop.f32.mrb[0].mxu0
  %v4444 = vadd.f32 0.0, %v4443
  %4445 = vmatprep.mubr.f32.mxu0 0.0
  %4446 = vmatmul.mubr.f32.gmra.mrb[0].mxu0 %v4199
  %v4447 = vpop.f32.mrb[0].mxu0
  %v4448 = vadd.f32 0.0, %v4447
  %v4449 = vpop.f32.mrb[0].mxu0
  %v4450 = vadd.f32 0.0, %v4449
  %4451 = vmatprep.mubr.f32.mxu0 0.0
  %4452 = vmatmul.mubr.f32.gmra.mrb[0].mxu0 %v4202
  %v4453 = vpop.f32.mrb[0].mxu0
  %v4454 = vadd.f32 0.0, %v4453
  %v4455 = vpop.f32.mrb[0].mxu0
  %v4456 = vadd.f32 0.0, %v4455
  %4457 = vmatprep.mubr.f32.mxu0 0.0
  %4458 = vmatmul.mubr.f32.gmra.mrb[0].mxu0 %v4205
  %v4459 = vpop.f32.mrb[0].mxu0
  %v4460 = vadd.f32 0.0, %v4459
  %v4461 = vpop.f32.mrb[0].mxu0
  %v4462 = vadd.f32 0.0, %v4461
  %4463 = vmatprep.mubr.f32.mxu0 0.0
  %4464 = vmatmul.mubr.f32.gmra.mrb[0].mxu0 %v4208
  %v4465 = vpop.f32.mrb[0].mxu0
  %v4466 = vadd.f32 0.0, %v4465
  %v4467 = vpop.f32.mrb[0].mxu0
  %v4468 = vadd.f32 0.0, %v4467
  %4469 = vmatprep.mubr.f32.mxu0 0.0
  %4470 = vmatmul.mubr.f32.gmra.mrb[0].mxu0 %v4211
  %v4471 = vpop.f32.mrb[0].mxu0
  %v4472 = vadd.f32 0.0, %v4471
  %v4473 = vpop.f32.mrb[0].mxu0
  %v4474 = vadd.f32 0.0, %v4473
  %4475 = vmatprep.mubr.f32.mxu0 0.0
  %4476 = vmatmul.mubr.f32.gmra.mrb[0].mxu0 %v4214
  %v4477 = vpop.f32.mrb[0].mxu0
  %v4478 = vadd.f32 0.0, %v4477
  %v4479 = vpop.f32.mrb[0].mxu0
  %v4480 = vadd.f32 0.0, %v4479
  %4481 = vmatprep.mubr.f32.mxu0 0.0
  %4482 = vmatmul.mubr.f32.gmra.mrb[0].mxu0 %v4217
  %v4483 = vpop.f32.mrb[0].mxu0
  %v4484 = vadd.f32 0.0, %v4483
  %v4485 = vpop.f32.mrb[0].mxu0
  %v4486 = vadd.f32 0.0, %v4485
  %4487 = vmatprep.mubr.f32.mxu0 0.0
  %4488 = vmatmul.mubr.f32.gmra.mrb[0].mxu0 %v4220
  %v4489 = vpop.f32.mrb[0].mxu0
  %v4490 = vadd.f32 0.0, %v4489
  %v4491 = vpop.f32.mrb[0].mxu0
  %v4492 = vadd.f32 0.0, %v4491
  %4493 = vmatprep.mubr.f32.mxu0 0.0
  %4494 = vmatmul.mubr.f32.gmra.mrb[0].mxu0 %v4223
  %v4495 = vpop.f32.mrb[0].mxu0
  %v4496 = vadd.f32 0.0, %v4495
  %v4497 = vpop.f32.mrb[0].mxu0
  %v4498 = vadd.f32 0.0, %v4497
  %4499 = vmatprep.mubr.f32.mxu0 0.0
  %4500 = vmatmul.mubr.f32.gmra.mrb[0].mxu0 %v4226
  %v4501 = vpop.f32.mrb[0].mxu0
  %v4502 = vadd.f32 0.0, %v4501
  %v4503 = vpop.f32.mrb[0].mxu0
  %v4504 = vadd.f32 0.0, %v4503
  %4505 = vmatprep.mubr.f32.mxu0 0.0
  %4506 = vmatmul.mubr.f32.gmra.mrb[0].mxu0 %v4229
  %v4507 = vpop.f32.mrb[0].mxu0
  %v4508 = vadd.f32 0.0, %v4507
  %v4509 = vpop.f32.mrb[0].mxu0
  %v4510 = vadd.f32 0.0, %v4509
  %4511 = vmatprep.mubr.f32.mxu0 0.0
  %4512 = vmatmul.mubr.f32.gmra.mrb[0].mxu0 %v4232
  %v4513 = vpop.f32.mrb[0].mxu0
  %v4514 = vadd.f32 0.0, %v4513
  %v4515 = vpop.f32.mrb[0].mxu0
  %v4516 = vadd.f32 0.0, %v4515
  %4517 = vmatprep.mubr.f32.mxu0 0.0
  %4518 = vmatmul.mubr.f32.gmra.mrb[0].mxu0 %v4235
  %v4519 = vpop.f32.mrb[0].mxu0
  %v4520 = vadd.f32 0.0, %v4519
  %v4521 = vpop.f32.mrb[0].mxu0
  %v4522 = vadd.f32 0.0, %v4521
  %4523 = vdwg.mxu0
  %4536 = vrot.lane.b32.xlu0 %v4346, 24
  %v4537 = vpop.permute.xlu0 %4536
  %4538 = vrot.lane.b32.xlu0 %v4348, 24
  %v4539 = vpop.permute.xlu0 %4538
  %4540 = vrot.lane.b32.xlu0 %v4352, 24
  %v4541 = vpop.permute.xlu0 %4540
  %4542 = vrot.lane.b32.xlu0 %v4354, 24
  %v4543 = vpop.permute.xlu0 %4542
  %4544 = vrot.lane.b32.xlu0 %v4358, 24
  %v4545 = vpop.permute.xlu0 %4544
  %4546 = vrot.lane.b32.xlu0 %v4360, 24
  %v4547 = vpop.permute.xlu0 %4546
  %4548 = vrot.lane.b32.xlu0 %v4364, 24
  %v4549 = vpop.permute.xlu0 %4548
  %4550 = vrot.lane.b32.xlu0 %v4366, 24
  %v4551 = vpop.permute.xlu0 %4550
  %4552 = vrot.lane.b32.xlu0 %v4370, 24
  %v4553 = vpop.permute.xlu0 %4552
  %4554 = vrot.lane.b32.xlu0 %v4372, 24
  %v4555 = vpop.permute.xlu0 %4554
  %4556 = vrot.lane.b32.xlu0 %v4376, 24
  %v4557 = vpop.permute.xlu0 %4556
  %4558 = vrot.lane.b32.xlu0 %v4378, 24
  %v4559 = vpop.permute.xlu0 %4558
  %v4560 = vsel %vm891, %v4537, %v4539
  %v4561 = vsel %vm891, %v4541, %v4543
  %v4562 = vsel %vm891, %v4545, %v4547
  %v4563 = vsel %vm891, %v4549, %v4551
  %v4564 = vsel %vm891, %v4553, %v4555
  %v4565 = vsel %vm891, %v4557, %v4559
  %4590 = vrot.lane.b32.xlu0 %v4382, 48
  %v4591 = vpop.permute.xlu0 %4590
  %4592 = vrot.lane.b32.xlu0 %v4384, 48
  %v4593 = vpop.permute.xlu0 %4592
  %4594 = vrot.lane.b32.xlu0 %v4388, 48
  %v4595 = vpop.permute.xlu0 %4594
  %4596 = vrot.lane.b32.xlu0 %v4390, 48
  %v4597 = vpop.permute.xlu0 %4596
  %4598 = vrot.lane.b32.xlu0 %v4394, 48
  %v4599 = vpop.permute.xlu0 %4598
  %4600 = vrot.lane.b32.xlu0 %v4396, 48
  %v4601 = vpop.permute.xlu0 %4600
  %4602 = vrot.lane.b32.xlu0 %v4400, 48
  %v4603 = vpop.permute.xlu0 %4602
  %4604 = vrot.lane.b32.xlu0 %v4402, 48
  %v4605 = vpop.permute.xlu0 %4604
  %4606 = vrot.lane.b32.xlu0 %v4406, 48
  %v4607 = vpop.permute.xlu0 %4606
  %4608 = vrot.lane.b32.xlu0 %v4408, 48
  %v4609 = vpop.permute.xlu0 %4608
  %4610 = vrot.lane.b32.xlu0 %v4412, 48
  %v4611 = vpop.permute.xlu0 %4610
  %4612 = vrot.lane.b32.xlu0 %v4414, 48
  %v4613 = vpop.permute.xlu0 %4612
  %v4614 = vsel %vm897, %v4591, %v4593
  %v4615 = vsel %vm897, %v4595, %v4597
  %v4616 = vsel %vm897, %v4599, %v4601
  %v4617 = vsel %vm897, %v4603, %v4605
  %v4618 = vsel %vm897, %v4607, %v4609
  %v4619 = vsel %vm897, %v4611, %v4613
  %4644 = vrot.lane.b32.xlu0 %v4418, 72
  %v4645 = vpop.permute.xlu0 %4644
  %4646 = vrot.lane.b32.xlu0 %v4420, 72
  %v4647 = vpop.permute.xlu0 %4646
  %4648 = vrot.lane.b32.xlu0 %v4424, 72
  %v4649 = vpop.permute.xlu0 %4648
  %4650 = vrot.lane.b32.xlu0 %v4426, 72
  %v4651 = vpop.permute.xlu0 %4650
  %4652 = vrot.lane.b32.xlu0 %v4430, 72
  %v4653 = vpop.permute.xlu0 %4652
  %4654 = vrot.lane.b32.xlu0 %v4432, 72
  %v4655 = vpop.permute.xlu0 %4654
  %4656 = vrot.lane.b32.xlu0 %v4436, 72
  %v4657 = vpop.permute.xlu0 %4656
  %4658 = vrot.lane.b32.xlu0 %v4438, 72
  %v4659 = vpop.permute.xlu0 %4658
  %4660 = vrot.lane.b32.xlu0 %v4442, 72
  %v4661 = vpop.permute.xlu0 %4660
  %4662 = vrot.lane.b32.xlu0 %v4444, 72
  %v4663 = vpop.permute.xlu0 %4662
  %4664 = vrot.lane.b32.xlu0 %v4448, 72
  %v4665 = vpop.permute.xlu0 %4664
  %4666 = vrot.lane.b32.xlu0 %v4450, 72
  %v4667 = vpop.permute.xlu0 %4666
  %v4668 = vsel %vm909, %v4645, %v4647
  %v4669 = vsel %vm909, %v4649, %v4651
  %v4670 = vsel %vm909, %v4653, %v4655
  %v4671 = vsel %vm909, %v4657, %v4659
  %v4672 = vsel %vm909, %v4661, %v4663
  %v4673 = vsel %vm909, %v4665, %v4667
  %4698 = vrot.lane.b32.xlu0 %v4454, 96
  %v4699 = vpop.permute.xlu0 %4698
  %4700 = vrot.lane.b32.xlu0 %v4456, 96
  %v4701 = vpop.permute.xlu0 %4700
  %4702 = vrot.lane.b32.xlu0 %v4460, 96
  %v4703 = vpop.permute.xlu0 %4702
  %4704 = vrot.lane.b32.xlu0 %v4462, 96
  %v4705 = vpop.permute.xlu0 %4704
  %4706 = vrot.lane.b32.xlu0 %v4466, 96
  %v4707 = vpop.permute.xlu0 %4706
  %4708 = vrot.lane.b32.xlu0 %v4468, 96
  %v4709 = vpop.permute.xlu0 %4708
  %4710 = vrot.lane.b32.xlu0 %v4472, 96
  %v4711 = vpop.permute.xlu0 %4710
  %4712 = vrot.lane.b32.xlu0 %v4474, 96
  %v4713 = vpop.permute.xlu0 %4712
  %4714 = vrot.lane.b32.xlu0 %v4478, 96
  %v4715 = vpop.permute.xlu0 %4714
  %4716 = vrot.lane.b32.xlu0 %v4480, 96
  %v4717 = vpop.permute.xlu0 %4716
  %4718 = vrot.lane.b32.xlu0 %v4484, 96
  %v4719 = vpop.permute.xlu0 %4718
  %4720 = vrot.lane.b32.xlu0 %v4486, 96
  %v4721 = vpop.permute.xlu0 %4720
  %v4722 = vsel %vm1641, %v4699, %v4701
  %v4723 = vsel %vm1641, %v4703, %v4705
  %v4724 = vsel %vm1641, %v4707, %v4709
  %v4725 = vsel %vm1641, %v4711, %v4713
  %v4726 = vsel %vm1641, %v4715, %v4717
  %v4727 = vsel %vm1641, %v4719, %v4721
  %4752 = vrot.lane.b32.xlu0 %v4490, 120
  %v4753 = vpop.permute.xlu0 %4752
  %4754 = vrot.lane.b32.xlu0 %v4492, 120
  %v4755 = vpop.permute.xlu0 %4754
  %4756 = vrot.lane.b32.xlu0 %v4496, 120
  %v4757 = vpop.permute.xlu0 %4756
  %4758 = vrot.lane.b32.xlu0 %v4498, 120
  %v4759 = vpop.permute.xlu0 %4758
  %4760 = vrot.lane.b32.xlu0 %v4502, 120
  %v4761 = vpop.permute.xlu0 %4760
  %4762 = vrot.lane.b32.xlu0 %v4504, 120
  %v4763 = vpop.permute.xlu0 %4762
  %4764 = vrot.lane.b32.xlu0 %v4508, 120
  %v4765 = vpop.permute.xlu0 %4764
  %4766 = vrot.lane.b32.xlu0 %v4510, 120
  %v4767 = vpop.permute.xlu0 %4766
  %4768 = vrot.lane.b32.xlu0 %v4514, 120
  %v4769 = vpop.permute.xlu0 %4768
  %4770 = vrot.lane.b32.xlu0 %v4516, 120
  %v4771 = vpop.permute.xlu0 %4770
  %4772 = vrot.lane.b32.xlu0 %v4520, 120
  %v4773 = vpop.permute.xlu0 %4772
  %4774 = vrot.lane.b32.xlu0 %v4522, 120
  %v4775 = vpop.permute.xlu0 %4774
  %vm4776 = vcmask 982016
  %v4777 = vsel %vm4776, %v4753, %v4755
  %v4778 = vsel %vm4776, %v4757, %v4759
  %v4779 = vsel %vm4776, %v4761, %v4763
  %v4780 = vsel %vm4776, %v4765, %v4767
  %v4781 = vsel %vm4776, %v4769, %v4771
  %v4782 = vsel %vm4776, %v4773, %v4775
  %v4795 = vsel %vm891, %v4312, %v4537
  %v4796 = vsel %vm891, %v4318, %v4541
  %v4797 = vsel %vm891, %v4324, %v4545
  %v4798 = vsel %vm891, %v4330, %v4549
  %v4799 = vsel %vm891, %v4336, %v4553
  %v4800 = vsel %vm891, %v4342, %v4557
  %v4801 = vsel %vm897, %v4560, %v4591
  %v4802 = vsel %vm897, %v4561, %v4595
  %v4803 = vsel %vm897, %v4562, %v4599
  %v4804 = vsel %vm897, %v4563, %v4603
  %v4805 = vsel %vm897, %v4564, %v4607
  %v4806 = vsel %vm897, %v4565, %v4611
  %v4807 = vsel %vm909, %v4614, %v4645
  %v4808 = vsel %vm909, %v4615, %v4649
  %v4809 = vsel %vm909, %v4616, %v4653
  %v4810 = vsel %vm909, %v4617, %v4657
  %v4811 = vsel %vm909, %v4618, %v4661
  %v4812 = vsel %vm909, %v4619, %v4665
  %v4813 = vsel %vm1641, %v4668, %v4699
  %v4814 = vsel %vm1641, %v4669, %v4703
  %v4815 = vsel %vm1641, %v4670, %v4707
  %v4816 = vsel %vm1641, %v4671, %v4711
  %v4817 = vsel %vm1641, %v4672, %v4715
  %v4818 = vsel %vm1641, %v4673, %v4719
  %v4819 = vsel %vm4776, %v4722, %v4753
  %v4820 = vsel %vm4776, %v4723, %v4757
  %v4821 = vsel %vm4776, %v4724, %v4761
  %v4822 = vsel %vm4776, %v4725, %v4765
  %v4823 = vsel %vm4776, %v4726, %v4769
  %v4824 = vsel %vm4776, %v4727, %v4773
  %v4826 = vlaneseq
  %v4827 = vshrl.u32 %v4826, 7
  %v4828 = vsub.s32 0, %v4827
  %v4829 = vrot.slane %v4127, %v4828
  %v4831 = vsel %vm889, %v4755, 0
  %v4833 = vsel %vm889, %v4759, 0
  %v4835 = vsel %vm889, %v4763, 0
  %v4837 = vsel %vm889, %v4767, 0
  %v4839 = vsel %vm889, %v4771, 0
  %v4841 = vsel %vm889, %v4775, 0
  %4843 = vmatprep.subr.mxu0 0.0
  %4844 = vmatpush1.msra.mxu0 %v4013
  %4845 = vmatprep.subr.mxu0 0.0
  %4846 = vmatpush1.msra.mxu0 %v4014
  %4847 = vmatprep.subr.mxu0 0.0
  %4848 = vmatpush1.msra.mxu0 %v4015
  %4849 = vmatprep.subr.mxu0 0.0
  %4850 = vmatpush1.msra.mxu0 %v4016
  %4851 = vmatprep.subr.mxu0 0.0
  %4852 = vmatpush1.msra.mxu0 %v4017
  %4853 = vmatprep.subr.mxu0 0.0
  %4854 = vmatpush1.msra.mxu0 %v4018
  %4855 = vmatprep.subr.mxu0 0.0
  %4856 = vmatpush1.msra.mxu0 %v4019
  %4857 = vmatprep.subr.mxu0 0.0
  %4858 = vmatpush1.msra.mxu0 %v4020
  %4859 = vmatprep.subr.mxu0 0.0
  %4860 = vmatpush1.msra.mxu0 %v4021
  %4861 = vmatprep.subr.mxu0 0.0
  %4862 = vmatpush1.msra.mxu0 %v4022
  %4863 = vmatprep.subr.mxu0 0.0
  %4864 = vmatpush1.msra.mxu0 %v4023
  %4865 = vmatprep.subr.mxu0 0.0
  %4866 = vmatpush1.msra.mxu0 %v4024
  %4867 = vmatprep.subr.mxu0 0.0
  %4868 = vmatpush1.msra.mxu0 %v4025
  %4869 = vmatprep.subr.mxu0 0.0
  %4870 = vmatpush1.msra.mxu0 %v4026
  %4871 = vmatprep.subr.mxu0 0.0
  %4872 = vmatpush1.msra.mxu0 %v4027
  %4873 = vmatprep.subr.mxu0 0.0
  %4874 = vmatpush1.msra.mxu0 %v4028
  %4875 = vmatprep.subr.mxu0 0.0
  %4876 = vmatpush1.msra.mxu0 %v4029
  %4877 = vmatprep.subr.mxu0 0.0
  %4878 = vmatpush1.msra.mxu0 %v4030
  %4879 = vmatprep.subr.mxu0 0.0
  %4880 = vmatpush1.msra.mxu0 %v4031
  %4881 = vmatprep.subr.mxu0 0.0
  %4882 = vmatpush1.msra.mxu0 %v4032
  %4883 = vmatprep.subr.mxu0 0.0
  %4884 = vmatpush1.msra.mxu0 %v4033
  %4885 = vmatprep.subr.mxu0 0.0
  %4886 = vmatpush1.msra.mxu0 %v4034
  %4887 = vmatprep.subr.mxu0 0.0
  %4888 = vmatpush1.msra.mxu0 %v4035
  %4889 = vmatprep.subr.mxu0 0.0
  %4890 = vmatpush1.msra.mxu0 %v4036
  %4891 = vmatprep.subr.mxu0 0.0
  %4892 = vmatpush1.msra.mxu0 %v4037
  %4893 = vmatprep.subr.mxu0 0.0
  %4894 = vmatpush1.msra.mxu0 %v4038
  %4895 = vmatprep.subr.mxu0 0.0
  %4896 = vmatpush1.msra.mxu0 %v4039
  %4897 = vmatprep.subr.mxu0 0.0
  %4898 = vmatpush1.msra.mxu0 %v4040
  %4899 = vmatprep.subr.mxu0 0.0
  %4900 = vmatpush1.msra.mxu0 %v4041
  %4901 = vmatprep.subr.mxu0 0.0
  %4902 = vmatpush1.msra.mxu0 %v4042
  %4903 = vmatprep.subr.mxu0 0.0
  %4904 = vmatpush1.msra.mxu0 %v4043
  %4905 = vmatprep.subr.mxu0 0.0
  %4906 = vmatpush1.msra.mxu0 %v4044
  %4907 = vmatprep.mubr.f32.mxu0 %v4795
  %4908 = vmatmul.mubr.f32.gmra.mrb[0].mxu0 %v4310
  %v4909 = vpop.f32.mrb[0].mxu0
  %v4910 = vadd.f32 %v4829, %v4909
  %v4911 = vpop.f32.mrb[0].mxu0
  %4912 = vmatprep.mubr.f32.mxu0 %v4796
  %4913 = vmatmul.mubr.f32.gmra.mrb[0].mxu0 %v4316
  %v4914 = vpop.f32.mrb[0].mxu0
  %v4915 = vadd.f32 %v4829, %v4914
  %v4916 = vpop.f32.mrb[0].mxu0
  %4917 = vmatprep.mubr.f32.mxu0 %v4797
  %4918 = vmatmul.mubr.f32.gmra.mrb[0].mxu0 %v4322
  %v4919 = vpop.f32.mrb[0].mxu0
  %v4920 = vadd.f32 %v4829, %v4919
  %v4921 = vpop.f32.mrb[0].mxu0
  %4922 = vmatprep.mubr.f32.mxu0 %v4798
  %4923 = vmatmul.mubr.f32.gmra.mrb[0].mxu0 %v4328
  %v4924 = vpop.f32.mrb[0].mxu0
  %v4925 = vadd.f32 %v4829, %v4924
  %v4926 = vpop.f32.mrb[0].mxu0
  %4927 = vmatprep.mubr.f32.mxu0 %v4799
  %4928 = vmatmul.mubr.f32.gmra.mrb[0].mxu0 %v4334
  %v4929 = vpop.f32.mrb[0].mxu0
  %v4930 = vadd.f32 %v4829, %v4929
  %v4931 = vpop.f32.mrb[0].mxu0
  %4932 = vmatprep.mubr.f32.mxu0 %v4800
  %4933 = vmatmul.mubr.f32.gmra.mrb[0].mxu0 %v4340
  %v4934 = vpop.f32.mrb[0].mxu0
  %v4935 = vadd.f32 %v4829, %v4934
  %v4936 = vpop.f32.mrb[0].mxu0
  %4937 = vdwg.mxu0
  %4938 = vmatprep.subr.mxu0 0.0
  %4939 = vmatpush1.msra.mxu0 %v4045
  %4940 = vmatprep.subr.mxu0 0.0
  %4941 = vmatpush1.msra.mxu0 %v4046
  %4942 = vmatprep.subr.mxu0 0.0
  %4943 = vmatpush1.msra.mxu0 %v4047
  %4944 = vmatprep.subr.mxu0 0.0
  %4945 = vmatpush1.msra.mxu0 %v4048
  %4946 = vmatprep.subr.mxu0 0.0
  %4947 = vmatpush1.msra.mxu0 %v4049
  %4948 = vmatprep.subr.mxu0 0.0
  %4949 = vmatpush1.msra.mxu0 %v4050
  %4950 = vmatprep.subr.mxu0 0.0
  %4951 = vmatpush1.msra.mxu0 %v4051
  %4952 = vmatprep.subr.mxu0 0.0
  %4953 = vmatpush1.msra.mxu0 %v4052
  %4954 = vmatprep.subr.mxu0 0.0
  %4955 = vmatpush1.msra.mxu0 %v4053
  %4956 = vmatprep.subr.mxu0 0.0
  %4957 = vmatpush1.msra.mxu0 %v4054
  %4958 = vmatprep.subr.mxu0 0.0
  %4959 = vmatpush1.msra.mxu0 %v4055
  %4960 = vmatprep.subr.mxu0 0.0
  %4961 = vmatpush1.msra.mxu0 %v4056
  %4962 = vmatprep.subr.mxu0 0.0
  %4963 = vmatpush1.msra.mxu0 %v4057
  %4964 = vmatprep.subr.mxu0 0.0
  %4965 = vmatpush1.msra.mxu0 %v4058
  %4966 = vmatprep.subr.mxu0 0.0
  %4967 = vmatpush1.msra.mxu0 %v4059
  %4968 = vmatprep.subr.mxu0 0.0
  %4969 = vmatpush1.msra.mxu0 %v4060
  %4970 = vmatprep.subr.mxu0 0.0
  %4971 = vmatpush1.msra.mxu0 %v4061
  %4972 = vmatprep.subr.mxu0 0.0
  %4973 = vmatpush1.msra.mxu0 %v4062
  %4974 = vmatprep.subr.mxu0 0.0
  %4975 = vmatpush1.msra.mxu0 %v4063
  %4976 = vmatprep.subr.mxu0 0.0
  %4977 = vmatpush1.msra.mxu0 %v4064
  %4978 = vmatprep.subr.mxu0 0.0
  %4979 = vmatpush1.msra.mxu0 %v4065
  %4980 = vmatprep.subr.mxu0 0.0
  %4981 = vmatpush1.msra.mxu0 %v4066
  %4982 = vmatprep.subr.mxu0 0.0
  %4983 = vmatpush1.msra.mxu0 %v4067
  %4984 = vmatprep.subr.mxu0 0.0
  %4985 = vmatpush1.msra.mxu0 %v4068
  %4986 = vmatprep.subr.mxu0 0.0
  %4987 = vmatpush1.msra.mxu0 %v4069
  %4988 = vmatprep.subr.mxu0 0.0
  %4989 = vmatpush1.msra.mxu0 %v4070
  %4990 = vmatprep.subr.mxu0 0.0
  %4991 = vmatpush1.msra.mxu0 %v4071
  %4992 = vmatprep.subr.mxu0 0.0
  %4993 = vmatpush1.msra.mxu0 %v4072
  %4994 = vmatprep.subr.mxu0 0.0
  %4995 = vmatpush1.msra.mxu0 %v4073
  %4996 = vmatprep.subr.mxu0 0.0
  %4997 = vmatpush1.msra.mxu0 %v4074
  %4998 = vmatprep.subr.mxu0 0.0
  %4999 = vmatpush1.msra.mxu0 %v4075
  %5000 = vmatprep.subr.mxu0 0.0
  %5001 = vmatpush1.msra.mxu0 %v4076
  %5002 = vmatprep.mubr.f32.mxu0 %v4807
  %5003 = vmatmul.mubr.f32.gmra.mrb[0].mxu0 %v4801
  %v5004 = vpop.f32.mrb[0].mxu0
  %v5005 = vadd.f32 %v4910, %v5004
  %v5006 = vpop.f32.mrb[0].mxu0
  %5007 = vmatprep.mubr.f32.mxu0 %v4808
  %5008 = vmatmul.mubr.f32.gmra.mrb[0].mxu0 %v4802
  %v5009 = vpop.f32.mrb[0].mxu0
  %v5010 = vadd.f32 %v4915, %v5009
  %v5011 = vpop.f32.mrb[0].mxu0
  %5012 = vmatprep.mubr.f32.mxu0 %v4809
  %5013 = vmatmul.mubr.f32.gmra.mrb[0].mxu0 %v4803
  %v5014 = vpop.f32.mrb[0].mxu0
  %v5015 = vadd.f32 %v4920, %v5014
  %v5016 = vpop.f32.mrb[0].mxu0
  %5017 = vmatprep.mubr.f32.mxu0 %v4810
  %5018 = vmatmul.mubr.f32.gmra.mrb[0].mxu0 %v4804
  %v5019 = vpop.f32.mrb[0].mxu0
  %v5020 = vadd.f32 %v4925, %v5019
  %v5021 = vpop.f32.mrb[0].mxu0
  %5022 = vmatprep.mubr.f32.mxu0 %v4811
  %5023 = vmatmul.mubr.f32.gmra.mrb[0].mxu0 %v4805
  %v5024 = vpop.f32.mrb[0].mxu0
  %v5025 = vadd.f32 %v4930, %v5024
  %v5026 = vpop.f32.mrb[0].mxu0
  %5027 = vmatprep.mubr.f32.mxu0 %v4812
  %5028 = vmatmul.mubr.f32.gmra.mrb[0].mxu0 %v4806
  %v5029 = vpop.f32.mrb[0].mxu0
  %v5030 = vadd.f32 %v4935, %v5029
  %v5031 = vpop.f32.mrb[0].mxu0
  %5032 = vdwg.mxu0
  %5033 = vmatprep.subr.mxu0 0.0
  %5034 = vmatpush1.msra.mxu0 %v4077
  %5035 = vmatprep.subr.mxu0 0.0
  %5036 = vmatpush1.msra.mxu0 %v4078
  %5037 = vmatprep.subr.mxu0 0.0
  %5038 = vmatpush1.msra.mxu0 %v4079
  %5039 = vmatprep.subr.mxu0 0.0
  %5040 = vmatpush1.msra.mxu0 %v4080
  %5041 = vmatprep.subr.mxu0 0.0
  %5042 = vmatpush1.msra.mxu0 %v4081
  %5043 = vmatprep.subr.mxu0 0.0
  %5044 = vmatpush1.msra.mxu0 %v4082
  %5045 = vmatprep.subr.mxu0 0.0
  %5046 = vmatpush1.msra.mxu0 %v4083
  %5047 = vmatprep.subr.mxu0 0.0
  %5048 = vmatpush1.msra.mxu0 %v4084
  %5049 = vmatprep.subr.mxu0 0.0
  %5050 = vmatpush1.msra.mxu0 %v4085
  %5051 = vmatprep.subr.mxu0 0.0
  %5052 = vmatpush1.msra.mxu0 %v4086
  %5053 = vmatprep.subr.mxu0 0.0
  %5054 = vmatpush1.msra.mxu0 %v4087
  %5055 = vmatprep.subr.mxu0 0.0
  %5056 = vmatpush1.msra.mxu0 %v4088
  %5057 = vmatprep.subr.mxu0 0.0
  %5058 = vmatpush1.msra.mxu0 %v4089
  %5059 = vmatprep.subr.mxu0 0.0
  %5060 = vmatpush1.msra.mxu0 %v4090
  %5061 = vmatprep.subr.mxu0 0.0
  %5062 = vmatpush1.msra.mxu0 %v4091
  %5063 = vmatprep.subr.mxu0 0.0
  %5064 = vmatpush1.msra.mxu0 %v4092
  %5065 = vmatprep.subr.mxu0 0.0
  %5066 = vmatpush1.msra.mxu0 %v4093
  %5067 = vmatprep.subr.mxu0 0.0
  %5068 = vmatpush1.msra.mxu0 %v4094
  %5069 = vmatprep.subr.mxu0 0.0
  %5070 = vmatpush1.msra.mxu0 %v4095
  %5071 = vmatprep.subr.mxu0 0.0
  %5072 = vmatpush1.msra.mxu0 %v4096
  %5073 = vmatprep.subr.mxu0 0.0
  %5074 = vmatpush1.msra.mxu0 %v4097
  %5075 = vmatprep.subr.mxu0 0.0
  %5076 = vmatpush1.msra.mxu0 %v4098
  %5077 = vmatprep.subr.mxu0 0.0
  %5078 = vmatpush1.msra.mxu0 %v4099
  %5079 = vmatprep.subr.mxu0 0.0
  %5080 = vmatpush1.msra.mxu0 %v4100
  %5081 = vmatprep.subr.mxu0 0.0
  %5082 = vmatpush1.msra.mxu0 %v4101
  %5083 = vmatprep.subr.mxu0 0.0
  %5084 = vmatpush1.msra.mxu0 %v4102
  %5085 = vmatprep.subr.mxu0 0.0
  %5086 = vmatpush1.msra.mxu0 %v4103
  %5087 = vmatprep.subr.mxu0 0.0
  %5088 = vmatpush1.msra.mxu0 %v4104
  %5089 = vmatprep.subr.mxu0 0.0
  %5090 = vmatpush1.msra.mxu0 %v4105
  %5091 = vmatprep.subr.mxu0 0.0
  %5092 = vmatpush1.msra.mxu0 %v4106
  %5093 = vmatprep.subr.mxu0 0.0
  %5094 = vmatpush1.msra.mxu0 %v4107
  %5095 = vmatprep.subr.mxu0 0.0
  %5096 = vmatpush1.msra.mxu0 %v4108
  %5097 = vmatprep.mubr.f32.mxu0 %v4819
  %5098 = vmatmul.mubr.f32.gmra.mrb[0].mxu0 %v4813
  %v5099 = vpop.f32.mrb[0].mxu0
  %v5100 = vadd.f32 %v5005, %v5099
  %v5101 = vpop.f32.mrb[0].mxu0
  %5102 = vmatprep.mubr.f32.mxu0 %v4820
  %5103 = vmatmul.mubr.f32.gmra.mrb[0].mxu0 %v4814
  %v5104 = vpop.f32.mrb[0].mxu0
  %v5105 = vadd.f32 %v5010, %v5104
  %v5106 = vpop.f32.mrb[0].mxu0
  %5107 = vmatprep.mubr.f32.mxu0 %v4821
  %5108 = vmatmul.mubr.f32.gmra.mrb[0].mxu0 %v4815
  %v5109 = vpop.f32.mrb[0].mxu0
  %v5110 = vadd.f32 %v5015, %v5109
  %v5111 = vpop.f32.mrb[0].mxu0
  %5112 = vmatprep.mubr.f32.mxu0 %v4822
  %5113 = vmatmul.mubr.f32.gmra.mrb[0].mxu0 %v4816
  %v5114 = vpop.f32.mrb[0].mxu0
  %v5115 = vadd.f32 %v5020, %v5114
  %v5116 = vpop.f32.mrb[0].mxu0
  %5117 = vmatprep.mubr.f32.mxu0 %v4823
  %5118 = vmatmul.mubr.f32.gmra.mrb[0].mxu0 %v4817
  %v5119 = vpop.f32.mrb[0].mxu0
  %v5120 = vadd.f32 %v5025, %v5119
  %v5121 = vpop.f32.mrb[0].mxu0
  %5122 = vmatprep.mubr.f32.mxu0 %v4824
  %5123 = vmatmul.mubr.f32.gmra.mrb[0].mxu0 %v4818
  %v5124 = vpop.f32.mrb[0].mxu0
  %v5125 = vadd.f32 %v5030, %v5124
  %v5126 = vpop.f32.mrb[0].mxu0
  %5127 = vdwg.mxu0
  %5128 = vmatprep.subr.mxu0 0.0
  %5129 = vmatpush1.msra.mxu0 %v4109
  %5130 = vmatprep.subr.mxu0 0.0
  %5131 = vmatpush1.msra.mxu0 %v4110
  %5132 = vmatprep.subr.mxu0 0.0
  %5133 = vmatpush1.msra.mxu0 %v4111
  %5134 = vmatprep.subr.mxu0 0.0
  %5135 = vmatpush1.msra.mxu0 %v4112
  %5136 = vmatprep.subr.mxu0 0.0
  %5137 = vmatpush1.msra.mxu0 %v4113
  %5138 = vmatprep.subr.mxu0 0.0
  %5139 = vmatpush1.msra.mxu0 %v4114
  %5140 = vmatprep.subr.mxu0 0.0
  %5141 = vmatpush1.msra.mxu0 %v4115
  %5142 = vmatprep.subr.mxu0 0.0
  %5143 = vmatpush1.msra.mxu0 %v4116
  %5144 = vmatprep.subr.mxu0 0.0
  %5145 = vmatpush1.msra.mxu0 %v4117
  %5146 = vmatprep.subr.mxu0 0.0
  %5147 = vmatpush1.msra.mxu0 %v4118
  %5148 = vmatprep.subr.mxu0 0.0
  %5149 = vmatpush1.msra.mxu0 %v4119
  %5150 = vmatprep.subr.mxu0 0.0
  %5151 = vmatpush1.msra.mxu0 %v4120
  %5152 = vmatprep.subr.mxu0 0.0
  %5153 = vmatpush1.msra.mxu0 %v4121
  %5154 = vmatprep.subr.mxu0 0.0
  %5155 = vmatpush1.msra.mxu0 %v4122
  %5156 = vmatprep.subr.mxu0 0.0
  %5157 = vmatpush1.msra.mxu0 %v4123
  %5158 = vmatprep.subr.mxu0 0.0
  %5159 = vmatpush1.msra.mxu0 %v4124
  %5160 = vmatprep.subr.mxu0 0.0
  %5161 = vmatpush1.msra.mxu0 %v4125
  %5162 = vmatprep.subr.mxu0 0.0
  %5163 = vmatpush1.msra.mxu0 %v4126
  %5164 = vmatprep.subr.mxu0 0.0
  %5165 = vmatpush1.msra.mxu0 0.0
  %5166 = vmatprep.subr.mxu0 0.0
  %5167 = vmatpush1.msra.mxu0 0.0
  %5168 = vmatprep.subr.mxu0 0.0
  %5169 = vmatpush1.msra.mxu0 0.0
  %5170 = vmatprep.subr.mxu0 0.0
  %5171 = vmatpush1.msra.mxu0 0.0
  %5172 = vmatprep.subr.mxu0 0.0
  %5173 = vmatpush1.msra.mxu0 0.0
  %5174 = vmatprep.subr.mxu0 0.0
  %5175 = vmatpush1.msra.mxu0 0.0
  %5176 = vmatprep.subr.mxu0 0.0
  %5177 = vmatpush1.msra.mxu0 0.0
  %5178 = vmatprep.subr.mxu0 0.0
  %5179 = vmatpush1.msra.mxu0 0.0
  %5180 = vmatprep.subr.mxu0 0.0
  %5181 = vmatpush1.msra.mxu0 0.0
  %5182 = vmatprep.subr.mxu0 0.0
  %5183 = vmatpush1.msra.mxu0 0.0
  %5184 = vmatprep.subr.mxu0 0.0
  %5185 = vmatpush1.msra.mxu0 0.0
  %5186 = vmatprep.subr.mxu0 0.0
  %5187 = vmatpush1.msra.mxu0 0.0
  %5188 = vmatprep.subr.mxu0 0.0
  %5189 = vmatpush1.msra.mxu0 0.0
  %5190 = vmatprep.subr.mxu0 0.0
  %5191 = vmatpush1.msra.mxu0 0.0
  %5192 = vmatprep.mubr.f32.mxu0 %v4831
  %5193 = vmatmul.mubr.f32.gmra.mrb[0].mxu0 %v4777
  %v5194 = vpop.f32.mrb[0].mxu0
  %v5195 = vadd.f32 %v5100, %v5194
  %v5196 = vpop.f32.mrb[0].mxu0
  %5197 = vmatprep.mubr.f32.mxu0 %v4833
  %5198 = vmatmul.mubr.f32.gmra.mrb[0].mxu0 %v4778
  %v5199 = vpop.f32.mrb[0].mxu0
  %v5200 = vadd.f32 %v5105, %v5199
  %v5201 = vpop.f32.mrb[0].mxu0
  %5202 = vmatprep.mubr.f32.mxu0 %v4835
  %5203 = vmatmul.mubr.f32.gmra.mrb[0].mxu0 %v4779
  %v5204 = vpop.f32.mrb[0].mxu0
  %v5205 = vadd.f32 %v5110, %v5204
  %v5206 = vpop.f32.mrb[0].mxu0
  %5207 = vmatprep.mubr.f32.mxu0 %v4837
  %5208 = vmatmul.mubr.f32.gmra.mrb[0].mxu0 %v4780
  %v5209 = vpop.f32.mrb[0].mxu0
  %v5210 = vadd.f32 %v5115, %v5209
  %v5211 = vpop.f32.mrb[0].mxu0
  %5212 = vmatprep.mubr.f32.mxu0 %v4839
  %5213 = vmatmul.mubr.f32.gmra.mrb[0].mxu0 %v4781
  %v5214 = vpop.f32.mrb[0].mxu0
  %v5215 = vadd.f32 %v5120, %v5214
  %v5216 = vpop.f32.mrb[0].mxu0
  %5217 = vmatprep.mubr.f32.mxu0 %v4841
  %5218 = vmatmul.mubr.f32.gmra.mrb[0].mxu0 %v4782
  %v5219 = vpop.f32.mrb[0].mxu0
  %v5220 = vadd.f32 %v5125, %v5219
  %v5221 = vpop.f32.mrb[0].mxu0
  %5222 = vdwg.mxu0
  %v5223 = vld [vmem:[%s65] sm:$0x1]
  %v5224 = vld [vmem:[%s67] sm:$0x1]
  %v5225 = vld [vmem:[%s69] sm:$0xff]
  %v5226 = vld [vmem:[%s69 + $0x8] sm:$0xff]
  %v5227 = vld [vmem:[%s69 + $0x10] sm:$0xff]
  %v5228 = vld [vmem:[%s69 + $0x18] sm:$0xff]
  %v5229 = vld [vmem:[%s69 + $0x20] sm:$0xff]
  %v5230 = vld [vmem:[%s69 + $0x28] sm:$0xff]
  %v5231 = vld [vmem:[%s69 + $0x30] sm:$0xff]
  %v5232 = vld [vmem:[%s69 + $0x38] sm:$0xff]
  %v5233 = vld [vmem:[%s69 + $0x40] sm:$0xff]
  %v5234 = vld [vmem:[%s69 + $0x48] sm:$0xff]
  %v5235 = vld [vmem:[%s69 + $0x50] sm:$0xff]
  %v5236 = vld [vmem:[%s69 + $0x58] sm:$0xff]
  %v5237 = vld [vmem:[%s71] sm:$0xf]
  %v5238 = vsel %vm1641, %v5195, 0.0
  %v5239 = vsel %vm1641, %v5200, 0.0
  %v5240 = vadd.f32 %v5238, %v5239
  %v5241 = vsel %vm1641, %v5205, 0.0
  %v5242 = vadd.f32 %v5240, %v5241
  %v5243 = vsel %vm1641, %v5210, 0.0
  %v5244 = vadd.f32 %v5242, %v5243
  %v5245 = vsel %vm1641, %v5215, 0.0
  %v5246 = vadd.f32 %v5244, %v5245
  %v5247 = vsel %vm1641, %v5220, 0.0
  %v5248 = vadd.f32 %v5246, %v5247
  %v5249 = vrot.slane %v5248, 4
  %v5250 = vadd.f32 %v5248, %v5249
  %v5251 = vrot.slane %v5250, 2
  %v5252 = vadd.f32 %v5250, %v5251
  %v5253 = vrot.slane %v5252, 1
  %v5254 = vadd.f32 %v5252, %v5253
  %v5256 = vsel %vm1641, %v5254, 0
  %5258 = vmatprep.subr.mxu0 0.0
  %5259 = vmatpush1.msra.mxu0 %v5225
  %5260 = vmatprep.subr.mxu0 0.0
  %5261 = vmatpush1.msra.mxu0 %v5226
  %5262 = vmatprep.subr.mxu0 0.0
  %5263 = vmatpush1.msra.mxu0 %v5227
  %5264 = vmatprep.subr.mxu0 0.0
  %5265 = vmatpush1.msra.mxu0 %v5228
  %5266 = vmatprep.subr.mxu0 0.0
  %5267 = vmatpush1.msra.mxu0 %v5229
  %5268 = vmatprep.subr.mxu0 0.0
  %5269 = vmatpush1.msra.mxu0 %v5230
  %5270 = vmatprep.subr.mxu0 0.0
  %5271 = vmatpush1.msra.mxu0 %v5231
  %5272 = vmatprep.subr.mxu0 0.0
  %5273 = vmatpush1.msra.mxu0 %v5232
  %5274 = vmatprep.subr.mxu0 0.0
  %5275 = vmatpush1.msra.mxu0 %v5233
  %5276 = vmatprep.subr.mxu0 0.0
  %5277 = vmatpush1.msra.mxu0 %v5234
  %5278 = vmatprep.subr.mxu0 0.0
  %5279 = vmatpush1.msra.mxu0 %v5235
  %5280 = vmatprep.subr.mxu0 0.0
  %5281 = vmatpush1.msra.mxu0 %v5236
  %5282 = vmatprep.subr.mxu0 0.0
  %5283 = vmatpush1.msra.mxu0 0.0
  %5284 = vmatprep.subr.mxu0 0.0
  %5285 = vmatpush1.msra.mxu0 0.0
  %5286 = vmatprep.subr.mxu0 0.0
  %5287 = vmatpush1.msra.mxu0 0.0
  %5288 = vmatprep.subr.mxu0 0.0
  %5289 = vmatpush1.msra.mxu0 0.0
  %5290 = vmatprep.subr.mxu0 0.0
  %5291 = vmatpush1.msra.mxu0 0.0
  %5292 = vmatprep.subr.mxu0 0.0
  %5293 = vmatpush1.msra.mxu0 0.0
  %5294 = vmatprep.subr.mxu0 0.0
  %5295 = vmatpush1.msra.mxu0 0.0
  %5296 = vmatprep.subr.mxu0 0.0
  %5297 = vmatpush1.msra.mxu0 0.0
  %5298 = vmatprep.subr.mxu0 0.0
  %5299 = vmatpush1.msra.mxu0 0.0
  %5300 = vmatprep.subr.mxu0 0.0
  %5301 = vmatpush1.msra.mxu0 0.0
  %5302 = vmatprep.subr.mxu0 0.0
  %5303 = vmatpush1.msra.mxu0 0.0
  %5304 = vmatprep.subr.mxu0 0.0
  %5305 = vmatpush1.msra.mxu0 0.0
  %5306 = vmatprep.subr.mxu0 0.0
  %5307 = vmatpush1.msra.mxu0 0.0
  %5308 = vmatprep.subr.mxu0 0.0
  %5309 = vmatpush1.msra.mxu0 0.0
  %5310 = vmatprep.subr.mxu0 0.0
  %5311 = vmatpush1.msra.mxu0 0.0
  %5312 = vmatprep.subr.mxu0 0.0
  %5313 = vmatpush1.msra.mxu0 0.0
  %5314 = vmatprep.subr.mxu0 0.0
  %5315 = vmatpush1.msra.mxu0 0.0
  %5316 = vmatprep.subr.mxu0 0.0
  %5317 = vmatpush1.msra.mxu0 0.0
  %5318 = vmatprep.subr.mxu0 0.0
  %5319 = vmatpush1.msra.mxu0 0.0
  %5320 = vmatprep.subr.mxu0 0.0
  %5321 = vmatpush1.msra.mxu0 0.0
  %5322 = vmatprep.mubr.f32.mxu0 0.0
  %5323 = vmatmul.mubr.f32.gmra.mrb[0].mxu0 %v5256
  %v5324 = vpop.f32.mrb[0].mxu0
  %v5325 = vadd.f32 0.0, %v5324
  %v5326 = vpop.f32.mrb[0].mxu0
  %5327 = vdwg.mxu0
  %v5328 = vmul.f32 %v5325, 0.00086805556
  %v5330 = vsel %vm254, %v5328, 0
  %v5333 = vsel %vm268, %v5237, 0
  %5335 = vmatprep.subr.mxu0 0.0
  %5336 = vmatpush1.msra.mxu0 %v5333
  %5337 = vmatprep.subr.mxu0 0.0
  %5338 = vmatpush1.msra.mxu0 0.0
  %5339 = vmatprep.subr.mxu0 0.0
  %5340 = vmatpush1.msra.mxu0 0.0
  %5341 = vmatprep.subr.mxu0 0.0
  %5342 = vmatpush1.msra.mxu0 0.0
  %5343 = vmatprep.subr.mxu0 0.0
  %5344 = vmatpush1.msra.mxu0 0.0
  %5345 = vmatprep.subr.mxu0 0.0
  %5346 = vmatpush1.msra.mxu0 0.0
  %5347 = vmatprep.subr.mxu0 0.0
  %5348 = vmatpush1.msra.mxu0 0.0
  %5349 = vmatprep.subr.mxu0 0.0
  %5350 = vmatpush1.msra.mxu0 0.0
  %5351 = vmatprep.subr.mxu0 0.0
  %5352 = vmatpush1.msra.mxu0 0.0
  %5353 = vmatprep.subr.mxu0 0.0
  %5354 = vmatpush1.msra.mxu0 0.0
  %5355 = vmatprep.subr.mxu0 0.0
  %5356 = vmatpush1.msra.mxu0 0.0
  %5357 = vmatprep.subr.mxu0 0.0
  %5358 = vmatpush1.msra.mxu0 0.0
  %5359 = vmatprep.subr.mxu0 0.0
  %5360 = vmatpush1.msra.mxu0 0.0
  %5361 = vmatprep.subr.mxu0 0.0
  %5362 = vmatpush1.msra.mxu0 0.0
  %5363 = vmatprep.subr.mxu0 0.0
  %5364 = vmatpush1.msra.mxu0 0.0
  %5365 = vmatprep.subr.mxu0 0.0
  %5366 = vmatpush1.msra.mxu0 0.0
  %5367 = vmatprep.subr.mxu0 0.0
  %5368 = vmatpush1.msra.mxu0 0.0
  %5369 = vmatprep.subr.mxu0 0.0
  %5370 = vmatpush1.msra.mxu0 0.0
  %5371 = vmatprep.subr.mxu0 0.0
  %5372 = vmatpush1.msra.mxu0 0.0
  %5373 = vmatprep.subr.mxu0 0.0
  %5374 = vmatpush1.msra.mxu0 0.0
  %5375 = vmatprep.subr.mxu0 0.0
  %5376 = vmatpush1.msra.mxu0 0.0
  %5377 = vmatprep.subr.mxu0 0.0
  %5378 = vmatpush1.msra.mxu0 0.0
  %5379 = vmatprep.subr.mxu0 0.0
  %5380 = vmatpush1.msra.mxu0 0.0
  %5381 = vmatprep.subr.mxu0 0.0
  %5382 = vmatpush1.msra.mxu0 0.0
  %5383 = vmatprep.subr.mxu0 0.0
  %5384 = vmatpush1.msra.mxu0 0.0
  %5385 = vmatprep.subr.mxu0 0.0
  %5386 = vmatpush1.msra.mxu0 0.0
  %5387 = vmatprep.subr.mxu0 0.0
  %5388 = vmatpush1.msra.mxu0 0.0
  %5389 = vmatprep.subr.mxu0 0.0
  %5390 = vmatpush1.msra.mxu0 0.0
  %5391 = vmatprep.subr.mxu0 0.0
  %5392 = vmatpush1.msra.mxu0 0.0
  %5393 = vmatprep.subr.mxu0 0.0
  %5394 = vmatpush1.msra.mxu0 0.0
  %5395 = vmatprep.subr.mxu0 0.0
  %5396 = vmatpush1.msra.mxu0 0.0
  %5397 = vmatprep.subr.mxu0 0.0
  %5398 = vmatpush1.msra.mxu0 0.0
  %5399 = vmatprep.mubr.f32.mxu0 0.0
  %5400 = vmatmul.mubr.f32.gmra.mrb[0].mxu0 %v5330
  %v5401 = vpop.f32.mrb[0].mxu0
  %v5402 = vadd.f32 0.0, %v5401
  %v5403 = vpop.f32.mrb[0].mxu0
  %5404 = vdwg.mxu0
  %v5405 = vlaneseq
  %v5406 = vshrl.u32 %v5405, 7
  %v5407 = vsub.s32 0, %v5406
  %v5408 = vrot.slane %v5402, %v5407
  %v5409 = vsub.f32 %v5195, %v5408
  %v5410 = vsub.f32 %v5200, %v5408
  %v5411 = vsub.f32 %v5205, %v5408
  %v5412 = vsub.f32 %v5210, %v5408
  %v5413 = vsub.f32 %v5215, %v5408
  %v5414 = vsub.f32 %v5220, %v5408
  %v5415 = vmul.f32 %v5409, %v5409
  %v5416 = vmul.f32 %v5410, %v5410
  %v5417 = vmul.f32 %v5411, %v5411
  %v5418 = vmul.f32 %v5412, %v5412
  %v5419 = vmul.f32 %v5413, %v5413
  %v5420 = vmul.f32 %v5414, %v5414
  %v5421 = vsel %vm1641, %v5415, 0.0
  %v5422 = vsel %vm1641, %v5416, 0.0
  %v5423 = vadd.f32 %v5421, %v5422
  %v5424 = vsel %vm1641, %v5417, 0.0
  %v5425 = vadd.f32 %v5423, %v5424
  %v5426 = vsel %vm1641, %v5418, 0.0
  %v5427 = vadd.f32 %v5425, %v5426
  %v5428 = vsel %vm1641, %v5419, 0.0
  %v5429 = vadd.f32 %v5427, %v5428
  %v5430 = vsel %vm1641, %v5420, 0.0
  %v5431 = vadd.f32 %v5429, %v5430
  %v5432 = vrot.slane %v5431, 4
  %v5433 = vadd.f32 %v5431, %v5432
  %v5434 = vrot.slane %v5433, 2
  %v5435 = vadd.f32 %v5433, %v5434
  %v5436 = vrot.slane %v5435, 1
  %v5437 = vadd.f32 %v5435, %v5436
  %v5439 = vsel %vm1641, %v5437, 0
  %5441 = vmatprep.subr.mxu0 0.0
  %5442 = vmatpush1.msra.mxu0 %v5225
  %5443 = vmatprep.subr.mxu0 0.0
  %5444 = vmatpush1.msra.mxu0 %v5226
  %5445 = vmatprep.subr.mxu0 0.0
  %5446 = vmatpush1.msra.mxu0 %v5227
  %5447 = vmatprep.subr.mxu0 0.0
  %5448 = vmatpush1.msra.mxu0 %v5228
  %5449 = vmatprep.subr.mxu0 0.0
  %5450 = vmatpush1.msra.mxu0 %v5229
  %5451 = vmatprep.subr.mxu0 0.0
  %5452 = vmatpush1.msra.mxu0 %v5230
  %5453 = vmatprep.subr.mxu0 0.0
  %5454 = vmatpush1.msra.mxu0 %v5231
  %5455 = vmatprep.subr.mxu0 0.0
  %5456 = vmatpush1.msra.mxu0 %v5232
  %5457 = vmatprep.subr.mxu0 0.0
  %5458 = vmatpush1.msra.mxu0 %v5233
  %5459 = vmatprep.subr.mxu0 0.0
  %5460 = vmatpush1.msra.mxu0 %v5234
  %5461 = vmatprep.subr.mxu0 0.0
  %5462 = vmatpush1.msra.mxu0 %v5235
  %5463 = vmatprep.subr.mxu0 0.0
  %5464 = vmatpush1.msra.mxu0 %v5236
  %5465 = vmatprep.subr.mxu0 0.0
  %5466 = vmatpush1.msra.mxu0 0.0
  %5467 = vmatprep.subr.mxu0 0.0
  %5468 = vmatpush1.msra.mxu0 0.0
  %5469 = vmatprep.subr.mxu0 0.0
  %5470 = vmatpush1.msra.mxu0 0.0
  %5471 = vmatprep.subr.mxu0 0.0
  %5472 = vmatpush1.msra.mxu0 0.0
  %5473 = vmatprep.subr.mxu0 0.0
  %5474 = vmatpush1.msra.mxu0 0.0
  %5475 = vmatprep.subr.mxu0 0.0
  %5476 = vmatpush1.msra.mxu0 0.0
  %5477 = vmatprep.subr.mxu0 0.0
  %5478 = vmatpush1.msra.mxu0 0.0
  %5479 = vmatprep.subr.mxu0 0.0
  %5480 = vmatpush1.msra.mxu0 0.0
  %5481 = vmatprep.subr.mxu0 0.0
  %5482 = vmatpush1.msra.mxu0 0.0
  %5483 = vmatprep.subr.mxu0 0.0
  %5484 = vmatpush1.msra.mxu0 0.0
  %5485 = vmatprep.subr.mxu0 0.0
  %5486 = vmatpush1.msra.mxu0 0.0
  %5487 = vmatprep.subr.mxu0 0.0
  %5488 = vmatpush1.msra.mxu0 0.0
  %5489 = vmatprep.subr.mxu0 0.0
  %5490 = vmatpush1.msra.mxu0 0.0
  %5491 = vmatprep.subr.mxu0 0.0
  %5492 = vmatpush1.msra.mxu0 0.0
  %5493 = vmatprep.subr.mxu0 0.0
  %5494 = vmatpush1.msra.mxu0 0.0
  %5495 = vmatprep.subr.mxu0 0.0
  %5496 = vmatpush1.msra.mxu0 0.0
  %5497 = vmatprep.subr.mxu0 0.0
  %5498 = vmatpush1.msra.mxu0 0.0
  %5499 = vmatprep.subr.mxu0 0.0
  %5500 = vmatpush1.msra.mxu0 0.0
  %5501 = vmatprep.subr.mxu0 0.0
  %5502 = vmatpush1.msra.mxu0 0.0
  %5503 = vmatprep.subr.mxu0 0.0
  %5504 = vmatpush1.msra.mxu0 0.0
  %5505 = vmatprep.mubr.f32.mxu0 0.0
  %5506 = vmatmul.mubr.f32.gmra.mrb[0].mxu0 %v5439
  %v5507 = vpop.f32.mrb[0].mxu0
  %v5508 = vadd.f32 0.0, %v5507
  %v5509 = vpop.f32.mrb[0].mxu0
  %5510 = vdwg.mxu0
  %v5511 = vmul.f32 %v5508, 0.00086805556
  %v5512 = vadd.f32 %v5511, 1e-05
  %v5513 = vrsqrt.pop %v5512
  %v5514 = vmul.f32 %v5223, %v5513
  %v5515 = vmul.f32 %v5328, %v5514
  %v5516 = vsub.f32 %v5224, %v5515
  %v5518 = vsel %vm254, %v5514, 0
  %5520 = vmatprep.subr.mxu0 0.0
  %5521 = vmatpush1.msra.mxu0 %v5333
  %5522 = vmatprep.subr.mxu0 0.0
  %5523 = vmatpush1.msra.mxu0 0.0
  %5524 = vmatprep.subr.mxu0 0.0
  %5525 = vmatpush1.msra.mxu0 0.0
  %5526 = vmatprep.subr.mxu0 0.0
  %5527 = vmatpush1.msra.mxu0 0.0
  %5528 = vmatprep.subr.mxu0 0.0
  %5529 = vmatpush1.msra.mxu0 0.0
  %5530 = vmatprep.subr.mxu0 0.0
  %5531 = vmatpush1.msra.mxu0 0.0
  %5532 = vmatprep.subr.mxu0 0.0
  %5533 = vmatpush1.msra.mxu0 0.0
  %5534 = vmatprep.subr.mxu0 0.0
  %5535 = vmatpush1.msra.mxu0 0.0
  %5536 = vmatprep.subr.mxu0 0.0
  %5537 = vmatpush1.msra.mxu0 0.0
  %5538 = vmatprep.subr.mxu0 0.0
  %5539 = vmatpush1.msra.mxu0 0.0
  %5540 = vmatprep.subr.mxu0 0.0
  %5541 = vmatpush1.msra.mxu0 0.0
  %5542 = vmatprep.subr.mxu0 0.0
  %5543 = vmatpush1.msra.mxu0 0.0
  %5544 = vmatprep.subr.mxu0 0.0
  %5545 = vmatpush1.msra.mxu0 0.0
  %5546 = vmatprep.subr.mxu0 0.0
  %5547 = vmatpush1.msra.mxu0 0.0
  %5548 = vmatprep.subr.mxu0 0.0
  %5549 = vmatpush1.msra.mxu0 0.0
  %5550 = vmatprep.subr.mxu0 0.0
  %5551 = vmatpush1.msra.mxu0 0.0
  %5552 = vmatprep.subr.mxu0 0.0
  %5553 = vmatpush1.msra.mxu0 0.0
  %5554 = vmatprep.subr.mxu0 0.0
  %5555 = vmatpush1.msra.mxu0 0.0
  %5556 = vmatprep.subr.mxu0 0.0
  %5557 = vmatpush1.msra.mxu0 0.0
  %5558 = vmatprep.subr.mxu0 0.0
  %5559 = vmatpush1.msra.mxu0 0.0
  %5560 = vmatprep.subr.mxu0 0.0
  %5561 = vmatpush1.msra.mxu0 0.0
  %5562 = vmatprep.subr.mxu0 0.0
  %5563 = vmatpush1.msra.mxu0 0.0
  %5564 = vmatprep.subr.mxu0 0.0
  %5565 = vmatpush1.msra.mxu0 0.0
  %5566 = vmatprep.subr.mxu0 0.0
  %5567 = vmatpush1.msra.mxu0 0.0
  %5568 = vmatprep.subr.mxu0 0.0
  %5569 = vmatpush1.msra.mxu0 0.0
  %5570 = vmatprep.subr.mxu0 0.0
  %5571 = vmatpush1.msra.mxu0 0.0
  %5572 = vmatprep.subr.mxu0 0.0
  %5573 = vmatpush1.msra.mxu0 0.0
  %5574 = vmatprep.subr.mxu0 0.0
  %5575 = vmatpush1.msra.mxu0 0.0
  %5576 = vmatprep.subr.mxu0 0.0
  %5577 = vmatpush1.msra.mxu0 0.0
  %5578 = vmatprep.subr.mxu0 0.0
  %5579 = vmatpush1.msra.mxu0 0.0
  %5580 = vmatprep.subr.mxu0 0.0
  %5581 = vmatpush1.msra.mxu0 0.0
  %5582 = vmatprep.subr.mxu0 0.0
  %5583 = vmatpush1.msra.mxu0 0.0
  %5584 = vmatprep.mubr.f32.mxu0 0.0
  %5585 = vmatmul.mubr.f32.gmra.mrb[0].mxu0 %v5518
  %v5586 = vpop.f32.mrb[0].mxu0
  %v5587 = vadd.f32 0.0, %v5586
  %v5588 = vpop.f32.mrb[0].mxu0
  %5589 = vdwg.mxu0
  %v5591 = vsel %vm254, %v5516, 0
  %5593 = vmatprep.subr.mxu0 0.0
  %5594 = vmatpush1.msra.mxu0 %v5333
  %5595 = vmatprep.subr.mxu0 0.0
  %5596 = vmatpush1.msra.mxu0 0.0
  %5597 = vmatprep.subr.mxu0 0.0
  %5598 = vmatpush1.msra.mxu0 0.0
  %5599 = vmatprep.subr.mxu0 0.0
  %5600 = vmatpush1.msra.mxu0 0.0
  %5601 = vmatprep.subr.mxu0 0.0
  %5602 = vmatpush1.msra.mxu0 0.0
  %5603 = vmatprep.subr.mxu0 0.0
  %5604 = vmatpush1.msra.mxu0 0.0
  %5605 = vmatprep.subr.mxu0 0.0
  %5606 = vmatpush1.msra.mxu0 0.0
  %5607 = vmatprep.subr.mxu0 0.0
  %5608 = vmatpush1.msra.mxu0 0.0
  %5609 = vmatprep.subr.mxu0 0.0
  %5610 = vmatpush1.msra.mxu0 0.0
  %5611 = vmatprep.subr.mxu0 0.0
  %5612 = vmatpush1.msra.mxu0 0.0
  %5613 = vmatprep.subr.mxu0 0.0
  %5614 = vmatpush1.msra.mxu0 0.0
  %5615 = vmatprep.subr.mxu0 0.0
  %5616 = vmatpush1.msra.mxu0 0.0
  %5617 = vmatprep.subr.mxu0 0.0
  %5618 = vmatpush1.msra.mxu0 0.0
  %5619 = vmatprep.subr.mxu0 0.0
  %5620 = vmatpush1.msra.mxu0 0.0
  %5621 = vmatprep.subr.mxu0 0.0
  %5622 = vmatpush1.msra.mxu0 0.0
  %5623 = vmatprep.subr.mxu0 0.0
  %5624 = vmatpush1.msra.mxu0 0.0
  %5625 = vmatprep.subr.mxu0 0.0
  %5626 = vmatpush1.msra.mxu0 0.0
  %5627 = vmatprep.subr.mxu0 0.0
  %5628 = vmatpush1.msra.mxu0 0.0
  %5629 = vmatprep.subr.mxu0 0.0
  %5630 = vmatpush1.msra.mxu0 0.0
  %5631 = vmatprep.subr.mxu0 0.0
  %5632 = vmatpush1.msra.mxu0 0.0
  %5633 = vmatprep.subr.mxu0 0.0
  %5634 = vmatpush1.msra.mxu0 0.0
  %5635 = vmatprep.subr.mxu0 0.0
  %5636 = vmatpush1.msra.mxu0 0.0
  %5637 = vmatprep.subr.mxu0 0.0
  %5638 = vmatpush1.msra.mxu0 0.0
  %5639 = vmatprep.subr.mxu0 0.0
  %5640 = vmatpush1.msra.mxu0 0.0
  %5641 = vmatprep.subr.mxu0 0.0
  %5642 = vmatpush1.msra.mxu0 0.0
  %5643 = vmatprep.subr.mxu0 0.0
  %5644 = vmatpush1.msra.mxu0 0.0
  %5645 = vmatprep.subr.mxu0 0.0
  %5646 = vmatpush1.msra.mxu0 0.0
  %5647 = vmatprep.subr.mxu0 0.0
  %5648 = vmatpush1.msra.mxu0 0.0
  %5649 = vmatprep.subr.mxu0 0.0
  %5650 = vmatpush1.msra.mxu0 0.0
  %5651 = vmatprep.subr.mxu0 0.0
  %5652 = vmatpush1.msra.mxu0 0.0
  %5653 = vmatprep.subr.mxu0 0.0
  %5654 = vmatpush1.msra.mxu0 0.0
  %5655 = vmatprep.subr.mxu0 0.0
  %5656 = vmatpush1.msra.mxu0 0.0
  %5657 = vmatprep.mubr.f32.mxu0 0.0
  %5658 = vmatmul.mubr.f32.gmra.mrb[0].mxu0 %v5591
  %v5659 = vpop.f32.mrb[0].mxu0
  %v5660 = vadd.f32 0.0, %v5659
  %v5661 = vpop.f32.mrb[0].mxu0
  %5662 = vdwg.mxu0
  %v5663 = vlaneseq
  %v5664 = vshrl.u32 %v5663, 7
  %v5665 = vsub.s32 0, %v5664
  %v5666 = vrot.slane %v5587, %v5665
  %v5667 = vmul.f32 %v5195, %v5666
  %v5668 = vmul.f32 %v5200, %v5666
  %v5669 = vmul.f32 %v5205, %v5666
  %v5670 = vmul.f32 %v5210, %v5666
  %v5671 = vmul.f32 %v5215, %v5666
  %v5672 = vmul.f32 %v5220, %v5666
  %v5673 = vlaneseq
  %v5674 = vshrl.u32 %v5673, 7
  %v5675 = vsub.s32 0, %v5674
  %v5676 = vrot.slane %v5660, %v5675
  %v5677 = vadd.f32 %v5667, %v5676
  %v5678 = vadd.f32 %v5668, %v5676
  %v5679 = vadd.f32 %v5669, %v5676
  %v5680 = vadd.f32 %v5670, %v5676
  %v5681 = vadd.f32 %v5671, %v5676
  %v5682 = vadd.f32 %v5672, %v5676
  %v5683 = vmax.f32 %v5677, 0.0
  %v5684 = vmax.f32 %v5678, 0.0
  %v5685 = vmax.f32 %v5679, 0.0
  %v5686 = vmax.f32 %v5680, 0.0
  %v5687 = vmax.f32 %v5681, 0.0
  %v5688 = vmax.f32 %v5682, 0.0
  %v5689 = vld [vmem:[%s73] sm:$0xff]
  %v5690 = vld [vmem:[%s73 + $0x8] sm:$0xff]
  %v5691 = vld [vmem:[%s73 + $0x10] sm:$0xff]
  %v5692 = vld [vmem:[%s73 + $0x18] sm:$0xff]
  %v5693 = vld [vmem:[%s73 + $0x20] sm:$0xff]
  %v5694 = vld [vmem:[%s73 + $0x28] sm:$0xff]
  %v5695 = vld [vmem:[%s73 + $0x30] sm:$0xff]
  %v5696 = vld [vmem:[%s73 + $0x38] sm:$0xff]
  %v5697 = vld [vmem:[%s73 + $0x40] sm:$0xff]
  %v5698 = vld [vmem:[%s73 + $0x48] sm:$0xff]
  %v5699 = vld [vmem:[%s73 + $0x50] sm:$0xff]
  %v5700 = vld [vmem:[%s73 + $0x58] sm:$0xff]
  %v5701 = vld [vmem:[%s73 + $0x60] sm:$0xff]
  %v5702 = vld [vmem:[%s73 + $0x68] sm:$0xff]
  %v5703 = vld [vmem:[%s73 + $0x70] sm:$0xff]
  %v5704 = vld [vmem:[%s73 + $0x78] sm:$0xff]
  %v5705 = vld [vmem:[%s73 + $0x80] sm:$0xff]
  %v5706 = vld [vmem:[%s73 + $0x88] sm:$0xff]
  %v5707 = vld [vmem:[%s73 + $0x90] sm:$0xff]
  %v5708 = vld [vmem:[%s73 + $0x98] sm:$0xff]
  %v5709 = vld [vmem:[%s73 + $0xa0] sm:$0xff]
  %v5710 = vld [vmem:[%s73 + $0xa8] sm:$0xff]
  %v5711 = vld [vmem:[%s73 + $0xb0] sm:$0xff]
  %v5712 = vld [vmem:[%s73 + $0xb8] sm:$0xff]
  %v5713 = vld [vmem:[%s73 + $0xc0] sm:$0xff]
  %v5714 = vld [vmem:[%s73 + $0xc8] sm:$0xff]
  %v5715 = vld [vmem:[%s73 + $0xd0] sm:$0xff]
  %v5716 = vld [vmem:[%s73 + $0xd8] sm:$0xff]
  %v5717 = vld [vmem:[%s73 + $0xe0] sm:$0xff]
  %v5718 = vld [vmem:[%s73 + $0xe8] sm:$0xff]
  %v5719 = vld [vmem:[%s73 + $0xf0] sm:$0xff]
  %v5720 = vld [vmem:[%s73 + $0xf8] sm:$0xff]
  %v5721 = vld [vmem:[%s73 + $0x100] sm:$0xff]
  %v5722 = vld [vmem:[%s73 + $0x108] sm:$0xff]
  %v5723 = vld [vmem:[%s73 + $0x110] sm:$0xff]
  %v5724 = vld [vmem:[%s73 + $0x118] sm:$0xff]
  %v5725 = vld [vmem:[%s73 + $0x120] sm:$0xff]
  %v5726 = vld [vmem:[%s73 + $0x128] sm:$0xff]
  %v5727 = vld [vmem:[%s73 + $0x130] sm:$0xff]
  %v5728 = vld [vmem:[%s73 + $0x138] sm:$0xff]
  %v5729 = vld [vmem:[%s73 + $0x140] sm:$0xff]
  %v5730 = vld [vmem:[%s73 + $0x148] sm:$0xff]
  %v5731 = vld [vmem:[%s73 + $0x150] sm:$0xff]
  %v5732 = vld [vmem:[%s73 + $0x158] sm:$0xff]
  %v5733 = vld [vmem:[%s73 + $0x160] sm:$0xff]
  %v5734 = vld [vmem:[%s73 + $0x168] sm:$0xff]
  %v5735 = vld [vmem:[%s73 + $0x170] sm:$0xff]
  %v5736 = vld [vmem:[%s73 + $0x178] sm:$0xff]
  %v5737 = vld [vmem:[%s73 + $0x180] sm:$0xff]
  %v5738 = vld [vmem:[%s73 + $0x188] sm:$0xff]
  %v5739 = vld [vmem:[%s73 + $0x190] sm:$0xff]
  %v5740 = vld [vmem:[%s73 + $0x198] sm:$0xff]
  %v5741 = vld [vmem:[%s73 + $0x1a0] sm:$0xff]
  %v5742 = vld [vmem:[%s73 + $0x1a8] sm:$0xff]
  %v5743 = vld [vmem:[%s73 + $0x1b0] sm:$0xff]
  %v5744 = vld [vmem:[%s73 + $0x1b8] sm:$0xff]
  %v5745 = vld [vmem:[%s73 + $0x1c0] sm:$0xff]
  %v5746 = vld [vmem:[%s73 + $0x1c8] sm:$0xff]
  %v5747 = vld [vmem:[%s73 + $0x1d0] sm:$0xff]
  %v5748 = vld [vmem:[%s73 + $0x1d8] sm:$0xff]
  %v5749 = vld [vmem:[%s73 + $0x1e0] sm:$0xff]
  %v5750 = vld [vmem:[%s73 + $0x1e8] sm:$0xff]
  %v5751 = vld [vmem:[%s73 + $0x1f0] sm:$0xff]
  %v5752 = vld [vmem:[%s73 + $0x1f8] sm:$0xff]
  %v5753 = vld [vmem:[%s73 + $0x200] sm:$0xff]
  %v5754 = vld [vmem:[%s73 + $0x208] sm:$0xff]
  %v5755 = vld [vmem:[%s73 + $0x210] sm:$0xff]
  %v5756 = vld [vmem:[%s73 + $0x218] sm:$0xff]
  %v5757 = vld [vmem:[%s73 + $0x220] sm:$0xff]
  %v5758 = vld [vmem:[%s73 + $0x228] sm:$0xff]
  %v5759 = vld [vmem:[%s73 + $0x230] sm:$0xff]
  %v5760 = vld [vmem:[%s73 + $0x238] sm:$0xff]
  %v5761 = vld [vmem:[%s73 + $0x240] sm:$0xff]
  %v5762 = vld [vmem:[%s73 + $0x248] sm:$0xff]
  %v5763 = vld [vmem:[%s73 + $0x250] sm:$0xff]
  %v5764 = vld [vmem:[%s73 + $0x258] sm:$0xff]
  %v5765 = vld [vmem:[%s73 + $0x260] sm:$0xff]
  %v5766 = vld [vmem:[%s73 + $0x268] sm:$0xff]
  %v5767 = vld [vmem:[%s73 + $0x270] sm:$0xff]
  %v5768 = vld [vmem:[%s73 + $0x278] sm:$0xff]
  %v5769 = vld [vmem:[%s73 + $0x280] sm:$0xff]
  %v5770 = vld [vmem:[%s73 + $0x288] sm:$0xff]
  %v5771 = vld [vmem:[%s73 + $0x290] sm:$0xff]
  %v5772 = vld [vmem:[%s73 + $0x298] sm:$0xff]
  %v5773 = vld [vmem:[%s73 + $0x2a0] sm:$0xff]
  %v5774 = vld [vmem:[%s73 + $0x2a8] sm:$0xff]
  %v5775 = vld [vmem:[%s73 + $0x2b0] sm:$0xff]
  %v5776 = vld [vmem:[%s73 + $0x2b8] sm:$0xff]
  %v5777 = vld [vmem:[%s73 + $0x2c0] sm:$0xff]
  %v5778 = vld [vmem:[%s73 + $0x2c8] sm:$0xff]
  %v5779 = vld [vmem:[%s73 + $0x2d0] sm:$0xff]
  %v5780 = vld [vmem:[%s73 + $0x2d8] sm:$0xff]
  %v5781 = vld [vmem:[%s73 + $0x2e0] sm:$0xff]
  %v5782 = vld [vmem:[%s73 + $0x2e8] sm:$0xf]
  %v5783 = vld [vmem:[%s75] sm:$0xff]
  %v5784 = vld [vmem:[%s75 + $0x8] sm:$0xff]
  %v5785 = vld [vmem:[%s75 + $0x10] sm:$0xff]
  %v5786 = vld [vmem:[%s75 + $0x18] sm:$0xff]
  %v5787 = vld [vmem:[%s75 + $0x20] sm:$0xff]
  %v5788 = vld [vmem:[%s75 + $0x28] sm:$0xff]
  %v5789 = vld [vmem:[%s75 + $0x30] sm:$0xff]
  %v5790 = vld [vmem:[%s75 + $0x38] sm:$0xff]
  %v5791 = vld [vmem:[%s75 + $0x40] sm:$0xff]
  %v5792 = vld [vmem:[%s75 + $0x48] sm:$0xff]
  %v5793 = vld [vmem:[%s75 + $0x50] sm:$0xff]
  %v5794 = vld [vmem:[%s75 + $0x58] sm:$0xff]
  %v5795 = vld [vmem:[%s75 + $0x60] sm:$0xff]
  %v5796 = vld [vmem:[%s75 + $0x68] sm:$0xff]
  %v5797 = vld [vmem:[%s75 + $0x70] sm:$0xff]
  %v5798 = vld [vmem:[%s75 + $0x78] sm:$0xff]
  %v5799 = vld [vmem:[%s75 + $0x80] sm:$0xff]
  %v5800 = vld [vmem:[%s75 + $0x88] sm:$0xff]
  %v5801 = vld [vmem:[%s75 + $0x90] sm:$0xff]
  %v5802 = vld [vmem:[%s75 + $0x98] sm:$0xff]
  %v5803 = vld [vmem:[%s75 + $0xa0] sm:$0xff]
  %v5804 = vld [vmem:[%s75 + $0xa8] sm:$0xff]
  %v5805 = vld [vmem:[%s75 + $0xb0] sm:$0xff]
  %v5806 = vld [vmem:[%s75 + $0xb8] sm:$0xff]
  %v5807 = vld [vmem:[%s75 + $0xc0] sm:$0xff]
  %v5808 = vld [vmem:[%s75 + $0xc8] sm:$0xff]
  %v5809 = vld [vmem:[%s75 + $0xd0] sm:$0xff]
  %v5810 = vld [vmem:[%s75 + $0xd8] sm:$0xff]
  %v5811 = vld [vmem:[%s75 + $0xe0] sm:$0xff]
  %v5812 = vld [vmem:[%s75 + $0xe8] sm:$0xff]
  %v5813 = vld [vmem:[%s75 + $0xf0] sm:$0xff]
  %v5814 = vld [vmem:[%s75 + $0xf8] sm:$0xff]
  %v5815 = vld [vmem:[%s75 + $0x100] sm:$0xff]
  %v5816 = vld [vmem:[%s75 + $0x108] sm:$0xff]
  %v5817 = vld [vmem:[%s75 + $0x110] sm:$0xff]
  %v5818 = vld [vmem:[%s75 + $0x118] sm:$0xff]
  %v5819 = vld [vmem:[%s75 + $0x120] sm:$0xff]
  %v5820 = vld [vmem:[%s75 + $0x128] sm:$0xff]
  %v5821 = vld [vmem:[%s75 + $0x130] sm:$0xff]
  %v5822 = vld [vmem:[%s75 + $0x138] sm:$0xff]
  %v5823 = vld [vmem:[%s75 + $0x140] sm:$0xff]
  %v5824 = vld [vmem:[%s75 + $0x148] sm:$0xff]
  %v5825 = vld [vmem:[%s75 + $0x150] sm:$0xff]
  %v5826 = vld [vmem:[%s75 + $0x158] sm:$0xff]
  %v5827 = vld [vmem:[%s75 + $0x160] sm:$0xff]
  %v5828 = vld [vmem:[%s75 + $0x168] sm:$0xff]
  %v5829 = vld [vmem:[%s75 + $0x170] sm:$0xff]
  %v5830 = vld [vmem:[%s75 + $0x178] sm:$0xff]
  %v5831 = vld [vmem:[%s75 + $0x180] sm:$0xff]
  %v5832 = vld [vmem:[%s75 + $0x188] sm:$0xff]
  %v5833 = vld [vmem:[%s75 + $0x190] sm:$0xff]
  %v5834 = vld [vmem:[%s75 + $0x198] sm:$0xff]
  %v5835 = vld [vmem:[%s75 + $0x1a0] sm:$0xff]
  %v5836 = vld [vmem:[%s75 + $0x1a8] sm:$0xff]
  %v5837 = vld [vmem:[%s75 + $0x1b0] sm:$0xff]
  %v5838 = vld [vmem:[%s75 + $0x1b8] sm:$0xff]
  %v5839 = vld [vmem:[%s75 + $0x1c0] sm:$0xff]
  %v5840 = vld [vmem:[%s75 + $0x1c8] sm:$0xff]
  %v5841 = vld [vmem:[%s75 + $0x1d0] sm:$0xff]
  %v5842 = vld [vmem:[%s75 + $0x1d8] sm:$0xff]
  %v5843 = vld [vmem:[%s75 + $0x1e0] sm:$0xff]
  %v5844 = vld [vmem:[%s75 + $0x1e8] sm:$0xff]
  %v5845 = vld [vmem:[%s75 + $0x1f0] sm:$0xff]
  %v5846 = vld [vmem:[%s75 + $0x1f8] sm:$0xff]
  %v5847 = vld [vmem:[%s75 + $0x200] sm:$0xff]
  %v5848 = vld [vmem:[%s75 + $0x208] sm:$0xff]
  %v5849 = vld [vmem:[%s75 + $0x210] sm:$0xff]
  %v5850 = vld [vmem:[%s75 + $0x218] sm:$0xff]
  %v5851 = vld [vmem:[%s75 + $0x220] sm:$0xff]
  %v5852 = vld [vmem:[%s75 + $0x228] sm:$0xff]
  %v5853 = vld [vmem:[%s75 + $0x230] sm:$0xff]
  %v5854 = vld [vmem:[%s75 + $0x238] sm:$0xff]
  %v5855 = vld [vmem:[%s75 + $0x240] sm:$0xff]
  %v5856 = vld [vmem:[%s75 + $0x248] sm:$0xff]
  %v5857 = vld [vmem:[%s75 + $0x250] sm:$0xff]
  %v5858 = vld [vmem:[%s75 + $0x258] sm:$0xff]
  %v5859 = vld [vmem:[%s75 + $0x260] sm:$0xff]
  %v5860 = vld [vmem:[%s75 + $0x268] sm:$0xff]
  %v5861 = vld [vmem:[%s75 + $0x270] sm:$0xff]
  %v5862 = vld [vmem:[%s75 + $0x278] sm:$0xff]
  %v5863 = vld [vmem:[%s75 + $0x280] sm:$0xff]
  %v5864 = vld [vmem:[%s75 + $0x288] sm:$0xff]
  %v5865 = vld [vmem:[%s75 + $0x290] sm:$0xff]
  %v5866 = vld [vmem:[%s75 + $0x298] sm:$0xff]
  %v5867 = vld [vmem:[%s75 + $0x2a0] sm:$0xff]
  %v5868 = vld [vmem:[%s75 + $0x2a8] sm:$0xff]
  %v5869 = vld [vmem:[%s75 + $0x2b0] sm:$0xff]
  %v5870 = vld [vmem:[%s75 + $0x2b8] sm:$0xff]
  %v5871 = vld [vmem:[%s75 + $0x2c0] sm:$0xff]
  %v5872 = vld [vmem:[%s75 + $0x2c8] sm:$0xff]
  %v5873 = vld [vmem:[%s75 + $0x2d0] sm:$0xff]
  %v5874 = vld [vmem:[%s75 + $0x2d8] sm:$0xff]
  %v5875 = vld [vmem:[%s75 + $0x2e0] sm:$0xff]
  %v5876 = vld [vmem:[%s75 + $0x2e8] sm:$0xff]
  %v5877 = vld [vmem:[%s75 + $0x2f0] sm:$0xff]
  %v5878 = vld [vmem:[%s75 + $0x2f8] sm:$0xff]
  %v5879 = vld [vmem:[%s75 + $0x300] sm:$0xff]
  %v5880 = vld [vmem:[%s75 + $0x308] sm:$0xff]
  %v5881 = vld [vmem:[%s75 + $0x310] sm:$0xff]
  %v5882 = vld [vmem:[%s75 + $0x318] sm:$0xff]
  %v5883 = vld [vmem:[%s75 + $0x320] sm:$0xff]
  %v5884 = vld [vmem:[%s75 + $0x328] sm:$0xff]
  %v5885 = vld [vmem:[%s75 + $0x330] sm:$0xff]
  %v5886 = vld [vmem:[%s75 + $0x338] sm:$0xff]
  %v5887 = vld [vmem:[%s75 + $0x340] sm:$0xff]
  %v5888 = vld [vmem:[%s75 + $0x348] sm:$0xff]
  %v5889 = vld [vmem:[%s75 + $0x350] sm:$0xff]
  %v5890 = vld [vmem:[%s75 + $0x358] sm:$0xff]
  %v5891 = vld [vmem:[%s75 + $0x360] sm:$0xff]
  %v5892 = vld [vmem:[%s75 + $0x368] sm:$0xff]
  %v5893 = vld [vmem:[%s75 + $0x370] sm:$0xff]
  %v5894 = vld [vmem:[%s75 + $0x378] sm:$0xff]
  %v5895 = vld [vmem:[%s75 + $0x380] sm:$0xff]
  %v5896 = vld [vmem:[%s75 + $0x388] sm:$0xff]
  %v5897 = vld [vmem:[%s75 + $0x390] sm:$0xff]
  %v5898 = vld [vmem:[%s75 + $0x398] sm:$0xff]
  %v5899 = vld [vmem:[%s75 + $0x3a0] sm:$0xff]
  %v5900 = vld [vmem:[%s75 + $0x3a8] sm:$0xff]
  %v5901 = vld [vmem:[%s75 + $0x3b0] sm:$0xff]
  %v5902 = vld [vmem:[%s75 + $0x3b8] sm:$0xff]
  %v5903 = vld [vmem:[%s75 + $0x3c0] sm:$0xff]
  %v5904 = vld [vmem:[%s75 + $0x3c8] sm:$0xff]
  %v5905 = vld [vmem:[%s75 + $0x3d0] sm:$0xff]
  %v5906 = vld [vmem:[%s75 + $0x3d8] sm:$0xff]
  %v5907 = vld [vmem:[%s75 + $0x3e0] sm:$0xff]
  %v5908 = vld [vmem:[%s75 + $0x3e8] sm:$0xff]
  %v5909 = vld [vmem:[%s75 + $0x3f0] sm:$0xff]
  %v5910 = vld [vmem:[%s75 + $0x3f8] sm:$0xff]
  %v5911 = vld [vmem:[%s75 + $0x400] sm:$0xff]
  %v5912 = vld [vmem:[%s75 + $0x408] sm:$0xff]
  %v5913 = vld [vmem:[%s75 + $0x410] sm:$0xff]
  %v5914 = vld [vmem:[%s75 + $0x418] sm:$0xff]
  %v5915 = vld [vmem:[%s77] sm:$0x1]
  %v5917 = vsel %vm897, %v5689, 0
  %v5920 = vsel %vm897, %v5690, 0
  %v5923 = vsel %vm897, %v5691, 0
  %v5926 = vsel %vm897, %v5692, 0
  %v5929 = vsel %vm897, %v5693, 0
  %v5932 = vsel %vm897, %v5694, 0
  %v5935 = vsel %vm897, %v5695, 0
  %v5938 = vsel %vm897, %v5696, 0
  %v5941 = vsel %vm897, %v5697, 0
  %v5944 = vsel %vm897, %v5698, 0
  %v5947 = vsel %vm897, %v5699, 0
  %v5950 = vsel %vm897, %v5700, 0
  %v5953 = vsel %vm897, %v5701, 0
  %v5956 = vsel %vm897, %v5702, 0
  %v5959 = vsel %vm897, %v5703, 0
  %v5962 = vsel %vm897, %v5704, 0
  %v5965 = vsel %vm897, %v5705, 0
  %v5968 = vsel %vm897, %v5706, 0
  %v5971 = vsel %vm897, %v5707, 0
  %v5974 = vsel %vm897, %v5708, 0
  %v5977 = vsel %vm897, %v5709, 0
  %v5980 = vsel %vm897, %v5710, 0
  %v5983 = vsel %vm897, %v5711, 0
  %v5986 = vsel %vm897, %v5712, 0
  %v5989 = vsel %vm897, %v5713, 0
  %v5992 = vsel %vm897, %v5714, 0
  %v5995 = vsel %vm897, %v5715, 0
  %v5998 = vsel %vm897, %v5716, 0
  %v6001 = vsel %vm897, %v5717, 0
  %v6004 = vsel %vm897, %v5718, 0
  %v6007 = vsel %vm897, %v5719, 0
  %v6010 = vsel %vm897, %v5720, 0
  %v6013 = vsel %vm897, %v5721, 0
  %v6016 = vsel %vm897, %v5722, 0
  %v6019 = vsel %vm897, %v5723, 0
  %v6022 = vsel %vm897, %v5724, 0
  %v6025 = vsel %vm897, %v5725, 0
  %v6028 = vsel %vm897, %v5726, 0
  %v6031 = vsel %vm897, %v5727, 0
  %v6034 = vsel %vm897, %v5728, 0
  %v6037 = vsel %vm897, %v5729, 0
  %v6040 = vsel %vm897, %v5730, 0
  %v6043 = vsel %vm897, %v5731, 0
  %v6046 = vsel %vm897, %v5732, 0
  %v6049 = vsel %vm897, %v5733, 0
  %v6052 = vsel %vm897, %v5734, 0
  %v6055 = vsel %vm897, %v5735, 0
  %v6058 = vsel %vm897, %v5736, 0
  %v6061 = vsel %vm897, %v5737, 0
  %v6064 = vsel %vm897, %v5738, 0
  %v6067 = vsel %vm897, %v5739, 0
  %v6070 = vsel %vm897, %v5740, 0
  %v6073 = vsel %vm897, %v5741, 0
  %v6076 = vsel %vm897, %v5742, 0
  %v6079 = vsel %vm897, %v5743, 0
  %v6082 = vsel %vm897, %v5744, 0
  %v6085 = vsel %vm897, %v5745, 0
  %v6088 = vsel %vm897, %v5746, 0
  %v6091 = vsel %vm897, %v5747, 0
  %v6094 = vsel %vm897, %v5748, 0
  %v6097 = vsel %vm897, %v5749, 0
  %v6100 = vsel %vm897, %v5750, 0
  %v6103 = vsel %vm897, %v5751, 0
  %v6106 = vsel %vm897, %v5752, 0
  %v6109 = vsel %vm897, %v5753, 0
  %v6112 = vsel %vm897, %v5754, 0
  %v6115 = vsel %vm897, %v5755, 0
  %v6118 = vsel %vm897, %v5756, 0
  %v6121 = vsel %vm897, %v5757, 0
  %v6124 = vsel %vm897, %v5758, 0
  %v6127 = vsel %vm897, %v5759, 0
  %v6130 = vsel %vm897, %v5760, 0
  %v6133 = vsel %vm897, %v5761, 0
  %v6136 = vsel %vm897, %v5762, 0
  %v6139 = vsel %vm897, %v5763, 0
  %v6142 = vsel %vm897, %v5764, 0
  %v6145 = vsel %vm897, %v5765, 0
  %v6148 = vsel %vm897, %v5766, 0
  %v6151 = vsel %vm897, %v5767, 0
  %v6154 = vsel %vm897, %v5768, 0
  %v6157 = vsel %vm897, %v5769, 0
  %v6160 = vsel %vm897, %v5770, 0
  %v6163 = vsel %vm897, %v5771, 0
  %v6166 = vsel %vm897, %v5772, 0
  %v6169 = vsel %vm897, %v5773, 0
  %v6172 = vsel %vm897, %v5774, 0
  %v6175 = vsel %vm897, %v5775, 0
  %v6178 = vsel %vm897, %v5776, 0
  %v6181 = vsel %vm897, %v5777, 0
  %v6184 = vsel %vm897, %v5778, 0
  %v6187 = vsel %vm897, %v5779, 0
  %v6190 = vsel %vm897, %v5780, 0
  %v6193 = vsel %vm897, %v5781, 0
  %v6196 = vsel %vm897, %v5782, 0
  %6198 = vmatprep.subr.mxu0 0.0
  %6199 = vmatpush1.msra.mxu0 %v5683
  %6200 = vmatprep.subr.mxu0 0.0
  %6201 = vmatpush1.msra.mxu0 %v5684
  %6202 = vmatprep.subr.mxu0 0.0
  %6203 = vmatpush1.msra.mxu0 %v5685
  %6204 = vmatprep.subr.mxu0 0.0
  %6205 = vmatpush1.msra.mxu0 %v5686
  %6206 = vmatprep.subr.mxu0 0.0
  %6207 = vmatpush1.msra.mxu0 %v5687
  %6208 = vmatprep.subr.mxu0 0.0
  %6209 = vmatpush1.msra.mxu0 %v5688
  %6210 = vmatprep.subr.mxu0 0.0
  %6211 = vmatpush1.msra.mxu0 0.0
  %6212 = vmatprep.subr.mxu0 0.0
  %6213 = vmatpush1.msra.mxu0 0.0
  %6214 = vmatprep.subr.mxu0 0.0
  %6215 = vmatpush1.msra.mxu0 0.0
  %6216 = vmatprep.subr.mxu0 0.0
  %6217 = vmatpush1.msra.mxu0 0.0
  %6218 = vmatprep.subr.mxu0 0.0
  %6219 = vmatpush1.msra.mxu0 0.0
  %6220 = vmatprep.subr.mxu0 0.0
  %6221 = vmatpush1.msra.mxu0 0.0
  %6222 = vmatprep.subr.mxu0 0.0
  %6223 = vmatpush1.msra.mxu0 0.0
  %6224 = vmatprep.subr.mxu0 0.0
  %6225 = vmatpush1.msra.mxu0 0.0
  %6226 = vmatprep.subr.mxu0 0.0
  %6227 = vmatpush1.msra.mxu0 0.0
  %6228 = vmatprep.subr.mxu0 0.0
  %6229 = vmatpush1.msra.mxu0 0.0
  %6230 = vmatprep.subr.mxu0 0.0
  %6231 = vmatpush1.msra.mxu0 0.0
  %6232 = vmatprep.subr.mxu0 0.0
  %6233 = vmatpush1.msra.mxu0 0.0
  %6234 = vmatprep.subr.mxu0 0.0
  %6235 = vmatpush1.msra.mxu0 0.0
  %6236 = vmatprep.subr.mxu0 0.0
  %6237 = vmatpush1.msra.mxu0 0.0
  %6238 = vmatprep.subr.mxu0 0.0
  %6239 = vmatpush1.msra.mxu0 0.0
  %6240 = vmatprep.subr.mxu0 0.0
  %6241 = vmatpush1.msra.mxu0 0.0
  %6242 = vmatprep.subr.mxu0 0.0
  %6243 = vmatpush1.msra.mxu0 0.0
  %6244 = vmatprep.subr.mxu0 0.0
  %6245 = vmatpush1.msra.mxu0 0.0
  %6246 = vmatprep.subr.mxu0 0.0
  %6247 = vmatpush1.msra.mxu0 0.0
  %6248 = vmatprep.subr.mxu0 0.0
  %6249 = vmatpush1.msra.mxu0 0.0
  %6250 = vmatprep.subr.mxu0 0.0
  %6251 = vmatpush1.msra.mxu0 0.0
  %6252 = vmatprep.subr.mxu0 0.0
  %6253 = vmatpush1.msra.mxu0 0.0
  %6254 = vmatprep.subr.mxu0 0.0
  %6255 = vmatpush1.msra.mxu0 0.0
  %6256 = vmatprep.subr.mxu0 0.0
  %6257 = vmatpush1.msra.mxu0 0.0
  %6258 = vmatprep.subr.mxu0 0.0
  %6259 = vmatpush1.msra.mxu0 0.0
  %6260 = vmatprep.subr.mxu0 0.0
  %6261 = vmatpush1.msra.mxu0 0.0
  %6262 = vmatprep.mubr.f32.mxu0 0.0
  %6263 = vmatmul.mubr.f32.gmra.mrb[0].mxu0 %v5917
  %v6264 = vpop.f32.mrb[0].mxu0
  %v6265 = vadd.f32 0.0, %v6264
  %v6266 = vpop.f32.mrb[0].mxu0
  %6267 = vmatprep.mubr.f32.mxu0 0.0
  %6268 = vmatmul.mubr.f32.gmra.mrb[0].mxu0 %v5920
  %v6269 = vpop.f32.mrb[0].mxu0
  %v6270 = vadd.f32 0.0, %v6269
  %v6271 = vpop.f32.mrb[0].mxu0
  %6272 = vmatprep.mubr.f32.mxu0 0.0
  %6273 = vmatmul.mubr.f32.gmra.mrb[0].mxu0 %v5923
  %v6274 = vpop.f32.mrb[0].mxu0
  %v6275 = vadd.f32 0.0, %v6274
  %v6276 = vpop.f32.mrb[0].mxu0
  %6277 = vmatprep.mubr.f32.mxu0 0.0
  %6278 = vmatmul.mubr.f32.gmra.mrb[0].mxu0 %v5926
  %v6279 = vpop.f32.mrb[0].mxu0
  %v6280 = vadd.f32 0.0, %v6279
  %v6281 = vpop.f32.mrb[0].mxu0
  %6282 = vmatprep.mubr.f32.mxu0 0.0
  %6283 = vmatmul.mubr.f32.gmra.mrb[0].mxu0 %v5929
  %v6284 = vpop.f32.mrb[0].mxu0
  %v6285 = vadd.f32 0.0, %v6284
  %v6286 = vpop.f32.mrb[0].mxu0
  %6287 = vmatprep.mubr.f32.mxu0 0.0
  %6288 = vmatmul.mubr.f32.gmra.mrb[0].mxu0 %v5932
  %v6289 = vpop.f32.mrb[0].mxu0
  %v6290 = vadd.f32 0.0, %v6289
  %v6291 = vpop.f32.mrb[0].mxu0
  %6292 = vmatprep.mubr.f32.mxu0 0.0
  %6293 = vmatmul.mubr.f32.gmra.mrb[0].mxu0 %v5935
  %v6294 = vpop.f32.mrb[0].mxu0
  %v6295 = vadd.f32 0.0, %v6294
  %v6296 = vpop.f32.mrb[0].mxu0
  %6297 = vmatprep.mubr.f32.mxu0 0.0
  %6298 = vmatmul.mubr.f32.gmra.mrb[0].mxu0 %v5938
  %v6299 = vpop.f32.mrb[0].mxu0
  %v6300 = vadd.f32 0.0, %v6299
  %v6301 = vpop.f32.mrb[0].mxu0
  %6302 = vmatprep.mubr.f32.mxu0 0.0
  %6303 = vmatmul.mubr.f32.gmra.mrb[0].mxu0 %v5941
  %v6304 = vpop.f32.mrb[0].mxu0
  %v6305 = vadd.f32 0.0, %v6304
  %v6306 = vpop.f32.mrb[0].mxu0
  %6307 = vmatprep.mubr.f32.mxu0 0.0
  %6308 = vmatmul.mubr.f32.gmra.mrb[0].mxu0 %v5944
  %v6309 = vpop.f32.mrb[0].mxu0
  %v6310 = vadd.f32 0.0, %v6309
  %v6311 = vpop.f32.mrb[0].mxu0
  %6312 = vmatprep.mubr.f32.mxu0 0.0
  %6313 = vmatmul.mubr.f32.gmra.mrb[0].mxu0 %v5947
  %v6314 = vpop.f32.mrb[0].mxu0
  %v6315 = vadd.f32 0.0, %v6314
  %v6316 = vpop.f32.mrb[0].mxu0
  %6317 = vmatprep.mubr.f32.mxu0 0.0
  %6318 = vmatmul.mubr.f32.gmra.mrb[0].mxu0 %v5950
  %v6319 = vpop.f32.mrb[0].mxu0
  %v6320 = vadd.f32 0.0, %v6319
  %v6321 = vpop.f32.mrb[0].mxu0
  %6322 = vmatprep.mubr.f32.mxu0 0.0
  %6323 = vmatmul.mubr.f32.gmra.mrb[0].mxu0 %v5953
  %v6324 = vpop.f32.mrb[0].mxu0
  %v6325 = vadd.f32 0.0, %v6324
  %v6326 = vpop.f32.mrb[0].mxu0
  %6327 = vmatprep.mubr.f32.mxu0 0.0
  %6328 = vmatmul.mubr.f32.gmra.mrb[0].mxu0 %v5956
  %v6329 = vpop.f32.mrb[0].mxu0
  %v6330 = vadd.f32 0.0, %v6329
  %v6331 = vpop.f32.mrb[0].mxu0
  %6332 = vmatprep.mubr.f32.mxu0 0.0
  %6333 = vmatmul.mubr.f32.gmra.mrb[0].mxu0 %v5959
  %v6334 = vpop.f32.mrb[0].mxu0
  %v6335 = vadd.f32 0.0, %v6334
  %v6336 = vpop.f32.mrb[0].mxu0
  %6337 = vmatprep.mubr.f32.mxu0 0.0
  %6338 = vmatmul.mubr.f32.gmra.mrb[0].mxu0 %v5962
  %v6339 = vpop.f32.mrb[0].mxu0
  %v6340 = vadd.f32 0.0, %v6339
  %v6341 = vpop.f32.mrb[0].mxu0
  %6342 = vmatprep.mubr.f32.mxu0 0.0
  %6343 = vmatmul.mubr.f32.gmra.mrb[0].mxu0 %v5965
  %v6344 = vpop.f32.mrb[0].mxu0
  %v6345 = vadd.f32 0.0, %v6344
  %v6346 = vpop.f32.mrb[0].mxu0
  %6347 = vmatprep.mubr.f32.mxu0 0.0
  %6348 = vmatmul.mubr.f32.gmra.mrb[0].mxu0 %v5968
  %v6349 = vpop.f32.mrb[0].mxu0
  %v6350 = vadd.f32 0.0, %v6349
  %v6351 = vpop.f32.mrb[0].mxu0
  %6352 = vmatprep.mubr.f32.mxu0 0.0
  %6353 = vmatmul.mubr.f32.gmra.mrb[0].mxu0 %v5971
  %v6354 = vpop.f32.mrb[0].mxu0
  %v6355 = vadd.f32 0.0, %v6354
  %v6356 = vpop.f32.mrb[0].mxu0
  %6357 = vmatprep.mubr.f32.mxu0 0.0
  %6358 = vmatmul.mubr.f32.gmra.mrb[0].mxu0 %v5974
  %v6359 = vpop.f32.mrb[0].mxu0
  %v6360 = vadd.f32 0.0, %v6359
  %v6361 = vpop.f32.mrb[0].mxu0
  %6362 = vmatprep.mubr.f32.mxu0 0.0
  %6363 = vmatmul.mubr.f32.gmra.mrb[0].mxu0 %v5977
  %v6364 = vpop.f32.mrb[0].mxu0
  %v6365 = vadd.f32 0.0, %v6364
  %v6366 = vpop.f32.mrb[0].mxu0
  %6367 = vmatprep.mubr.f32.mxu0 0.0
  %6368 = vmatmul.mubr.f32.gmra.mrb[0].mxu0 %v5980
  %v6369 = vpop.f32.mrb[0].mxu0
  %v6370 = vadd.f32 0.0, %v6369
  %v6371 = vpop.f32.mrb[0].mxu0
  %6372 = vmatprep.mubr.f32.mxu0 0.0
  %6373 = vmatmul.mubr.f32.gmra.mrb[0].mxu0 %v5983
  %v6374 = vpop.f32.mrb[0].mxu0
  %v6375 = vadd.f32 0.0, %v6374
  %v6376 = vpop.f32.mrb[0].mxu0
  %6377 = vmatprep.mubr.f32.mxu0 0.0
  %6378 = vmatmul.mubr.f32.gmra.mrb[0].mxu0 %v5986
  %v6379 = vpop.f32.mrb[0].mxu0
  %v6380 = vadd.f32 0.0, %v6379
  %v6381 = vpop.f32.mrb[0].mxu0
  %6382 = vmatprep.mubr.f32.mxu0 0.0
  %6383 = vmatmul.mubr.f32.gmra.mrb[0].mxu0 %v5989
  %v6384 = vpop.f32.mrb[0].mxu0
  %v6385 = vadd.f32 0.0, %v6384
  %v6386 = vpop.f32.mrb[0].mxu0
  %6387 = vmatprep.mubr.f32.mxu0 0.0
  %6388 = vmatmul.mubr.f32.gmra.mrb[0].mxu0 %v5992
  %v6389 = vpop.f32.mrb[0].mxu0
  %v6390 = vadd.f32 0.0, %v6389
  %v6391 = vpop.f32.mrb[0].mxu0
  %6392 = vmatprep.mubr.f32.mxu0 0.0
  %6393 = vmatmul.mubr.f32.gmra.mrb[0].mxu0 %v5995
  %v6394 = vpop.f32.mrb[0].mxu0
  %v6395 = vadd.f32 0.0, %v6394
  %v6396 = vpop.f32.mrb[0].mxu0
  %6397 = vmatprep.mubr.f32.mxu0 0.0
  %6398 = vmatmul.mubr.f32.gmra.mrb[0].mxu0 %v5998
  %v6399 = vpop.f32.mrb[0].mxu0
  %v6400 = vadd.f32 0.0, %v6399
  %v6401 = vpop.f32.mrb[0].mxu0
  %6402 = vmatprep.mubr.f32.mxu0 0.0
  %6403 = vmatmul.mubr.f32.gmra.mrb[0].mxu0 %v6001
  %v6404 = vpop.f32.mrb[0].mxu0
  %v6405 = vadd.f32 0.0, %v6404
  %v6406 = vpop.f32.mrb[0].mxu0
  %6407 = vmatprep.mubr.f32.mxu0 0.0
  %6408 = vmatmul.mubr.f32.gmra.mrb[0].mxu0 %v6004
  %v6409 = vpop.f32.mrb[0].mxu0
  %v6410 = vadd.f32 0.0, %v6409
  %v6411 = vpop.f32.mrb[0].mxu0
  %6412 = vmatprep.mubr.f32.mxu0 0.0
  %6413 = vmatmul.mubr.f32.gmra.mrb[0].mxu0 %v6007
  %v6414 = vpop.f32.mrb[0].mxu0
  %v6415 = vadd.f32 0.0, %v6414
  %v6416 = vpop.f32.mrb[0].mxu0
  %6417 = vmatprep.mubr.f32.mxu0 0.0
  %6418 = vmatmul.mubr.f32.gmra.mrb[0].mxu0 %v6010
  %v6419 = vpop.f32.mrb[0].mxu0
  %v6420 = vadd.f32 0.0, %v6419
  %v6421 = vpop.f32.mrb[0].mxu0
  %6422 = vmatprep.mubr.f32.mxu0 0.0
  %6423 = vmatmul.mubr.f32.gmra.mrb[0].mxu0 %v6013
  %v6424 = vpop.f32.mrb[0].mxu0
  %v6425 = vadd.f32 0.0, %v6424
  %v6426 = vpop.f32.mrb[0].mxu0
  %6427 = vmatprep.mubr.f32.mxu0 0.0
  %6428 = vmatmul.mubr.f32.gmra.mrb[0].mxu0 %v6016
  %v6429 = vpop.f32.mrb[0].mxu0
  %v6430 = vadd.f32 0.0, %v6429
  %v6431 = vpop.f32.mrb[0].mxu0
  %6432 = vmatprep.mubr.f32.mxu0 0.0
  %6433 = vmatmul.mubr.f32.gmra.mrb[0].mxu0 %v6019
  %v6434 = vpop.f32.mrb[0].mxu0
  %v6435 = vadd.f32 0.0, %v6434
  %v6436 = vpop.f32.mrb[0].mxu0
  %6437 = vmatprep.mubr.f32.mxu0 0.0
  %6438 = vmatmul.mubr.f32.gmra.mrb[0].mxu0 %v6022
  %v6439 = vpop.f32.mrb[0].mxu0
  %v6440 = vadd.f32 0.0, %v6439
  %v6441 = vpop.f32.mrb[0].mxu0
  %6442 = vmatprep.mubr.f32.mxu0 0.0
  %6443 = vmatmul.mubr.f32.gmra.mrb[0].mxu0 %v6025
  %v6444 = vpop.f32.mrb[0].mxu0
  %v6445 = vadd.f32 0.0, %v6444
  %v6446 = vpop.f32.mrb[0].mxu0
  %6447 = vmatprep.mubr.f32.mxu0 0.0
  %6448 = vmatmul.mubr.f32.gmra.mrb[0].mxu0 %v6028
  %v6449 = vpop.f32.mrb[0].mxu0
  %v6450 = vadd.f32 0.0, %v6449
  %v6451 = vpop.f32.mrb[0].mxu0
  %6452 = vmatprep.mubr.f32.mxu0 0.0
  %6453 = vmatmul.mubr.f32.gmra.mrb[0].mxu0 %v6031
  %v6454 = vpop.f32.mrb[0].mxu0
  %v6455 = vadd.f32 0.0, %v6454
  %v6456 = vpop.f32.mrb[0].mxu0
  %6457 = vmatprep.mubr.f32.mxu0 0.0
  %6458 = vmatmul.mubr.f32.gmra.mrb[0].mxu0 %v6034
  %v6459 = vpop.f32.mrb[0].mxu0
  %v6460 = vadd.f32 0.0, %v6459
  %v6461 = vpop.f32.mrb[0].mxu0
  %6462 = vmatprep.mubr.f32.mxu0 0.0
  %6463 = vmatmul.mubr.f32.gmra.mrb[0].mxu0 %v6037
  %v6464 = vpop.f32.mrb[0].mxu0
  %v6465 = vadd.f32 0.0, %v6464
  %v6466 = vpop.f32.mrb[0].mxu0
  %6467 = vmatprep.mubr.f32.mxu0 0.0
  %6468 = vmatmul.mubr.f32.gmra.mrb[0].mxu0 %v6040
  %v6469 = vpop.f32.mrb[0].mxu0
  %v6470 = vadd.f32 0.0, %v6469
  %v6471 = vpop.f32.mrb[0].mxu0
  %6472 = vmatprep.mubr.f32.mxu0 0.0
  %6473 = vmatmul.mubr.f32.gmra.mrb[0].mxu0 %v6043
  %v6474 = vpop.f32.mrb[0].mxu0
  %v6475 = vadd.f32 0.0, %v6474
  %v6476 = vpop.f32.mrb[0].mxu0
  %6477 = vmatprep.mubr.f32.mxu0 0.0
  %6478 = vmatmul.mubr.f32.gmra.mrb[0].mxu0 %v6046
  %v6479 = vpop.f32.mrb[0].mxu0
  %v6480 = vadd.f32 0.0, %v6479
  %v6481 = vpop.f32.mrb[0].mxu0
  %6482 = vmatprep.mubr.f32.mxu0 0.0
  %6483 = vmatmul.mubr.f32.gmra.mrb[0].mxu0 %v6049
  %v6484 = vpop.f32.mrb[0].mxu0
  %v6485 = vadd.f32 0.0, %v6484
  %v6486 = vpop.f32.mrb[0].mxu0
  %6487 = vmatprep.mubr.f32.mxu0 0.0
  %6488 = vmatmul.mubr.f32.gmra.mrb[0].mxu0 %v6052
  %v6489 = vpop.f32.mrb[0].mxu0
  %v6490 = vadd.f32 0.0, %v6489
  %v6491 = vpop.f32.mrb[0].mxu0
  %6492 = vmatprep.mubr.f32.mxu0 0.0
  %6493 = vmatmul.mubr.f32.gmra.mrb[0].mxu0 %v6055
  %v6494 = vpop.f32.mrb[0].mxu0
  %v6495 = vadd.f32 0.0, %v6494
  %v6496 = vpop.f32.mrb[0].mxu0
  %6497 = vmatprep.mubr.f32.mxu0 0.0
  %6498 = vmatmul.mubr.f32.gmra.mrb[0].mxu0 %v6058
  %v6499 = vpop.f32.mrb[0].mxu0
  %v6500 = vadd.f32 0.0, %v6499
  %v6501 = vpop.f32.mrb[0].mxu0
  %6502 = vmatprep.mubr.f32.mxu0 0.0
  %6503 = vmatmul.mubr.f32.gmra.mrb[0].mxu0 %v6061
  %v6504 = vpop.f32.mrb[0].mxu0
  %v6505 = vadd.f32 0.0, %v6504
  %v6506 = vpop.f32.mrb[0].mxu0
  %6507 = vmatprep.mubr.f32.mxu0 0.0
  %6508 = vmatmul.mubr.f32.gmra.mrb[0].mxu0 %v6064
  %v6509 = vpop.f32.mrb[0].mxu0
  %v6510 = vadd.f32 0.0, %v6509
  %v6511 = vpop.f32.mrb[0].mxu0
  %6512 = vmatprep.mubr.f32.mxu0 0.0
  %6513 = vmatmul.mubr.f32.gmra.mrb[0].mxu0 %v6067
  %v6514 = vpop.f32.mrb[0].mxu0
  %v6515 = vadd.f32 0.0, %v6514
  %v6516 = vpop.f32.mrb[0].mxu0
  %6517 = vmatprep.mubr.f32.mxu0 0.0
  %6518 = vmatmul.mubr.f32.gmra.mrb[0].mxu0 %v6070
  %v6519 = vpop.f32.mrb[0].mxu0
  %v6520 = vadd.f32 0.0, %v6519
  %v6521 = vpop.f32.mrb[0].mxu0
  %6522 = vmatprep.mubr.f32.mxu0 0.0
  %6523 = vmatmul.mubr.f32.gmra.mrb[0].mxu0 %v6073
  %v6524 = vpop.f32.mrb[0].mxu0
  %v6525 = vadd.f32 0.0, %v6524
  %v6526 = vpop.f32.mrb[0].mxu0
  %6527 = vmatprep.mubr.f32.mxu0 0.0
  %6528 = vmatmul.mubr.f32.gmra.mrb[0].mxu0 %v6076
  %v6529 = vpop.f32.mrb[0].mxu0
  %v6530 = vadd.f32 0.0, %v6529
  %v6531 = vpop.f32.mrb[0].mxu0
  %6532 = vmatprep.mubr.f32.mxu0 0.0
  %6533 = vmatmul.mubr.f32.gmra.mrb[0].mxu0 %v6079
  %v6534 = vpop.f32.mrb[0].mxu0
  %v6535 = vadd.f32 0.0, %v6534
  %v6536 = vpop.f32.mrb[0].mxu0
  %6537 = vmatprep.mubr.f32.mxu0 0.0
  %6538 = vmatmul.mubr.f32.gmra.mrb[0].mxu0 %v6082
  %v6539 = vpop.f32.mrb[0].mxu0
  %v6540 = vadd.f32 0.0, %v6539
  %v6541 = vpop.f32.mrb[0].mxu0
  %6542 = vmatprep.mubr.f32.mxu0 0.0
  %6543 = vmatmul.mubr.f32.gmra.mrb[0].mxu0 %v6085
  %v6544 = vpop.f32.mrb[0].mxu0
  %v6545 = vadd.f32 0.0, %v6544
  %v6546 = vpop.f32.mrb[0].mxu0
  %6547 = vmatprep.mubr.f32.mxu0 0.0
  %6548 = vmatmul.mubr.f32.gmra.mrb[0].mxu0 %v6088
  %v6549 = vpop.f32.mrb[0].mxu0
  %v6550 = vadd.f32 0.0, %v6549
  %v6551 = vpop.f32.mrb[0].mxu0
  %6552 = vmatprep.mubr.f32.mxu0 0.0
  %6553 = vmatmul.mubr.f32.gmra.mrb[0].mxu0 %v6091
  %v6554 = vpop.f32.mrb[0].mxu0
  %v6555 = vadd.f32 0.0, %v6554
  %v6556 = vpop.f32.mrb[0].mxu0
  %6557 = vmatprep.mubr.f32.mxu0 0.0
  %6558 = vmatmul.mubr.f32.gmra.mrb[0].mxu0 %v6094
  %v6559 = vpop.f32.mrb[0].mxu0
  %v6560 = vadd.f32 0.0, %v6559
  %v6561 = vpop.f32.mrb[0].mxu0
  %6562 = vmatprep.mubr.f32.mxu0 0.0
  %6563 = vmatmul.mubr.f32.gmra.mrb[0].mxu0 %v6097
  %v6564 = vpop.f32.mrb[0].mxu0
  %v6565 = vadd.f32 0.0, %v6564
  %v6566 = vpop.f32.mrb[0].mxu0
  %6567 = vmatprep.mubr.f32.mxu0 0.0
  %6568 = vmatmul.mubr.f32.gmra.mrb[0].mxu0 %v6100
  %v6569 = vpop.f32.mrb[0].mxu0
  %v6570 = vadd.f32 0.0, %v6569
  %v6571 = vpop.f32.mrb[0].mxu0
  %6572 = vmatprep.mubr.f32.mxu0 0.0
  %6573 = vmatmul.mubr.f32.gmra.mrb[0].mxu0 %v6103
  %v6574 = vpop.f32.mrb[0].mxu0
  %v6575 = vadd.f32 0.0, %v6574
  %v6576 = vpop.f32.mrb[0].mxu0
  %6577 = vmatprep.mubr.f32.mxu0 0.0
  %6578 = vmatmul.mubr.f32.gmra.mrb[0].mxu0 %v6106
  %v6579 = vpop.f32.mrb[0].mxu0
  %v6580 = vadd.f32 0.0, %v6579
  %v6581 = vpop.f32.mrb[0].mxu0
  %6582 = vmatprep.mubr.f32.mxu0 0.0
  %6583 = vmatmul.mubr.f32.gmra.mrb[0].mxu0 %v6109
  %v6584 = vpop.f32.mrb[0].mxu0
  %v6585 = vadd.f32 0.0, %v6584
  %v6586 = vpop.f32.mrb[0].mxu0
  %6587 = vmatprep.mubr.f32.mxu0 0.0
  %6588 = vmatmul.mubr.f32.gmra.mrb[0].mxu0 %v6112
  %v6589 = vpop.f32.mrb[0].mxu0
  %v6590 = vadd.f32 0.0, %v6589
  %v6591 = vpop.f32.mrb[0].mxu0
  %6592 = vmatprep.mubr.f32.mxu0 0.0
  %6593 = vmatmul.mubr.f32.gmra.mrb[0].mxu0 %v6115
  %v6594 = vpop.f32.mrb[0].mxu0
  %v6595 = vadd.f32 0.0, %v6594
  %v6596 = vpop.f32.mrb[0].mxu0
  %6597 = vmatprep.mubr.f32.mxu0 0.0
  %6598 = vmatmul.mubr.f32.gmra.mrb[0].mxu0 %v6118
  %v6599 = vpop.f32.mrb[0].mxu0
  %v6600 = vadd.f32 0.0, %v6599
  %v6601 = vpop.f32.mrb[0].mxu0
  %6602 = vmatprep.mubr.f32.mxu0 0.0
  %6603 = vmatmul.mubr.f32.gmra.mrb[0].mxu0 %v6121
  %v6604 = vpop.f32.mrb[0].mxu0
  %v6605 = vadd.f32 0.0, %v6604
  %v6606 = vpop.f32.mrb[0].mxu0
  %6607 = vmatprep.mubr.f32.mxu0 0.0
  %6608 = vmatmul.mubr.f32.gmra.mrb[0].mxu0 %v6124
  %v6609 = vpop.f32.mrb[0].mxu0
  %v6610 = vadd.f32 0.0, %v6609
  %v6611 = vpop.f32.mrb[0].mxu0
  %6612 = vmatprep.mubr.f32.mxu0 0.0
  %6613 = vmatmul.mubr.f32.gmra.mrb[0].mxu0 %v6127
  %v6614 = vpop.f32.mrb[0].mxu0
  %v6615 = vadd.f32 0.0, %v6614
  %v6616 = vpop.f32.mrb[0].mxu0
  %6617 = vmatprep.mubr.f32.mxu0 0.0
  %6618 = vmatmul.mubr.f32.gmra.mrb[0].mxu0 %v6130
  %v6619 = vpop.f32.mrb[0].mxu0
  %v6620 = vadd.f32 0.0, %v6619
  %v6621 = vpop.f32.mrb[0].mxu0
  %6622 = vmatprep.mubr.f32.mxu0 0.0
  %6623 = vmatmul.mubr.f32.gmra.mrb[0].mxu0 %v6133
  %v6624 = vpop.f32.mrb[0].mxu0
  %v6625 = vadd.f32 0.0, %v6624
  %v6626 = vpop.f32.mrb[0].mxu0
  %6627 = vmatprep.mubr.f32.mxu0 0.0
  %6628 = vmatmul.mubr.f32.gmra.mrb[0].mxu0 %v6136
  %v6629 = vpop.f32.mrb[0].mxu0
  %v6630 = vadd.f32 0.0, %v6629
  %v6631 = vpop.f32.mrb[0].mxu0
  %6632 = vmatprep.mubr.f32.mxu0 0.0
  %6633 = vmatmul.mubr.f32.gmra.mrb[0].mxu0 %v6139
  %v6634 = vpop.f32.mrb[0].mxu0
  %v6635 = vadd.f32 0.0, %v6634
  %v6636 = vpop.f32.mrb[0].mxu0
  %6637 = vmatprep.mubr.f32.mxu0 0.0
  %6638 = vmatmul.mubr.f32.gmra.mrb[0].mxu0 %v6142
  %v6639 = vpop.f32.mrb[0].mxu0
  %v6640 = vadd.f32 0.0, %v6639
  %v6641 = vpop.f32.mrb[0].mxu0
  %6642 = vmatprep.mubr.f32.mxu0 0.0
  %6643 = vmatmul.mubr.f32.gmra.mrb[0].mxu0 %v6145
  %v6644 = vpop.f32.mrb[0].mxu0
  %v6645 = vadd.f32 0.0, %v6644
  %v6646 = vpop.f32.mrb[0].mxu0
  %6647 = vmatprep.mubr.f32.mxu0 0.0
  %6648 = vmatmul.mubr.f32.gmra.mrb[0].mxu0 %v6148
  %v6649 = vpop.f32.mrb[0].mxu0
  %v6650 = vadd.f32 0.0, %v6649
  %v6651 = vpop.f32.mrb[0].mxu0
  %6652 = vmatprep.mubr.f32.mxu0 0.0
  %6653 = vmatmul.mubr.f32.gmra.mrb[0].mxu0 %v6151
  %v6654 = vpop.f32.mrb[0].mxu0
  %v6655 = vadd.f32 0.0, %v6654
  %v6656 = vpop.f32.mrb[0].mxu0
  %6657 = vmatprep.mubr.f32.mxu0 0.0
  %6658 = vmatmul.mubr.f32.gmra.mrb[0].mxu0 %v6154
  %v6659 = vpop.f32.mrb[0].mxu0
  %v6660 = vadd.f32 0.0, %v6659
  %v6661 = vpop.f32.mrb[0].mxu0
  %6662 = vmatprep.mubr.f32.mxu0 0.0
  %6663 = vmatmul.mubr.f32.gmra.mrb[0].mxu0 %v6157
  %v6664 = vpop.f32.mrb[0].mxu0
  %v6665 = vadd.f32 0.0, %v6664
  %v6666 = vpop.f32.mrb[0].mxu0
  %6667 = vmatprep.mubr.f32.mxu0 0.0
  %6668 = vmatmul.mubr.f32.gmra.mrb[0].mxu0 %v6160
  %v6669 = vpop.f32.mrb[0].mxu0
  %v6670 = vadd.f32 0.0, %v6669
  %v6671 = vpop.f32.mrb[0].mxu0
  %6672 = vmatprep.mubr.f32.mxu0 0.0
  %6673 = vmatmul.mubr.f32.gmra.mrb[0].mxu0 %v6163
  %v6674 = vpop.f32.mrb[0].mxu0
  %v6675 = vadd.f32 0.0, %v6674
  %v6676 = vpop.f32.mrb[0].mxu0
  %6677 = vmatprep.mubr.f32.mxu0 0.0
  %6678 = vmatmul.mubr.f32.gmra.mrb[0].mxu0 %v6166
  %v6679 = vpop.f32.mrb[0].mxu0
  %v6680 = vadd.f32 0.0, %v6679
  %v6681 = vpop.f32.mrb[0].mxu0
  %6682 = vmatprep.mubr.f32.mxu0 0.0
  %6683 = vmatmul.mubr.f32.gmra.mrb[0].mxu0 %v6169
  %v6684 = vpop.f32.mrb[0].mxu0
  %v6685 = vadd.f32 0.0, %v6684
  %v6686 = vpop.f32.mrb[0].mxu0
  %6687 = vmatprep.mubr.f32.mxu0 0.0
  %6688 = vmatmul.mubr.f32.gmra.mrb[0].mxu0 %v6172
  %v6689 = vpop.f32.mrb[0].mxu0
  %v6690 = vadd.f32 0.0, %v6689
  %v6691 = vpop.f32.mrb[0].mxu0
  %6692 = vmatprep.mubr.f32.mxu0 0.0
  %6693 = vmatmul.mubr.f32.gmra.mrb[0].mxu0 %v6175
  %v6694 = vpop.f32.mrb[0].mxu0
  %v6695 = vadd.f32 0.0, %v6694
  %v6696 = vpop.f32.mrb[0].mxu0
  %6697 = vmatprep.mubr.f32.mxu0 0.0
  %6698 = vmatmul.mubr.f32.gmra.mrb[0].mxu0 %v6178
  %v6699 = vpop.f32.mrb[0].mxu0
  %v6700 = vadd.f32 0.0, %v6699
  %v6701 = vpop.f32.mrb[0].mxu0
  %6702 = vmatprep.mubr.f32.mxu0 0.0
  %6703 = vmatmul.mubr.f32.gmra.mrb[0].mxu0 %v6181
  %v6704 = vpop.f32.mrb[0].mxu0
  %v6705 = vadd.f32 0.0, %v6704
  %v6706 = vpop.f32.mrb[0].mxu0
  %6707 = vmatprep.mubr.f32.mxu0 0.0
  %6708 = vmatmul.mubr.f32.gmra.mrb[0].mxu0 %v6184
  %v6709 = vpop.f32.mrb[0].mxu0
  %v6710 = vadd.f32 0.0, %v6709
  %v6711 = vpop.f32.mrb[0].mxu0
  %6712 = vmatprep.mubr.f32.mxu0 0.0
  %6713 = vmatmul.mubr.f32.gmra.mrb[0].mxu0 %v6187
  %v6714 = vpop.f32.mrb[0].mxu0
  %v6715 = vadd.f32 0.0, %v6714
  %v6716 = vpop.f32.mrb[0].mxu0
  %6717 = vmatprep.mubr.f32.mxu0 0.0
  %6718 = vmatmul.mubr.f32.gmra.mrb[0].mxu0 %v6190
  %v6719 = vpop.f32.mrb[0].mxu0
  %v6720 = vadd.f32 0.0, %v6719
  %v6721 = vpop.f32.mrb[0].mxu0
  %6722 = vmatprep.mubr.f32.mxu0 0.0
  %6723 = vmatmul.mubr.f32.gmra.mrb[0].mxu0 %v6193
  %v6724 = vpop.f32.mrb[0].mxu0
  %v6725 = vadd.f32 0.0, %v6724
  %v6726 = vpop.f32.mrb[0].mxu0
  %6727 = vmatprep.mubr.f32.mxu0 0.0
  %6728 = vmatmul.mubr.f32.gmra.mrb[0].mxu0 %v6196
  %v6729 = vpop.f32.mrb[0].mxu0
  %v6730 = vadd.f32 0.0, %v6729
  %v6731 = vpop.f32.mrb[0].mxu0
  %6732 = vdwg.mxu0
  %v6742 = vrot.slane %v6305, 4
  %v6743 = vrot.slane %v6310, 4
  %v6744 = vsel %vm268, %v6742, %v6743
  %v6745 = vrot.slane %v6315, 4
  %v6746 = vsel %vm268, %v6743, %v6745
  %v6747 = vrot.slane %v6320, 4
  %v6748 = vsel %vm268, %v6745, %v6747
  %v6749 = vrot.slane %v6325, 4
  %v6750 = vsel %vm268, %v6747, %v6749
  %v6751 = vrot.slane %v6330, 4
  %v6752 = vsel %vm268, %v6749, %v6751
  %v6753 = vrot.slane %v6335, 4
  %v6754 = vsel %vm268, %v6751, %v6753
  %v6755 = vrot.slane %v6340, 4
  %v6756 = vsel %vm268, %v6753, %v6755
  %v6757 = vrot.slane %v6345, 4
  %v6758 = vsel %vm268, %v6755, %v6757
  %6759 = vrot.lane.b32.xlu0 %v6744, 96
  %v6760 = vpop.permute.xlu0 %6759
  %6761 = vrot.lane.b32.xlu0 %v6746, 96
  %v6762 = vpop.permute.xlu0 %6761
  %6763 = vrot.lane.b32.xlu0 %v6748, 96
  %v6764 = vpop.permute.xlu0 %6763
  %6765 = vrot.lane.b32.xlu0 %v6750, 96
  %v6766 = vpop.permute.xlu0 %6765
  %6767 = vrot.lane.b32.xlu0 %v6752, 96
  %v6768 = vpop.permute.xlu0 %6767
  %6769 = vrot.lane.b32.xlu0 %v6754, 96
  %v6770 = vpop.permute.xlu0 %6769
  %6771 = vrot.lane.b32.xlu0 %v6756, 96
  %v6772 = vpop.permute.xlu0 %6771
  %6773 = vrot.lane.b32.xlu0 %v6758, 96
  %v6774 = vpop.permute.xlu0 %6773
  %6775 = vrot.lane.b32.xlu0 %v6757, 96
  %v6776 = vpop.permute.xlu0 %6775
  %6795 = vrot.lane.b32.xlu0 %v6350, 64
  %v6796 = vpop.permute.xlu0 %6795
  %6797 = vrot.lane.b32.xlu0 %v6355, 64
  %v6798 = vpop.permute.xlu0 %6797
  %6799 = vrot.lane.b32.xlu0 %v6360, 64
  %v6800 = vpop.permute.xlu0 %6799
  %6801 = vrot.lane.b32.xlu0 %v6365, 64
  %v6802 = vpop.permute.xlu0 %6801
  %6803 = vrot.lane.b32.xlu0 %v6370, 64
  %v6804 = vpop.permute.xlu0 %6803
  %6805 = vrot.lane.b32.xlu0 %v6375, 64
  %v6806 = vpop.permute.xlu0 %6805
  %6807 = vrot.lane.b32.xlu0 %v6380, 64
  %v6808 = vpop.permute.xlu0 %6807
  %6809 = vrot.lane.b32.xlu0 %v6385, 64
  %v6810 = vpop.permute.xlu0 %6809
  %6811 = vrot.lane.b32.xlu0 %v6390, 64
  %v6812 = vpop.permute.xlu0 %6811
  %v6830 = vrot.slane %v6390, 4
  %v6831 = vrot.slane %v6395, 4
  %v6832 = vsel %vm268, %v6830, %v6831
  %v6833 = vrot.slane %v6400, 4
  %v6834 = vsel %vm268, %v6831, %v6833
  %v6835 = vrot.slane %v6405, 4
  %v6836 = vsel %vm268, %v6833, %v6835
  %v6837 = vrot.slane %v6410, 4
  %v6838 = vsel %vm268, %v6835, %v6837
  %v6839 = vrot.slane %v6415, 4
  %v6840 = vsel %vm268, %v6837, %v6839
  %v6841 = vrot.slane %v6420, 4
  %v6842 = vsel %vm268, %v6839, %v6841
  %v6843 = vrot.slane %v6425, 4
  %v6844 = vsel %vm268, %v6841, %v6843
  %v6845 = vrot.slane %v6430, 4
  %v6846 = vsel %vm268, %v6843, %v6845
  %6847 = vrot.lane.b32.xlu0 %v6832, 32
  %v6848 = vpop.permute.xlu0 %6847
  %6849 = vrot.lane.b32.xlu0 %v6834, 32
  %v6850 = vpop.permute.xlu0 %6849
  %6851 = vrot.lane.b32.xlu0 %v6836, 32
  %v6852 = vpop.permute.xlu0 %6851
  %6853 = vrot.lane.b32.xlu0 %v6838, 32
  %v6854 = vpop.permute.xlu0 %6853
  %6855 = vrot.lane.b32.xlu0 %v6840, 32
  %v6856 = vpop.permute.xlu0 %6855
  %6857 = vrot.lane.b32.xlu0 %v6842, 32
  %v6858 = vpop.permute.xlu0 %6857
  %6859 = vrot.lane.b32.xlu0 %v6844, 32
  %v6860 = vpop.permute.xlu0 %6859
  %6861 = vrot.lane.b32.xlu0 %v6846, 32
  %v6862 = vpop.permute.xlu0 %6861
  %6863 = vrot.lane.b32.xlu0 %v6845, 32
  %v6864 = vpop.permute.xlu0 %6863
  %v6883 = vrot.slane %v6475, 4
  %v6884 = vrot.slane %v6480, 4
  %v6885 = vsel %vm268, %v6883, %v6884
  %v6886 = vrot.slane %v6485, 4
  %v6887 = vsel %vm268, %v6884, %v6886
  %v6888 = vrot.slane %v6490, 4
  %v6889 = vsel %vm268, %v6886, %v6888
  %v6890 = vrot.slane %v6495, 4
  %v6891 = vsel %vm268, %v6888, %v6890
  %v6892 = vrot.slane %v6500, 4
  %v6893 = vsel %vm268, %v6890, %v6892
  %v6894 = vrot.slane %v6505, 4
  %v6895 = vsel %vm268, %v6892, %v6894
  %v6896 = vrot.slane %v6510, 4
  %v6897 = vsel %vm268, %v6894, %v6896
  %v6898 = vrot.slane %v6515, 4
  %v6899 = vsel %vm268, %v6896, %v6898
  %6900 = vrot.lane.b32.xlu0 %v6885, 96
  %v6901 = vpop.permute.xlu0 %6900
  %6902 = vrot.lane.b32.xlu0 %v6887, 96
  %v6903 = vpop.permute.xlu0 %6902
  %6904 = vrot.lane.b32.xlu0 %v6889, 96
  %v6905 = vpop.permute.xlu0 %6904
  %6906 = vrot.lane.b32.xlu0 %v6891, 96
  %v6907 = vpop.permute.xlu0 %6906
  %6908 = vrot.lane.b32.xlu0 %v6893, 96
  %v6909 = vpop.permute.xlu0 %6908
  %6910 = vrot.lane.b32.xlu0 %v6895, 96
  %v6911 = vpop.permute.xlu0 %6910
  %6912 = vrot.lane.b32.xlu0 %v6897, 96
  %v6913 = vpop.permute.xlu0 %6912
  %6914 = vrot.lane.b32.xlu0 %v6899, 96
  %v6915 = vpop.permute.xlu0 %6914
  %6916 = vrot.lane.b32.xlu0 %v6898, 96
  %v6917 = vpop.permute.xlu0 %6916
  %6936 = vrot.lane.b32.xlu0 %v6520, 64
  %v6937 = vpop.permute.xlu0 %6936
  %6938 = vrot.lane.b32.xlu0 %v6525, 64
  %v6939 = vpop.permute.xlu0 %6938
  %6940 = vrot.lane.b32.xlu0 %v6530, 64
  %v6941 = vpop.permute.xlu0 %6940
  %6942 = vrot.lane.b32.xlu0 %v6535, 64
  %v6943 = vpop.permute.xlu0 %6942
  %6944 = vrot.lane.b32.xlu0 %v6540, 64
  %v6945 = vpop.permute.xlu0 %6944
  %6946 = vrot.lane.b32.xlu0 %v6545, 64
  %v6947 = vpop.permute.xlu0 %6946
  %6948 = vrot.lane.b32.xlu0 %v6550, 64
  %v6949 = vpop.permute.xlu0 %6948
  %6950 = vrot.lane.b32.xlu0 %v6555, 64
  %v6951 = vpop.permute.xlu0 %6950
  %6952 = vrot.lane.b32.xlu0 %v6560, 64
  %v6953 = vpop.permute.xlu0 %6952
  %v6971 = vrot.slane %v6560, 4
  %v6972 = vrot.slane %v6565, 4
  %v6973 = vsel %vm268, %v6971, %v6972
  %v6974 = vrot.slane %v6570, 4
  %v6975 = vsel %vm268, %v6972, %v6974
  %v6976 = vrot.slane %v6575, 4
  %v6977 = vsel %vm268, %v6974, %v6976
  %v6978 = vrot.slane %v6580, 4
  %v6979 = vsel %vm268, %v6976, %v6978
  %v6980 = vrot.slane %v6585, 4
  %v6981 = vsel %vm268, %v6978, %v6980
  %v6982 = vrot.slane %v6590, 4
  %v6983 = vsel %vm268, %v6980, %v6982
  %v6984 = vrot.slane %v6595, 4
  %v6985 = vsel %vm268, %v6982, %v6984
  %v6986 = vrot.slane %v6600, 4
  %v6987 = vsel %vm268, %v6984, %v6986
  %6988 = vrot.lane.b32.xlu0 %v6973, 32
  %v6989 = vpop.permute.xlu0 %6988
  %6990 = vrot.lane.b32.xlu0 %v6975, 32
  %v6991 = vpop.permute.xlu0 %6990
  %6992 = vrot.lane.b32.xlu0 %v6977, 32
  %v6993 = vpop.permute.xlu0 %6992
  %6994 = vrot.lane.b32.xlu0 %v6979, 32
  %v6995 = vpop.permute.xlu0 %6994
  %6996 = vrot.lane.b32.xlu0 %v6981, 32
  %v6997 = vpop.permute.xlu0 %6996
  %6998 = vrot.lane.b32.xlu0 %v6983, 32
  %v6999 = vpop.permute.xlu0 %6998
  %7000 = vrot.lane.b32.xlu0 %v6985, 32
  %v7001 = vpop.permute.xlu0 %7000
  %7002 = vrot.lane.b32.xlu0 %v6987, 32
  %v7003 = vpop.permute.xlu0 %7002
  %7004 = vrot.lane.b32.xlu0 %v6986, 32
  %v7005 = vpop.permute.xlu0 %7004
  %v7024 = vrot.slane %v6645, 4
  %v7025 = vrot.slane %v6650, 4
  %v7026 = vsel %vm268, %v7024, %v7025
  %v7027 = vrot.slane %v6655, 4
  %v7028 = vsel %vm268, %v7025, %v7027
  %v7029 = vrot.slane %v6660, 4
  %v7030 = vsel %vm268, %v7027, %v7029
  %v7031 = vrot.slane %v6665, 4
  %v7032 = vsel %vm268, %v7029, %v7031
  %v7033 = vrot.slane %v6670, 4
  %v7034 = vsel %vm268, %v7031, %v7033
  %v7035 = vrot.slane %v6675, 4
  %v7036 = vsel %vm268, %v7033, %v7035
  %v7037 = vrot.slane %v6680, 4
  %v7038 = vsel %vm268, %v7035, %v7037
  %v7039 = vrot.slane %v6685, 4
  %v7040 = vsel %vm268, %v7037, %v7039
  %7041 = vrot.lane.b32.xlu0 %v7026, 96
  %v7042 = vpop.permute.xlu0 %7041
  %7043 = vrot.lane.b32.xlu0 %v7028, 96
  %v7044 = vpop.permute.xlu0 %7043
  %7045 = vrot.lane.b32.xlu0 %v7030, 96
  %v7046 = vpop.permute.xlu0 %7045
  %7047 = vrot.lane.b32.xlu0 %v7032, 96
  %v7048 = vpop.permute.xlu0 %7047
  %7049 = vrot.lane.b32.xlu0 %v7034, 96
  %v7050 = vpop.permute.xlu0 %7049
  %7051 = vrot.lane.b32.xlu0 %v7036, 96
  %v7052 = vpop.permute.xlu0 %7051
  %7053 = vrot.lane.b32.xlu0 %v7038, 96
  %v7054 = vpop.permute.xlu0 %7053
  %7055 = vrot.lane.b32.xlu0 %v7040, 96
  %v7056 = vpop.permute.xlu0 %7055
  %7057 = vrot.lane.b32.xlu0 %v7039, 96
  %v7058 = vpop.permute.xlu0 %7057
  %7077 = vrot.lane.b32.xlu0 %v6690, 64
  %v7078 = vpop.permute.xlu0 %7077
  %7079 = vrot.lane.b32.xlu0 %v6695, 64
  %v7080 = vpop.permute.xlu0 %7079
  %7081 = vrot.lane.b32.xlu0 %v6700, 64
  %v7082 = vpop.permute.xlu0 %7081
  %7083 = vrot.lane.b32.xlu0 %v6705, 64
  %v7084 = vpop.permute.xlu0 %7083
  %7085 = vrot.lane.b32.xlu0 %v6710, 64
  %v7086 = vpop.permute.xlu0 %7085
  %7087 = vrot.lane.b32.xlu0 %v6715, 64
  %v7088 = vpop.permute.xlu0 %7087
  %7089 = vrot.lane.b32.xlu0 %v6720, 64
  %v7090 = vpop.permute.xlu0 %7089
  %7091 = vrot.lane.b32.xlu0 %v6725, 64
  %v7092 = vpop.permute.xlu0 %7091
  %7093 = vrot.lane.b32.xlu0 %v6730, 64
  %v7094 = vpop.permute.xlu0 %7093
  %v7104 = vsel %vm1641, %v6265, %v6760
  %v7105 = vsel %vm1641, %v6270, %v6762
  %v7106 = vsel %vm1641, %v6275, %v6764
  %v7107 = vsel %vm1641, %v6280, %v6766
  %v7108 = vsel %vm1641, %v6285, %v6768
  %v7109 = vsel %vm1641, %v6290, %v6770
  %v7110 = vsel %vm1641, %v6295, %v6772
  %v7111 = vsel %vm1641, %v6300, %v6774
  %v7112 = vsel %vm1641, %v6305, %v6776
  %v7113 = vsel %vm901, %v6760, %v6796
  %v7114 = vsel %vm901, %v6762, %v6798
  %v7115 = vsel %vm901, %v6764, %v6800
  %v7116 = vsel %vm901, %v6766, %v6802
  %v7117 = vsel %vm901, %v6768, %v6804
  %v7118 = vsel %vm901, %v6770, %v6806
  %v7119 = vsel %vm901, %v6772, %v6808
  %v7120 = vsel %vm901, %v6774, %v6810
  %v7121 = vsel %vm901, %v6776, %v6812
  %v7122 = vsel %vm893, %v6796, %v6848
  %v7123 = vsel %vm893, %v6798, %v6850
  %v7124 = vsel %vm893, %v6800, %v6852
  %v7125 = vsel %vm893, %v6802, %v6854
  %v7126 = vsel %vm893, %v6804, %v6856
  %v7127 = vsel %vm893, %v6806, %v6858
  %v7128 = vsel %vm893, %v6808, %v6860
  %v7129 = vsel %vm893, %v6810, %v6862
  %v7130 = vsel %vm893, %v6812, %v6864
  %v7131 = vsel %vm1641, %v6435, %v6901
  %v7132 = vsel %vm1641, %v6440, %v6903
  %v7133 = vsel %vm1641, %v6445, %v6905
  %v7134 = vsel %vm1641, %v6450, %v6907
  %v7135 = vsel %vm1641, %v6455, %v6909
  %v7136 = vsel %vm1641, %v6460, %v6911
  %v7137 = vsel %vm1641, %v6465, %v6913
  %v7138 = vsel %vm1641, %v6470, %v6915
  %v7139 = vsel %vm1641, %v6475, %v6917
  %v7140 = vsel %vm901, %v6901, %v6937
  %v7141 = vsel %vm901, %v6903, %v6939
  %v7142 = vsel %vm901, %v6905, %v6941
  %v7143 = vsel %vm901, %v6907, %v6943
  %v7144 = vsel %vm901, %v6909, %v6945
  %v7145 = vsel %vm901, %v6911, %v6947
  %v7146 = vsel %vm901, %v6913, %v6949
  %v7147 = vsel %vm901, %v6915, %v6951
  %v7148 = vsel %vm901, %v6917, %v6953
  %v7149 = vsel %vm893, %v6937, %v6989
  %v7150 = vsel %vm893, %v6939, %v6991
  %v7151 = vsel %vm893, %v6941, %v6993
  %v7152 = vsel %vm893, %v6943, %v6995
  %v7153 = vsel %vm893, %v6945, %v6997
  %v7154 = vsel %vm893, %v6947, %v6999
  %v7155 = vsel %vm893, %v6949, %v7001
  %v7156 = vsel %vm893, %v6951, %v7003
  %v7157 = vsel %vm893, %v6953, %v7005
  %v7158 = vsel %vm1641, %v6605, %v7042
  %v7159 = vsel %vm1641, %v6610, %v7044
  %v7160 = vsel %vm1641, %v6615, %v7046
  %v7161 = vsel %vm1641, %v6620, %v7048
  %v7162 = vsel %vm1641, %v6625, %v7050
  %v7163 = vsel %vm1641, %v6630, %v7052
  %v7164 = vsel %vm1641, %v6635, %v7054
  %v7165 = vsel %vm1641, %v6640, %v7056
  %v7166 = vsel %vm1641, %v6645, %v7058
  %v7167 = vsel %vm901, %v7042, %v7078
  %v7168 = vsel %vm901, %v7044, %v7080
  %v7169 = vsel %vm901, %v7046, %v7082
  %v7170 = vsel %vm901, %v7048, %v7084
  %v7171 = vsel %vm901, %v7050, %v7086
  %v7172 = vsel %vm901, %v7052, %v7088
  %v7173 = vsel %vm901, %v7054, %v7090
  %v7174 = vsel %vm901, %v7056, %v7092
  %v7175 = vsel %vm901, %v7058, %v7094
  %v7177 = vlaneseq
  %v7178 = vshrl.u32 %v7177, 7
  %v7179 = vsub.s32 0, %v7178
  %v7180 = vrot.slane %v5915, %v7179
  %v7182 = vsel %vm893, %v7078, 0
  %v7184 = vsel %vm893, %v7080, 0
  %v7186 = vsel %vm893, %v7082, 0
  %v7188 = vsel %vm893, %v7084, 0
  %v7190 = vsel %vm893, %v7086, 0
  %v7192 = vsel %vm893, %v7088, 0
  %v7194 = vsel %vm893, %v7090, 0
  %v7196 = vsel %vm893, %v7092, 0
  %v7198 = vsel %vm893, %v7094, 0
  %7200 = vmatprep.subr.mxu0 0.0
  %7201 = vmatpush1.msra.mxu0 %v5783
  %7202 = vmatprep.subr.mxu0 0.0
  %7203 = vmatpush1.msra.mxu0 %v5784
  %7204 = vmatprep.subr.mxu0 0.0
  %7205 = vmatpush1.msra.mxu0 %v5785
  %7206 = vmatprep.subr.mxu0 0.0
  %7207 = vmatpush1.msra.mxu0 %v5786
  %7208 = vmatprep.subr.mxu0 0.0
  %7209 = vmatpush1.msra.mxu0 %v5787
  %7210 = vmatprep.subr.mxu0 0.0
  %7211 = vmatpush1.msra.mxu0 %v5788
  %7212 = vmatprep.subr.mxu0 0.0
  %7213 = vmatpush1.msra.mxu0 %v5789
  %7214 = vmatprep.subr.mxu0 0.0
  %7215 = vmatpush1.msra.mxu0 %v5790
  %7216 = vmatprep.subr.mxu0 0.0
  %7217 = vmatpush1.msra.mxu0 %v5791
  %7218 = vmatprep.subr.mxu0 0.0
  %7219 = vmatpush1.msra.mxu0 %v5792
  %7220 = vmatprep.subr.mxu0 0.0
  %7221 = vmatpush1.msra.mxu0 %v5793
  %7222 = vmatprep.subr.mxu0 0.0
  %7223 = vmatpush1.msra.mxu0 %v5794
  %7224 = vmatprep.subr.mxu0 0.0
  %7225 = vmatpush1.msra.mxu0 %v5795
  %7226 = vmatprep.subr.mxu0 0.0
  %7227 = vmatpush1.msra.mxu0 %v5796
  %7228 = vmatprep.subr.mxu0 0.0
  %7229 = vmatpush1.msra.mxu0 %v5797
  %7230 = vmatprep.subr.mxu0 0.0
  %7231 = vmatpush1.msra.mxu0 %v5798
  %7232 = vmatprep.subr.mxu0 0.0
  %7233 = vmatpush1.msra.mxu0 %v5799
  %7234 = vmatprep.subr.mxu0 0.0
  %7235 = vmatpush1.msra.mxu0 %v5800
  %7236 = vmatprep.subr.mxu0 0.0
  %7237 = vmatpush1.msra.mxu0 %v5801
  %7238 = vmatprep.subr.mxu0 0.0
  %7239 = vmatpush1.msra.mxu0 %v5802
  %7240 = vmatprep.subr.mxu0 0.0
  %7241 = vmatpush1.msra.mxu0 %v5803
  %7242 = vmatprep.subr.mxu0 0.0
  %7243 = vmatpush1.msra.mxu0 %v5804
  %7244 = vmatprep.subr.mxu0 0.0
  %7245 = vmatpush1.msra.mxu0 %v5805
  %7246 = vmatprep.subr.mxu0 0.0
  %7247 = vmatpush1.msra.mxu0 %v5806
  %7248 = vmatprep.subr.mxu0 0.0
  %7249 = vmatpush1.msra.mxu0 %v5807
  %7250 = vmatprep.subr.mxu0 0.0
  %7251 = vmatpush1.msra.mxu0 %v5808
  %7252 = vmatprep.subr.mxu0 0.0
  %7253 = vmatpush1.msra.mxu0 %v5809
  %7254 = vmatprep.subr.mxu0 0.0
  %7255 = vmatpush1.msra.mxu0 %v5810
  %7256 = vmatprep.subr.mxu0 0.0
  %7257 = vmatpush1.msra.mxu0 %v5811
  %7258 = vmatprep.subr.mxu0 0.0
  %7259 = vmatpush1.msra.mxu0 %v5812
  %7260 = vmatprep.subr.mxu0 0.0
  %7261 = vmatpush1.msra.mxu0 %v5813
  %7262 = vmatprep.subr.mxu0 0.0
  %7263 = vmatpush1.msra.mxu0 %v5814
  %7264 = vmatprep.mubr.f32.mxu0 %v7113
  %7265 = vmatmul.mubr.f32.gmra.mrb[0].mxu0 %v7104
  %v7266 = vpop.f32.mrb[0].mxu0
  %v7267 = vadd.f32 %v7180, %v7266
  %v7268 = vpop.f32.mrb[0].mxu0
  %7269 = vmatprep.mubr.f32.mxu0 %v7114
  %7270 = vmatmul.mubr.f32.gmra.mrb[0].mxu0 %v7105
  %v7271 = vpop.f32.mrb[0].mxu0
  %v7272 = vadd.f32 %v7180, %v7271
  %v7273 = vpop.f32.mrb[0].mxu0
  %7274 = vmatprep.mubr.f32.mxu0 %v7115
  %7275 = vmatmul.mubr.f32.gmra.mrb[0].mxu0 %v7106
  %v7276 = vpop.f32.mrb[0].mxu0
  %v7277 = vadd.f32 %v7180, %v7276
  %v7278 = vpop.f32.mrb[0].mxu0
  %7279 = vmatprep.mubr.f32.mxu0 %v7116
  %7280 = vmatmul.mubr.f32.gmra.mrb[0].mxu0 %v7107
  %v7281 = vpop.f32.mrb[0].mxu0
  %v7282 = vadd.f32 %v7180, %v7281
  %v7283 = vpop.f32.mrb[0].mxu0
  %7284 = vmatprep.mubr.f32.mxu0 %v7117
  %7285 = vmatmul.mubr.f32.gmra.mrb[0].mxu0 %v7108
  %v7286 = vpop.f32.mrb[0].mxu0
  %v7287 = vadd.f32 %v7180, %v7286
  %v7288 = vpop.f32.mrb[0].mxu0
  %7289 = vmatprep.mubr.f32.mxu0 %v7118
  %7290 = vmatmul.mubr.f32.gmra.mrb[0].mxu0 %v7109
  %v7291 = vpop.f32.mrb[0].mxu0
  %v7292 = vadd.f32 %v7180, %v7291
  %v7293 = vpop.f32.mrb[0].mxu0
  %7294 = vmatprep.mubr.f32.mxu0 %v7119
  %7295 = vmatmul.mubr.f32.gmra.mrb[0].mxu0 %v7110
  %v7296 = vpop.f32.mrb[0].mxu0
  %v7297 = vadd.f32 %v7180, %v7296
  %v7298 = vpop.f32.mrb[0].mxu0
  %7299 = vmatprep.mubr.f32.mxu0 %v7120
  %7300 = vmatmul.mubr.f32.gmra.mrb[0].mxu0 %v7111
  %v7301 = vpop.f32.mrb[0].mxu0
  %v7302 = vadd.f32 %v7180, %v7301
  %v7303 = vpop.f32.mrb[0].mxu0
  %7304 = vmatprep.mubr.f32.mxu0 %v7121
  %7305 = vmatmul.mubr.f32.gmra.mrb[0].mxu0 %v7112
  %v7306 = vpop.f32.mrb[0].mxu0
  %v7307 = vadd.f32 %v7180, %v7306
  %v7308 = vpop.f32.mrb[0].mxu0
  %7309 = vdwg.mxu0
  %7310 = vmatprep.subr.mxu0 0.0
  %7311 = vmatpush1.msra.mxu0 %v5815
  %7312 = vmatprep.subr.mxu0 0.0
  %7313 = vmatpush1.msra.mxu0 %v5816
  %7314 = vmatprep.subr.mxu0 0.0
  %7315 = vmatpush1.msra.mxu0 %v5817
  %7316 = vmatprep.subr.mxu0 0.0
  %7317 = vmatpush1.msra.mxu0 %v5818
  %7318 = vmatprep.subr.mxu0 0.0
  %7319 = vmatpush1.msra.mxu0 %v5819
  %7320 = vmatprep.subr.mxu0 0.0
  %7321 = vmatpush1.msra.mxu0 %v5820
  %7322 = vmatprep.subr.mxu0 0.0
  %7323 = vmatpush1.msra.mxu0 %v5821
  %7324 = vmatprep.subr.mxu0 0.0
  %7325 = vmatpush1.msra.mxu0 %v5822
  %7326 = vmatprep.subr.mxu0 0.0
  %7327 = vmatpush1.msra.mxu0 %v5823
  %7328 = vmatprep.subr.mxu0 0.0
  %7329 = vmatpush1.msra.mxu0 %v5824
  %7330 = vmatprep.subr.mxu0 0.0
  %7331 = vmatpush1.msra.mxu0 %v5825
  %7332 = vmatprep.subr.mxu0 0.0
  %7333 = vmatpush1.msra.mxu0 %v5826
  %7334 = vmatprep.subr.mxu0 0.0
  %7335 = vmatpush1.msra.mxu0 %v5827
  %7336 = vmatprep.subr.mxu0 0.0
  %7337 = vmatpush1.msra.mxu0 %v5828
  %7338 = vmatprep.subr.mxu0 0.0
  %7339 = vmatpush1.msra.mxu0 %v5829
  %7340 = vmatprep.subr.mxu0 0.0
  %7341 = vmatpush1.msra.mxu0 %v5830
  %7342 = vmatprep.subr.mxu0 0.0
  %7343 = vmatpush1.msra.mxu0 %v5831
  %7344 = vmatprep.subr.mxu0 0.0
  %7345 = vmatpush1.msra.mxu0 %v5832
  %7346 = vmatprep.subr.mxu0 0.0
  %7347 = vmatpush1.msra.mxu0 %v5833
  %7348 = vmatprep.subr.mxu0 0.0
  %7349 = vmatpush1.msra.mxu0 %v5834
  %7350 = vmatprep.subr.mxu0 0.0
  %7351 = vmatpush1.msra.mxu0 %v5835
  %7352 = vmatprep.subr.mxu0 0.0
  %7353 = vmatpush1.msra.mxu0 %v5836
  %7354 = vmatprep.subr.mxu0 0.0
  %7355 = vmatpush1.msra.mxu0 %v5837
  %7356 = vmatprep.subr.mxu0 0.0
  %7357 = vmatpush1.msra.mxu0 %v5838
  %7358 = vmatprep.subr.mxu0 0.0
  %7359 = vmatpush1.msra.mxu0 %v5839
  %7360 = vmatprep.subr.mxu0 0.0
  %7361 = vmatpush1.msra.mxu0 %v5840
  %7362 = vmatprep.subr.mxu0 0.0
  %7363 = vmatpush1.msra.mxu0 %v5841
  %7364 = vmatprep.subr.mxu0 0.0
  %7365 = vmatpush1.msra.mxu0 %v5842
  %7366 = vmatprep.subr.mxu0 0.0
  %7367 = vmatpush1.msra.mxu0 %v5843
  %7368 = vmatprep.subr.mxu0 0.0
  %7369 = vmatpush1.msra.mxu0 %v5844
  %7370 = vmatprep.subr.mxu0 0.0
  %7371 = vmatpush1.msra.mxu0 %v5845
  %7372 = vmatprep.subr.mxu0 0.0
  %7373 = vmatpush1.msra.mxu0 %v5846
  %7374 = vmatprep.mubr.f32.mxu0 %v7131
  %7375 = vmatmul.mubr.f32.gmra.mrb[0].mxu0 %v7122
  %v7376 = vpop.f32.mrb[0].mxu0
  %v7377 = vadd.f32 %v7267, %v7376
  %v7378 = vpop.f32.mrb[0].mxu0
  %7379 = vmatprep.mubr.f32.mxu0 %v7132
  %7380 = vmatmul.mubr.f32.gmra.mrb[0].mxu0 %v7123
  %v7381 = vpop.f32.mrb[0].mxu0
  %v7382 = vadd.f32 %v7272, %v7381
  %v7383 = vpop.f32.mrb[0].mxu0
  %7384 = vmatprep.mubr.f32.mxu0 %v7133
  %7385 = vmatmul.mubr.f32.gmra.mrb[0].mxu0 %v7124
  %v7386 = vpop.f32.mrb[0].mxu0
  %v7387 = vadd.f32 %v7277, %v7386
  %v7388 = vpop.f32.mrb[0].mxu0
  %7389 = vmatprep.mubr.f32.mxu0 %v7134
  %7390 = vmatmul.mubr.f32.gmra.mrb[0].mxu0 %v7125
  %v7391 = vpop.f32.mrb[0].mxu0
  %v7392 = vadd.f32 %v7282, %v7391
  %v7393 = vpop.f32.mrb[0].mxu0
  %7394 = vmatprep.mubr.f32.mxu0 %v7135
  %7395 = vmatmul.mubr.f32.gmra.mrb[0].mxu0 %v7126
  %v7396 = vpop.f32.mrb[0].mxu0
  %v7397 = vadd.f32 %v7287, %v7396
  %v7398 = vpop.f32.mrb[0].mxu0
  %7399 = vmatprep.mubr.f32.mxu0 %v7136
  %7400 = vmatmul.mubr.f32.gmra.mrb[0].mxu0 %v7127
  %v7401 = vpop.f32.mrb[0].mxu0
  %v7402 = vadd.f32 %v7292, %v7401
  %v7403 = vpop.f32.mrb[0].mxu0
  %7404 = vmatprep.mubr.f32.mxu0 %v7137
  %7405 = vmatmul.mubr.f32.gmra.mrb[0].mxu0 %v7128
  %v7406 = vpop.f32.mrb[0].mxu0
  %v7407 = vadd.f32 %v7297, %v7406
  %v7408 = vpop.f32.mrb[0].mxu0
  %7409 = vmatprep.mubr.f32.mxu0 %v7138
  %7410 = vmatmul.mubr.f32.gmra.mrb[0].mxu0 %v7129
  %v7411 = vpop.f32.mrb[0].mxu0
  %v7412 = vadd.f32 %v7302, %v7411
  %v7413 = vpop.f32.mrb[0].mxu0
  %7414 = vmatprep.mubr.f32.mxu0 %v7139
  %7415 = vmatmul.mubr.f32.gmra.mrb[0].mxu0 %v7130
  %v7416 = vpop.f32.mrb[0].mxu0
  %v7417 = vadd.f32 %v7307, %v7416
  %v7418 = vpop.f32.mrb[0].mxu0
  %7419 = vdwg.mxu0
  %7420 = vmatprep.subr.mxu0 0.0
  %7421 = vmatpush1.msra.mxu0 %v5847
  %7422 = vmatprep.subr.mxu0 0.0
  %7423 = vmatpush1.msra.mxu0 %v5848
  %7424 = vmatprep.subr.mxu0 0.0
  %7425 = vmatpush1.msra.mxu0 %v5849
  %7426 = vmatprep.subr.mxu0 0.0
  %7427 = vmatpush1.msra.mxu0 %v5850
  %7428 = vmatprep.subr.mxu0 0.0
  %7429 = vmatpush1.msra.mxu0 %v5851
  %7430 = vmatprep.subr.mxu0 0.0
  %7431 = vmatpush1.msra.mxu0 %v5852
  %7432 = vmatprep.subr.mxu0 0.0
  %7433 = vmatpush1.msra.mxu0 %v5853
  %7434 = vmatprep.subr.mxu0 0.0
  %7435 = vmatpush1.msra.mxu0 %v5854
  %7436 = vmatprep.subr.mxu0 0.0
  %7437 = vmatpush1.msra.mxu0 %v5855
  %7438 = vmatprep.subr.mxu0 0.0
  %7439 = vmatpush1.msra.mxu0 %v5856
  %7440 = vmatprep.subr.mxu0 0.0
  %7441 = vmatpush1.msra.mxu0 %v5857
  %7442 = vmatprep.subr.mxu0 0.0
  %7443 = vmatpush1.msra.mxu0 %v5858
  %7444 = vmatprep.subr.mxu0 0.0
  %7445 = vmatpush1.msra.mxu0 %v5859
  %7446 = vmatprep.subr.mxu0 0.0
  %7447 = vmatpush1.msra.mxu0 %v5860
  %7448 = vmatprep.subr.mxu0 0.0
  %7449 = vmatpush1.msra.mxu0 %v5861
  %7450 = vmatprep.subr.mxu0 0.0
  %7451 = vmatpush1.msra.mxu0 %v5862
  %7452 = vmatprep.subr.mxu0 0.0
  %7453 = vmatpush1.msra.mxu0 %v5863
  %7454 = vmatprep.subr.mxu0 0.0
  %7455 = vmatpush1.msra.mxu0 %v5864
  %7456 = vmatprep.subr.mxu0 0.0
  %7457 = vmatpush1.msra.mxu0 %v5865
  %7458 = vmatprep.subr.mxu0 0.0
  %7459 = vmatpush1.msra.mxu0 %v5866
  %7460 = vmatprep.subr.mxu0 0.0
  %7461 = vmatpush1.msra.mxu0 %v5867
  %7462 = vmatprep.subr.mxu0 0.0
  %7463 = vmatpush1.msra.mxu0 %v5868
  %7464 = vmatprep.subr.mxu0 0.0
  %7465 = vmatpush1.msra.mxu0 %v5869
  %7466 = vmatprep.subr.mxu0 0.0
  %7467 = vmatpush1.msra.mxu0 %v5870
  %7468 = vmatprep.subr.mxu0 0.0
  %7469 = vmatpush1.msra.mxu0 %v5871
  %7470 = vmatprep.subr.mxu0 0.0
  %7471 = vmatpush1.msra.mxu0 %v5872
  %7472 = vmatprep.subr.mxu0 0.0
  %7473 = vmatpush1.msra.mxu0 %v5873
  %7474 = vmatprep.subr.mxu0 0.0
  %7475 = vmatpush1.msra.mxu0 %v5874
  %7476 = vmatprep.subr.mxu0 0.0
  %7477 = vmatpush1.msra.mxu0 %v5875
  %7478 = vmatprep.subr.mxu0 0.0
  %7479 = vmatpush1.msra.mxu0 %v5876
  %7480 = vmatprep.subr.mxu0 0.0
  %7481 = vmatpush1.msra.mxu0 %v5877
  %7482 = vmatprep.subr.mxu0 0.0
  %7483 = vmatpush1.msra.mxu0 %v5878
  %7484 = vmatprep.mubr.f32.mxu0 %v7149
  %7485 = vmatmul.mubr.f32.gmra.mrb[0].mxu0 %v7140
  %v7486 = vpop.f32.mrb[0].mxu0
  %v7487 = vadd.f32 %v7377, %v7486
  %v7488 = vpop.f32.mrb[0].mxu0
  %7489 = vmatprep.mubr.f32.mxu0 %v7150
  %7490 = vmatmul.mubr.f32.gmra.mrb[0].mxu0 %v7141
  %v7491 = vpop.f32.mrb[0].mxu0
  %v7492 = vadd.f32 %v7382, %v7491
  %v7493 = vpop.f32.mrb[0].mxu0
  %7494 = vmatprep.mubr.f32.mxu0 %v7151
  %7495 = vmatmul.mubr.f32.gmra.mrb[0].mxu0 %v7142
  %v7496 = vpop.f32.mrb[0].mxu0
  %v7497 = vadd.f32 %v7387, %v7496
  %v7498 = vpop.f32.mrb[0].mxu0
  %7499 = vmatprep.mubr.f32.mxu0 %v7152
  %7500 = vmatmul.mubr.f32.gmra.mrb[0].mxu0 %v7143
  %v7501 = vpop.f32.mrb[0].mxu0
  %v7502 = vadd.f32 %v7392, %v7501
  %v7503 = vpop.f32.mrb[0].mxu0
  %7504 = vmatprep.mubr.f32.mxu0 %v7153
  %7505 = vmatmul.mubr.f32.gmra.mrb[0].mxu0 %v7144
  %v7506 = vpop.f32.mrb[0].mxu0
  %v7507 = vadd.f32 %v7397, %v7506
  %v7508 = vpop.f32.mrb[0].mxu0
  %7509 = vmatprep.mubr.f32.mxu0 %v7154
  %7510 = vmatmul.mubr.f32.gmra.mrb[0].mxu0 %v7145
  %v7511 = vpop.f32.mrb[0].mxu0
  %v7512 = vadd.f32 %v7402, %v7511
  %v7513 = vpop.f32.mrb[0].mxu0
  %7514 = vmatprep.mubr.f32.mxu0 %v7155
  %7515 = vmatmul.mubr.f32.gmra.mrb[0].mxu0 %v7146
  %v7516 = vpop.f32.mrb[0].mxu0
  %v7517 = vadd.f32 %v7407, %v7516
  %v7518 = vpop.f32.mrb[0].mxu0
  %7519 = vmatprep.mubr.f32.mxu0 %v7156
  %7520 = vmatmul.mubr.f32.gmra.mrb[0].mxu0 %v7147
  %v7521 = vpop.f32.mrb[0].mxu0
  %v7522 = vadd.f32 %v7412, %v7521
  %v7523 = vpop.f32.mrb[0].mxu0
  %7524 = vmatprep.mubr.f32.mxu0 %v7157
  %7525 = vmatmul.mubr.f32.gmra.mrb[0].mxu0 %v7148
  %v7526 = vpop.f32.mrb[0].mxu0
  %v7527 = vadd.f32 %v7417, %v7526
  %v7528 = vpop.f32.mrb[0].mxu0
  %7529 = vdwg.mxu0
  %7530 = vmatprep.subr.mxu0 0.0
  %7531 = vmatpush1.msra.mxu0 %v5879
  %7532 = vmatprep.subr.mxu0 0.0
  %7533 = vmatpush1.msra.mxu0 %v5880
  %7534 = vmatprep.subr.mxu0 0.0
  %7535 = vmatpush1.msra.mxu0 %v5881
  %7536 = vmatprep.subr.mxu0 0.0
  %7537 = vmatpush1.msra.mxu0 %v5882
  %7538 = vmatprep.subr.mxu0 0.0
  %7539 = vmatpush1.msra.mxu0 %v5883
  %7540 = vmatprep.subr.mxu0 0.0
  %7541 = vmatpush1.msra.mxu0 %v5884
  %7542 = vmatprep.subr.mxu0 0.0
  %7543 = vmatpush1.msra.mxu0 %v5885
  %7544 = vmatprep.subr.mxu0 0.0
  %7545 = vmatpush1.msra.mxu0 %v5886
  %7546 = vmatprep.subr.mxu0 0.0
  %7547 = vmatpush1.msra.mxu0 %v5887
  %7548 = vmatprep.subr.mxu0 0.0
  %7549 = vmatpush1.msra.mxu0 %v5888
  %7550 = vmatprep.subr.mxu0 0.0
  %7551 = vmatpush1.msra.mxu0 %v5889
  %7552 = vmatprep.subr.mxu0 0.0
  %7553 = vmatpush1.msra.mxu0 %v5890
  %7554 = vmatprep.subr.mxu0 0.0
  %7555 = vmatpush1.msra.mxu0 %v5891
  %7556 = vmatprep.subr.mxu0 0.0
  %7557 = vmatpush1.msra.mxu0 %v5892
  %7558 = vmatprep.subr.mxu0 0.0
  %7559 = vmatpush1.msra.mxu0 %v5893
  %7560 = vmatprep.subr.mxu0 0.0
  %7561 = vmatpush1.msra.mxu0 %v5894
  %7562 = vmatprep.subr.mxu0 0.0
  %7563 = vmatpush1.msra.mxu0 %v5895
  %7564 = vmatprep.subr.mxu0 0.0
  %7565 = vmatpush1.msra.mxu0 %v5896
  %7566 = vmatprep.subr.mxu0 0.0
  %7567 = vmatpush1.msra.mxu0 %v5897
  %7568 = vmatprep.subr.mxu0 0.0
  %7569 = vmatpush1.msra.mxu0 %v5898
  %7570 = vmatprep.subr.mxu0 0.0
  %7571 = vmatpush1.msra.mxu0 %v5899
  %7572 = vmatprep.subr.mxu0 0.0
  %7573 = vmatpush1.msra.mxu0 %v5900
  %7574 = vmatprep.subr.mxu0 0.0
  %7575 = vmatpush1.msra.mxu0 %v5901
  %7576 = vmatprep.subr.mxu0 0.0
  %7577 = vmatpush1.msra.mxu0 %v5902
  %7578 = vmatprep.subr.mxu0 0.0
  %7579 = vmatpush1.msra.mxu0 %v5903
  %7580 = vmatprep.subr.mxu0 0.0
  %7581 = vmatpush1.msra.mxu0 %v5904
  %7582 = vmatprep.subr.mxu0 0.0
  %7583 = vmatpush1.msra.mxu0 %v5905
  %7584 = vmatprep.subr.mxu0 0.0
  %7585 = vmatpush1.msra.mxu0 %v5906
  %7586 = vmatprep.subr.mxu0 0.0
  %7587 = vmatpush1.msra.mxu0 %v5907
  %7588 = vmatprep.subr.mxu0 0.0
  %7589 = vmatpush1.msra.mxu0 %v5908
  %7590 = vmatprep.subr.mxu0 0.0
  %7591 = vmatpush1.msra.mxu0 %v5909
  %7592 = vmatprep.subr.mxu0 0.0
  %7593 = vmatpush1.msra.mxu0 %v5910
  %7594 = vmatprep.mubr.f32.mxu0 %v7167
  %7595 = vmatmul.mubr.f32.gmra.mrb[0].mxu0 %v7158
  %v7596 = vpop.f32.mrb[0].mxu0
  %v7597 = vadd.f32 %v7487, %v7596
  %v7598 = vpop.f32.mrb[0].mxu0
  %7599 = vmatprep.mubr.f32.mxu0 %v7168
  %7600 = vmatmul.mubr.f32.gmra.mrb[0].mxu0 %v7159
  %v7601 = vpop.f32.mrb[0].mxu0
  %v7602 = vadd.f32 %v7492, %v7601
  %v7603 = vpop.f32.mrb[0].mxu0
  %7604 = vmatprep.mubr.f32.mxu0 %v7169
  %7605 = vmatmul.mubr.f32.gmra.mrb[0].mxu0 %v7160
  %v7606 = vpop.f32.mrb[0].mxu0
  %v7607 = vadd.f32 %v7497, %v7606
  %v7608 = vpop.f32.mrb[0].mxu0
  %7609 = vmatprep.mubr.f32.mxu0 %v7170
  %7610 = vmatmul.mubr.f32.gmra.mrb[0].mxu0 %v7161
  %v7611 = vpop.f32.mrb[0].mxu0
  %v7612 = vadd.f32 %v7502, %v7611
  %v7613 = vpop.f32.mrb[0].mxu0
  %7614 = vmatprep.mubr.f32.mxu0 %v7171
  %7615 = vmatmul.mubr.f32.gmra.mrb[0].mxu0 %v7162
  %v7616 = vpop.f32.mrb[0].mxu0
  %v7617 = vadd.f32 %v7507, %v7616
  %v7618 = vpop.f32.mrb[0].mxu0
  %7619 = vmatprep.mubr.f32.mxu0 %v7172
  %7620 = vmatmul.mubr.f32.gmra.mrb[0].mxu0 %v7163
  %v7621 = vpop.f32.mrb[0].mxu0
  %v7622 = vadd.f32 %v7512, %v7621
  %v7623 = vpop.f32.mrb[0].mxu0
  %7624 = vmatprep.mubr.f32.mxu0 %v7173
  %7625 = vmatmul.mubr.f32.gmra.mrb[0].mxu0 %v7164
  %v7626 = vpop.f32.mrb[0].mxu0
  %v7627 = vadd.f32 %v7517, %v7626
  %v7628 = vpop.f32.mrb[0].mxu0
  %7629 = vmatprep.mubr.f32.mxu0 %v7174
  %7630 = vmatmul.mubr.f32.gmra.mrb[0].mxu0 %v7165
  %v7631 = vpop.f32.mrb[0].mxu0
  %v7632 = vadd.f32 %v7522, %v7631
  %v7633 = vpop.f32.mrb[0].mxu0
  %7634 = vmatprep.mubr.f32.mxu0 %v7175
  %7635 = vmatmul.mubr.f32.gmra.mrb[0].mxu0 %v7166
  %v7636 = vpop.f32.mrb[0].mxu0
  %v7637 = vadd.f32 %v7527, %v7636
  %v7638 = vpop.f32.mrb[0].mxu0
  %7639 = vdwg.mxu0
  %7640 = vmatprep.subr.mxu0 0.0
  %7641 = vmatpush1.msra.mxu0 %v5911
  %7642 = vmatprep.subr.mxu0 0.0
  %7643 = vmatpush1.msra.mxu0 %v5912
  %7644 = vmatprep.subr.mxu0 0.0
  %7645 = vmatpush1.msra.mxu0 %v5913
  %7646 = vmatprep.subr.mxu0 0.0
  %7647 = vmatpush1.msra.mxu0 %v5914
  %7648 = vmatprep.subr.mxu0 0.0
  %7649 = vmatpush1.msra.mxu0 0.0
  %7650 = vmatprep.subr.mxu0 0.0
  %7651 = vmatpush1.msra.mxu0 0.0
  %7652 = vmatprep.subr.mxu0 0.0
  %7653 = vmatpush1.msra.mxu0 0.0
  %7654 = vmatprep.subr.mxu0 0.0
  %7655 = vmatpush1.msra.mxu0 0.0
  %7656 = vmatprep.subr.mxu0 0.0
  %7657 = vmatpush1.msra.mxu0 0.0
  %7658 = vmatprep.subr.mxu0 0.0
  %7659 = vmatpush1.msra.mxu0 0.0
  %7660 = vmatprep.subr.mxu0 0.0
  %7661 = vmatpush1.msra.mxu0 0.0
  %7662 = vmatprep.subr.mxu0 0.0
  %7663 = vmatpush1.msra.mxu0 0.0
  %7664 = vmatprep.subr.mxu0 0.0
  %7665 = vmatpush1.msra.mxu0 0.0
  %7666 = vmatprep.subr.mxu0 0.0
  %7667 = vmatpush1.msra.mxu0 0.0
  %7668 = vmatprep.subr.mxu0 0.0
  %7669 = vmatpush1.msra.mxu0 0.0
  %7670 = vmatprep.subr.mxu0 0.0
  %7671 = vmatpush1.msra.mxu0 0.0
  %7672 = vmatprep.subr.mxu0 0.0
  %7673 = vmatpush1.msra.mxu0 0.0
  %7674 = vmatprep.subr.mxu0 0.0
  %7675 = vmatpush1.msra.mxu0 0.0
  %7676 = vmatprep.subr.mxu0 0.0
  %7677 = vmatpush1.msra.mxu0 0.0
  %7678 = vmatprep.subr.mxu0 0.0
  %7679 = vmatpush1.msra.mxu0 0.0
  %7680 = vmatprep.subr.mxu0 0.0
  %7681 = vmatpush1.msra.mxu0 0.0
  %7682 = vmatprep.subr.mxu0 0.0
  %7683 = vmatpush1.msra.mxu0 0.0
  %7684 = vmatprep.subr.mxu0 0.0
  %7685 = vmatpush1.msra.mxu0 0.0
  %7686 = vmatprep.subr.mxu0 0.0
  %7687 = vmatpush1.msra.mxu0 0.0
  %7688 = vmatprep.subr.mxu0 0.0
  %7689 = vmatpush1.msra.mxu0 0.0
  %7690 = vmatprep.subr.mxu0 0.0
  %7691 = vmatpush1.msra.mxu0 0.0
  %7692 = vmatprep.subr.mxu0 0.0
  %7693 = vmatpush1.msra.mxu0 0.0
  %7694 = vmatprep.subr.mxu0 0.0
  %7695 = vmatpush1.msra.mxu0 0.0
  %7696 = vmatprep.subr.mxu0 0.0
  %7697 = vmatpush1.msra.mxu0 0.0
  %7698 = vmatprep.subr.mxu0 0.0
  %7699 = vmatpush1.msra.mxu0 0.0
  %7700 = vmatprep.subr.mxu0 0.0
  %7701 = vmatpush1.msra.mxu0 0.0
  %7702 = vmatprep.subr.mxu0 0.0
  %7703 = vmatpush1.msra.mxu0 0.0
  %7704 = vmatprep.mubr.f32.mxu0 0.0
  %7705 = vmatmul.mubr.f32.gmra.mrb[0].mxu0 %v7182
  %v7706 = vpop.f32.mrb[0].mxu0
  %v7707 = vadd.f32 %v7597, %v7706
  %v7708 = vpop.f32.mrb[0].mxu0
  %7709 = vmatprep.mubr.f32.mxu0 0.0
  %7710 = vmatmul.mubr.f32.gmra.mrb[0].mxu0 %v7184
  %v7711 = vpop.f32.mrb[0].mxu0
  %v7712 = vadd.f32 %v7602, %v7711
  %v7713 = vpop.f32.mrb[0].mxu0
  %7714 = vmatprep.mubr.f32.mxu0 0.0
  %7715 = vmatmul.mubr.f32.gmra.mrb[0].mxu0 %v7186
  %v7716 = vpop.f32.mrb[0].mxu0
  %v7717 = vadd.f32 %v7607, %v7716
  %v7718 = vpop.f32.mrb[0].mxu0
  %7719 = vmatprep.mubr.f32.mxu0 0.0
  %7720 = vmatmul.mubr.f32.gmra.mrb[0].mxu0 %v7188
  %v7721 = vpop.f32.mrb[0].mxu0
  %v7722 = vadd.f32 %v7612, %v7721
  %v7723 = vpop.f32.mrb[0].mxu0
  %7724 = vmatprep.mubr.f32.mxu0 0.0
  %7725 = vmatmul.mubr.f32.gmra.mrb[0].mxu0 %v7190
  %v7726 = vpop.f32.mrb[0].mxu0
  %v7727 = vadd.f32 %v7617, %v7726
  %v7728 = vpop.f32.mrb[0].mxu0
  %7729 = vmatprep.mubr.f32.mxu0 0.0
  %7730 = vmatmul.mubr.f32.gmra.mrb[0].mxu0 %v7192
  %v7731 = vpop.f32.mrb[0].mxu0
  %v7732 = vadd.f32 %v7622, %v7731
  %v7733 = vpop.f32.mrb[0].mxu0
  %7734 = vmatprep.mubr.f32.mxu0 0.0
  %7735 = vmatmul.mubr.f32.gmra.mrb[0].mxu0 %v7194
  %v7736 = vpop.f32.mrb[0].mxu0
  %v7737 = vadd.f32 %v7627, %v7736
  %v7738 = vpop.f32.mrb[0].mxu0
  %7739 = vmatprep.mubr.f32.mxu0 0.0
  %7740 = vmatmul.mubr.f32.gmra.mrb[0].mxu0 %v7196
  %v7741 = vpop.f32.mrb[0].mxu0
  %v7742 = vadd.f32 %v7632, %v7741
  %v7743 = vpop.f32.mrb[0].mxu0
  %7744 = vmatprep.mubr.f32.mxu0 0.0
  %7745 = vmatmul.mubr.f32.gmra.mrb[0].mxu0 %v7198
  %v7746 = vpop.f32.mrb[0].mxu0
  %v7747 = vadd.f32 %v7637, %v7746
  %v7748 = vpop.f32.mrb[0].mxu0
  %7749 = vdwg.mxu0
  %v7750 = vtanh.pop %v7707
  %v7751 = vtanh.pop %v7712
  %v7752 = vtanh.pop %v7717
  %v7753 = vtanh.pop %v7722
  %v7754 = vtanh.pop %v7727
  %v7755 = vtanh.pop %v7732
  %v7756 = vtanh.pop %v7737
  %v7757 = vtanh.pop %v7742
  %v7758 = vtanh.pop %v7747
  %7759 = vst [vmem:[%s79] sm:$0xff] %v7750
  %7760 = vst [vmem:[%s79 + $0x8] sm:$0xff] %v7751
  %7761 = vst [vmem:[%s79 + $0x10] sm:$0xff] %v7752
  %7762 = vst [vmem:[%s79 + $0x18] sm:$0xff] %v7753
  %7763 = vst [vmem:[%s79 + $0x20] sm:$0xff] %v7754
  %7764 = vst [vmem:[%s79 + $0x28] sm:$0xff] %v7755
  %7765 = vst [vmem:[%s79 + $0x30] sm:$0xff] %v7756
  %7766 = vst [vmem:[%s79 + $0x38] sm:$0xff] %v7757
  %7767 = vst [vmem:[%s79 + $0x40] sm:$0xf] %v7758
  // Predicated region
  $region158: #{forward.1} parent=0 // pred_check
    _
  $region159: #{forward.1} parent=0 // pred_check_branch
    %7769 = sbr.rel (0) target = $region161
  $region160: #{forward.1} parent=0 // pred_region
    _
  $region161: #{forward.1} parent=0 // pred_fallthru
    _
  // Predicated region
  $region162: #{forward.1} parent=0 // pred_check
    _
  $region163: #{forward.1} parent=0 // pred_check_branch
    %7771 = sbr.rel (0) target = $region165
  $region164: #{forward.1} parent=0 // pred_region
    _
  $region165: #{forward.1} parent=0 // pred_fallthru
    _

</llo_original>
